<compile_context>
chip_gen: v5e
topology: v5e:2x2
jax: 0.10.0
libtpu: 0.0.40
codegen_flags: <defaults>
</compile_context>

<pallas_src>
import jax
import jax.numpy as jnp
import numpy as np
from jax.experimental import pallas as pl
from jax.experimental.pallas import tpu as pltpu

BN_EPS = 1e-5


# --------------------------------------------------------------------------
# One-time parameter preparation (outside jit)
# --------------------------------------------------------------------------

def _banded_conv_matrix(w, w_in):
    """w: (Cout, Cin, KH, KW) torch-layout conv weight.

    Returns B with B[dy] in R^{(w_in*Cin) x (Wo*Cout)} such that for an
    activation row-slab X[h, w*Cin + ci]:
        sum_dy  X[i+dy, :] @ B[dy]   ==   conv output row i in (Wo*Cout) layout.
    """
    cout, cin, kh, kw = w.shape
    wo = w_in - kw + 1
    wn = np.asarray(w, np.float32)
    b = np.zeros((kh, w_in * cin, wo * cout), np.float32)
    for dy in range(kh):
        for j in range(wo):
            for dx in range(kw):
                b[dy,
                  (j + dx) * cin:(j + dx + 1) * cin,
                  j * cout:(j + 1) * cout] = wn[:, :, dy, dx].T
    return b


def _channel_sum_matrix(wo, c):
    """(wo*c, c) 0/1 matrix: collapses lane layout (w, c) to per-channel sums."""
    m = np.zeros((wo * c, c), np.float32)
    for j in range(wo):
        m[j * c:(j + 1) * c, :] = np.eye(c, dtype=np.float32)
    return m


def _pool_matrices(h, w, c):
    """Selection matrices for a 2x2/stride-2 max pool on an (h, w*c) slab."""
    ho, wo = h // 2, w // 2
    pe = np.zeros((ho, h), np.float32)
    po = np.zeros((ho, h), np.float32)
    for i in range(ho):
        pe[i, 2 * i] = 1.0
        po[i, 2 * i + 1] = 1.0
    se = np.zeros((w * c, wo * c), np.float32)
    so = np.zeros((w * c, wo * c), np.float32)
    for j in range(wo):
        for ch in range(c):
            se[(2 * j) * c + ch, j * c + ch] = 1.0
            so[(2 * j + 1) * c + ch, j * c + ch] = 1.0
    return pe, po, se, so


def prepare_params(params):
    """Convert torch-layout weights into the matrices the fused kernel uses."""
    def bn_pack(w, gamma, beta, w_in):
        cout, _, kh, _ = w.shape
        wo = w_in - kh + 1
        cs = _channel_sum_matrix(wo, cout)
        return (jnp.asarray(_banded_conv_matrix(w, w_in)),      # (KH, Win*Cin, Wo*Cout)
                jnp.asarray(cs),                                 # (Wo*Cout, Cout)
                jnp.asarray(np.ascontiguousarray(cs.T)),         # (Cout, Wo*Cout)
                jnp.asarray(np.asarray(gamma, np.float32).reshape(1, cout)),
                jnp.asarray(np.asarray(beta, np.float32).reshape(1, cout)))

    pe, po, se, so = _pool_matrices(24, 24, 10)
    wb3 = _banded_conv_matrix(params["w3"], 24)[0]               # (288, 240) block-diag
    w7m = np.asarray(params["w7"], np.float32).reshape(16, 20).T  # (20, 16)
    w8m = np.asarray(params["w8"], np.float32).reshape(10, 16).T  # (16, 10)

    return (
        *bn_pack(params["w1"], params["g1"], params["b1"], 28),
        *bn_pack(params["w2"], params["g2"], params["b2"], 26),
        jnp.asarray(wb3),
        jnp.asarray(pe), jnp.asarray(po), jnp.asarray(se), jnp.asarray(so),
        *bn_pack(params["w4"], params["g4"], params["b4"], 12),
        *bn_pack(params["w5"], params["g5"], params["b5"], 10),
        *bn_pack(params["w6"], params["g6"], params["b6"], 8),
        jnp.asarray(w7m), jnp.asarray(w8m),
    )


# --------------------------------------------------------------------------
# The fused Pallas kernel
# --------------------------------------------------------------------------

def _fused_kernel(x_ref,
                  wb1, cs1, ce1, g1, b1,
                  wb2, cs2, ce2, g2, b2,
                  wb3,
                  pe, po, se, so,
                  wb4, cs4, ce4, g4, b4,
                  wb5, cs5, ce5, g5, b5,
                  wb6, cs6, ce6, g6, b6,
                  w7, w8,
                  out_ref,
                  a1, a2, ap, a4, a5, a6):
    n_batch = x_ref.shape[0]

    def conv_relu_bn(in_ref, dst_ref, wb_ref, cs_ref, ce_ref, g_ref, b_ref):
        # in_ref : (N, H_in,  W_in * C_in)   VMEM
        # dst_ref: (N, H_out, W_out * C_out) VMEM
        h_in = in_ref.shape[1]
        h_out, wc_out = dst_ref.shape[1], dst_ref.shape[2]
        kh = h_in - h_out + 1
        c_out = cs_ref.shape[1]
        w_out = wc_out // c_out

        tot_s = jnp.zeros((1, c_out), jnp.float32)
        tot_ss = jnp.zeros((1, c_out), jnp.float32)
        # Pass 1: conv (as KH banded matmuls) + ReLU; stash and accumulate stats.
        for n in range(n_batch):
            acc = None
            for dy in range(kh):
                t = jnp.dot(in_ref[n, pl.ds(dy, h_out), :], wb_ref[dy],
                            preferred_element_type=jnp.float32)
                acc = t if acc is None else acc + t
            y = jnp.maximum(acc, 0.0)                       # Conv -> ReLU
            dst_ref[n, :, :] = y
            tot_s = tot_s + jnp.dot(jnp.sum(y, axis=0, keepdims=True),
                                    cs_ref[...],
                                    preferred_element_type=jnp.float32)
            tot_ss = tot_ss + jnp.dot(jnp.sum(y * y, axis=0, keepdims=True),
                                      cs_ref[...],
                                      preferred_element_type=jnp.float32)
        # Single-pass batch statistics (biased var, as in torch training BN).
        inv_cnt = 1.0 / float(n_batch * h_out * w_out)
        mean = tot_s * inv_cnt
        var = tot_ss * inv_cnt - mean * mean
        scale = g_ref[...] * jax.lax.rsqrt(var + BN_EPS)     # (1, C_out)
        shift = b_ref[...] - mean * scale
        scale_w = jnp.dot(scale, ce_ref[...], preferred_element_type=jnp.float32)
        shift_w = jnp.dot(shift, ce_ref[...], preferred_element_type=jnp.float32)
        # Pass 2: normalize in place.
        for n in range(n_batch):
            dst_ref[n, :, :] = dst_ref[n, :, :] * scale_w + shift_w

    # convblock1 / convblock2
    conv_relu_bn(x_ref, a1, wb1, cs1, ce1, g1, b1)           # (N, 26, 26*8)
    conv_relu_bn(a1, a2, wb2, cs2, ce2, g2, b2)              # (N, 24, 24*12)

    # convblock3 (1x1, no ReLU/BN) fused with the 2x2/stride-2 max pool.
    for n in range(n_batch):
        x3 = jnp.dot(a2[n, :, :], wb3[...],
                     preferred_element_type=jnp.float32)     # (24, 24*10)
        v = jnp.maximum(
            jnp.dot(pe[...], x3, preferred_element_type=jnp.float32),
            jnp.dot(po[...], x3, preferred_element_type=jnp.float32))
        ap[n, :, :] = jnp.maximum(
            jnp.dot(v, se[...], preferred_element_type=jnp.float32),
            jnp.dot(v, so[...], preferred_element_type=jnp.float32))

    # convblock4/5/6
    conv_relu_bn(ap, a4, wb4, cs4, ce4, g4, b4)              # (N, 10, 10*14)
    conv_relu_bn(a4, a5, wb5, cs5, ce5, g5, b5)              # (N,  8,  8*16)
    conv_relu_bn(a5, a6, wb6, cs6, ce6, g6, b6)              # (N,  6,  6*20)

    # GAP -> 1x1 conv (20->16) -> 1x1 conv (16->10) -> log_softmax
    for n in range(n_batch):
        y6 = a6[n, :, :]                                     # (6, 6*20)
        rs = jnp.sum(y6, axis=0, keepdims=True)              # (1, 120)
        g = jnp.dot(rs, cs6[...],
                    preferred_element_type=jnp.float32) * (1.0 / 36.0)  # (1, 20)
        z = jnp.dot(g, w7[...], preferred_element_type=jnp.float32)     # (1, 16)
        z = jnp.dot(z, w8[...], preferred_element_type=jnp.float32)     # (1, 10)
        z = z - jnp.max(z, axis=-1, keepdims=True)
        lse = jnp.log(jnp.sum(jnp.exp(z), axis=-1, keepdims=True))
        out_ref[pl.ds(n, 1), :] = z - lse


# --------------------------------------------------------------------------
# Wrapper
# --------------------------------------------------------------------------

@jax.jit
def model_forward(x_nchw, prep_args):
    n = x_nchw.shape[0]
    # NCHW with C==1 -> lane-dense (N, H, W*C) row-slab layout (pure reshape).
    x = x_nchw.astype(jnp.float32).reshape(n, 28, 28)
    scratch = [
        pltpu.VMEM((n, 26, 26 * 8), jnp.float32),    # conv1 out
        pltpu.VMEM((n, 24, 24 * 12), jnp.float32),   # conv2 out
        pltpu.VMEM((n, 12, 12 * 10), jnp.float32),   # pooled
        pltpu.VMEM((n, 10, 10 * 14), jnp.float32),   # conv4 out
        pltpu.VMEM((n, 8, 8 * 16), jnp.float32),     # conv5 out
        pltpu.VMEM((n, 6, 6 * 20), jnp.float32),     # conv6 out
    ]
    return pl.pallas_call(
        _fused_kernel,
        out_shape=jax.ShapeDtypeStruct((n, 10), jnp.float32),
        in_specs=[pl.BlockSpec(memory_space=pltpu.MemorySpace.VMEM)]
                 * (1 + len(prep_args)),
        out_specs=pl.BlockSpec(memory_space=pltpu.MemorySpace.VMEM),
        scratch_shapes=scratch,
    )(x, *prep_args)


# --------------------------------------------------------------------------
# Parameter init (torch-layout, same as the PyTorch module) and a pure-JAX
# reference of the forward pass for validation.
# --------------------------------------------------------------------------

def init_params(key):
    def conv_w(k, cout, cin, kh, kw):
        fan_in = cin * kh * kw
        return (jax.random.normal(k, (cout, cin, kh, kw), jnp.float32)
                * (2.0 / fan_in) ** 0.5)

    ks = jax.random.split(key, 8)
    p = {
        "w1": conv_w(ks[0], 8, 1, 3, 3),
        "w2": conv_w(ks[1], 12, 8, 3, 3),
        "w3": conv_w(ks[2], 10, 12, 1, 1),
        "w4": conv_w(ks[3], 14, 10, 3, 3),
        "w5": conv_w(ks[4], 16, 14, 3, 3),
        "w6": conv_w(ks[5], 20, 16, 3, 3),
        "w7": conv_w(ks[6], 16, 20, 1, 1),
        "w8": conv_w(ks[7], 10, 16, 1, 1),
    }
    for name, c in (("1", 8), ("2", 12), ("4", 14), ("5", 16), ("6", 20)):
        p["g" + name] = jnp.ones((c,), jnp.float32)
        p["b" + name] = jnp.zeros((c,), jnp.float32)
    return p


@jax.jit
def reference_forward(x_nchw, params):
    x = jnp.transpose(x_nchw, (0, 2, 3, 1)).astype(jnp.float32)

    def conv(x, w):
        return jax.lax.conv_general_dilated(
            x, jnp.transpose(w, (2, 3, 1, 0)), window_strides=(1, 1),
            padding="VALID", dimension_numbers=("NHWC", "HWIO", "NHWC"),
            precision=jax.lax.Precision.HIGHEST)

    def bn(y, g, b):
        mean = jnp.mean(y, axis=(0, 1, 2), keepdims=True)
        var = jnp.mean((y - mean) ** 2, axis=(0, 1, 2), keepdims=True)
        return (y - mean) * jax.lax.rsqrt(var + BN_EPS) * g + b

    def block(x, w, g, b):
        return bn(jnp.maximum(conv(x, w), 0.0), g, b)

    x = block(x, params["w1"], params["g1"], params["b1"])
    x = block(x, params["w2"], params["g2"], params["b2"])
    x = conv(x, params["w3"])
    x = jax.lax.reduce_window(x, -jnp.inf, jax.lax.max,
                              (1, 2, 2, 1), (1, 2, 2, 1), "VALID")
    x = block(x, params["w4"], params["g4"], params["b4"])
    x = block(x, params["w5"], params["g5"], params["b5"])
    x = block(x, params["w6"], params["g6"], params["b6"])
    g = jnp.mean(x, axis=(1, 2))                                    # (N, 20)
    z = jnp.dot(g, params["w7"].reshape(16, 20).T,
                precision=jax.lax.Precision.HIGHEST)
    z = jnp.dot(z, params["w8"].reshape(10, 16).T,
                precision=jax.lax.Precision.HIGHEST)
    return jax.nn.log_softmax(z, axis=-1)


if __name__ == "__main__":
    key = jax.random.PRNGKey(0)
    k_x, k_p = jax.random.split(key)
    x = jax.random.normal(k_x, (2, 1, 28, 28), jnp.float32)  # NCHW, like PyTorch
    params = init_params(k_p)

    prep = prepare_params(params)        # one-time weight prep, outside jit
    out = model_forward(x, prep)
    out = jax.block_until_ready(out)

    assert out.shape == (2, 10)
    # log_softmax rows must exponentiate-sum to 1
    assert jnp.allclose(jnp.sum(jnp.exp(out), axis=-1), 1.0, atol=1e-4)
    # compare against a pure-JAX/XLA reference of the same forward pass
    ref = jax.block_until_ready(reference_forward(x, params))
    err = float(jnp.max(jnp.abs(out - ref)))
    assert err < 1e-2, f"kernel vs reference max abs err = {err}"
    print("KERNEL_OK")
</pallas_src>

<mosaic_0001>
module attributes {stable_mosaic.version = 11 : i64} {
  func.func @_fused_kernel(%arg0: memref<2x28x28xf32, #tpu.memory_space<vmem>>, %arg1: memref<3x28x208xf32, #tpu.memory_space<vmem>>, %arg2: memref<208x8xf32, #tpu.memory_space<vmem>>, %arg3: memref<8x208xf32, #tpu.memory_space<vmem>>, %arg4: memref<1x8xf32, #tpu.memory_space<vmem>>, %arg5: memref<1x8xf32, #tpu.memory_space<vmem>>, %arg6: memref<3x208x288xf32, #tpu.memory_space<vmem>>, %arg7: memref<288x12xf32, #tpu.memory_space<vmem>>, %arg8: memref<12x288xf32, #tpu.memory_space<vmem>>, %arg9: memref<1x12xf32, #tpu.memory_space<vmem>>, %arg10: memref<1x12xf32, #tpu.memory_space<vmem>>, %arg11: memref<288x240xf32, #tpu.memory_space<vmem>>, %arg12: memref<12x24xf32, #tpu.memory_space<vmem>>, %arg13: memref<12x24xf32, #tpu.memory_space<vmem>>, %arg14: memref<240x120xf32, #tpu.memory_space<vmem>>, %arg15: memref<240x120xf32, #tpu.memory_space<vmem>>, %arg16: memref<3x120x140xf32, #tpu.memory_space<vmem>>, %arg17: memref<140x14xf32, #tpu.memory_space<vmem>>, %arg18: memref<14x140xf32, #tpu.memory_space<vmem>>, %arg19: memref<1x14xf32, #tpu.memory_space<vmem>>, %arg20: memref<1x14xf32, #tpu.memory_space<vmem>>, %arg21: memref<3x140x128xf32, #tpu.memory_space<vmem>>, %arg22: memref<128x16xf32, #tpu.memory_space<vmem>>, %arg23: memref<16x128xf32, #tpu.memory_space<vmem>>, %arg24: memref<1x16xf32, #tpu.memory_space<vmem>>, %arg25: memref<1x16xf32, #tpu.memory_space<vmem>>, %arg26: memref<3x128x120xf32, #tpu.memory_space<vmem>>, %arg27: memref<120x20xf32, #tpu.memory_space<vmem>>, %arg28: memref<20x120xf32, #tpu.memory_space<vmem>>, %arg29: memref<1x20xf32, #tpu.memory_space<vmem>>, %arg30: memref<1x20xf32, #tpu.memory_space<vmem>>, %arg31: memref<20x16xf32, #tpu.memory_space<vmem>>, %arg32: memref<16x10xf32, #tpu.memory_space<vmem>>, %arg33: memref<2x10xf32, #tpu.memory_space<vmem>>, %arg34: memref<2x26x208xf32, #tpu.memory_space<vmem>>, %arg35: memref<2x24x288xf32, #tpu.memory_space<vmem>>, %arg36: memref<2x12x120xf32, #tpu.memory_space<vmem>>, %arg37: memref<2x10x140xf32, #tpu.memory_space<vmem>>, %arg38: memref<2x8x128xf32, #tpu.memory_space<vmem>>, %arg39: memref<2x6x120xf32, #tpu.memory_space<vmem>>) attributes {dimension_semantics = [], scalar_prefetch = 0 : i64, scratch_operands = 6 : i64, tpu.core_type = #tpu.core_type<tc>} {
    %cst = arith.constant 0.000000e+00 : f32
    %0 = vector.broadcast %cst : f32 to vector<1x8xf32>
    %cst_0 = arith.constant 0.000000e+00 : f32
    %1 = vector.broadcast %cst_0 : f32 to vector<1x8xf32>
    %c0 = arith.constant 0 : index
    %c0_1 = arith.constant 0 : index
    %c0_2 = arith.constant 0 : index
    %2 = vector.load %arg0[%c0, %c0_1, %c0_2] : memref<2x28x28xf32, #tpu.memory_space<vmem>>, vector<1x26x28xf32>
    %3 = vector.shape_cast %2 : vector<1x26x28xf32> to vector<26x28xf32>
    %c0_3 = arith.constant 0 : index
    %c0_4 = arith.constant 0 : index
    %c0_5 = arith.constant 0 : index
    %4 = vector.load %arg1[%c0_3, %c0_4, %c0_5] : memref<3x28x208xf32, #tpu.memory_space<vmem>>, vector<1x28x208xf32>
    %5 = vector.shape_cast %4 : vector<1x28x208xf32> to vector<28x208xf32>
    %cst_6 = arith.constant dense<0.000000e+00> : vector<26x208xf32>
    %6 = tpu.matmul %3, %5, %cst_6 {dimension_numbers = #tpu.dot_dimension_numbers<[1], [0], [0], [1], [0, 0, 1, 1], [], []>} : vector<26x28xf32>, vector<28x208xf32>, vector<26x208xf32> -> vector<26x208xf32>
    %c0_7 = arith.constant 0 : index
    %c1 = arith.constant 1 : index
    %c0_8 = arith.constant 0 : index
    %7 = vector.load %arg0[%c0_7, %c1, %c0_8] : memref<2x28x28xf32, #tpu.memory_space<vmem>>, vector<1x26x28xf32>
    %8 = vector.shape_cast %7 : vector<1x26x28xf32> to vector<26x28xf32>
    %c1_9 = arith.constant 1 : index
    %c0_10 = arith.constant 0 : index
    %c0_11 = arith.constant 0 : index
    %9 = vector.load %arg1[%c1_9, %c0_10, %c0_11] : memref<3x28x208xf32, #tpu.memory_space<vmem>>, vector<1x28x208xf32>
    %10 = vector.shape_cast %9 : vector<1x28x208xf32> to vector<28x208xf32>
    %cst_12 = arith.constant dense<0.000000e+00> : vector<26x208xf32>
    %11 = tpu.matmul %8, %10, %cst_12 {dimension_numbers = #tpu.dot_dimension_numbers<[1], [0], [0], [1], [0, 0, 1, 1], [], []>} : vector<26x28xf32>, vector<28x208xf32>, vector<26x208xf32> -> vector<26x208xf32>
    %12 = arith.addf %6, %11 : vector<26x208xf32>
    %c0_13 = arith.constant 0 : index
    %c2 = arith.constant 2 : index
    %c0_14 = arith.constant 0 : index
    %13 = vector.load %arg0[%c0_13, %c2, %c0_14] : memref<2x28x28xf32, #tpu.memory_space<vmem>>, vector<1x26x28xf32>
    %14 = vector.shape_cast %13 : vector<1x26x28xf32> to vector<26x28xf32>
    %c2_15 = arith.constant 2 : index
    %c0_16 = arith.constant 0 : index
    %c0_17 = arith.constant 0 : index
    %15 = vector.load %arg1[%c2_15, %c0_16, %c0_17] : memref<3x28x208xf32, #tpu.memory_space<vmem>>, vector<1x28x208xf32>
    %16 = vector.shape_cast %15 : vector<1x28x208xf32> to vector<28x208xf32>
    %cst_18 = arith.constant dense<0.000000e+00> : vector<26x208xf32>
    %17 = tpu.matmul %14, %16, %cst_18 {dimension_numbers = #tpu.dot_dimension_numbers<[1], [0], [0], [1], [0, 0, 1, 1], [], []>} : vector<26x28xf32>, vector<28x208xf32>, vector<26x208xf32> -> vector<26x208xf32>
    %18 = arith.addf %12, %17 : vector<26x208xf32>
    %cst_19 = arith.constant 0.000000e+00 : f32
    %19 = vector.broadcast %cst_19 : f32 to vector<26x208xf32>
    %20 = arith.maximumf %18, %19 : vector<26x208xf32>
    %c0_20 = arith.constant 0 : index
    %c0_21 = arith.constant 0 : index
    %c0_22 = arith.constant 0 : index
    %21 = vector.load %arg34[%c0_20, %c0_21, %c0_22] : memref<2x26x208xf32, #tpu.memory_space<vmem>>, vector<1x26x208xf32>
    %22 = vector.shape_cast %21 : vector<1x26x208xf32> to vector<26x208xf32>
    %23 = vector.shape_cast %20 : vector<26x208xf32> to vector<1x26x208xf32>
    tpu.vector_store %arg34[%c0_20, %c0_21, %c0_22], %23 {strides = array<i32>} : memref<2x26x208xf32, #tpu.memory_space<vmem>>, vector<1x26x208xf32>,
    %cst_23 = arith.constant dense<0.000000e+00> : vector<208xf32>
    %24 = vector.multi_reduction <add>, %20, %cst_23 [0] : vector<26x208xf32> to vector<208xf32>
    %25 = vector.shape_cast %24 : vector<208xf32> to vector<1x208xf32>
    %c0_24 = arith.constant 0 : index
    %c0_25 = arith.constant 0 : index
    %26 = vector.load %arg2[%c0_24, %c0_25] : memref<208x8xf32, #tpu.memory_space<vmem>>, vector<208x8xf32>
    %cst_26 = arith.constant dense<0.000000e+00> : vector<1x8xf32>
    %27 = tpu.matmul %25, %26, %cst_26 {dimension_numbers = #tpu.dot_dimension_numbers<[1], [0], [0], [1], [0, 0, 1, 1], [], []>} : vector<1x208xf32>, vector<208x8xf32>, vector<1x8xf32> -> vector<1x8xf32>
    %28 = arith.addf %0, %27 : vector<1x8xf32>
    %29 = arith.mulf %20, %20 : vector<26x208xf32>
    %cst_27 = arith.constant dense<0.000000e+00> : vector<208xf32>
    %30 = vector.multi_reduction <add>, %29, %cst_27 [0] : vector<26x208xf32> to vector<208xf32>
    %31 = vector.shape_cast %30 : vector<208xf32> to vector<1x208xf32>
    %c0_28 = arith.constant 0 : index
    %c0_29 = arith.constant 0 : index
    %32 = vector.load %arg2[%c0_28, %c0_29] : memref<208x8xf32, #tpu.memory_space<vmem>>, vector<208x8xf32>
    %cst_30 = arith.constant dense<0.000000e+00> : vector<1x8xf32>
    %33 = tpu.matmul %31, %32, %cst_30 {dimension_numbers = #tpu.dot_dimension_numbers<[1], [0], [0], [1], [0, 0, 1, 1], [], []>} : vector<1x208xf32>, vector<208x8xf32>, vector<1x8xf32> -> vector<1x8xf32>
    %34 = arith.addf %1, %33 : vector<1x8xf32>
    %c1_31 = arith.constant 1 : index
    %c0_32 = arith.constant 0 : index
    %c0_33 = arith.constant 0 : index
    %35 = vector.load %arg0[%c1_31, %c0_32, %c0_33] : memref<2x28x28xf32, #tpu.memory_space<vmem>>, vector<1x26x28xf32>
    %36 = vector.shape_cast %35 : vector<1x26x28xf32> to vector<26x28xf32>
    %c0_34 = arith.constant 0 : index
    %c0_35 = arith.constant 0 : index
    %c0_36 = arith.constant 0 : index
    %37 = vector.load %arg1[%c0_34, %c0_35, %c0_36] : memref<3x28x208xf32, #tpu.memory_space<vmem>>, vector<1x28x208xf32>
    %38 = vector.shape_cast %37 : vector<1x28x208xf32> to vector<28x208xf32>
    %cst_37 = arith.constant dense<0.000000e+00> : vector<26x208xf32>
    %39 = tpu.matmul %36, %38, %cst_37 {dimension_numbers = #tpu.dot_dimension_numbers<[1], [0], [0], [1], [0, 0, 1, 1], [], []>} : vector<26x28xf32>, vector<28x208xf32>, vector<26x208xf32> -> vector<26x208xf32>
    %c1_38 = arith.constant 1 : index
    %c1_39 = arith.constant 1 : index
    %c0_40 = arith.constant 0 : index
    %40 = vector.load %arg0[%c1_38, %c1_39, %c0_40] : memref<2x28x28xf32, #tpu.memory_space<vmem>>, vector<1x26x28xf32>
    %41 = vector.shape_cast %40 : vector<1x26x28xf32> to vector<26x28xf32>
    %c1_41 = arith.constant 1 : index
    %c0_42 = arith.constant 0 : index
    %c0_43 = arith.constant 0 : index
    %42 = vector.load %arg1[%c1_41, %c0_42, %c0_43] : memref<3x28x208xf32, #tpu.memory_space<vmem>>, vector<1x28x208xf32>
    %43 = vector.shape_cast %42 : vector<1x28x208xf32> to vector<28x208xf32>
    %cst_44 = arith.constant dense<0.000000e+00> : vector<26x208xf32>
    %44 = tpu.matmul %41, %43, %cst_44 {dimension_numbers = #tpu.dot_dimension_numbers<[1], [0], [0], [1], [0, 0, 1, 1], [], []>} : vector<26x28xf32>, vector<28x208xf32>, vector<26x208xf32> -> vector<26x208xf32>
    %45 = arith.addf %39, %44 : vector<26x208xf32>
    %c1_45 = arith.constant 1 : index
    %c2_46 = arith.constant 2 : index
    %c0_47 = arith.constant 0 : index
    %46 = vector.load %arg0[%c1_45, %c2_46, %c0_47] : memref<2x28x28xf32, #tpu.memory_space<vmem>>, vector<1x26x28xf32>
    %47 = vector.shape_cast %46 : vector<1x26x28xf32> to vector<26x28xf32>
    %c2_48 = arith.constant 2 : index
    %c0_49 = arith.constant 0 : index
    %c0_50 = arith.constant 0 : index
    %48 = vector.load %arg1[%c2_48, %c0_49, %c0_50] : memref<3x28x208xf32, #tpu.memory_space<vmem>>, vector<1x28x208xf32>
    %49 = vector.shape_cast %48 : vector<1x28x208xf32> to vector<28x208xf32>
    %cst_51 = arith.constant dense<0.000000e+00> : vector<26x208xf32>
    %50 = tpu.matmul %47, %49, %cst_51 {dimension_numbers = #tpu.dot_dimension_numbers<[1], [0], [0], [1], [0, 0, 1, 1], [], []>} : vector<26x28xf32>, vector<28x208xf32>, vector<26x208xf32> -> vector<26x208xf32>
    %51 = arith.addf %45, %50 : vector<26x208xf32>
    %cst_52 = arith.constant 0.000000e+00 : f32
    %52 = vector.broadcast %cst_52 : f32 to vector<26x208xf32>
    %53 = arith.maximumf %51, %52 : vector<26x208xf32>
    %c1_53 = arith.constant 1 : index
    %c0_54 = arith.constant 0 : index
    %c0_55 = arith.constant 0 : index
    %54 = vector.load %arg34[%c1_53, %c0_54, %c0_55] : memref<2x26x208xf32, #tpu.memory_space<vmem>>, vector<1x26x208xf32>
    %55 = vector.shape_cast %54 : vector<1x26x208xf32> to vector<26x208xf32>
    %56 = vector.shape_cast %53 : vector<26x208xf32> to vector<1x26x208xf32>
    tpu.vector_store %arg34[%c1_53, %c0_54, %c0_55], %56 {strides = array<i32>} : memref<2x26x208xf32, #tpu.memory_space<vmem>>, vector<1x26x208xf32>,
    %cst_56 = arith.constant dense<0.000000e+00> : vector<208xf32>
    %57 = vector.multi_reduction <add>, %53, %cst_56 [0] : vector<26x208xf32> to vector<208xf32>
    %58 = vector.shape_cast %57 : vector<208xf32> to vector<1x208xf32>
    %c0_57 = arith.constant 0 : index
    %c0_58 = arith.constant 0 : index
    %59 = vector.load %arg2[%c0_57, %c0_58] : memref<208x8xf32, #tpu.memory_space<vmem>>, vector<208x8xf32>
    %cst_59 = arith.constant dense<0.000000e+00> : vector<1x8xf32>
    %60 = tpu.matmul %58, %59, %cst_59 {dimension_numbers = #tpu.dot_dimension_numbers<[1], [0], [0], [1], [0, 0, 1, 1], [], []>} : vector<1x208xf32>, vector<208x8xf32>, vector<1x8xf32> -> vector<1x8xf32>
    %61 = arith.addf %28, %60 : vector<1x8xf32>
    %62 = arith.mulf %53, %53 : vector<26x208xf32>
    %cst_60 = arith.constant dense<0.000000e+00> : vector<208xf32>
    %63 = vector.multi_reduction <add>, %62, %cst_60 [0] : vector<26x208xf32> to vector<208xf32>
    %64 = vector.shape_cast %63 : vector<208xf32> to vector<1x208xf32>
    %c0_61 = arith.constant 0 : index
    %c0_62 = arith.constant 0 : index
    %65 = vector.load %arg2[%c0_61, %c0_62] : memref<208x8xf32, #tpu.memory_space<vmem>>, vector<208x8xf32>
    %cst_63 = arith.constant dense<0.000000e+00> : vector<1x8xf32>
    %66 = tpu.matmul %64, %65, %cst_63 {dimension_numbers = #tpu.dot_dimension_numbers<[1], [0], [0], [1], [0, 0, 1, 1], [], []>} : vector<1x208xf32>, vector<208x8xf32>, vector<1x8xf32> -> vector<1x8xf32>
    %67 = arith.addf %34, %66 : vector<1x8xf32>
    %cst_64 = arith.constant 7.396450e-04 : f32
    %68 = vector.broadcast %cst_64 : f32 to vector<1x8xf32>
    %69 = arith.mulf %61, %68 : vector<1x8xf32>
    %cst_65 = arith.constant 7.396450e-04 : f32
    %70 = vector.broadcast %cst_65 : f32 to vector<1x8xf32>
    %71 = arith.mulf %67, %70 : vector<1x8xf32>
    %72 = arith.mulf %69, %69 : vector<1x8xf32>
    %73 = arith.subf %71, %72 : vector<1x8xf32>
    %c0_66 = arith.constant 0 : index
    %c0_67 = arith.constant 0 : index
    %74 = vector.load %arg4[%c0_66, %c0_67] : memref<1x8xf32, #tpu.memory_space<vmem>>, vector<1x8xf32>
    %cst_68 = arith.constant 9.99999974E-6 : f32
    %75 = vector.broadcast %cst_68 : f32 to vector<1x8xf32>
    %76 = arith.addf %73, %75 : vector<1x8xf32>
    %77 = math.rsqrt %76 : vector<1x8xf32>
    %78 = arith.mulf %74, %77 : vector<1x8xf32>
    %c0_69 = arith.constant 0 : index
    %c0_70 = arith.constant 0 : index
    %79 = vector.load %arg5[%c0_69, %c0_70] : memref<1x8xf32, #tpu.memory_space<vmem>>, vector<1x8xf32>
    %80 = arith.mulf %69, %78 : vector<1x8xf32>
    %81 = arith.subf %79, %80 : vector<1x8xf32>
    %c0_71 = arith.constant 0 : index
    %c0_72 = arith.constant 0 : index
    %82 = vector.load %arg3[%c0_71, %c0_72] : memref<8x208xf32, #tpu.memory_space<vmem>>, vector<8x208xf32>
    %cst_73 = arith.constant dense<0.000000e+00> : vector<1x208xf32>
    %83 = tpu.matmul %78, %82, %cst_73 {dimension_numbers = #tpu.dot_dimension_numbers<[1], [0], [0], [1], [0, 0, 1, 1], [], []>} : vector<1x8xf32>, vector<8x208xf32>, vector<1x208xf32> -> vector<1x208xf32>
    %c0_74 = arith.constant 0 : index
    %c0_75 = arith.constant 0 : index
    %84 = vector.load %arg3[%c0_74, %c0_75] : memref<8x208xf32, #tpu.memory_space<vmem>>, vector<8x208xf32>
    %cst_76 = arith.constant dense<0.000000e+00> : vector<1x208xf32>
    %85 = tpu.matmul %81, %84, %cst_76 {dimension_numbers = #tpu.dot_dimension_numbers<[1], [0], [0], [1], [0, 0, 1, 1], [], []>} : vector<1x8xf32>, vector<8x208xf32>, vector<1x208xf32> -> vector<1x208xf32>
    %c0_77 = arith.constant 0 : index
    %c0_78 = arith.constant 0 : index
    %c0_79 = arith.constant 0 : index
    %86 = vector.load %arg34[%c0_77, %c0_78, %c0_79] : memref<2x26x208xf32, #tpu.memory_space<vmem>>, vector<1x26x208xf32>
    %87 = vector.shape_cast %86 : vector<1x26x208xf32> to vector<26x208xf32>
    %88 = vector.broadcast %83 : vector<1x208xf32> to vector<26x208xf32>
    %89 = arith.mulf %87, %88 : vector<26x208xf32>
    %90 = vector.broadcast %85 : vector<1x208xf32> to vector<26x208xf32>
    %91 = arith.addf %89, %90 : vector<26x208xf32>
    %c0_80 = arith.constant 0 : index
    %c0_81 = arith.constant 0 : index
    %c0_82 = arith.constant 0 : index
    %92 = vector.load %arg34[%c0_80, %c0_81, %c0_82] : memref<2x26x208xf32, #tpu.memory_space<vmem>>, vector<1x26x208xf32>
    %93 = vector.shape_cast %92 : vector<1x26x208xf32> to vector<26x208xf32>
    %94 = vector.shape_cast %91 : vector<26x208xf32> to vector<1x26x208xf32>
    tpu.vector_store %arg34[%c0_80, %c0_81, %c0_82], %94 {strides = array<i32>} : memref<2x26x208xf32, #tpu.memory_space<vmem>>, vector<1x26x208xf32>,
    %c1_83 = arith.constant 1 : index
    %c0_84 = arith.constant 0 : index
    %c0_85 = arith.constant 0 : index
    %95 = vector.load %arg34[%c1_83, %c0_84, %c0_85] : memref<2x26x208xf32, #tpu.memory_space<vmem>>, vector<1x26x208xf32>
    %96 = vector.shape_cast %95 : vector<1x26x208xf32> to vector<26x208xf32>
    %97 = vector.broadcast %83 : vector<1x208xf32> to vector<26x208xf32>
    %98 = arith.mulf %96, %97 : vector<26x208xf32>
    %99 = vector.broadcast %85 : vector<1x208xf32> to vector<26x208xf32>
    %100 = arith.addf %98, %99 : vector<26x208xf32>
    %c1_86 = arith.constant 1 : index
    %c0_87 = arith.constant 0 : index
    %c0_88 = arith.constant 0 : index
    %101 = vector.load %arg34[%c1_86, %c0_87, %c0_88] : memref<2x26x208xf32, #tpu.memory_space<vmem>>, vector<1x26x208xf32>
    %102 = vector.shape_cast %101 : vector<1x26x208xf32> to vector<26x208xf32>
    %103 = vector.shape_cast %100 : vector<26x208xf32> to vector<1x26x208xf32>
    tpu.vector_store %arg34[%c1_86, %c0_87, %c0_88], %103 {strides = array<i32>} : memref<2x26x208xf32, #tpu.memory_space<vmem>>, vector<1x26x208xf32>,
    %cst_89 = arith.constant 0.000000e+00 : f32
    %104 = vector.broadcast %cst_89 : f32 to vector<1x12xf32>
    %cst_90 = arith.constant 0.000000e+00 : f32
    %105 = vector.broadcast %cst_90 : f32 to vector<1x12xf32>
    %c0_91 = arith.constant 0 : index
    %c0_92 = arith.constant 0 : index
    %c0_93 = arith.constant 0 : index
    %106 = vector.load %arg34[%c0_91, %c0_92, %c0_93] : memref<2x26x208xf32, #tpu.memory_space<vmem>>, vector<1x24x208xf32>
    %107 = vector.shape_cast %106 : vector<1x24x208xf32> to vector<24x208xf32>
    %c0_94 = arith.constant 0 : index
    %c0_95 = arith.constant 0 : index
    %c0_96 = arith.constant 0 : index
    %108 = vector.load %arg6[%c0_94, %c0_95, %c0_96] : memref<3x208x288xf32, #tpu.memory_space<vmem>>, vector<1x208x288xf32>
    %109 = vector.shape_cast %108 : vector<1x208x288xf32> to vector<208x288xf32>
    %cst_97 = arith.constant dense<0.000000e+00> : vector<24x288xf32>
    %110 = tpu.matmul %107, %109, %cst_97 {dimension_numbers = #tpu.dot_dimension_numbers<[1], [0], [0], [1], [0, 0, 1, 1], [], []>} : vector<24x208xf32>, vector<208x288xf32>, vector<24x288xf32> -> vector<24x288xf32>
    %c0_98 = arith.constant 0 : index
    %c1_99 = arith.constant 1 : index
    %c0_100 = arith.constant 0 : index
    %111 = vector.load %arg34[%c0_98, %c1_99, %c0_100] : memref<2x26x208xf32, #tpu.memory_space<vmem>>, vector<1x24x208xf32>
    %112 = vector.shape_cast %111 : vector<1x24x208xf32> to vector<24x208xf32>
    %c1_101 = arith.constant 1 : index
    %c0_102 = arith.constant 0 : index
    %c0_103 = arith.constant 0 : index
    %113 = vector.load %arg6[%c1_101, %c0_102, %c0_103] : memref<3x208x288xf32, #tpu.memory_space<vmem>>, vector<1x208x288xf32>
    %114 = vector.shape_cast %113 : vector<1x208x288xf32> to vector<208x288xf32>
    %cst_104 = arith.constant dense<0.000000e+00> : vector<24x288xf32>
    %115 = tpu.matmul %112, %114, %cst_104 {dimension_numbers = #tpu.dot_dimension_numbers<[1], [0], [0], [1], [0, 0, 1, 1], [], []>} : vector<24x208xf32>, vector<208x288xf32>, vector<24x288xf32> -> vector<24x288xf32>
    %116 = arith.addf %110, %115 : vector<24x288xf32>
    %c0_105 = arith.constant 0 : index
    %c2_106 = arith.constant 2 : index
    %c0_107 = arith.constant 0 : index
    %117 = vector.load %arg34[%c0_105, %c2_106, %c0_107] : memref<2x26x208xf32, #tpu.memory_space<vmem>>, vector<1x24x208xf32>
    %118 = vector.shape_cast %117 : vector<1x24x208xf32> to vector<24x208xf32>
    %c2_108 = arith.constant 2 : index
    %c0_109 = arith.constant 0 : index
    %c0_110 = arith.constant 0 : index
    %119 = vector.load %arg6[%c2_108, %c0_109, %c0_110] : memref<3x208x288xf32, #tpu.memory_space<vmem>>, vector<1x208x288xf32>
    %120 = vector.shape_cast %119 : vector<1x208x288xf32> to vector<208x288xf32>
    %cst_111 = arith.constant dense<0.000000e+00> : vector<24x288xf32>
    %121 = tpu.matmul %118, %120, %cst_111 {dimension_numbers = #tpu.dot_dimension_numbers<[1], [0], [0], [1], [0, 0, 1, 1], [], []>} : vector<24x208xf32>, vector<208x288xf32>, vector<24x288xf32> -> vector<24x288xf32>
    %122 = arith.addf %116, %121 : vector<24x288xf32>
    %cst_112 = arith.constant 0.000000e+00 : f32
    %123 = vector.broadcast %cst_112 : f32 to vector<24x288xf32>
    %124 = arith.maximumf %122, %123 : vector<24x288xf32>
    %c0_113 = arith.constant 0 : index
    %c0_114 = arith.constant 0 : index
    %c0_115 = arith.constant 0 : index
    %125 = vector.load %arg35[%c0_113, %c0_114, %c0_115] : memref<2x24x288xf32, #tpu.memory_space<vmem>>, vector<1x24x288xf32>
    %126 = vector.shape_cast %125 : vector<1x24x288xf32> to vector<24x288xf32>
    %127 = vector.shape_cast %124 : vector<24x288xf32> to vector<1x24x288xf32>
    tpu.vector_store %arg35[%c0_113, %c0_114, %c0_115], %127 {strides = array<i32>} : memref<2x24x288xf32, #tpu.memory_space<vmem>>, vector<1x24x288xf32>,
    %cst_116 = arith.constant dense<0.000000e+00> : vector<288xf32>
    %128 = vector.multi_reduction <add>, %124, %cst_116 [0] : vector<24x288xf32> to vector<288xf32>
    %129 = vector.shape_cast %128 : vector<288xf32> to vector<1x288xf32>
    %c0_117 = arith.constant 0 : index
    %c0_118 = arith.constant 0 : index
    %130 = vector.load %arg7[%c0_117, %c0_118] : memref<288x12xf32, #tpu.memory_space<vmem>>, vector<288x12xf32>
    %cst_119 = arith.constant dense<0.000000e+00> : vector<1x12xf32>
    %131 = tpu.matmul %129, %130, %cst_119 {dimension_numbers = #tpu.dot_dimension_numbers<[1], [0], [0], [1], [0, 0, 1, 1], [], []>} : vector<1x288xf32>, vector<288x12xf32>, vector<1x12xf32> -> vector<1x12xf32>
    %132 = arith.addf %104, %131 : vector<1x12xf32>
    %133 = arith.mulf %124, %124 : vector<24x288xf32>
    %cst_120 = arith.constant dense<0.000000e+00> : vector<288xf32>
    %134 = vector.multi_reduction <add>, %133, %cst_120 [0] : vector<24x288xf32> to vector<288xf32>
    %135 = vector.shape_cast %134 : vector<288xf32> to vector<1x288xf32>
    %c0_121 = arith.constant 0 : index
    %c0_122 = arith.constant 0 : index
    %136 = vector.load %arg7[%c0_121, %c0_122] : memref<288x12xf32, #tpu.memory_space<vmem>>, vector<288x12xf32>
    %cst_123 = arith.constant dense<0.000000e+00> : vector<1x12xf32>
    %137 = tpu.matmul %135, %136, %cst_123 {dimension_numbers = #tpu.dot_dimension_numbers<[1], [0], [0], [1], [0, 0, 1, 1], [], []>} : vector<1x288xf32>, vector<288x12xf32>, vector<1x12xf32> -> vector<1x12xf32>
    %138 = arith.addf %105, %137 : vector<1x12xf32>
    %c1_124 = arith.constant 1 : index
    %c0_125 = arith.constant 0 : index
    %c0_126 = arith.constant 0 : index
    %139 = vector.load %arg34[%c1_124, %c0_125, %c0_126] : memref<2x26x208xf32, #tpu.memory_space<vmem>>, vector<1x24x208xf32>
    %140 = vector.shape_cast %139 : vector<1x24x208xf32> to vector<24x208xf32>
    %c0_127 = arith.constant 0 : index
    %c0_128 = arith.constant 0 : index
    %c0_129 = arith.constant 0 : index
    %141 = vector.load %arg6[%c0_127, %c0_128, %c0_129] : memref<3x208x288xf32, #tpu.memory_space<vmem>>, vector<1x208x288xf32>
    %142 = vector.shape_cast %141 : vector<1x208x288xf32> to vector<208x288xf32>
    %cst_130 = arith.constant dense<0.000000e+00> : vector<24x288xf32>
    %143 = tpu.matmul %140, %142, %cst_130 {dimension_numbers = #tpu.dot_dimension_numbers<[1], [0], [0], [1], [0, 0, 1, 1], [], []>} : vector<24x208xf32>, vector<208x288xf32>, vector<24x288xf32> -> vector<24x288xf32>
    %c1_131 = arith.constant 1 : index
    %c1_132 = arith.constant 1 : index
    %c0_133 = arith.constant 0 : index
    %144 = vector.load %arg34[%c1_131, %c1_132, %c0_133] : memref<2x26x208xf32, #tpu.memory_space<vmem>>, vector<1x24x208xf32>
    %145 = vector.shape_cast %144 : vector<1x24x208xf32> to vector<24x208xf32>
    %c1_134 = arith.constant 1 : index
    %c0_135 = arith.constant 0 : index
    %c0_136 = arith.constant 0 : index
    %146 = vector.load %arg6[%c1_134, %c0_135, %c0_136] : memref<3x208x288xf32, #tpu.memory_space<vmem>>, vector<1x208x288xf32>
    %147 = vector.shape_cast %146 : vector<1x208x288xf32> to vector<208x288xf32>
    %cst_137 = arith.constant dense<0.000000e+00> : vector<24x288xf32>
    %148 = tpu.matmul %145, %147, %cst_137 {dimension_numbers = #tpu.dot_dimension_numbers<[1], [0], [0], [1], [0, 0, 1, 1], [], []>} : vector<24x208xf32>, vector<208x288xf32>, vector<24x288xf32> -> vector<24x288xf32>
    %149 = arith.addf %143, %148 : vector<24x288xf32>
    %c1_138 = arith.constant 1 : index
    %c2_139 = arith.constant 2 : index
    %c0_140 = arith.constant 0 : index
    %150 = vector.load %arg34[%c1_138, %c2_139, %c0_140] : memref<2x26x208xf32, #tpu.memory_space<vmem>>, vector<1x24x208xf32>
    %151 = vector.shape_cast %150 : vector<1x24x208xf32> to vector<24x208xf32>
    %c2_141 = arith.constant 2 : index
    %c0_142 = arith.constant 0 : index
    %c0_143 = arith.constant 0 : index
    %152 = vector.load %arg6[%c2_141, %c0_142, %c0_143] : memref<3x208x288xf32, #tpu.memory_space<vmem>>, vector<1x208x288xf32>
    %153 = vector.shape_cast %152 : vector<1x208x288xf32> to vector<208x288xf32>
    %cst_144 = arith.constant dense<0.000000e+00> : vector<24x288xf32>
    %154 = tpu.matmul %151, %153, %cst_144 {dimension_numbers = #tpu.dot_dimension_numbers<[1], [0], [0], [1], [0, 0, 1, 1], [], []>} : vector<24x208xf32>, vector<208x288xf32>, vector<24x288xf32> -> vector<24x288xf32>
    %155 = arith.addf %149, %154 : vector<24x288xf32>
    %cst_145 = arith.constant 0.000000e+00 : f32
    %156 = vector.broadcast %cst_145 : f32 to vector<24x288xf32>
    %157 = arith.maximumf %155, %156 : vector<24x288xf32>
    %c1_146 = arith.constant 1 : index
    %c0_147 = arith.constant 0 : index
    %c0_148 = arith.constant 0 : index
    %158 = vector.load %arg35[%c1_146, %c0_147, %c0_148] : memref<2x24x288xf32, #tpu.memory_space<vmem>>, vector<1x24x288xf32>
    %159 = vector.shape_cast %158 : vector<1x24x288xf32> to vector<24x288xf32>
    %160 = vector.shape_cast %157 : vector<24x288xf32> to vector<1x24x288xf32>
    tpu.vector_store %arg35[%c1_146, %c0_147, %c0_148], %160 {strides = array<i32>} : memref<2x24x288xf32, #tpu.memory_space<vmem>>, vector<1x24x288xf32>,
    %cst_149 = arith.constant dense<0.000000e+00> : vector<288xf32>
    %161 = vector.multi_reduction <add>, %157, %cst_149 [0] : vector<24x288xf32> to vector<288xf32>
    %162 = vector.shape_cast %161 : vector<288xf32> to vector<1x288xf32>
    %c0_150 = arith.constant 0 : index
    %c0_151 = arith.constant 0 : index
    %163 = vector.load %arg7[%c0_150, %c0_151] : memref<288x12xf32, #tpu.memory_space<vmem>>, vector<288x12xf32>
    %cst_152 = arith.constant dense<0.000000e+00> : vector<1x12xf32>
    %164 = tpu.matmul %162, %163, %cst_152 {dimension_numbers = #tpu.dot_dimension_numbers<[1], [0], [0], [1], [0, 0, 1, 1], [], []>} : vector<1x288xf32>, vector<288x12xf32>, vector<1x12xf32> -> vector<1x12xf32>
    %165 = arith.addf %132, %164 : vector<1x12xf32>
    %166 = arith.mulf %157, %157 : vector<24x288xf32>
    %cst_153 = arith.constant dense<0.000000e+00> : vector<288xf32>
    %167 = vector.multi_reduction <add>, %166, %cst_153 [0] : vector<24x288xf32> to vector<288xf32>
    %168 = vector.shape_cast %167 : vector<288xf32> to vector<1x288xf32>
    %c0_154 = arith.constant 0 : index
    %c0_155 = arith.constant 0 : index
    %169 = vector.load %arg7[%c0_154, %c0_155] : memref<288x12xf32, #tpu.memory_space<vmem>>, vector<288x12xf32>
    %cst_156 = arith.constant dense<0.000000e+00> : vector<1x12xf32>
    %170 = tpu.matmul %168, %169, %cst_156 {dimension_numbers = #tpu.dot_dimension_numbers<[1], [0], [0], [1], [0, 0, 1, 1], [], []>} : vector<1x288xf32>, vector<288x12xf32>, vector<1x12xf32> -> vector<1x12xf32>
    %171 = arith.addf %138, %170 : vector<1x12xf32>
    %cst_157 = arith.constant 8.68055562E-4 : f32
    %172 = vector.broadcast %cst_157 : f32 to vector<1x12xf32>
    %173 = arith.mulf %165, %172 : vector<1x12xf32>
    %cst_158 = arith.constant 8.68055562E-4 : f32
    %174 = vector.broadcast %cst_158 : f32 to vector<1x12xf32>
    %175 = arith.mulf %171, %174 : vector<1x12xf32>
    %176 = arith.mulf %173, %173 : vector<1x12xf32>
    %177 = arith.subf %175, %176 : vector<1x12xf32>
    %c0_159 = arith.constant 0 : index
    %c0_160 = arith.constant 0 : index
    %178 = vector.load %arg9[%c0_159, %c0_160] : memref<1x12xf32, #tpu.memory_space<vmem>>, vector<1x12xf32>
    %cst_161 = arith.constant 9.99999974E-6 : f32
    %179 = vector.broadcast %cst_161 : f32 to vector<1x12xf32>
    %180 = arith.addf %177, %179 : vector<1x12xf32>
    %181 = math.rsqrt %180 : vector<1x12xf32>
    %182 = arith.mulf %178, %181 : vector<1x12xf32>
    %c0_162 = arith.constant 0 : index
    %c0_163 = arith.constant 0 : index
    %183 = vector.load %arg10[%c0_162, %c0_163] : memref<1x12xf32, #tpu.memory_space<vmem>>, vector<1x12xf32>
    %184 = arith.mulf %173, %182 : vector<1x12xf32>
    %185 = arith.subf %183, %184 : vector<1x12xf32>
    %c0_164 = arith.constant 0 : index
    %c0_165 = arith.constant 0 : index
    %186 = vector.load %arg8[%c0_164, %c0_165] : memref<12x288xf32, #tpu.memory_space<vmem>>, vector<12x288xf32>
    %cst_166 = arith.constant dense<0.000000e+00> : vector<1x288xf32>
    %187 = tpu.matmul %182, %186, %cst_166 {dimension_numbers = #tpu.dot_dimension_numbers<[1], [0], [0], [1], [0, 0, 1, 1], [], []>} : vector<1x12xf32>, vector<12x288xf32>, vector<1x288xf32> -> vector<1x288xf32>
    %c0_167 = arith.constant 0 : index
    %c0_168 = arith.constant 0 : index
    %188 = vector.load %arg8[%c0_167, %c0_168] : memref<12x288xf32, #tpu.memory_space<vmem>>, vector<12x288xf32>
    %cst_169 = arith.constant dense<0.000000e+00> : vector<1x288xf32>
    %189 = tpu.matmul %185, %188, %cst_169 {dimension_numbers = #tpu.dot_dimension_numbers<[1], [0], [0], [1], [0, 0, 1, 1], [], []>} : vector<1x12xf32>, vector<12x288xf32>, vector<1x288xf32> -> vector<1x288xf32>
    %c0_170 = arith.constant 0 : index
    %c0_171 = arith.constant 0 : index
    %c0_172 = arith.constant 0 : index
    %190 = vector.load %arg35[%c0_170, %c0_171, %c0_172] : memref<2x24x288xf32, #tpu.memory_space<vmem>>, vector<1x24x288xf32>
    %191 = vector.shape_cast %190 : vector<1x24x288xf32> to vector<24x288xf32>
    %192 = vector.broadcast %187 : vector<1x288xf32> to vector<24x288xf32>
    %193 = arith.mulf %191, %192 : vector<24x288xf32>
    %194 = vector.broadcast %189 : vector<1x288xf32> to vector<24x288xf32>
    %195 = arith.addf %193, %194 : vector<24x288xf32>
    %c0_173 = arith.constant 0 : index
    %c0_174 = arith.constant 0 : index
    %c0_175 = arith.constant 0 : index
    %196 = vector.load %arg35[%c0_173, %c0_174, %c0_175] : memref<2x24x288xf32, #tpu.memory_space<vmem>>, vector<1x24x288xf32>
    %197 = vector.shape_cast %196 : vector<1x24x288xf32> to vector<24x288xf32>
    %198 = vector.shape_cast %195 : vector<24x288xf32> to vector<1x24x288xf32>
    tpu.vector_store %arg35[%c0_173, %c0_174, %c0_175], %198 {strides = array<i32>} : memref<2x24x288xf32, #tpu.memory_space<vmem>>, vector<1x24x288xf32>,
    %c1_176 = arith.constant 1 : index
    %c0_177 = arith.constant 0 : index
    %c0_178 = arith.constant 0 : index
    %199 = vector.load %arg35[%c1_176, %c0_177, %c0_178] : memref<2x24x288xf32, #tpu.memory_space<vmem>>, vector<1x24x288xf32>
    %200 = vector.shape_cast %199 : vector<1x24x288xf32> to vector<24x288xf32>
    %201 = vector.broadcast %187 : vector<1x288xf32> to vector<24x288xf32>
    %202 = arith.mulf %200, %201 : vector<24x288xf32>
    %203 = vector.broadcast %189 : vector<1x288xf32> to vector<24x288xf32>
    %204 = arith.addf %202, %203 : vector<24x288xf32>
    %c1_179 = arith.constant 1 : index
    %c0_180 = arith.constant 0 : index
    %c0_181 = arith.constant 0 : index
    %205 = vector.load %arg35[%c1_179, %c0_180, %c0_181] : memref<2x24x288xf32, #tpu.memory_space<vmem>>, vector<1x24x288xf32>
    %206 = vector.shape_cast %205 : vector<1x24x288xf32> to vector<24x288xf32>
    %207 = vector.shape_cast %204 : vector<24x288xf32> to vector<1x24x288xf32>
    tpu.vector_store %arg35[%c1_179, %c0_180, %c0_181], %207 {strides = array<i32>} : memref<2x24x288xf32, #tpu.memory_space<vmem>>, vector<1x24x288xf32>,
    %c0_182 = arith.constant 0 : index
    %c0_183 = arith.constant 0 : index
    %c0_184 = arith.constant 0 : index
    %208 = vector.load %arg35[%c0_182, %c0_183, %c0_184] : memref<2x24x288xf32, #tpu.memory_space<vmem>>, vector<1x24x288xf32>
    %209 = vector.shape_cast %208 : vector<1x24x288xf32> to vector<24x288xf32>
    %c0_185 = arith.constant 0 : index
    %c0_186 = arith.constant 0 : index
    %210 = vector.load %arg11[%c0_185, %c0_186] : memref<288x240xf32, #tpu.memory_space<vmem>>, vector<288x240xf32>
    %cst_187 = arith.constant dense<0.000000e+00> : vector<24x240xf32>
    %211 = tpu.matmul %209, %210, %cst_187 {dimension_numbers = #tpu.dot_dimension_numbers<[1], [0], [0], [1], [0, 0, 1, 1], [], []>} : vector<24x288xf32>, vector<288x240xf32>, vector<24x240xf32> -> vector<24x240xf32>
    %c0_188 = arith.constant 0 : index
    %c0_189 = arith.constant 0 : index
    %212 = vector.load %arg12[%c0_188, %c0_189] : memref<12x24xf32, #tpu.memory_space<vmem>>, vector<12x24xf32>
    %cst_190 = arith.constant dense<0.000000e+00> : vector<12x240xf32>
    %213 = tpu.matmul %212, %211, %cst_190 {dimension_numbers = #tpu.dot_dimension_numbers<[1], [0], [0], [1], [0, 0, 1, 1], [], []>} : vector<12x24xf32>, vector<24x240xf32>, vector<12x240xf32> -> vector<12x240xf32>
    %c0_191 = arith.constant 0 : index
    %c0_192 = arith.constant 0 : index
    %214 = vector.load %arg13[%c0_191, %c0_192] : memref<12x24xf32, #tpu.memory_space<vmem>>, vector<12x24xf32>
    %cst_193 = arith.constant dense<0.000000e+00> : vector<12x240xf32>
    %215 = tpu.matmul %214, %211, %cst_193 {dimension_numbers = #tpu.dot_dimension_numbers<[1], [0], [0], [1], [0, 0, 1, 1], [], []>} : vector<12x24xf32>, vector<24x240xf32>, vector<12x240xf32> -> vector<12x240xf32>
    %216 = arith.maximumf %213, %215 : vector<12x240xf32>
    %c0_194 = arith.constant 0 : index
    %c0_195 = arith.constant 0 : index
    %217 = vector.load %arg14[%c0_194, %c0_195] : memref<240x120xf32, #tpu.memory_space<vmem>>, vector<240x120xf32>
    %cst_196 = arith.constant dense<0.000000e+00> : vector<12x120xf32>
    %218 = tpu.matmul %216, %217, %cst_196 {dimension_numbers = #tpu.dot_dimension_numbers<[1], [0], [0], [1], [0, 0, 1, 1], [], []>} : vector<12x240xf32>, vector<240x120xf32>, vector<12x120xf32> -> vector<12x120xf32>
    %c0_197 = arith.constant 0 : index
    %c0_198 = arith.constant 0 : index
    %219 = vector.load %arg15[%c0_197, %c0_198] : memref<240x120xf32, #tpu.memory_space<vmem>>, vector<240x120xf32>
    %cst_199 = arith.constant dense<0.000000e+00> : vector<12x120xf32>
    %220 = tpu.matmul %216, %219, %cst_199 {dimension_numbers = #tpu.dot_dimension_numbers<[1], [0], [0], [1], [0, 0, 1, 1], [], []>} : vector<12x240xf32>, vector<240x120xf32>, vector<12x120xf32> -> vector<12x120xf32>
    %221 = arith.maximumf %218, %220 : vector<12x120xf32>
    %c0_200 = arith.constant 0 : index
    %c0_201 = arith.constant 0 : index
    %c0_202 = arith.constant 0 : index
    %222 = vector.load %arg36[%c0_200, %c0_201, %c0_202] : memref<2x12x120xf32, #tpu.memory_space<vmem>>, vector<1x12x120xf32>
    %223 = vector.shape_cast %222 : vector<1x12x120xf32> to vector<12x120xf32>
    %224 = vector.shape_cast %221 : vector<12x120xf32> to vector<1x12x120xf32>
    tpu.vector_store %arg36[%c0_200, %c0_201, %c0_202], %224 {strides = array<i32>} : memref<2x12x120xf32, #tpu.memory_space<vmem>>, vector<1x12x120xf32>,
    %c1_203 = arith.constant 1 : index
    %c0_204 = arith.constant 0 : index
    %c0_205 = arith.constant 0 : index
    %225 = vector.load %arg35[%c1_203, %c0_204, %c0_205] : memref<2x24x288xf32, #tpu.memory_space<vmem>>, vector<1x24x288xf32>
    %226 = vector.shape_cast %225 : vector<1x24x288xf32> to vector<24x288xf32>
    %c0_206 = arith.constant 0 : index
    %c0_207 = arith.constant 0 : index
    %227 = vector.load %arg11[%c0_206, %c0_207] : memref<288x240xf32, #tpu.memory_space<vmem>>, vector<288x240xf32>
    %cst_208 = arith.constant dense<0.000000e+00> : vector<24x240xf32>
    %228 = tpu.matmul %226, %227, %cst_208 {dimension_numbers = #tpu.dot_dimension_numbers<[1], [0], [0], [1], [0, 0, 1, 1], [], []>} : vector<24x288xf32>, vector<288x240xf32>, vector<24x240xf32> -> vector<24x240xf32>
    %c0_209 = arith.constant 0 : index
    %c0_210 = arith.constant 0 : index
    %229 = vector.load %arg12[%c0_209, %c0_210] : memref<12x24xf32, #tpu.memory_space<vmem>>, vector<12x24xf32>
    %cst_211 = arith.constant dense<0.000000e+00> : vector<12x240xf32>
    %230 = tpu.matmul %229, %228, %cst_211 {dimension_numbers = #tpu.dot_dimension_numbers<[1], [0], [0], [1], [0, 0, 1, 1], [], []>} : vector<12x24xf32>, vector<24x240xf32>, vector<12x240xf32> -> vector<12x240xf32>
    %c0_212 = arith.constant 0 : index
    %c0_213 = arith.constant 0 : index
    %231 = vector.load %arg13[%c0_212, %c0_213] : memref<12x24xf32, #tpu.memory_space<vmem>>, vector<12x24xf32>
    %cst_214 = arith.constant dense<0.000000e+00> : vector<12x240xf32>
    %232 = tpu.matmul %231, %228, %cst_214 {dimension_numbers = #tpu.dot_dimension_numbers<[1], [0], [0], [1], [0, 0, 1, 1], [], []>} : vector<12x24xf32>, vector<24x240xf32>, vector<12x240xf32> -> vector<12x240xf32>
    %233 = arith.maximumf %230, %232 : vector<12x240xf32>
    %c0_215 = arith.constant 0 : index
    %c0_216 = arith.constant 0 : index
    %234 = vector.load %arg14[%c0_215, %c0_216] : memref<240x120xf32, #tpu.memory_space<vmem>>, vector<240x120xf32>
    %cst_217 = arith.constant dense<0.000000e+00> : vector<12x120xf32>
    %235 = tpu.matmul %233, %234, %cst_217 {dimension_numbers = #tpu.dot_dimension_numbers<[1], [0], [0], [1], [0, 0, 1, 1], [], []>} : vector<12x240xf32>, vector<240x120xf32>, vector<12x120xf32> -> vector<12x120xf32>
    %c0_218 = arith.constant 0 : index
    %c0_219 = arith.constant 0 : index
    %236 = vector.load %arg15[%c0_218, %c0_219] : memref<240x120xf32, #tpu.memory_space<vmem>>, vector<240x120xf32>
    %cst_220 = arith.constant dense<0.000000e+00> : vector<12x120xf32>
    %237 = tpu.matmul %233, %236, %cst_220 {dimension_numbers = #tpu.dot_dimension_numbers<[1], [0], [0], [1], [0, 0, 1, 1], [], []>} : vector<12x240xf32>, vector<240x120xf32>, vector<12x120xf32> -> vector<12x120xf32>
    %238 = arith.maximumf %235, %237 : vector<12x120xf32>
    %c1_221 = arith.constant 1 : index
    %c0_222 = arith.constant 0 : index
    %c0_223 = arith.constant 0 : index
    %239 = vector.load %arg36[%c1_221, %c0_222, %c0_223] : memref<2x12x120xf32, #tpu.memory_space<vmem>>, vector<1x12x120xf32>
    %240 = vector.shape_cast %239 : vector<1x12x120xf32> to vector<12x120xf32>
    %241 = vector.shape_cast %238 : vector<12x120xf32> to vector<1x12x120xf32>
    tpu.vector_store %arg36[%c1_221, %c0_222, %c0_223], %241 {strides = array<i32>} : memref<2x12x120xf32, #tpu.memory_space<vmem>>, vector<1x12x120xf32>,
    %cst_224 = arith.constant 0.000000e+00 : f32
    %242 = vector.broadcast %cst_224 : f32 to vector<1x14xf32>
    %cst_225 = arith.constant 0.000000e+00 : f32
    %243 = vector.broadcast %cst_225 : f32 to vector<1x14xf32>
    %c0_226 = arith.constant 0 : index
    %c0_227 = arith.constant 0 : index
    %c0_228 = arith.constant 0 : index
    %244 = vector.load %arg36[%c0_226, %c0_227, %c0_228] : memref<2x12x120xf32, #tpu.memory_space<vmem>>, vector<1x10x120xf32>
    %245 = vector.shape_cast %244 : vector<1x10x120xf32> to vector<10x120xf32>
    %c0_229 = arith.constant 0 : index
    %c0_230 = arith.constant 0 : index
    %c0_231 = arith.constant 0 : index
    %246 = vector.load %arg16[%c0_229, %c0_230, %c0_231] : memref<3x120x140xf32, #tpu.memory_space<vmem>>, vector<1x120x140xf32>
    %247 = vector.shape_cast %246 : vector<1x120x140xf32> to vector<120x140xf32>
    %cst_232 = arith.constant dense<0.000000e+00> : vector<10x140xf32>
    %248 = tpu.matmul %245, %247, %cst_232 {dimension_numbers = #tpu.dot_dimension_numbers<[1], [0], [0], [1], [0, 0, 1, 1], [], []>} : vector<10x120xf32>, vector<120x140xf32>, vector<10x140xf32> -> vector<10x140xf32>
    %c0_233 = arith.constant 0 : index
    %c1_234 = arith.constant 1 : index
    %c0_235 = arith.constant 0 : index
    %249 = vector.load %arg36[%c0_233, %c1_234, %c0_235] : memref<2x12x120xf32, #tpu.memory_space<vmem>>, vector<1x10x120xf32>
    %250 = vector.shape_cast %249 : vector<1x10x120xf32> to vector<10x120xf32>
    %c1_236 = arith.constant 1 : index
    %c0_237 = arith.constant 0 : index
    %c0_238 = arith.constant 0 : index
    %251 = vector.load %arg16[%c1_236, %c0_237, %c0_238] : memref<3x120x140xf32, #tpu.memory_space<vmem>>, vector<1x120x140xf32>
    %252 = vector.shape_cast %251 : vector<1x120x140xf32> to vector<120x140xf32>
    %cst_239 = arith.constant dense<0.000000e+00> : vector<10x140xf32>
    %253 = tpu.matmul %250, %252, %cst_239 {dimension_numbers = #tpu.dot_dimension_numbers<[1], [0], [0], [1], [0, 0, 1, 1], [], []>} : vector<10x120xf32>, vector<120x140xf32>, vector<10x140xf32> -> vector<10x140xf32>
    %254 = arith.addf %248, %253 : vector<10x140xf32>
    %c0_240 = arith.constant 0 : index
    %c2_241 = arith.constant 2 : index
    %c0_242 = arith.constant 0 : index
    %255 = vector.load %arg36[%c0_240, %c2_241, %c0_242] : memref<2x12x120xf32, #tpu.memory_space<vmem>>, vector<1x10x120xf32>
    %256 = vector.shape_cast %255 : vector<1x10x120xf32> to vector<10x120xf32>
    %c2_243 = arith.constant 2 : index
    %c0_244 = arith.constant 0 : index
    %c0_245 = arith.constant 0 : index
    %257 = vector.load %arg16[%c2_243, %c0_244, %c0_245] : memref<3x120x140xf32, #tpu.memory_space<vmem>>, vector<1x120x140xf32>
    %258 = vector.shape_cast %257 : vector<1x120x140xf32> to vector<120x140xf32>
    %cst_246 = arith.constant dense<0.000000e+00> : vector<10x140xf32>
    %259 = tpu.matmul %256, %258, %cst_246 {dimension_numbers = #tpu.dot_dimension_numbers<[1], [0], [0], [1], [0, 0, 1, 1], [], []>} : vector<10x120xf32>, vector<120x140xf32>, vector<10x140xf32> -> vector<10x140xf32>
    %260 = arith.addf %254, %259 : vector<10x140xf32>
    %cst_247 = arith.constant 0.000000e+00 : f32
    %261 = vector.broadcast %cst_247 : f32 to vector<10x140xf32>
    %262 = arith.maximumf %260, %261 : vector<10x140xf32>
    %c0_248 = arith.constant 0 : index
    %c0_249 = arith.constant 0 : index
    %c0_250 = arith.constant 0 : index
    %263 = vector.load %arg37[%c0_248, %c0_249, %c0_250] : memref<2x10x140xf32, #tpu.memory_space<vmem>>, vector<1x10x140xf32>
    %264 = vector.shape_cast %263 : vector<1x10x140xf32> to vector<10x140xf32>
    %265 = vector.shape_cast %262 : vector<10x140xf32> to vector<1x10x140xf32>
    tpu.vector_store %arg37[%c0_248, %c0_249, %c0_250], %265 {strides = array<i32>} : memref<2x10x140xf32, #tpu.memory_space<vmem>>, vector<1x10x140xf32>,
    %cst_251 = arith.constant dense<0.000000e+00> : vector<140xf32>
    %266 = vector.multi_reduction <add>, %262, %cst_251 [0] : vector<10x140xf32> to vector<140xf32>
    %267 = vector.shape_cast %266 : vector<140xf32> to vector<1x140xf32>
    %c0_252 = arith.constant 0 : index
    %c0_253 = arith.constant 0 : index
    %268 = vector.load %arg17[%c0_252, %c0_253] : memref<140x14xf32, #tpu.memory_space<vmem>>, vector<140x14xf32>
    %cst_254 = arith.constant dense<0.000000e+00> : vector<1x14xf32>
    %269 = tpu.matmul %267, %268, %cst_254 {dimension_numbers = #tpu.dot_dimension_numbers<[1], [0], [0], [1], [0, 0, 1, 1], [], []>} : vector<1x140xf32>, vector<140x14xf32>, vector<1x14xf32> -> vector<1x14xf32>
    %270 = arith.addf %242, %269 : vector<1x14xf32>
    %271 = arith.mulf %262, %262 : vector<10x140xf32>
    %cst_255 = arith.constant dense<0.000000e+00> : vector<140xf32>
    %272 = vector.multi_reduction <add>, %271, %cst_255 [0] : vector<10x140xf32> to vector<140xf32>
    %273 = vector.shape_cast %272 : vector<140xf32> to vector<1x140xf32>
    %c0_256 = arith.constant 0 : index
    %c0_257 = arith.constant 0 : index
    %274 = vector.load %arg17[%c0_256, %c0_257] : memref<140x14xf32, #tpu.memory_space<vmem>>, vector<140x14xf32>
    %cst_258 = arith.constant dense<0.000000e+00> : vector<1x14xf32>
    %275 = tpu.matmul %273, %274, %cst_258 {dimension_numbers = #tpu.dot_dimension_numbers<[1], [0], [0], [1], [0, 0, 1, 1], [], []>} : vector<1x140xf32>, vector<140x14xf32>, vector<1x14xf32> -> vector<1x14xf32>
    %276 = arith.addf %243, %275 : vector<1x14xf32>
    %c1_259 = arith.constant 1 : index
    %c0_260 = arith.constant 0 : index
    %c0_261 = arith.constant 0 : index
    %277 = vector.load %arg36[%c1_259, %c0_260, %c0_261] : memref<2x12x120xf32, #tpu.memory_space<vmem>>, vector<1x10x120xf32>
    %278 = vector.shape_cast %277 : vector<1x10x120xf32> to vector<10x120xf32>
    %c0_262 = arith.constant 0 : index
    %c0_263 = arith.constant 0 : index
    %c0_264 = arith.constant 0 : index
    %279 = vector.load %arg16[%c0_262, %c0_263, %c0_264] : memref<3x120x140xf32, #tpu.memory_space<vmem>>, vector<1x120x140xf32>
    %280 = vector.shape_cast %279 : vector<1x120x140xf32> to vector<120x140xf32>
    %cst_265 = arith.constant dense<0.000000e+00> : vector<10x140xf32>
    %281 = tpu.matmul %278, %280, %cst_265 {dimension_numbers = #tpu.dot_dimension_numbers<[1], [0], [0], [1], [0, 0, 1, 1], [], []>} : vector<10x120xf32>, vector<120x140xf32>, vector<10x140xf32> -> vector<10x140xf32>
    %c1_266 = arith.constant 1 : index
    %c1_267 = arith.constant 1 : index
    %c0_268 = arith.constant 0 : index
    %282 = vector.load %arg36[%c1_266, %c1_267, %c0_268] : memref<2x12x120xf32, #tpu.memory_space<vmem>>, vector<1x10x120xf32>
    %283 = vector.shape_cast %282 : vector<1x10x120xf32> to vector<10x120xf32>
    %c1_269 = arith.constant 1 : index
    %c0_270 = arith.constant 0 : index
    %c0_271 = arith.constant 0 : index
    %284 = vector.load %arg16[%c1_269, %c0_270, %c0_271] : memref<3x120x140xf32, #tpu.memory_space<vmem>>, vector<1x120x140xf32>
    %285 = vector.shape_cast %284 : vector<1x120x140xf32> to vector<120x140xf32>
    %cst_272 = arith.constant dense<0.000000e+00> : vector<10x140xf32>
    %286 = tpu.matmul %283, %285, %cst_272 {dimension_numbers = #tpu.dot_dimension_numbers<[1], [0], [0], [1], [0, 0, 1, 1], [], []>} : vector<10x120xf32>, vector<120x140xf32>, vector<10x140xf32> -> vector<10x140xf32>
    %287 = arith.addf %281, %286 : vector<10x140xf32>
    %c1_273 = arith.constant 1 : index
    %c2_274 = arith.constant 2 : index
    %c0_275 = arith.constant 0 : index
    %288 = vector.load %arg36[%c1_273, %c2_274, %c0_275] : memref<2x12x120xf32, #tpu.memory_space<vmem>>, vector<1x10x120xf32>
    %289 = vector.shape_cast %288 : vector<1x10x120xf32> to vector<10x120xf32>
    %c2_276 = arith.constant 2 : index
    %c0_277 = arith.constant 0 : index
    %c0_278 = arith.constant 0 : index
    %290 = vector.load %arg16[%c2_276, %c0_277, %c0_278] : memref<3x120x140xf32, #tpu.memory_space<vmem>>, vector<1x120x140xf32>
    %291 = vector.shape_cast %290 : vector<1x120x140xf32> to vector<120x140xf32>
    %cst_279 = arith.constant dense<0.000000e+00> : vector<10x140xf32>
    %292 = tpu.matmul %289, %291, %cst_279 {dimension_numbers = #tpu.dot_dimension_numbers<[1], [0], [0], [1], [0, 0, 1, 1], [], []>} : vector<10x120xf32>, vector<120x140xf32>, vector<10x140xf32> -> vector<10x140xf32>
    %293 = arith.addf %287, %292 : vector<10x140xf32>
    %cst_280 = arith.constant 0.000000e+00 : f32
    %294 = vector.broadcast %cst_280 : f32 to vector<10x140xf32>
    %295 = arith.maximumf %293, %294 : vector<10x140xf32>
    %c1_281 = arith.constant 1 : index
    %c0_282 = arith.constant 0 : index
    %c0_283 = arith.constant 0 : index
    %296 = vector.load %arg37[%c1_281, %c0_282, %c0_283] : memref<2x10x140xf32, #tpu.memory_space<vmem>>, vector<1x10x140xf32>
    %297 = vector.shape_cast %296 : vector<1x10x140xf32> to vector<10x140xf32>
    %298 = vector.shape_cast %295 : vector<10x140xf32> to vector<1x10x140xf32>
    tpu.vector_store %arg37[%c1_281, %c0_282, %c0_283], %298 {strides = array<i32>} : memref<2x10x140xf32, #tpu.memory_space<vmem>>, vector<1x10x140xf32>,
    %cst_284 = arith.constant dense<0.000000e+00> : vector<140xf32>
    %299 = vector.multi_reduction <add>, %295, %cst_284 [0] : vector<10x140xf32> to vector<140xf32>
    %300 = vector.shape_cast %299 : vector<140xf32> to vector<1x140xf32>
    %c0_285 = arith.constant 0 : index
    %c0_286 = arith.constant 0 : index
    %301 = vector.load %arg17[%c0_285, %c0_286] : memref<140x14xf32, #tpu.memory_space<vmem>>, vector<140x14xf32>
    %cst_287 = arith.constant dense<0.000000e+00> : vector<1x14xf32>
    %302 = tpu.matmul %300, %301, %cst_287 {dimension_numbers = #tpu.dot_dimension_numbers<[1], [0], [0], [1], [0, 0, 1, 1], [], []>} : vector<1x140xf32>, vector<140x14xf32>, vector<1x14xf32> -> vector<1x14xf32>
    %303 = arith.addf %270, %302 : vector<1x14xf32>
    %304 = arith.mulf %295, %295 : vector<10x140xf32>
    %cst_288 = arith.constant dense<0.000000e+00> : vector<140xf32>
    %305 = vector.multi_reduction <add>, %304, %cst_288 [0] : vector<10x140xf32> to vector<140xf32>
    %306 = vector.shape_cast %305 : vector<140xf32> to vector<1x140xf32>
    %c0_289 = arith.constant 0 : index
    %c0_290 = arith.constant 0 : index
    %307 = vector.load %arg17[%c0_289, %c0_290] : memref<140x14xf32, #tpu.memory_space<vmem>>, vector<140x14xf32>
    %cst_291 = arith.constant dense<0.000000e+00> : vector<1x14xf32>
    %308 = tpu.matmul %306, %307, %cst_291 {dimension_numbers = #tpu.dot_dimension_numbers<[1], [0], [0], [1], [0, 0, 1, 1], [], []>} : vector<1x140xf32>, vector<140x14xf32>, vector<1x14xf32> -> vector<1x14xf32>
    %309 = arith.addf %276, %308 : vector<1x14xf32>
    %cst_292 = arith.constant 5.000000e-03 : f32
    %310 = vector.broadcast %cst_292 : f32 to vector<1x14xf32>
    %311 = arith.mulf %303, %310 : vector<1x14xf32>
    %cst_293 = arith.constant 5.000000e-03 : f32
    %312 = vector.broadcast %cst_293 : f32 to vector<1x14xf32>
    %313 = arith.mulf %309, %312 : vector<1x14xf32>
    %314 = arith.mulf %311, %311 : vector<1x14xf32>
    %315 = arith.subf %313, %314 : vector<1x14xf32>
    %c0_294 = arith.constant 0 : index
    %c0_295 = arith.constant 0 : index
    %316 = vector.load %arg19[%c0_294, %c0_295] : memref<1x14xf32, #tpu.memory_space<vmem>>, vector<1x14xf32>
    %cst_296 = arith.constant 9.99999974E-6 : f32
    %317 = vector.broadcast %cst_296 : f32 to vector<1x14xf32>
    %318 = arith.addf %315, %317 : vector<1x14xf32>
    %319 = math.rsqrt %318 : vector<1x14xf32>
    %320 = arith.mulf %316, %319 : vector<1x14xf32>
    %c0_297 = arith.constant 0 : index
    %c0_298 = arith.constant 0 : index
    %321 = vector.load %arg20[%c0_297, %c0_298] : memref<1x14xf32, #tpu.memory_space<vmem>>, vector<1x14xf32>
    %322 = arith.mulf %311, %320 : vector<1x14xf32>
    %323 = arith.subf %321, %322 : vector<1x14xf32>
    %c0_299 = arith.constant 0 : index
    %c0_300 = arith.constant 0 : index
    %324 = vector.load %arg18[%c0_299, %c0_300] : memref<14x140xf32, #tpu.memory_space<vmem>>, vector<14x140xf32>
    %cst_301 = arith.constant dense<0.000000e+00> : vector<1x140xf32>
    %325 = tpu.matmul %320, %324, %cst_301 {dimension_numbers = #tpu.dot_dimension_numbers<[1], [0], [0], [1], [0, 0, 1, 1], [], []>} : vector<1x14xf32>, vector<14x140xf32>, vector<1x140xf32> -> vector<1x140xf32>
    %c0_302 = arith.constant 0 : index
    %c0_303 = arith.constant 0 : index
    %326 = vector.load %arg18[%c0_302, %c0_303] : memref<14x140xf32, #tpu.memory_space<vmem>>, vector<14x140xf32>
    %cst_304 = arith.constant dense<0.000000e+00> : vector<1x140xf32>
    %327 = tpu.matmul %323, %326, %cst_304 {dimension_numbers = #tpu.dot_dimension_numbers<[1], [0], [0], [1], [0, 0, 1, 1], [], []>} : vector<1x14xf32>, vector<14x140xf32>, vector<1x140xf32> -> vector<1x140xf32>
    %c0_305 = arith.constant 0 : index
    %c0_306 = arith.constant 0 : index
    %c0_307 = arith.constant 0 : index
    %328 = vector.load %arg37[%c0_305, %c0_306, %c0_307] : memref<2x10x140xf32, #tpu.memory_space<vmem>>, vector<1x10x140xf32>
    %329 = vector.shape_cast %328 : vector<1x10x140xf32> to vector<10x140xf32>
    %330 = vector.broadcast %325 : vector<1x140xf32> to vector<10x140xf32>
    %331 = arith.mulf %329, %330 : vector<10x140xf32>
    %332 = vector.broadcast %327 : vector<1x140xf32> to vector<10x140xf32>
    %333 = arith.addf %331, %332 : vector<10x140xf32>
    %c0_308 = arith.constant 0 : index
    %c0_309 = arith.constant 0 : index
    %c0_310 = arith.constant 0 : index
    %334 = vector.load %arg37[%c0_308, %c0_309, %c0_310] : memref<2x10x140xf32, #tpu.memory_space<vmem>>, vector<1x10x140xf32>
    %335 = vector.shape_cast %334 : vector<1x10x140xf32> to vector<10x140xf32>
    %336 = vector.shape_cast %333 : vector<10x140xf32> to vector<1x10x140xf32>
    tpu.vector_store %arg37[%c0_308, %c0_309, %c0_310], %336 {strides = array<i32>} : memref<2x10x140xf32, #tpu.memory_space<vmem>>, vector<1x10x140xf32>,
    %c1_311 = arith.constant 1 : index
    %c0_312 = arith.constant 0 : index
    %c0_313 = arith.constant 0 : index
    %337 = vector.load %arg37[%c1_311, %c0_312, %c0_313] : memref<2x10x140xf32, #tpu.memory_space<vmem>>, vector<1x10x140xf32>
    %338 = vector.shape_cast %337 : vector<1x10x140xf32> to vector<10x140xf32>
    %339 = vector.broadcast %325 : vector<1x140xf32> to vector<10x140xf32>
    %340 = arith.mulf %338, %339 : vector<10x140xf32>
    %341 = vector.broadcast %327 : vector<1x140xf32> to vector<10x140xf32>
    %342 = arith.addf %340, %341 : vector<10x140xf32>
    %c1_314 = arith.constant 1 : index
    %c0_315 = arith.constant 0 : index
    %c0_316 = arith.constant 0 : index
    %343 = vector.load %arg37[%c1_314, %c0_315, %c0_316] : memref<2x10x140xf32, #tpu.memory_space<vmem>>, vector<1x10x140xf32>
    %344 = vector.shape_cast %343 : vector<1x10x140xf32> to vector<10x140xf32>
    %345 = vector.shape_cast %342 : vector<10x140xf32> to vector<1x10x140xf32>
    tpu.vector_store %arg37[%c1_314, %c0_315, %c0_316], %345 {strides = array<i32>} : memref<2x10x140xf32, #tpu.memory_space<vmem>>, vector<1x10x140xf32>,
    %cst_317 = arith.constant 0.000000e+00 : f32
    %346 = vector.broadcast %cst_317 : f32 to vector<1x16xf32>
    %cst_318 = arith.constant 0.000000e+00 : f32
    %347 = vector.broadcast %cst_318 : f32 to vector<1x16xf32>
    %c0_319 = arith.constant 0 : index
    %c0_320 = arith.constant 0 : index
    %c0_321 = arith.constant 0 : index
    %348 = vector.load %arg37[%c0_319, %c0_320, %c0_321] : memref<2x10x140xf32, #tpu.memory_space<vmem>>, vector<1x8x140xf32>
    %349 = vector.shape_cast %348 : vector<1x8x140xf32> to vector<8x140xf32>
    %c0_322 = arith.constant 0 : index
    %c0_323 = arith.constant 0 : index
    %c0_324 = arith.constant 0 : index
    %350 = vector.load %arg21[%c0_322, %c0_323, %c0_324] : memref<3x140x128xf32, #tpu.memory_space<vmem>>, vector<1x140x128xf32>
    %351 = vector.shape_cast %350 : vector<1x140x128xf32> to vector<140x128xf32>
    %cst_325 = arith.constant dense<0.000000e+00> : vector<8x128xf32>
    %352 = tpu.matmul %349, %351, %cst_325 {dimension_numbers = #tpu.dot_dimension_numbers<[1], [0], [0], [1], [0, 0, 1, 1], [], []>} : vector<8x140xf32>, vector<140x128xf32>, vector<8x128xf32> -> vector<8x128xf32>
    %c0_326 = arith.constant 0 : index
    %c1_327 = arith.constant 1 : index
    %c0_328 = arith.constant 0 : index
    %353 = vector.load %arg37[%c0_326, %c1_327, %c0_328] : memref<2x10x140xf32, #tpu.memory_space<vmem>>, vector<1x8x140xf32>
    %354 = vector.shape_cast %353 : vector<1x8x140xf32> to vector<8x140xf32>
    %c1_329 = arith.constant 1 : index
    %c0_330 = arith.constant 0 : index
    %c0_331 = arith.constant 0 : index
    %355 = vector.load %arg21[%c1_329, %c0_330, %c0_331] : memref<3x140x128xf32, #tpu.memory_space<vmem>>, vector<1x140x128xf32>
    %356 = vector.shape_cast %355 : vector<1x140x128xf32> to vector<140x128xf32>
    %cst_332 = arith.constant dense<0.000000e+00> : vector<8x128xf32>
    %357 = tpu.matmul %354, %356, %cst_332 {dimension_numbers = #tpu.dot_dimension_numbers<[1], [0], [0], [1], [0, 0, 1, 1], [], []>} : vector<8x140xf32>, vector<140x128xf32>, vector<8x128xf32> -> vector<8x128xf32>
    %358 = arith.addf %352, %357 : vector<8x128xf32>
    %c0_333 = arith.constant 0 : index
    %c2_334 = arith.constant 2 : index
    %c0_335 = arith.constant 0 : index
    %359 = vector.load %arg37[%c0_333, %c2_334, %c0_335] : memref<2x10x140xf32, #tpu.memory_space<vmem>>, vector<1x8x140xf32>
    %360 = vector.shape_cast %359 : vector<1x8x140xf32> to vector<8x140xf32>
    %c2_336 = arith.constant 2 : index
    %c0_337 = arith.constant 0 : index
    %c0_338 = arith.constant 0 : index
    %361 = vector.load %arg21[%c2_336, %c0_337, %c0_338] : memref<3x140x128xf32, #tpu.memory_space<vmem>>, vector<1x140x128xf32>
    %362 = vector.shape_cast %361 : vector<1x140x128xf32> to vector<140x128xf32>
    %cst_339 = arith.constant dense<0.000000e+00> : vector<8x128xf32>
    %363 = tpu.matmul %360, %362, %cst_339 {dimension_numbers = #tpu.dot_dimension_numbers<[1], [0], [0], [1], [0, 0, 1, 1], [], []>} : vector<8x140xf32>, vector<140x128xf32>, vector<8x128xf32> -> vector<8x128xf32>
    %364 = arith.addf %358, %363 : vector<8x128xf32>
    %cst_340 = arith.constant 0.000000e+00 : f32
    %365 = vector.broadcast %cst_340 : f32 to vector<8x128xf32>
    %366 = arith.maximumf %364, %365 : vector<8x128xf32>
    %c0_341 = arith.constant 0 : index
    %c0_342 = arith.constant 0 : index
    %c0_343 = arith.constant 0 : index
    %367 = vector.load %arg38[%c0_341, %c0_342, %c0_343] : memref<2x8x128xf32, #tpu.memory_space<vmem>>, vector<1x8x128xf32>
    %368 = vector.shape_cast %367 : vector<1x8x128xf32> to vector<8x128xf32>
    %369 = vector.shape_cast %366 : vector<8x128xf32> to vector<1x8x128xf32>
    tpu.vector_store %arg38[%c0_341, %c0_342, %c0_343], %369 {strides = array<i32>} : memref<2x8x128xf32, #tpu.memory_space<vmem>>, vector<1x8x128xf32>,
    %cst_344 = arith.constant dense<0.000000e+00> : vector<128xf32>
    %370 = vector.multi_reduction <add>, %366, %cst_344 [0] : vector<8x128xf32> to vector<128xf32>
    %371 = vector.shape_cast %370 : vector<128xf32> to vector<1x128xf32>
    %c0_345 = arith.constant 0 : index
    %c0_346 = arith.constant 0 : index
    %372 = vector.load %arg22[%c0_345, %c0_346] : memref<128x16xf32, #tpu.memory_space<vmem>>, vector<128x16xf32>
    %cst_347 = arith.constant dense<0.000000e+00> : vector<1x16xf32>
    %373 = tpu.matmul %371, %372, %cst_347 {dimension_numbers = #tpu.dot_dimension_numbers<[1], [0], [0], [1], [0, 0, 1, 1], [], []>} : vector<1x128xf32>, vector<128x16xf32>, vector<1x16xf32> -> vector<1x16xf32>
    %374 = arith.addf %346, %373 : vector<1x16xf32>
    %375 = arith.mulf %366, %366 : vector<8x128xf32>
    %cst_348 = arith.constant dense<0.000000e+00> : vector<128xf32>
    %376 = vector.multi_reduction <add>, %375, %cst_348 [0] : vector<8x128xf32> to vector<128xf32>
    %377 = vector.shape_cast %376 : vector<128xf32> to vector<1x128xf32>
    %c0_349 = arith.constant 0 : index
    %c0_350 = arith.constant 0 : index
    %378 = vector.load %arg22[%c0_349, %c0_350] : memref<128x16xf32, #tpu.memory_space<vmem>>, vector<128x16xf32>
    %cst_351 = arith.constant dense<0.000000e+00> : vector<1x16xf32>
    %379 = tpu.matmul %377, %378, %cst_351 {dimension_numbers = #tpu.dot_dimension_numbers<[1], [0], [0], [1], [0, 0, 1, 1], [], []>} : vector<1x128xf32>, vector<128x16xf32>, vector<1x16xf32> -> vector<1x16xf32>
    %380 = arith.addf %347, %379 : vector<1x16xf32>
    %c1_352 = arith.constant 1 : index
    %c0_353 = arith.constant 0 : index
    %c0_354 = arith.constant 0 : index
    %381 = vector.load %arg37[%c1_352, %c0_353, %c0_354] : memref<2x10x140xf32, #tpu.memory_space<vmem>>, vector<1x8x140xf32>
    %382 = vector.shape_cast %381 : vector<1x8x140xf32> to vector<8x140xf32>
    %c0_355 = arith.constant 0 : index
    %c0_356 = arith.constant 0 : index
    %c0_357 = arith.constant 0 : index
    %383 = vector.load %arg21[%c0_355, %c0_356, %c0_357] : memref<3x140x128xf32, #tpu.memory_space<vmem>>, vector<1x140x128xf32>
    %384 = vector.shape_cast %383 : vector<1x140x128xf32> to vector<140x128xf32>
    %cst_358 = arith.constant dense<0.000000e+00> : vector<8x128xf32>
    %385 = tpu.matmul %382, %384, %cst_358 {dimension_numbers = #tpu.dot_dimension_numbers<[1], [0], [0], [1], [0, 0, 1, 1], [], []>} : vector<8x140xf32>, vector<140x128xf32>, vector<8x128xf32> -> vector<8x128xf32>
    %c1_359 = arith.constant 1 : index
    %c1_360 = arith.constant 1 : index
    %c0_361 = arith.constant 0 : index
    %386 = vector.load %arg37[%c1_359, %c1_360, %c0_361] : memref<2x10x140xf32, #tpu.memory_space<vmem>>, vector<1x8x140xf32>
    %387 = vector.shape_cast %386 : vector<1x8x140xf32> to vector<8x140xf32>
    %c1_362 = arith.constant 1 : index
    %c0_363 = arith.constant 0 : index
    %c0_364 = arith.constant 0 : index
    %388 = vector.load %arg21[%c1_362, %c0_363, %c0_364] : memref<3x140x128xf32, #tpu.memory_space<vmem>>, vector<1x140x128xf32>
    %389 = vector.shape_cast %388 : vector<1x140x128xf32> to vector<140x128xf32>
    %cst_365 = arith.constant dense<0.000000e+00> : vector<8x128xf32>
    %390 = tpu.matmul %387, %389, %cst_365 {dimension_numbers = #tpu.dot_dimension_numbers<[1], [0], [0], [1], [0, 0, 1, 1], [], []>} : vector<8x140xf32>, vector<140x128xf32>, vector<8x128xf32> -> vector<8x128xf32>
    %391 = arith.addf %385, %390 : vector<8x128xf32>
    %c1_366 = arith.constant 1 : index
    %c2_367 = arith.constant 2 : index
    %c0_368 = arith.constant 0 : index
    %392 = vector.load %arg37[%c1_366, %c2_367, %c0_368] : memref<2x10x140xf32, #tpu.memory_space<vmem>>, vector<1x8x140xf32>
    %393 = vector.shape_cast %392 : vector<1x8x140xf32> to vector<8x140xf32>
    %c2_369 = arith.constant 2 : index
    %c0_370 = arith.constant 0 : index
    %c0_371 = arith.constant 0 : index
    %394 = vector.load %arg21[%c2_369, %c0_370, %c0_371] : memref<3x140x128xf32, #tpu.memory_space<vmem>>, vector<1x140x128xf32>
    %395 = vector.shape_cast %394 : vector<1x140x128xf32> to vector<140x128xf32>
    %cst_372 = arith.constant dense<0.000000e+00> : vector<8x128xf32>
    %396 = tpu.matmul %393, %395, %cst_372 {dimension_numbers = #tpu.dot_dimension_numbers<[1], [0], [0], [1], [0, 0, 1, 1], [], []>} : vector<8x140xf32>, vector<140x128xf32>, vector<8x128xf32> -> vector<8x128xf32>
    %397 = arith.addf %391, %396 : vector<8x128xf32>
    %cst_373 = arith.constant 0.000000e+00 : f32
    %398 = vector.broadcast %cst_373 : f32 to vector<8x128xf32>
    %399 = arith.maximumf %397, %398 : vector<8x128xf32>
    %c1_374 = arith.constant 1 : index
    %c0_375 = arith.constant 0 : index
    %c0_376 = arith.constant 0 : index
    %400 = vector.load %arg38[%c1_374, %c0_375, %c0_376] : memref<2x8x128xf32, #tpu.memory_space<vmem>>, vector<1x8x128xf32>
    %401 = vector.shape_cast %400 : vector<1x8x128xf32> to vector<8x128xf32>
    %402 = vector.shape_cast %399 : vector<8x128xf32> to vector<1x8x128xf32>
    tpu.vector_store %arg38[%c1_374, %c0_375, %c0_376], %402 {strides = array<i32>} : memref<2x8x128xf32, #tpu.memory_space<vmem>>, vector<1x8x128xf32>,
    %cst_377 = arith.constant dense<0.000000e+00> : vector<128xf32>
    %403 = vector.multi_reduction <add>, %399, %cst_377 [0] : vector<8x128xf32> to vector<128xf32>
    %404 = vector.shape_cast %403 : vector<128xf32> to vector<1x128xf32>
    %c0_378 = arith.constant 0 : index
    %c0_379 = arith.constant 0 : index
    %405 = vector.load %arg22[%c0_378, %c0_379] : memref<128x16xf32, #tpu.memory_space<vmem>>, vector<128x16xf32>
    %cst_380 = arith.constant dense<0.000000e+00> : vector<1x16xf32>
    %406 = tpu.matmul %404, %405, %cst_380 {dimension_numbers = #tpu.dot_dimension_numbers<[1], [0], [0], [1], [0, 0, 1, 1], [], []>} : vector<1x128xf32>, vector<128x16xf32>, vector<1x16xf32> -> vector<1x16xf32>
    %407 = arith.addf %374, %406 : vector<1x16xf32>
    %408 = arith.mulf %399, %399 : vector<8x128xf32>
    %cst_381 = arith.constant dense<0.000000e+00> : vector<128xf32>
    %409 = vector.multi_reduction <add>, %408, %cst_381 [0] : vector<8x128xf32> to vector<128xf32>
    %410 = vector.shape_cast %409 : vector<128xf32> to vector<1x128xf32>
    %c0_382 = arith.constant 0 : index
    %c0_383 = arith.constant 0 : index
    %411 = vector.load %arg22[%c0_382, %c0_383] : memref<128x16xf32, #tpu.memory_space<vmem>>, vector<128x16xf32>
    %cst_384 = arith.constant dense<0.000000e+00> : vector<1x16xf32>
    %412 = tpu.matmul %410, %411, %cst_384 {dimension_numbers = #tpu.dot_dimension_numbers<[1], [0], [0], [1], [0, 0, 1, 1], [], []>} : vector<1x128xf32>, vector<128x16xf32>, vector<1x16xf32> -> vector<1x16xf32>
    %413 = arith.addf %380, %412 : vector<1x16xf32>
    %cst_385 = arith.constant 7.812500e-03 : f32
    %414 = vector.broadcast %cst_385 : f32 to vector<1x16xf32>
    %415 = arith.mulf %407, %414 : vector<1x16xf32>
    %cst_386 = arith.constant 7.812500e-03 : f32
    %416 = vector.broadcast %cst_386 : f32 to vector<1x16xf32>
    %417 = arith.mulf %413, %416 : vector<1x16xf32>
    %418 = arith.mulf %415, %415 : vector<1x16xf32>
    %419 = arith.subf %417, %418 : vector<1x16xf32>
    %c0_387 = arith.constant 0 : index
    %c0_388 = arith.constant 0 : index
    %420 = vector.load %arg24[%c0_387, %c0_388] : memref<1x16xf32, #tpu.memory_space<vmem>>, vector<1x16xf32>
    %cst_389 = arith.constant 9.99999974E-6 : f32
    %421 = vector.broadcast %cst_389 : f32 to vector<1x16xf32>
    %422 = arith.addf %419, %421 : vector<1x16xf32>
    %423 = math.rsqrt %422 : vector<1x16xf32>
    %424 = arith.mulf %420, %423 : vector<1x16xf32>
    %c0_390 = arith.constant 0 : index
    %c0_391 = arith.constant 0 : index
    %425 = vector.load %arg25[%c0_390, %c0_391] : memref<1x16xf32, #tpu.memory_space<vmem>>, vector<1x16xf32>
    %426 = arith.mulf %415, %424 : vector<1x16xf32>
    %427 = arith.subf %425, %426 : vector<1x16xf32>
    %c0_392 = arith.constant 0 : index
    %c0_393 = arith.constant 0 : index
    %428 = vector.load %arg23[%c0_392, %c0_393] : memref<16x128xf32, #tpu.memory_space<vmem>>, vector<16x128xf32>
    %cst_394 = arith.constant dense<0.000000e+00> : vector<1x128xf32>
    %429 = tpu.matmul %424, %428, %cst_394 {dimension_numbers = #tpu.dot_dimension_numbers<[1], [0], [0], [1], [0, 0, 1, 1], [], []>} : vector<1x16xf32>, vector<16x128xf32>, vector<1x128xf32> -> vector<1x128xf32>
    %c0_395 = arith.constant 0 : index
    %c0_396 = arith.constant 0 : index
    %430 = vector.load %arg23[%c0_395, %c0_396] : memref<16x128xf32, #tpu.memory_space<vmem>>, vector<16x128xf32>
    %cst_397 = arith.constant dense<0.000000e+00> : vector<1x128xf32>
    %431 = tpu.matmul %427, %430, %cst_397 {dimension_numbers = #tpu.dot_dimension_numbers<[1], [0], [0], [1], [0, 0, 1, 1], [], []>} : vector<1x16xf32>, vector<16x128xf32>, vector<1x128xf32> -> vector<1x128xf32>
    %c0_398 = arith.constant 0 : index
    %c0_399 = arith.constant 0 : index
    %c0_400 = arith.constant 0 : index
    %432 = vector.load %arg38[%c0_398, %c0_399, %c0_400] : memref<2x8x128xf32, #tpu.memory_space<vmem>>, vector<1x8x128xf32>
    %433 = vector.shape_cast %432 : vector<1x8x128xf32> to vector<8x128xf32>
    %434 = vector.broadcast %429 : vector<1x128xf32> to vector<8x128xf32>
    %435 = arith.mulf %433, %434 : vector<8x128xf32>
    %436 = vector.broadcast %431 : vector<1x128xf32> to vector<8x128xf32>
    %437 = arith.addf %435, %436 : vector<8x128xf32>
    %c0_401 = arith.constant 0 : index
    %c0_402 = arith.constant 0 : index
    %c0_403 = arith.constant 0 : index
    %438 = vector.load %arg38[%c0_401, %c0_402, %c0_403] : memref<2x8x128xf32, #tpu.memory_space<vmem>>, vector<1x8x128xf32>
    %439 = vector.shape_cast %438 : vector<1x8x128xf32> to vector<8x128xf32>
    %440 = vector.shape_cast %437 : vector<8x128xf32> to vector<1x8x128xf32>
    tpu.vector_store %arg38[%c0_401, %c0_402, %c0_403], %440 {strides = array<i32>} : memref<2x8x128xf32, #tpu.memory_space<vmem>>, vector<1x8x128xf32>,
    %c1_404 = arith.constant 1 : index
    %c0_405 = arith.constant 0 : index
    %c0_406 = arith.constant 0 : index
    %441 = vector.load %arg38[%c1_404, %c0_405, %c0_406] : memref<2x8x128xf32, #tpu.memory_space<vmem>>, vector<1x8x128xf32>
    %442 = vector.shape_cast %441 : vector<1x8x128xf32> to vector<8x128xf32>
    %443 = vector.broadcast %429 : vector<1x128xf32> to vector<8x128xf32>
    %444 = arith.mulf %442, %443 : vector<8x128xf32>
    %445 = vector.broadcast %431 : vector<1x128xf32> to vector<8x128xf32>
    %446 = arith.addf %444, %445 : vector<8x128xf32>
    %c1_407 = arith.constant 1 : index
    %c0_408 = arith.constant 0 : index
    %c0_409 = arith.constant 0 : index
    %447 = vector.load %arg38[%c1_407, %c0_408, %c0_409] : memref<2x8x128xf32, #tpu.memory_space<vmem>>, vector<1x8x128xf32>
    %448 = vector.shape_cast %447 : vector<1x8x128xf32> to vector<8x128xf32>
    %449 = vector.shape_cast %446 : vector<8x128xf32> to vector<1x8x128xf32>
    tpu.vector_store %arg38[%c1_407, %c0_408, %c0_409], %449 {strides = array<i32>} : memref<2x8x128xf32, #tpu.memory_space<vmem>>, vector<1x8x128xf32>,
    %cst_410 = arith.constant 0.000000e+00 : f32
    %450 = vector.broadcast %cst_410 : f32 to vector<1x20xf32>
    %cst_411 = arith.constant 0.000000e+00 : f32
    %451 = vector.broadcast %cst_411 : f32 to vector<1x20xf32>
    %c0_412 = arith.constant 0 : index
    %c0_413 = arith.constant 0 : index
    %c0_414 = arith.constant 0 : index
    %452 = vector.load %arg38[%c0_412, %c0_413, %c0_414] : memref<2x8x128xf32, #tpu.memory_space<vmem>>, vector<1x6x128xf32>
    %453 = vector.shape_cast %452 : vector<1x6x128xf32> to vector<6x128xf32>
    %c0_415 = arith.constant 0 : index
    %c0_416 = arith.constant 0 : index
    %c0_417 = arith.constant 0 : index
    %454 = vector.load %arg26[%c0_415, %c0_416, %c0_417] : memref<3x128x120xf32, #tpu.memory_space<vmem>>, vector<1x128x120xf32>
    %455 = vector.shape_cast %454 : vector<1x128x120xf32> to vector<128x120xf32>
    %cst_418 = arith.constant dense<0.000000e+00> : vector<6x120xf32>
    %456 = tpu.matmul %453, %455, %cst_418 {dimension_numbers = #tpu.dot_dimension_numbers<[1], [0], [0], [1], [0, 0, 1, 1], [], []>} : vector<6x128xf32>, vector<128x120xf32>, vector<6x120xf32> -> vector<6x120xf32>
    %c0_419 = arith.constant 0 : index
    %c1_420 = arith.constant 1 : index
    %c0_421 = arith.constant 0 : index
    %457 = vector.load %arg38[%c0_419, %c1_420, %c0_421] : memref<2x8x128xf32, #tpu.memory_space<vmem>>, vector<1x6x128xf32>
    %458 = vector.shape_cast %457 : vector<1x6x128xf32> to vector<6x128xf32>
    %c1_422 = arith.constant 1 : index
    %c0_423 = arith.constant 0 : index
    %c0_424 = arith.constant 0 : index
    %459 = vector.load %arg26[%c1_422, %c0_423, %c0_424] : memref<3x128x120xf32, #tpu.memory_space<vmem>>, vector<1x128x120xf32>
    %460 = vector.shape_cast %459 : vector<1x128x120xf32> to vector<128x120xf32>
    %cst_425 = arith.constant dense<0.000000e+00> : vector<6x120xf32>
    %461 = tpu.matmul %458, %460, %cst_425 {dimension_numbers = #tpu.dot_dimension_numbers<[1], [0], [0], [1], [0, 0, 1, 1], [], []>} : vector<6x128xf32>, vector<128x120xf32>, vector<6x120xf32> -> vector<6x120xf32>
    %462 = arith.addf %456, %461 : vector<6x120xf32>
    %c0_426 = arith.constant 0 : index
    %c2_427 = arith.constant 2 : index
    %c0_428 = arith.constant 0 : index
    %463 = vector.load %arg38[%c0_426, %c2_427, %c0_428] : memref<2x8x128xf32, #tpu.memory_space<vmem>>, vector<1x6x128xf32>
    %464 = vector.shape_cast %463 : vector<1x6x128xf32> to vector<6x128xf32>
    %c2_429 = arith.constant 2 : index
    %c0_430 = arith.constant 0 : index
    %c0_431 = arith.constant 0 : index
    %465 = vector.load %arg26[%c2_429, %c0_430, %c0_431] : memref<3x128x120xf32, #tpu.memory_space<vmem>>, vector<1x128x120xf32>
    %466 = vector.shape_cast %465 : vector<1x128x120xf32> to vector<128x120xf32>
    %cst_432 = arith.constant dense<0.000000e+00> : vector<6x120xf32>
    %467 = tpu.matmul %464, %466, %cst_432 {dimension_numbers = #tpu.dot_dimension_numbers<[1], [0], [0], [1], [0, 0, 1, 1], [], []>} : vector<6x128xf32>, vector<128x120xf32>, vector<6x120xf32> -> vector<6x120xf32>
    %468 = arith.addf %462, %467 : vector<6x120xf32>
    %cst_433 = arith.constant 0.000000e+00 : f32
    %469 = vector.broadcast %cst_433 : f32 to vector<6x120xf32>
    %470 = arith.maximumf %468, %469 : vector<6x120xf32>
    %c0_434 = arith.constant 0 : index
    %c0_435 = arith.constant 0 : index
    %c0_436 = arith.constant 0 : index
    %471 = vector.load %arg39[%c0_434, %c0_435, %c0_436] : memref<2x6x120xf32, #tpu.memory_space<vmem>>, vector<1x6x120xf32>
    %472 = vector.shape_cast %471 : vector<1x6x120xf32> to vector<6x120xf32>
    %473 = vector.shape_cast %470 : vector<6x120xf32> to vector<1x6x120xf32>
    tpu.vector_store %arg39[%c0_434, %c0_435, %c0_436], %473 {strides = array<i32>} : memref<2x6x120xf32, #tpu.memory_space<vmem>>, vector<1x6x120xf32>,
    %cst_437 = arith.constant dense<0.000000e+00> : vector<120xf32>
    %474 = vector.multi_reduction <add>, %470, %cst_437 [0] : vector<6x120xf32> to vector<120xf32>
    %475 = vector.shape_cast %474 : vector<120xf32> to vector<1x120xf32>
    %c0_438 = arith.constant 0 : index
    %c0_439 = arith.constant 0 : index
    %476 = vector.load %arg27[%c0_438, %c0_439] : memref<120x20xf32, #tpu.memory_space<vmem>>, vector<120x20xf32>
    %cst_440 = arith.constant dense<0.000000e+00> : vector<1x20xf32>
    %477 = tpu.matmul %475, %476, %cst_440 {dimension_numbers = #tpu.dot_dimension_numbers<[1], [0], [0], [1], [0, 0, 1, 1], [], []>} : vector<1x120xf32>, vector<120x20xf32>, vector<1x20xf32> -> vector<1x20xf32>
    %478 = arith.addf %450, %477 : vector<1x20xf32>
    %479 = arith.mulf %470, %470 : vector<6x120xf32>
    %cst_441 = arith.constant dense<0.000000e+00> : vector<120xf32>
    %480 = vector.multi_reduction <add>, %479, %cst_441 [0] : vector<6x120xf32> to vector<120xf32>
    %481 = vector.shape_cast %480 : vector<120xf32> to vector<1x120xf32>
    %c0_442 = arith.constant 0 : index
    %c0_443 = arith.constant 0 : index
    %482 = vector.load %arg27[%c0_442, %c0_443] : memref<120x20xf32, #tpu.memory_space<vmem>>, vector<120x20xf32>
    %cst_444 = arith.constant dense<0.000000e+00> : vector<1x20xf32>
    %483 = tpu.matmul %481, %482, %cst_444 {dimension_numbers = #tpu.dot_dimension_numbers<[1], [0], [0], [1], [0, 0, 1, 1], [], []>} : vector<1x120xf32>, vector<120x20xf32>, vector<1x20xf32> -> vector<1x20xf32>
    %484 = arith.addf %451, %483 : vector<1x20xf32>
    %c1_445 = arith.constant 1 : index
    %c0_446 = arith.constant 0 : index
    %c0_447 = arith.constant 0 : index
    %485 = vector.load %arg38[%c1_445, %c0_446, %c0_447] : memref<2x8x128xf32, #tpu.memory_space<vmem>>, vector<1x6x128xf32>
    %486 = vector.shape_cast %485 : vector<1x6x128xf32> to vector<6x128xf32>
    %c0_448 = arith.constant 0 : index
    %c0_449 = arith.constant 0 : index
    %c0_450 = arith.constant 0 : index
    %487 = vector.load %arg26[%c0_448, %c0_449, %c0_450] : memref<3x128x120xf32, #tpu.memory_space<vmem>>, vector<1x128x120xf32>
    %488 = vector.shape_cast %487 : vector<1x128x120xf32> to vector<128x120xf32>
    %cst_451 = arith.constant dense<0.000000e+00> : vector<6x120xf32>
    %489 = tpu.matmul %486, %488, %cst_451 {dimension_numbers = #tpu.dot_dimension_numbers<[1], [0], [0], [1], [0, 0, 1, 1], [], []>} : vector<6x128xf32>, vector<128x120xf32>, vector<6x120xf32> -> vector<6x120xf32>
    %c1_452 = arith.constant 1 : index
    %c1_453 = arith.constant 1 : index
    %c0_454 = arith.constant 0 : index
    %490 = vector.load %arg38[%c1_452, %c1_453, %c0_454] : memref<2x8x128xf32, #tpu.memory_space<vmem>>, vector<1x6x128xf32>
    %491 = vector.shape_cast %490 : vector<1x6x128xf32> to vector<6x128xf32>
    %c1_455 = arith.constant 1 : index
    %c0_456 = arith.constant 0 : index
    %c0_457 = arith.constant 0 : index
    %492 = vector.load %arg26[%c1_455, %c0_456, %c0_457] : memref<3x128x120xf32, #tpu.memory_space<vmem>>, vector<1x128x120xf32>
    %493 = vector.shape_cast %492 : vector<1x128x120xf32> to vector<128x120xf32>
    %cst_458 = arith.constant dense<0.000000e+00> : vector<6x120xf32>
    %494 = tpu.matmul %491, %493, %cst_458 {dimension_numbers = #tpu.dot_dimension_numbers<[1], [0], [0], [1], [0, 0, 1, 1], [], []>} : vector<6x128xf32>, vector<128x120xf32>, vector<6x120xf32> -> vector<6x120xf32>
    %495 = arith.addf %489, %494 : vector<6x120xf32>
    %c1_459 = arith.constant 1 : index
    %c2_460 = arith.constant 2 : index
    %c0_461 = arith.constant 0 : index
    %496 = vector.load %arg38[%c1_459, %c2_460, %c0_461] : memref<2x8x128xf32, #tpu.memory_space<vmem>>, vector<1x6x128xf32>
    %497 = vector.shape_cast %496 : vector<1x6x128xf32> to vector<6x128xf32>
    %c2_462 = arith.constant 2 : index
    %c0_463 = arith.constant 0 : index
    %c0_464 = arith.constant 0 : index
    %498 = vector.load %arg26[%c2_462, %c0_463, %c0_464] : memref<3x128x120xf32, #tpu.memory_space<vmem>>, vector<1x128x120xf32>
    %499 = vector.shape_cast %498 : vector<1x128x120xf32> to vector<128x120xf32>
    %cst_465 = arith.constant dense<0.000000e+00> : vector<6x120xf32>
    %500 = tpu.matmul %497, %499, %cst_465 {dimension_numbers = #tpu.dot_dimension_numbers<[1], [0], [0], [1], [0, 0, 1, 1], [], []>} : vector<6x128xf32>, vector<128x120xf32>, vector<6x120xf32> -> vector<6x120xf32>
    %501 = arith.addf %495, %500 : vector<6x120xf32>
    %cst_466 = arith.constant 0.000000e+00 : f32
    %502 = vector.broadcast %cst_466 : f32 to vector<6x120xf32>
    %503 = arith.maximumf %501, %502 : vector<6x120xf32>
    %c1_467 = arith.constant 1 : index
    %c0_468 = arith.constant 0 : index
    %c0_469 = arith.constant 0 : index
    %504 = vector.load %arg39[%c1_467, %c0_468, %c0_469] : memref<2x6x120xf32, #tpu.memory_space<vmem>>, vector<1x6x120xf32>
    %505 = vector.shape_cast %504 : vector<1x6x120xf32> to vector<6x120xf32>
    %506 = vector.shape_cast %503 : vector<6x120xf32> to vector<1x6x120xf32>
    tpu.vector_store %arg39[%c1_467, %c0_468, %c0_469], %506 {strides = array<i32>} : memref<2x6x120xf32, #tpu.memory_space<vmem>>, vector<1x6x120xf32>,
    %cst_470 = arith.constant dense<0.000000e+00> : vector<120xf32>
    %507 = vector.multi_reduction <add>, %503, %cst_470 [0] : vector<6x120xf32> to vector<120xf32>
    %508 = vector.shape_cast %507 : vector<120xf32> to vector<1x120xf32>
    %c0_471 = arith.constant 0 : index
    %c0_472 = arith.constant 0 : index
    %509 = vector.load %arg27[%c0_471, %c0_472] : memref<120x20xf32, #tpu.memory_space<vmem>>, vector<120x20xf32>
    %cst_473 = arith.constant dense<0.000000e+00> : vector<1x20xf32>
    %510 = tpu.matmul %508, %509, %cst_473 {dimension_numbers = #tpu.dot_dimension_numbers<[1], [0], [0], [1], [0, 0, 1, 1], [], []>} : vector<1x120xf32>, vector<120x20xf32>, vector<1x20xf32> -> vector<1x20xf32>
    %511 = arith.addf %478, %510 : vector<1x20xf32>
    %512 = arith.mulf %503, %503 : vector<6x120xf32>
    %cst_474 = arith.constant dense<0.000000e+00> : vector<120xf32>
    %513 = vector.multi_reduction <add>, %512, %cst_474 [0] : vector<6x120xf32> to vector<120xf32>
    %514 = vector.shape_cast %513 : vector<120xf32> to vector<1x120xf32>
    %c0_475 = arith.constant 0 : index
    %c0_476 = arith.constant 0 : index
    %515 = vector.load %arg27[%c0_475, %c0_476] : memref<120x20xf32, #tpu.memory_space<vmem>>, vector<120x20xf32>
    %cst_477 = arith.constant dense<0.000000e+00> : vector<1x20xf32>
    %516 = tpu.matmul %514, %515, %cst_477 {dimension_numbers = #tpu.dot_dimension_numbers<[1], [0], [0], [1], [0, 0, 1, 1], [], []>} : vector<1x120xf32>, vector<120x20xf32>, vector<1x20xf32> -> vector<1x20xf32>
    %517 = arith.addf %484, %516 : vector<1x20xf32>
    %cst_478 = arith.constant 0.013888889 : f32
    %518 = vector.broadcast %cst_478 : f32 to vector<1x20xf32>
    %519 = arith.mulf %511, %518 : vector<1x20xf32>
    %cst_479 = arith.constant 0.013888889 : f32
    %520 = vector.broadcast %cst_479 : f32 to vector<1x20xf32>
    %521 = arith.mulf %517, %520 : vector<1x20xf32>
    %522 = arith.mulf %519, %519 : vector<1x20xf32>
    %523 = arith.subf %521, %522 : vector<1x20xf32>
    %c0_480 = arith.constant 0 : index
    %c0_481 = arith.constant 0 : index
    %524 = vector.load %arg29[%c0_480, %c0_481] : memref<1x20xf32, #tpu.memory_space<vmem>>, vector<1x20xf32>
    %cst_482 = arith.constant 9.99999974E-6 : f32
    %525 = vector.broadcast %cst_482 : f32 to vector<1x20xf32>
    %526 = arith.addf %523, %525 : vector<1x20xf32>
    %527 = math.rsqrt %526 : vector<1x20xf32>
    %528 = arith.mulf %524, %527 : vector<1x20xf32>
    %c0_483 = arith.constant 0 : index
    %c0_484 = arith.constant 0 : index
    %529 = vector.load %arg30[%c0_483, %c0_484] : memref<1x20xf32, #tpu.memory_space<vmem>>, vector<1x20xf32>
    %530 = arith.mulf %519, %528 : vector<1x20xf32>
    %531 = arith.subf %529, %530 : vector<1x20xf32>
    %c0_485 = arith.constant 0 : index
    %c0_486 = arith.constant 0 : index
    %532 = vector.load %arg28[%c0_485, %c0_486] : memref<20x120xf32, #tpu.memory_space<vmem>>, vector<20x120xf32>
    %cst_487 = arith.constant dense<0.000000e+00> : vector<1x120xf32>
    %533 = tpu.matmul %528, %532, %cst_487 {dimension_numbers = #tpu.dot_dimension_numbers<[1], [0], [0], [1], [0, 0, 1, 1], [], []>} : vector<1x20xf32>, vector<20x120xf32>, vector<1x120xf32> -> vector<1x120xf32>
    %c0_488 = arith.constant 0 : index
    %c0_489 = arith.constant 0 : index
    %534 = vector.load %arg28[%c0_488, %c0_489] : memref<20x120xf32, #tpu.memory_space<vmem>>, vector<20x120xf32>
    %cst_490 = arith.constant dense<0.000000e+00> : vector<1x120xf32>
    %535 = tpu.matmul %531, %534, %cst_490 {dimension_numbers = #tpu.dot_dimension_numbers<[1], [0], [0], [1], [0, 0, 1, 1], [], []>} : vector<1x20xf32>, vector<20x120xf32>, vector<1x120xf32> -> vector<1x120xf32>
    %c0_491 = arith.constant 0 : index
    %c0_492 = arith.constant 0 : index
    %c0_493 = arith.constant 0 : index
    %536 = vector.load %arg39[%c0_491, %c0_492, %c0_493] : memref<2x6x120xf32, #tpu.memory_space<vmem>>, vector<1x6x120xf32>
    %537 = vector.shape_cast %536 : vector<1x6x120xf32> to vector<6x120xf32>
    %538 = vector.broadcast %533 : vector<1x120xf32> to vector<6x120xf32>
    %539 = arith.mulf %537, %538 : vector<6x120xf32>
    %540 = vector.broadcast %535 : vector<1x120xf32> to vector<6x120xf32>
    %541 = arith.addf %539, %540 : vector<6x120xf32>
    %c0_494 = arith.constant 0 : index
    %c0_495 = arith.constant 0 : index
    %c0_496 = arith.constant 0 : index
    %542 = vector.load %arg39[%c0_494, %c0_495, %c0_496] : memref<2x6x120xf32, #tpu.memory_space<vmem>>, vector<1x6x120xf32>
    %543 = vector.shape_cast %542 : vector<1x6x120xf32> to vector<6x120xf32>
    %544 = vector.shape_cast %541 : vector<6x120xf32> to vector<1x6x120xf32>
    tpu.vector_store %arg39[%c0_494, %c0_495, %c0_496], %544 {strides = array<i32>} : memref<2x6x120xf32, #tpu.memory_space<vmem>>, vector<1x6x120xf32>,
    %c1_497 = arith.constant 1 : index
    %c0_498 = arith.constant 0 : index
    %c0_499 = arith.constant 0 : index
    %545 = vector.load %arg39[%c1_497, %c0_498, %c0_499] : memref<2x6x120xf32, #tpu.memory_space<vmem>>, vector<1x6x120xf32>
    %546 = vector.shape_cast %545 : vector<1x6x120xf32> to vector<6x120xf32>
    %547 = vector.broadcast %533 : vector<1x120xf32> to vector<6x120xf32>
    %548 = arith.mulf %546, %547 : vector<6x120xf32>
    %549 = vector.broadcast %535 : vector<1x120xf32> to vector<6x120xf32>
    %550 = arith.addf %548, %549 : vector<6x120xf32>
    %c1_500 = arith.constant 1 : index
    %c0_501 = arith.constant 0 : index
    %c0_502 = arith.constant 0 : index
    %551 = vector.load %arg39[%c1_500, %c0_501, %c0_502] : memref<2x6x120xf32, #tpu.memory_space<vmem>>, vector<1x6x120xf32>
    %552 = vector.shape_cast %551 : vector<1x6x120xf32> to vector<6x120xf32>
    %553 = vector.shape_cast %550 : vector<6x120xf32> to vector<1x6x120xf32>
    tpu.vector_store %arg39[%c1_500, %c0_501, %c0_502], %553 {strides = array<i32>} : memref<2x6x120xf32, #tpu.memory_space<vmem>>, vector<1x6x120xf32>,
    %c0_503 = arith.constant 0 : index
    %c0_504 = arith.constant 0 : index
    %c0_505 = arith.constant 0 : index
    %554 = vector.load %arg39[%c0_503, %c0_504, %c0_505] : memref<2x6x120xf32, #tpu.memory_space<vmem>>, vector<1x6x120xf32>
    %555 = vector.shape_cast %554 : vector<1x6x120xf32> to vector<6x120xf32>
    %cst_506 = arith.constant dense<0.000000e+00> : vector<120xf32>
    %556 = vector.multi_reduction <add>, %555, %cst_506 [0] : vector<6x120xf32> to vector<120xf32>
    %557 = vector.shape_cast %556 : vector<120xf32> to vector<1x120xf32>
    %c0_507 = arith.constant 0 : index
    %c0_508 = arith.constant 0 : index
    %558 = vector.load %arg27[%c0_507, %c0_508] : memref<120x20xf32, #tpu.memory_space<vmem>>, vector<120x20xf32>
    %cst_509 = arith.constant dense<0.000000e+00> : vector<1x20xf32>
    %559 = tpu.matmul %557, %558, %cst_509 {dimension_numbers = #tpu.dot_dimension_numbers<[1], [0], [0], [1], [0, 0, 1, 1], [], []>} : vector<1x120xf32>, vector<120x20xf32>, vector<1x20xf32> -> vector<1x20xf32>
    %cst_510 = arith.constant 0.027777778 : f32
    %560 = vector.broadcast %cst_510 : f32 to vector<1x20xf32>
    %561 = arith.mulf %559, %560 : vector<1x20xf32>
    %c0_511 = arith.constant 0 : index
    %c0_512 = arith.constant 0 : index
    %562 = vector.load %arg31[%c0_511, %c0_512] : memref<20x16xf32, #tpu.memory_space<vmem>>, vector<20x16xf32>
    %cst_513 = arith.constant dense<0.000000e+00> : vector<1x16xf32>
    %563 = tpu.matmul %561, %562, %cst_513 {dimension_numbers = #tpu.dot_dimension_numbers<[1], [0], [0], [1], [0, 0, 1, 1], [], []>} : vector<1x20xf32>, vector<20x16xf32>, vector<1x16xf32> -> vector<1x16xf32>
    %c0_514 = arith.constant 0 : index
    %c0_515 = arith.constant 0 : index
    %564 = vector.load %arg32[%c0_514, %c0_515] : memref<16x10xf32, #tpu.memory_space<vmem>>, vector<16x10xf32>
    %cst_516 = arith.constant dense<0.000000e+00> : vector<1x10xf32>
    %565 = tpu.matmul %563, %564, %cst_516 {dimension_numbers = #tpu.dot_dimension_numbers<[1], [0], [0], [1], [0, 0, 1, 1], [], []>} : vector<1x16xf32>, vector<16x10xf32>, vector<1x10xf32> -> vector<1x10xf32>
    %cst_517 = arith.constant dense<0xFF800000> : vector<1xf32>
    %566 = vector.multi_reduction <maximumf>, %565, %cst_517 [1] : vector<1x10xf32> to vector<1xf32>
    %567 = vector.shape_cast %566 : vector<1xf32> to vector<1x1xf32>
    %568 = vector.broadcast %567 : vector<1x1xf32> to vector<1x10xf32>
    %569 = arith.subf %565, %568 : vector<1x10xf32>
    %570 = math.exp %569 : vector<1x10xf32>
    %cst_518 = arith.constant dense<0.000000e+00> : vector<1xf32>
    %571 = vector.multi_reduction <add>, %570, %cst_518 [1] : vector<1x10xf32> to vector<1xf32>
    %572 = vector.shape_cast %571 : vector<1xf32> to vector<1x1xf32>
    %573 = math.log %572 : vector<1x1xf32>
    %574 = vector.broadcast %573 : vector<1x1xf32> to vector<1x10xf32>
    %575 = arith.subf %569, %574 : vector<1x10xf32>
    %c0_519 = arith.constant 0 : index
    %c0_520 = arith.constant 0 : index
    %576 = vector.load %arg33[%c0_519, %c0_520] : memref<2x10xf32, #tpu.memory_space<vmem>>, vector<1x10xf32>
    tpu.vector_store %arg33[%c0_519, %c0_520], %575 {strides = array<i32>} : memref<2x10xf32, #tpu.memory_space<vmem>>, vector<1x10xf32>,
    %c1_521 = arith.constant 1 : index
    %c0_522 = arith.constant 0 : index
    %c0_523 = arith.constant 0 : index
    %577 = vector.load %arg39[%c1_521, %c0_522, %c0_523] : memref<2x6x120xf32, #tpu.memory_space<vmem>>, vector<1x6x120xf32>
    %578 = vector.shape_cast %577 : vector<1x6x120xf32> to vector<6x120xf32>
    %cst_524 = arith.constant dense<0.000000e+00> : vector<120xf32>
    %579 = vector.multi_reduction <add>, %578, %cst_524 [0] : vector<6x120xf32> to vector<120xf32>
    %580 = vector.shape_cast %579 : vector<120xf32> to vector<1x120xf32>
    %c0_525 = arith.constant 0 : index
    %c0_526 = arith.constant 0 : index
    %581 = vector.load %arg27[%c0_525, %c0_526] : memref<120x20xf32, #tpu.memory_space<vmem>>, vector<120x20xf32>
    %cst_527 = arith.constant dense<0.000000e+00> : vector<1x20xf32>
    %582 = tpu.matmul %580, %581, %cst_527 {dimension_numbers = #tpu.dot_dimension_numbers<[1], [0], [0], [1], [0, 0, 1, 1], [], []>} : vector<1x120xf32>, vector<120x20xf32>, vector<1x20xf32> -> vector<1x20xf32>
    %cst_528 = arith.constant 0.027777778 : f32
    %583 = vector.broadcast %cst_528 : f32 to vector<1x20xf32>
    %584 = arith.mulf %582, %583 : vector<1x20xf32>
    %c0_529 = arith.constant 0 : index
    %c0_530 = arith.constant 0 : index
    %585 = vector.load %arg31[%c0_529, %c0_530] : memref<20x16xf32, #tpu.memory_space<vmem>>, vector<20x16xf32>
    %cst_531 = arith.constant dense<0.000000e+00> : vector<1x16xf32>
    %586 = tpu.matmul %584, %585, %cst_531 {dimension_numbers = #tpu.dot_dimension_numbers<[1], [0], [0], [1], [0, 0, 1, 1], [], []>} : vector<1x20xf32>, vector<20x16xf32>, vector<1x16xf32> -> vector<1x16xf32>
    %c0_532 = arith.constant 0 : index
    %c0_533 = arith.constant 0 : index
    %587 = vector.load %arg32[%c0_532, %c0_533] : memref<16x10xf32, #tpu.memory_space<vmem>>, vector<16x10xf32>
    %cst_534 = arith.constant dense<0.000000e+00> : vector<1x10xf32>
    %588 = tpu.matmul %586, %587, %cst_534 {dimension_numbers = #tpu.dot_dimension_numbers<[1], [0], [0], [1], [0, 0, 1, 1], [], []>} : vector<1x16xf32>, vector<16x10xf32>, vector<1x10xf32> -> vector<1x10xf32>
    %cst_535 = arith.constant dense<0xFF800000> : vector<1xf32>
    %589 = vector.multi_reduction <maximumf>, %588, %cst_535 [1] : vector<1x10xf32> to vector<1xf32>
    %590 = vector.shape_cast %589 : vector<1xf32> to vector<1x1xf32>
    %591 = vector.broadcast %590 : vector<1x1xf32> to vector<1x10xf32>
    %592 = arith.subf %588, %591 : vector<1x10xf32>
    %593 = math.exp %592 : vector<1x10xf32>
    %cst_536 = arith.constant dense<0.000000e+00> : vector<1xf32>
    %594 = vector.multi_reduction <add>, %593, %cst_536 [1] : vector<1x10xf32> to vector<1xf32>
    %595 = vector.shape_cast %594 : vector<1xf32> to vector<1x1xf32>
    %596 = math.log %595 : vector<1x1xf32>
    %597 = vector.broadcast %596 : vector<1x1xf32> to vector<1x10xf32>
    %598 = arith.subf %592, %597 : vector<1x10xf32>
    %c1_537 = arith.constant 1 : index
    %c0_538 = arith.constant 0 : index
    %599 = vector.load %arg33[%c1_537, %c0_538] : memref<2x10xf32, #tpu.memory_space<vmem>>, vector<1x10xf32>
    tpu.vector_store %arg33[%c1_537, %c0_538], %598 {strides = array<i32>} : memref<2x10xf32, #tpu.memory_space<vmem>>, vector<1x10xf32>,
    return
  }
}

</mosaic_0001>

<llo_original>
// kernel: model_forward.1
$region0: #{model_forward.1}
  #allocation0 [shape = 'u32[]', space=smem, size = 0x4, offset = 0x4, fixed_abs, tag = 'smem constant byte address 0x4 - core index']
  #allocation1 [shape = 'u32[72,128]{1,0:T(1,128)}', space=vmem, size = 0x9000, scoped, tag = 'internal scratch']
  #allocation2 [shape = 'f32[2,26,208]{2,1,0:T(8,128)}', space=vmem, size = 0x10000, scoped, tag = 'scratch operand']
  #allocation3 [shape = 'f32[2,24,288]{2,1,0:T(8,128)}', space=vmem, size = 0x12000, scoped, tag = 'scratch operand']
  #allocation4 [shape = 'f32[2,12,120]{2,1,0:T(8,128)}', space=vmem, size = 0x4000, scoped, tag = 'scratch operand']
  #allocation5 [shape = 'f32[2,10,140]{2,1,0:T(8,128)}', space=vmem, size = 0x8000, scoped, tag = 'scratch operand']
  #allocation6 [shape = 'f32[2,8,128]{2,1,0:T(8,128)}', space=vmem, size = 0x2000, scoped, tag = 'scratch operand']
  #allocation7 [shape = 'f32[2,6,120]{2,1,0:T(8,128)}', space=vmem, size = 0x2000, scoped, tag = 'scratch operand']
  %s0 = inlined_call_operand.smem [shape: u32[34], index: -1, kind: input, shape index: {}]
  %s1 = sld [smem:[%s0]]
  %s2 = scalar_lea.smem %s0, 1
  %s3 = sld [smem:[%s2]]
  %s4 = scalar_lea.smem %s0, 2
  %s5 = sld [smem:[%s4]]
  %s6 = scalar_lea.smem %s0, 3
  %s7 = sld [smem:[%s6]]
  %s8 = scalar_lea.smem %s0, 4
  %s9 = sld [smem:[%s8]]
  %s10 = scalar_lea.smem %s0, 5
  %s11 = sld [smem:[%s10]]
  %s12 = scalar_lea.smem %s0, 6
  %s13 = sld [smem:[%s12]]
  %s14 = scalar_lea.smem %s0, 7
  %s15 = sld [smem:[%s14]]
  %s16 = scalar_lea.smem %s0, 8
  %s17 = sld [smem:[%s16]]
  %s18 = scalar_lea.smem %s0, 9
  %s19 = sld [smem:[%s18]]
  %s20 = scalar_lea.smem %s0, 10
  %s21 = sld [smem:[%s20]]
  %s22 = scalar_lea.smem %s0, 11
  %s23 = sld [smem:[%s22]]
  %s24 = scalar_lea.smem %s0, 12
  %s25 = sld [smem:[%s24]]
  %s26 = scalar_lea.smem %s0, 13
  %s27 = sld [smem:[%s26]]
  %s28 = scalar_lea.smem %s0, 14
  %s29 = sld [smem:[%s28]]
  %s30 = scalar_lea.smem %s0, 15
  %s31 = sld [smem:[%s30]]
  %s32 = scalar_lea.smem %s0, 16
  %s33 = sld [smem:[%s32]]
  %s34 = scalar_lea.smem %s0, 17
  %s35 = sld [smem:[%s34]]
  %s36 = scalar_lea.smem %s0, 18
  %s37 = sld [smem:[%s36]]
  %s38 = scalar_lea.smem %s0, 19
  %s39 = sld [smem:[%s38]]
  %s40 = scalar_lea.smem %s0, 20
  %s41 = sld [smem:[%s40]]
  %s42 = scalar_lea.smem %s0, 21
  %s43 = sld [smem:[%s42]]
  %s44 = scalar_lea.smem %s0, 22
  %s45 = sld [smem:[%s44]]
  %s46 = scalar_lea.smem %s0, 23
  %s47 = sld [smem:[%s46]]
  %s48 = scalar_lea.smem %s0, 24
  %s49 = sld [smem:[%s48]]
  %s50 = scalar_lea.smem %s0, 25
  %s51 = sld [smem:[%s50]]
  %s52 = scalar_lea.smem %s0, 26
  %s53 = sld [smem:[%s52]]
  %s54 = scalar_lea.smem %s0, 27
  %s55 = sld [smem:[%s54]]
  %s56 = scalar_lea.smem %s0, 28
  %s57 = sld [smem:[%s56]]
  %s58 = scalar_lea.smem %s0, 29
  %s59 = sld [smem:[%s58]]
  %s60 = scalar_lea.smem %s0, 30
  %s61 = sld [smem:[%s60]]
  %s62 = scalar_lea.smem %s0, 31
  %s63 = sld [smem:[%s62]]
  %s64 = scalar_lea.smem %s0, 32
  %s65 = sld [smem:[%s64]]
  %s66 = scalar_lea.smem %s0, 33
  %s67 = sld [smem:[%s66]]
  %s68 = sld [smem:[#allocation0]]
  $region142: #{model_forward.1} parent=0
    _
  %s70 = ssub.s32 1, %s68
  %s71 = scalar_select 0, %s70, %s68
  $region1: #{model_forward.1} parent=0
    #allocation8 [shape = 'u8[1024]{0}', space=vmem, size = 0x400, scoped, tag = 'output window, operand 0, single buffered']
    #allocation9 [shape = 's32[1]{0}', space=sflag, size = 0x4, scoped, tag = 'scoped memory for model_forward.1']
    %72 = vsyncpa [#allocation9], 0
    // Predicated region
    $region2: #{model_forward.1} parent=1 // pred_check
      _
    $region3: #{model_forward.1} parent=1 // pred_check_branch
      %74 = sbr.rel (0) target = $region5
    $region4: #{model_forward.1} parent=1 // pred_region
      _
    $region5: #{model_forward.1} parent=1 // pred_fallthru
      _
    // Predicated region
    $region6: #{model_forward.1} parent=1 // pred_check
      _
    $region7: #{model_forward.1} parent=1 // pred_check_branch
      %76 = sbr.rel (0) target = $region9
    $region8: #{model_forward.1} parent=1 // pred_region
      _
    $region9: #{model_forward.1} parent=1 // pred_fallthru
      _
    // Predicated region
    $region10: #{model_forward.1} parent=1 // pred_check
      _
    $region11: #{model_forward.1} parent=1 // pred_check_branch
      %78 = sbr.rel (0) target = $region13
    $region12: #{model_forward.1} parent=1 // pred_region
      _
    $region13: #{model_forward.1} parent=1 // pred_fallthru
      _
    // Predicated region
    $region14: #{model_forward.1} parent=1 // pred_check
      _
    $region15: #{model_forward.1} parent=1 // pred_check_branch
      %80 = sbr.rel (0) target = $region17
    $region16: #{model_forward.1} parent=1 // pred_region
      _
    $region17: #{model_forward.1} parent=1 // pred_fallthru
      _
    // Predicated region
    $region18: #{model_forward.1} parent=1 // pred_check
      _
    $region19: #{model_forward.1} parent=1 // pred_check_branch
      %82 = sbr.rel (0) target = $region21
    $region20: #{model_forward.1} parent=1 // pred_region
      _
    $region21: #{model_forward.1} parent=1 // pred_fallthru
      _
    // Predicated region
    $region22: #{model_forward.1} parent=1 // pred_check
      _
    $region23: #{model_forward.1} parent=1 // pred_check_branch
      %84 = sbr.rel (0) target = $region25
    $region24: #{model_forward.1} parent=1 // pred_region
      _
    $region25: #{model_forward.1} parent=1 // pred_fallthru
      _
    // Predicated region
    $region26: #{model_forward.1} parent=1 // pred_check
      _
    $region27: #{model_forward.1} parent=1 // pred_check_branch
      %86 = sbr.rel (0) target = $region29
    $region28: #{model_forward.1} parent=1 // pred_region
      _
    $region29: #{model_forward.1} parent=1 // pred_fallthru
      _
    // Predicated region
    $region30: #{model_forward.1} parent=1 // pred_check
      _
    $region31: #{model_forward.1} parent=1 // pred_check_branch
      %88 = sbr.rel (0) target = $region33
    $region32: #{model_forward.1} parent=1 // pred_region
      _
    $region33: #{model_forward.1} parent=1 // pred_fallthru
      _
    // Predicated region
    $region34: #{model_forward.1} parent=1 // pred_check
      _
    $region35: #{model_forward.1} parent=1 // pred_check_branch
      %90 = sbr.rel (0) target = $region37
    $region36: #{model_forward.1} parent=1 // pred_region
      _
    $region37: #{model_forward.1} parent=1 // pred_fallthru
      _
    // Predicated region
    $region38: #{model_forward.1} parent=1 // pred_check
      _
    $region39: #{model_forward.1} parent=1 // pred_check_branch
      %92 = sbr.rel (0) target = $region41
    $region40: #{model_forward.1} parent=1 // pred_region
      _
    $region41: #{model_forward.1} parent=1 // pred_fallthru
      _
    // Predicated region
    $region42: #{model_forward.1} parent=1 // pred_check
      _
    $region43: #{model_forward.1} parent=1 // pred_check_branch
      %94 = sbr.rel (0) target = $region45
    $region44: #{model_forward.1} parent=1 // pred_region
      _
    $region45: #{model_forward.1} parent=1 // pred_fallthru
      _
    // Predicated region
    $region46: #{model_forward.1} parent=1 // pred_check
      _
    $region47: #{model_forward.1} parent=1 // pred_check_branch
      %96 = sbr.rel (0) target = $region49
    $region48: #{model_forward.1} parent=1 // pred_region
      _
    $region49: #{model_forward.1} parent=1 // pred_fallthru
      _
    // Predicated region
    $region50: #{model_forward.1} parent=1 // pred_check
      _
    $region51: #{model_forward.1} parent=1 // pred_check_branch
      %98 = sbr.rel (0) target = $region53
    $region52: #{model_forward.1} parent=1 // pred_region
      _
    $region53: #{model_forward.1} parent=1 // pred_fallthru
      _
    // Predicated region
    $region54: #{model_forward.1} parent=1 // pred_check
      _
    $region55: #{model_forward.1} parent=1 // pred_check_branch
      %100 = sbr.rel (0) target = $region57
    $region56: #{model_forward.1} parent=1 // pred_region
      _
    $region57: #{model_forward.1} parent=1 // pred_fallthru
      _
    // Predicated region
    $region58: #{model_forward.1} parent=1 // pred_check
      _
    $region59: #{model_forward.1} parent=1 // pred_check_branch
      %102 = sbr.rel (0) target = $region61
    $region60: #{model_forward.1} parent=1 // pred_region
      _
    $region61: #{model_forward.1} parent=1 // pred_fallthru
      _
    // Predicated region
    $region62: #{model_forward.1} parent=1 // pred_check
      _
    $region63: #{model_forward.1} parent=1 // pred_check_branch
      %104 = sbr.rel (0) target = $region65
    $region64: #{model_forward.1} parent=1 // pred_region
      _
    $region65: #{model_forward.1} parent=1 // pred_fallthru
      _
    // Predicated region
    $region66: #{model_forward.1} parent=1 // pred_check
      _
    $region67: #{model_forward.1} parent=1 // pred_check_branch
      %106 = sbr.rel (0) target = $region69
    $region68: #{model_forward.1} parent=1 // pred_region
      _
    $region69: #{model_forward.1} parent=1 // pred_fallthru
      _
    // Predicated region
    $region70: #{model_forward.1} parent=1 // pred_check
      _
    $region71: #{model_forward.1} parent=1 // pred_check_branch
      %108 = sbr.rel (0) target = $region73
    $region72: #{model_forward.1} parent=1 // pred_region
      _
    $region73: #{model_forward.1} parent=1 // pred_fallthru
      _
    // Predicated region
    $region74: #{model_forward.1} parent=1 // pred_check
      _
    $region75: #{model_forward.1} parent=1 // pred_check_branch
      %110 = sbr.rel (0) target = $region77
    $region76: #{model_forward.1} parent=1 // pred_region
      _
    $region77: #{model_forward.1} parent=1 // pred_fallthru
      _
    // Predicated region
    $region78: #{model_forward.1} parent=1 // pred_check
      _
    $region79: #{model_forward.1} parent=1 // pred_check_branch
      %112 = sbr.rel (0) target = $region81
    $region80: #{model_forward.1} parent=1 // pred_region
      _
    $region81: #{model_forward.1} parent=1 // pred_fallthru
      _
    // Predicated region
    $region82: #{model_forward.1} parent=1 // pred_check
      _
    $region83: #{model_forward.1} parent=1 // pred_check_branch
      %114 = sbr.rel (0) target = $region85
    $region84: #{model_forward.1} parent=1 // pred_region
      _
    $region85: #{model_forward.1} parent=1 // pred_fallthru
      _
    // Predicated region
    $region86: #{model_forward.1} parent=1 // pred_check
      _
    $region87: #{model_forward.1} parent=1 // pred_check_branch
      %116 = sbr.rel (0) target = $region89
    $region88: #{model_forward.1} parent=1 // pred_region
      _
    $region89: #{model_forward.1} parent=1 // pred_fallthru
      _
    // Predicated region
    $region90: #{model_forward.1} parent=1 // pred_check
      _
    $region91: #{model_forward.1} parent=1 // pred_check_branch
      %118 = sbr.rel (0) target = $region93
    $region92: #{model_forward.1} parent=1 // pred_region
      _
    $region93: #{model_forward.1} parent=1 // pred_fallthru
      _
    // Predicated region
    $region94: #{model_forward.1} parent=1 // pred_check
      _
    $region95: #{model_forward.1} parent=1 // pred_check_branch
      %120 = sbr.rel (0) target = $region97
    $region96: #{model_forward.1} parent=1 // pred_region
      _
    $region97: #{model_forward.1} parent=1 // pred_fallthru
      _
    // Predicated region
    $region98: #{model_forward.1} parent=1 // pred_check
      _
    $region99: #{model_forward.1} parent=1 // pred_check_branch
      %122 = sbr.rel (0) target = $region101
    $region100: #{model_forward.1} parent=1 // pred_region
      _
    $region101: #{model_forward.1} parent=1 // pred_fallthru
      _
    // Predicated region
    $region102: #{model_forward.1} parent=1 // pred_check
      _
    $region103: #{model_forward.1} parent=1 // pred_check_branch
      %124 = sbr.rel (0) target = $region105
    $region104: #{model_forward.1} parent=1 // pred_region
      _
    $region105: #{model_forward.1} parent=1 // pred_fallthru
      _
    // Predicated region
    $region106: #{model_forward.1} parent=1 // pred_check
      _
    $region107: #{model_forward.1} parent=1 // pred_check_branch
      %126 = sbr.rel (0) target = $region109
    $region108: #{model_forward.1} parent=1 // pred_region
      _
    $region109: #{model_forward.1} parent=1 // pred_fallthru
      _
    // Predicated region
    $region110: #{model_forward.1} parent=1 // pred_check
      _
    $region111: #{model_forward.1} parent=1 // pred_check_branch
      %128 = sbr.rel (0) target = $region113
    $region112: #{model_forward.1} parent=1 // pred_region
      _
    $region113: #{model_forward.1} parent=1 // pred_fallthru
      _
    // Predicated region
    $region114: #{model_forward.1} parent=1 // pred_check
      _
    $region115: #{model_forward.1} parent=1 // pred_check_branch
      %130 = sbr.rel (0) target = $region117
    $region116: #{model_forward.1} parent=1 // pred_region
      _
    $region117: #{model_forward.1} parent=1 // pred_fallthru
      _
    // Predicated region
    $region118: #{model_forward.1} parent=1 // pred_check
      _
    $region119: #{model_forward.1} parent=1 // pred_check_branch
      %132 = sbr.rel (0) target = $region121
    $region120: #{model_forward.1} parent=1 // pred_region
      _
    $region121: #{model_forward.1} parent=1 // pred_fallthru
      _
    // Predicated region
    $region122: #{model_forward.1} parent=1 // pred_check
      _
    $region123: #{model_forward.1} parent=1 // pred_check_branch
      %134 = sbr.rel (0) target = $region125
    $region124: #{model_forward.1} parent=1 // pred_region
      _
    $region125: #{model_forward.1} parent=1 // pred_fallthru
      _
    // Predicated region
    $region126: #{model_forward.1} parent=1 // pred_check
      _
    $region127: #{model_forward.1} parent=1 // pred_check_branch
      %136 = sbr.rel (0) target = $region129
    $region128: #{model_forward.1} parent=1 // pred_region
      _
    $region129: #{model_forward.1} parent=1 // pred_fallthru
      _
    // Predicated region
    $region130: #{model_forward.1} parent=1 // pred_check
      _
    $region131: #{model_forward.1} parent=1 // pred_check_branch
      %138 = sbr.rel (0) target = $region133
    $region132: #{model_forward.1} parent=1 // pred_region
      _
    $region133: #{model_forward.1} parent=1 // pred_fallthru
      _
    %v139 = vld [vmem:[%s1] sm:$0xff]
    %v140 = vld [vmem:[%s1 + $0x8] sm:$0xff]
    %v141 = vld [vmem:[%s1 + $0x10] sm:$0xff]
    %v142 = vld [vmem:[%s1 + $0x18] sm:$0x3]
    %v143 = vld [vmem:[%s3] sm:$0xff]
    %v144 = vld [vmem:[%s3 + $0x8] sm:$0xff]
    %v145 = vld [vmem:[%s3 + $0x10] sm:$0xff]
    %v146 = vld [vmem:[%s3 + $0x18] sm:$0xff]
    %v147 = vld [vmem:[%s3 + $0x20] sm:$0xff]
    %v148 = vld [vmem:[%s3 + $0x28] sm:$0xff]
    %v149 = vld [vmem:[%s3 + $0x30] sm:$0xf]
    %v150 = vld [vmem:[%s3 + $0x38] sm:$0xf]
    %v151 = vld [vmem:[%s1 + $0x1] sm:$0xff]
    %v152 = vld [vmem:[%s1 + $0x9] sm:$0xff]
    %v153 = vld [vmem:[%s1 + $0x11] sm:$0xff]
    %v154 = vld [vmem:[%s1 + $0x19] sm:$0x3]
    %s155 = scalar_lea.vmem %s3, 64
    %v156 = vld [vmem:[%s155] sm:$0xff]
    %v157 = vld [vmem:[%s155 + $0x8] sm:$0xff]
    %v158 = vld [vmem:[%s155 + $0x10] sm:$0xff]
    %v159 = vld [vmem:[%s155 + $0x18] sm:$0xff]
    %v160 = vld [vmem:[%s155 + $0x20] sm:$0xff]
    %v161 = vld [vmem:[%s155 + $0x28] sm:$0xff]
    %v162 = vld [vmem:[%s155 + $0x30] sm:$0xf]
    %v163 = vld [vmem:[%s155 + $0x38] sm:$0xf]
    %vm164 = vcmask 228352
    %v166 = vsel %vm164, %v151, 0
    %v169 = vsel %vm164, %v152, 0
    %v172 = vsel %vm164, %v153, 0
    %v175 = vsel %vm164, %v154, 0
    %vm177 = vcmask 1043456
    %v179 = vsel %vm177, %v162, 0
    %v182 = vsel %vm177, %v163, 0
    %184 = vmatpush.msra.mxu0 0.0
    %185 = vmatpush.msra.mxu0 0.0
    %186 = vmatpush.msra.mxu0 0.0
    %187 = vmatpush.msra.mxu0 0.0
    %188 = vmatpush.msra.mxu0 0.0
    %189 = vmatpush.msra.mxu0 0.0
    %190 = vmatpush.msra.mxu0 0.0
    %191 = vmatpush.msra.mxu0 0.0
    %192 = vmatpush.msra.mxu0 0.0
    %193 = vmatpush.msra.mxu0 0.0
    %194 = vmatpush.msra.mxu0 0.0
    %195 = vmatpush.msra.mxu0 0.0
    %196 = vmatpush.msra.mxu0 %v179
    %197 = vmatpush.msra.mxu0 %v160
    %198 = vmatpush.msra.mxu0 %v158
    %199 = vmatpush.msra.mxu0 %v156
    %200 = vmatmul.f32.gmra.mxu0 %v166
    %v201 = vpop.f32.mrf.mxu0
    %v202 = vadd.f32 0.0, %v201
    %203 = vmatmul.f32.gmra.mxu0 %v169
    %v204 = vpop.f32.mrf.mxu0
    %v205 = vadd.f32 0.0, %v204
    %206 = vmatmul.f32.gmra.mxu0 %v172
    %v207 = vpop.f32.mrf.mxu0
    %v208 = vadd.f32 0.0, %v207
    %209 = vmatmul.f32.gmra.mxu0 %v175
    %v210 = vpop.f32.mrf.mxu0
    %v211 = vadd.f32 0.0, %v210
    %212 = vdwg.mxu0
    %213 = vmatpush.msra.mxu0 0.0
    %214 = vmatpush.msra.mxu0 0.0
    %215 = vmatpush.msra.mxu0 0.0
    %216 = vmatpush.msra.mxu0 0.0
    %217 = vmatpush.msra.mxu0 0.0
    %218 = vmatpush.msra.mxu0 0.0
    %219 = vmatpush.msra.mxu0 0.0
    %220 = vmatpush.msra.mxu0 0.0
    %221 = vmatpush.msra.mxu0 0.0
    %222 = vmatpush.msra.mxu0 0.0
    %223 = vmatpush.msra.mxu0 0.0
    %224 = vmatpush.msra.mxu0 0.0
    %225 = vmatpush.msra.mxu0 %v182
    %226 = vmatpush.msra.mxu0 %v161
    %227 = vmatpush.msra.mxu0 %v159
    %228 = vmatpush.msra.mxu0 %v157
    %229 = vmatmul.f32.gmra.mxu0 %v166
    %v230 = vpop.f32.mrf.mxu0
    %v231 = vadd.f32 0.0, %v230
    %232 = vmatmul.f32.gmra.mxu0 %v169
    %v233 = vpop.f32.mrf.mxu0
    %v234 = vadd.f32 0.0, %v233
    %235 = vmatmul.f32.gmra.mxu0 %v172
    %v236 = vpop.f32.mrf.mxu0
    %v237 = vadd.f32 0.0, %v236
    %238 = vmatmul.f32.gmra.mxu0 %v175
    %v239 = vpop.f32.mrf.mxu0
    %v240 = vadd.f32 0.0, %v239
    %241 = vdwg.mxu0
    %v243 = vsel %vm164, %v139, 0
    %v246 = vsel %vm164, %v140, 0
    %v249 = vsel %vm164, %v141, 0
    %v252 = vsel %vm164, %v142, 0
    %v255 = vsel %vm177, %v149, 0
    %v258 = vsel %vm177, %v150, 0
    %260 = vmatpush.msra.mxu0 0.0
    %261 = vmatpush.msra.mxu0 0.0
    %262 = vmatpush.msra.mxu0 0.0
    %263 = vmatpush.msra.mxu0 0.0
    %264 = vmatpush.msra.mxu0 0.0
    %265 = vmatpush.msra.mxu0 0.0
    %266 = vmatpush.msra.mxu0 0.0
    %267 = vmatpush.msra.mxu0 0.0
    %268 = vmatpush.msra.mxu0 0.0
    %269 = vmatpush.msra.mxu0 0.0
    %270 = vmatpush.msra.mxu0 0.0
    %271 = vmatpush.msra.mxu0 0.0
    %272 = vmatpush.msra.mxu0 %v255
    %273 = vmatpush.msra.mxu0 %v147
    %274 = vmatpush.msra.mxu0 %v145
    %275 = vmatpush.msra.mxu0 %v143
    %276 = vmatmul.f32.gmra.mxu0 %v243
    %v277 = vpop.f32.mrf.mxu0
    %v278 = vadd.f32 %v202, %v277
    %279 = vmatmul.f32.gmra.mxu0 %v246
    %v280 = vpop.f32.mrf.mxu0
    %v281 = vadd.f32 %v205, %v280
    %282 = vmatmul.f32.gmra.mxu0 %v249
    %v283 = vpop.f32.mrf.mxu0
    %v284 = vadd.f32 %v208, %v283
    %285 = vmatmul.f32.gmra.mxu0 %v252
    %v286 = vpop.f32.mrf.mxu0
    %v287 = vadd.f32 %v211, %v286
    %288 = vdwg.mxu0
    %289 = vmatpush.msra.mxu0 0.0
    %290 = vmatpush.msra.mxu0 0.0
    %291 = vmatpush.msra.mxu0 0.0
    %292 = vmatpush.msra.mxu0 0.0
    %293 = vmatpush.msra.mxu0 0.0
    %294 = vmatpush.msra.mxu0 0.0
    %295 = vmatpush.msra.mxu0 0.0
    %296 = vmatpush.msra.mxu0 0.0
    %297 = vmatpush.msra.mxu0 0.0
    %298 = vmatpush.msra.mxu0 0.0
    %299 = vmatpush.msra.mxu0 0.0
    %300 = vmatpush.msra.mxu0 0.0
    %301 = vmatpush.msra.mxu0 %v258
    %302 = vmatpush.msra.mxu0 %v148
    %303 = vmatpush.msra.mxu0 %v146
    %304 = vmatpush.msra.mxu0 %v144
    %305 = vmatmul.f32.gmra.mxu0 %v243
    %v306 = vpop.f32.mrf.mxu0
    %v307 = vadd.f32 %v231, %v306
    %308 = vmatmul.f32.gmra.mxu0 %v246
    %v309 = vpop.f32.mrf.mxu0
    %v310 = vadd.f32 %v234, %v309
    %311 = vmatmul.f32.gmra.mxu0 %v249
    %v312 = vpop.f32.mrf.mxu0
    %v313 = vadd.f32 %v237, %v312
    %314 = vmatmul.f32.gmra.mxu0 %v252
    %v315 = vpop.f32.mrf.mxu0
    %v316 = vadd.f32 %v240, %v315
    %317 = vdwg.mxu0
    %v318 = vld [vmem:[%s1 + $0x2] sm:$0xff]
    %v319 = vld [vmem:[%s1 + $0xa] sm:$0xff]
    %v320 = vld [vmem:[%s1 + $0x12] sm:$0xff]
    %v321 = vld [vmem:[%s1 + $0x1a] sm:$0x3]
    %s322 = scalar_lea.vmem %s3, 128
    %v323 = vld [vmem:[%s322] sm:$0xff]
    %v324 = vld [vmem:[%s322 + $0x8] sm:$0xff]
    %v325 = vld [vmem:[%s322 + $0x10] sm:$0xff]
    %v326 = vld [vmem:[%s322 + $0x18] sm:$0xff]
    %v327 = vld [vmem:[%s322 + $0x20] sm:$0xff]
    %v328 = vld [vmem:[%s322 + $0x28] sm:$0xff]
    %v329 = vld [vmem:[%s322 + $0x30] sm:$0xf]
    %v330 = vld [vmem:[%s322 + $0x38] sm:$0xf]
    %v332 = vsel %vm164, %v318, 0
    %v335 = vsel %vm164, %v319, 0
    %v338 = vsel %vm164, %v320, 0
    %v341 = vsel %vm164, %v321, 0
    %v344 = vsel %vm177, %v329, 0
    %v347 = vsel %vm177, %v330, 0
    %349 = vmatpush.msra.mxu0 0.0
    %350 = vmatpush.msra.mxu0 0.0
    %351 = vmatpush.msra.mxu0 0.0
    %352 = vmatpush.msra.mxu0 0.0
    %353 = vmatpush.msra.mxu0 0.0
    %354 = vmatpush.msra.mxu0 0.0
    %355 = vmatpush.msra.mxu0 0.0
    %356 = vmatpush.msra.mxu0 0.0
    %357 = vmatpush.msra.mxu0 0.0
    %358 = vmatpush.msra.mxu0 0.0
    %359 = vmatpush.msra.mxu0 0.0
    %360 = vmatpush.msra.mxu0 0.0
    %361 = vmatpush.msra.mxu0 %v344
    %362 = vmatpush.msra.mxu0 %v327
    %363 = vmatpush.msra.mxu0 %v325
    %364 = vmatpush.msra.mxu0 %v323
    %365 = vmatmul.f32.gmra.mxu0 %v332
    %v366 = vpop.f32.mrf.mxu0
    %v367 = vadd.f32 0.0, %v366
    %368 = vmatmul.f32.gmra.mxu0 %v335
    %v369 = vpop.f32.mrf.mxu0
    %v370 = vadd.f32 0.0, %v369
    %371 = vmatmul.f32.gmra.mxu0 %v338
    %v372 = vpop.f32.mrf.mxu0
    %v373 = vadd.f32 0.0, %v372
    %374 = vmatmul.f32.gmra.mxu0 %v341
    %v375 = vpop.f32.mrf.mxu0
    %v376 = vadd.f32 0.0, %v375
    %377 = vdwg.mxu0
    %378 = vmatpush.msra.mxu0 0.0
    %379 = vmatpush.msra.mxu0 0.0
    %380 = vmatpush.msra.mxu0 0.0
    %381 = vmatpush.msra.mxu0 0.0
    %382 = vmatpush.msra.mxu0 0.0
    %383 = vmatpush.msra.mxu0 0.0
    %384 = vmatpush.msra.mxu0 0.0
    %385 = vmatpush.msra.mxu0 0.0
    %386 = vmatpush.msra.mxu0 0.0
    %387 = vmatpush.msra.mxu0 0.0
    %388 = vmatpush.msra.mxu0 0.0
    %389 = vmatpush.msra.mxu0 0.0
    %390 = vmatpush.msra.mxu0 %v347
    %391 = vmatpush.msra.mxu0 %v328
    %392 = vmatpush.msra.mxu0 %v326
    %393 = vmatpush.msra.mxu0 %v324
    %394 = vmatmul.f32.gmra.mxu0 %v332
    %v395 = vpop.f32.mrf.mxu0
    %v396 = vadd.f32 0.0, %v395
    %397 = vmatmul.f32.gmra.mxu0 %v335
    %v398 = vpop.f32.mrf.mxu0
    %v399 = vadd.f32 0.0, %v398
    %400 = vmatmul.f32.gmra.mxu0 %v338
    %v401 = vpop.f32.mrf.mxu0
    %v402 = vadd.f32 0.0, %v401
    %403 = vmatmul.f32.gmra.mxu0 %v341
    %v404 = vpop.f32.mrf.mxu0
    %v405 = vadd.f32 0.0, %v404
    %406 = vdwg.mxu0
    %v407 = vadd.f32 %v278, %v367
    %v408 = vadd.f32 %v307, %v396
    %v409 = vadd.f32 %v281, %v370
    %v410 = vadd.f32 %v310, %v399
    %v411 = vadd.f32 %v284, %v373
    %v412 = vadd.f32 %v313, %v402
    %v413 = vadd.f32 %v287, %v376
    %v414 = vadd.f32 %v316, %v405
    %v415 = vmax.f32 %v407, 0.0
    %v416 = vmax.f32 %v408, 0.0
    %v417 = vmax.f32 %v409, 0.0
    %v418 = vmax.f32 %v410, 0.0
    %v419 = vmax.f32 %v411, 0.0
    %v420 = vmax.f32 %v412, 0.0
    %v421 = vmax.f32 %v413, 0.0
    %v422 = vmax.f32 %v414, 0.0
    %423 = vst [vmem:[#allocation2] sm:$0xff] %v415
    %vm424 = vcmask 654336
    %425 = vst.msk [vmem:[#allocation2 + $0x8] sm:$0xff] %vm424, %v416
    %426 = vst [vmem:[#allocation2 + $0x10] sm:$0xff] %v417
    %427 = vst.msk [vmem:[#allocation2 + $0x18] sm:$0xff] %vm424, %v418
    %428 = vst [vmem:[#allocation2 + $0x20] sm:$0xff] %v419
    %429 = vst.msk [vmem:[#allocation2 + $0x28] sm:$0xff] %vm424, %v420
    %430 = vst [vmem:[#allocation2 + $0x30] sm:$0x3] %v421
    %vm431 = vcmask 648192
    %432 = vst.msk [vmem:[#allocation2 + $0x38] sm:$0x3] %vm431, %v422
    %v433 = vadd.f32 %v415, %v417
    %v434 = vadd.f32 %v433, %v419
    %vm435 = vcmask 1041408
    %v436 = vsel %vm435, %v421, 0.0
    %v437 = vadd.f32 %v434, %v436
    %v438 = vrot.slane %v437, 4
    %v439 = vadd.f32 %v437, %v438
    %v440 = vrot.slane %v439, 2
    %v441 = vadd.f32 %v439, %v440
    %v442 = vrot.slane %v441, 1
    %v443 = vadd.f32 %v441, %v442
    %v444 = vsel %vm424, %v416, 0.0
    %v445 = vsel %vm424, %v418, 0.0
    %v446 = vadd.f32 %v444, %v445
    %v447 = vsel %vm424, %v420, 0.0
    %v448 = vadd.f32 %v446, %v447
    %v449 = vsel %vm431, %v422, 0.0
    %v450 = vadd.f32 %v448, %v449
    %v451 = vrot.slane %v450, 4
    %v452 = vadd.f32 %v450, %v451
    %v453 = vrot.slane %v452, 2
    %v454 = vadd.f32 %v452, %v453
    %v455 = vrot.slane %v454, 1
    %v456 = vadd.f32 %v454, %v455
    %v457 = vld [vmem:[%s5] sm:$0xff]
    %v458 = vld [vmem:[%s5 + $0x8] sm:$0xff]
    %v459 = vld [vmem:[%s5 + $0x10] sm:$0xff]
    %v460 = vld [vmem:[%s5 + $0x18] sm:$0xff]
    %v461 = vld [vmem:[%s5 + $0x20] sm:$0xff]
    %v462 = vld [vmem:[%s5 + $0x28] sm:$0xff]
    %v463 = vld [vmem:[%s5 + $0x30] sm:$0xff]
    %v464 = vld [vmem:[%s5 + $0x38] sm:$0xff]
    %v465 = vld [vmem:[%s5 + $0x40] sm:$0xff]
    %v466 = vld [vmem:[%s5 + $0x48] sm:$0xff]
    %v467 = vld [vmem:[%s5 + $0x50] sm:$0xff]
    %v468 = vld [vmem:[%s5 + $0x58] sm:$0xff]
    %v469 = vld [vmem:[%s5 + $0x60] sm:$0xff]
    %v470 = vld [vmem:[%s5 + $0x68] sm:$0xff]
    %v471 = vld [vmem:[%s5 + $0x70] sm:$0xff]
    %v472 = vld [vmem:[%s5 + $0x78] sm:$0xff]
    %v473 = vld [vmem:[%s5 + $0x80] sm:$0xff]
    %v474 = vld [vmem:[%s5 + $0x88] sm:$0xff]
    %v475 = vld [vmem:[%s5 + $0x90] sm:$0xff]
    %v476 = vld [vmem:[%s5 + $0x98] sm:$0xff]
    %v477 = vld [vmem:[%s5 + $0xa0] sm:$0xff]
    %v478 = vld [vmem:[%s5 + $0xa8] sm:$0xff]
    %v479 = vld [vmem:[%s5 + $0xb0] sm:$0xff]
    %v480 = vld [vmem:[%s5 + $0xb8] sm:$0xff]
    %v481 = vld [vmem:[%s5 + $0xc0] sm:$0xff]
    %v482 = vld [vmem:[%s5 + $0xc8] sm:$0xff]
    %v483 = vmul.f32 %v415, %v415
    %v484 = vmul.f32 %v416, %v416
    %v485 = vmul.f32 %v417, %v417
    %v486 = vmul.f32 %v418, %v418
    %v487 = vmul.f32 %v419, %v419
    %v488 = vmul.f32 %v420, %v420
    %v489 = vmul.f32 %v421, %v421
    %v490 = vmul.f32 %v422, %v422
    %v491 = vadd.f32 %v483, %v485
    %v492 = vadd.f32 %v491, %v487
    %v493 = vsel %vm435, %v489, 0.0
    %v494 = vadd.f32 %v492, %v493
    %v495 = vrot.slane %v494, 4
    %v496 = vadd.f32 %v494, %v495
    %v497 = vrot.slane %v496, 2
    %v498 = vadd.f32 %v496, %v497
    %v499 = vrot.slane %v498, 1
    %v500 = vadd.f32 %v498, %v499
    %v501 = vsel %vm424, %v484, 0.0
    %v502 = vsel %vm424, %v486, 0.0
    %v503 = vadd.f32 %v501, %v502
    %v504 = vsel %vm424, %v488, 0.0
    %v505 = vadd.f32 %v503, %v504
    %v506 = vsel %vm431, %v490, 0.0
    %v507 = vadd.f32 %v505, %v506
    %v508 = vrot.slane %v507, 4
    %v509 = vadd.f32 %v507, %v508
    %v510 = vrot.slane %v509, 2
    %v511 = vadd.f32 %v509, %v510
    %v512 = vrot.slane %v511, 1
    %v513 = vadd.f32 %v511, %v512
    %s514 = scalar_lea.vmem %s1, 32
    %v515 = vld [vmem:[%s514] sm:$0xff]
    %v516 = vld [vmem:[%s514 + $0x8] sm:$0xff]
    %v517 = vld [vmem:[%s514 + $0x10] sm:$0xff]
    %v518 = vld [vmem:[%s514 + $0x18] sm:$0x3]
    %v519 = vld [vmem:[%s3] sm:$0xff]
    %v520 = vld [vmem:[%s3 + $0x8] sm:$0xff]
    %v521 = vld [vmem:[%s3 + $0x10] sm:$0xff]
    %v522 = vld [vmem:[%s3 + $0x18] sm:$0xff]
    %v523 = vld [vmem:[%s3 + $0x20] sm:$0xff]
    %v524 = vld [vmem:[%s3 + $0x28] sm:$0xff]
    %v525 = vld [vmem:[%s3 + $0x30] sm:$0xf]
    %v526 = vld [vmem:[%s3 + $0x38] sm:$0xf]
    %v527 = vld [vmem:[%s514 + $0x1] sm:$0xff]
    %v528 = vld [vmem:[%s514 + $0x9] sm:$0xff]
    %v529 = vld [vmem:[%s514 + $0x11] sm:$0xff]
    %v530 = vld [vmem:[%s514 + $0x19] sm:$0x3]
    %v531 = vld [vmem:[%s155] sm:$0xff]
    %v532 = vld [vmem:[%s155 + $0x8] sm:$0xff]
    %v533 = vld [vmem:[%s155 + $0x10] sm:$0xff]
    %v534 = vld [vmem:[%s155 + $0x18] sm:$0xff]
    %v535 = vld [vmem:[%s155 + $0x20] sm:$0xff]
    %v536 = vld [vmem:[%s155 + $0x28] sm:$0xff]
    %v537 = vld [vmem:[%s155 + $0x30] sm:$0xf]
    %v538 = vld [vmem:[%s155 + $0x38] sm:$0xf]
    %v540 = vsel %vm164, %v527, 0
    %v543 = vsel %vm164, %v528, 0
    %v546 = vsel %vm164, %v529, 0
    %v549 = vsel %vm164, %v530, 0
    %v552 = vsel %vm177, %v537, 0
    %v555 = vsel %vm177, %v538, 0
    %557 = vmatpush.msra.mxu0 0.0
    %558 = vmatpush.msra.mxu0 0.0
    %559 = vmatpush.msra.mxu0 0.0
    %560 = vmatpush.msra.mxu0 0.0
    %561 = vmatpush.msra.mxu0 0.0
    %562 = vmatpush.msra.mxu0 0.0
    %563 = vmatpush.msra.mxu0 0.0
    %564 = vmatpush.msra.mxu0 0.0
    %565 = vmatpush.msra.mxu0 0.0
    %566 = vmatpush.msra.mxu0 0.0
    %567 = vmatpush.msra.mxu0 0.0
    %568 = vmatpush.msra.mxu0 0.0
    %569 = vmatpush.msra.mxu0 %v552
    %570 = vmatpush.msra.mxu0 %v535
    %571 = vmatpush.msra.mxu0 %v533
    %572 = vmatpush.msra.mxu0 %v531
    %573 = vmatmul.f32.gmra.mxu0 %v540
    %v574 = vpop.f32.mrf.mxu0
    %v575 = vadd.f32 0.0, %v574
    %576 = vmatmul.f32.gmra.mxu0 %v543
    %v577 = vpop.f32.mrf.mxu0
    %v578 = vadd.f32 0.0, %v577
    %579 = vmatmul.f32.gmra.mxu0 %v546
    %v580 = vpop.f32.mrf.mxu0
    %v581 = vadd.f32 0.0, %v580
    %582 = vmatmul.f32.gmra.mxu0 %v549
    %v583 = vpop.f32.mrf.mxu0
    %v584 = vadd.f32 0.0, %v583
    %585 = vdwg.mxu0
    %586 = vmatpush.msra.mxu0 0.0
    %587 = vmatpush.msra.mxu0 0.0
    %588 = vmatpush.msra.mxu0 0.0
    %589 = vmatpush.msra.mxu0 0.0
    %590 = vmatpush.msra.mxu0 0.0
    %591 = vmatpush.msra.mxu0 0.0
    %592 = vmatpush.msra.mxu0 0.0
    %593 = vmatpush.msra.mxu0 0.0
    %594 = vmatpush.msra.mxu0 0.0
    %595 = vmatpush.msra.mxu0 0.0
    %596 = vmatpush.msra.mxu0 0.0
    %597 = vmatpush.msra.mxu0 0.0
    %598 = vmatpush.msra.mxu0 %v555
    %599 = vmatpush.msra.mxu0 %v536
    %600 = vmatpush.msra.mxu0 %v534
    %601 = vmatpush.msra.mxu0 %v532
    %602 = vmatmul.f32.gmra.mxu0 %v540
    %v603 = vpop.f32.mrf.mxu0
    %v604 = vadd.f32 0.0, %v603
    %605 = vmatmul.f32.gmra.mxu0 %v543
    %v606 = vpop.f32.mrf.mxu0
    %v607 = vadd.f32 0.0, %v606
    %608 = vmatmul.f32.gmra.mxu0 %v546
    %v609 = vpop.f32.mrf.mxu0
    %v610 = vadd.f32 0.0, %v609
    %611 = vmatmul.f32.gmra.mxu0 %v549
    %v612 = vpop.f32.mrf.mxu0
    %v613 = vadd.f32 0.0, %v612
    %614 = vdwg.mxu0
    %v616 = vsel %vm164, %v515, 0
    %v619 = vsel %vm164, %v516, 0
    %v622 = vsel %vm164, %v517, 0
    %v625 = vsel %vm164, %v518, 0
    %v628 = vsel %vm177, %v525, 0
    %v631 = vsel %vm177, %v526, 0
    %633 = vmatpush.msra.mxu0 0.0
    %634 = vmatpush.msra.mxu0 0.0
    %635 = vmatpush.msra.mxu0 0.0
    %636 = vmatpush.msra.mxu0 0.0
    %637 = vmatpush.msra.mxu0 0.0
    %638 = vmatpush.msra.mxu0 0.0
    %639 = vmatpush.msra.mxu0 0.0
    %640 = vmatpush.msra.mxu0 0.0
    %641 = vmatpush.msra.mxu0 0.0
    %642 = vmatpush.msra.mxu0 0.0
    %643 = vmatpush.msra.mxu0 0.0
    %644 = vmatpush.msra.mxu0 0.0
    %645 = vmatpush.msra.mxu0 %v628
    %646 = vmatpush.msra.mxu0 %v523
    %647 = vmatpush.msra.mxu0 %v521
    %648 = vmatpush.msra.mxu0 %v519
    %649 = vmatmul.f32.gmra.mxu0 %v616
    %v650 = vpop.f32.mrf.mxu0
    %v651 = vadd.f32 %v575, %v650
    %652 = vmatmul.f32.gmra.mxu0 %v619
    %v653 = vpop.f32.mrf.mxu0
    %v654 = vadd.f32 %v578, %v653
    %655 = vmatmul.f32.gmra.mxu0 %v622
    %v656 = vpop.f32.mrf.mxu0
    %v657 = vadd.f32 %v581, %v656
    %658 = vmatmul.f32.gmra.mxu0 %v625
    %v659 = vpop.f32.mrf.mxu0
    %v660 = vadd.f32 %v584, %v659
    %661 = vdwg.mxu0
    %662 = vmatpush.msra.mxu0 0.0
    %663 = vmatpush.msra.mxu0 0.0
    %664 = vmatpush.msra.mxu0 0.0
    %665 = vmatpush.msra.mxu0 0.0
    %666 = vmatpush.msra.mxu0 0.0
    %667 = vmatpush.msra.mxu0 0.0
    %668 = vmatpush.msra.mxu0 0.0
    %669 = vmatpush.msra.mxu0 0.0
    %670 = vmatpush.msra.mxu0 0.0
    %671 = vmatpush.msra.mxu0 0.0
    %672 = vmatpush.msra.mxu0 0.0
    %673 = vmatpush.msra.mxu0 0.0
    %674 = vmatpush.msra.mxu0 %v631
    %675 = vmatpush.msra.mxu0 %v524
    %676 = vmatpush.msra.mxu0 %v522
    %677 = vmatpush.msra.mxu0 %v520
    %678 = vmatmul.f32.gmra.mxu0 %v616
    %v679 = vpop.f32.mrf.mxu0
    %v680 = vadd.f32 %v604, %v679
    %681 = vmatmul.f32.gmra.mxu0 %v619
    %v682 = vpop.f32.mrf.mxu0
    %v683 = vadd.f32 %v607, %v682
    %684 = vmatmul.f32.gmra.mxu0 %v622
    %v685 = vpop.f32.mrf.mxu0
    %v686 = vadd.f32 %v610, %v685
    %687 = vmatmul.f32.gmra.mxu0 %v625
    %v688 = vpop.f32.mrf.mxu0
    %v689 = vadd.f32 %v613, %v688
    %690 = vdwg.mxu0
    %v691 = vld [vmem:[%s514 + $0x2] sm:$0xff]
    %v692 = vld [vmem:[%s514 + $0xa] sm:$0xff]
    %v693 = vld [vmem:[%s514 + $0x12] sm:$0xff]
    %v694 = vld [vmem:[%s514 + $0x1a] sm:$0x3]
    %v695 = vld [vmem:[%s322] sm:$0xff]
    %v696 = vld [vmem:[%s322 + $0x8] sm:$0xff]
    %v697 = vld [vmem:[%s322 + $0x10] sm:$0xff]
    %v698 = vld [vmem:[%s322 + $0x18] sm:$0xff]
    %v699 = vld [vmem:[%s322 + $0x20] sm:$0xff]
    %v700 = vld [vmem:[%s322 + $0x28] sm:$0xff]
    %v701 = vld [vmem:[%s322 + $0x30] sm:$0xf]
    %v702 = vld [vmem:[%s322 + $0x38] sm:$0xf]
    %v704 = vsel %vm164, %v691, 0
    %v707 = vsel %vm164, %v692, 0
    %v710 = vsel %vm164, %v693, 0
    %v713 = vsel %vm164, %v694, 0
    %v716 = vsel %vm177, %v701, 0
    %v719 = vsel %vm177, %v702, 0
    %721 = vmatpush.msra.mxu0 0.0
    %722 = vmatpush.msra.mxu0 0.0
    %723 = vmatpush.msra.mxu0 0.0
    %724 = vmatpush.msra.mxu0 0.0
    %725 = vmatpush.msra.mxu0 0.0
    %726 = vmatpush.msra.mxu0 0.0
    %727 = vmatpush.msra.mxu0 0.0
    %728 = vmatpush.msra.mxu0 0.0
    %729 = vmatpush.msra.mxu0 0.0
    %730 = vmatpush.msra.mxu0 0.0
    %731 = vmatpush.msra.mxu0 0.0
    %732 = vmatpush.msra.mxu0 0.0
    %733 = vmatpush.msra.mxu0 %v716
    %734 = vmatpush.msra.mxu0 %v699
    %735 = vmatpush.msra.mxu0 %v697
    %736 = vmatpush.msra.mxu0 %v695
    %737 = vmatmul.f32.gmra.mxu0 %v704
    %v738 = vpop.f32.mrf.mxu0
    %v739 = vadd.f32 0.0, %v738
    %740 = vmatmul.f32.gmra.mxu0 %v707
    %v741 = vpop.f32.mrf.mxu0
    %v742 = vadd.f32 0.0, %v741
    %743 = vmatmul.f32.gmra.mxu0 %v710
    %v744 = vpop.f32.mrf.mxu0
    %v745 = vadd.f32 0.0, %v744
    %746 = vmatmul.f32.gmra.mxu0 %v713
    %v747 = vpop.f32.mrf.mxu0
    %v748 = vadd.f32 0.0, %v747
    %749 = vdwg.mxu0
    %750 = vmatpush.msra.mxu0 0.0
    %751 = vmatpush.msra.mxu0 0.0
    %752 = vmatpush.msra.mxu0 0.0
    %753 = vmatpush.msra.mxu0 0.0
    %754 = vmatpush.msra.mxu0 0.0
    %755 = vmatpush.msra.mxu0 0.0
    %756 = vmatpush.msra.mxu0 0.0
    %757 = vmatpush.msra.mxu0 0.0
    %758 = vmatpush.msra.mxu0 0.0
    %759 = vmatpush.msra.mxu0 0.0
    %760 = vmatpush.msra.mxu0 0.0
    %761 = vmatpush.msra.mxu0 0.0
    %762 = vmatpush.msra.mxu0 %v719
    %763 = vmatpush.msra.mxu0 %v700
    %764 = vmatpush.msra.mxu0 %v698
    %765 = vmatpush.msra.mxu0 %v696
    %766 = vmatmul.f32.gmra.mxu0 %v704
    %v767 = vpop.f32.mrf.mxu0
    %v768 = vadd.f32 0.0, %v767
    %769 = vmatmul.f32.gmra.mxu0 %v707
    %v770 = vpop.f32.mrf.mxu0
    %v771 = vadd.f32 0.0, %v770
    %772 = vmatmul.f32.gmra.mxu0 %v710
    %v773 = vpop.f32.mrf.mxu0
    %v774 = vadd.f32 0.0, %v773
    %775 = vmatmul.f32.gmra.mxu0 %v713
    %v776 = vpop.f32.mrf.mxu0
    %v777 = vadd.f32 0.0, %v776
    %778 = vdwg.mxu0
    %v779 = vadd.f32 %v651, %v739
    %v780 = vadd.f32 %v680, %v768
    %v781 = vadd.f32 %v654, %v742
    %v782 = vadd.f32 %v683, %v771
    %v783 = vadd.f32 %v657, %v745
    %v784 = vadd.f32 %v686, %v774
    %v785 = vadd.f32 %v660, %v748
    %v786 = vadd.f32 %v689, %v777
    %v787 = vmax.f32 %v779, 0.0
    %v788 = vmax.f32 %v780, 0.0
    %v789 = vmax.f32 %v781, 0.0
    %v790 = vmax.f32 %v782, 0.0
    %v791 = vmax.f32 %v783, 0.0
    %v792 = vmax.f32 %v784, 0.0
    %v793 = vmax.f32 %v785, 0.0
    %v794 = vmax.f32 %v786, 0.0
    %s795 = scalar_lea.vmem [#allocation2], 64
    %796 = vst [vmem:[%s795] sm:$0xff] %v787
    %797 = vst.msk [vmem:[%s795 + $0x8] sm:$0xff] %vm424, %v788
    %798 = vst [vmem:[%s795 + $0x10] sm:$0xff] %v789
    %799 = vst.msk [vmem:[%s795 + $0x18] sm:$0xff] %vm424, %v790
    %800 = vst [vmem:[%s795 + $0x20] sm:$0xff] %v791
    %801 = vst.msk [vmem:[%s795 + $0x28] sm:$0xff] %vm424, %v792
    %802 = vst [vmem:[%s795 + $0x30] sm:$0x3] %v793
    %803 = vst.msk [vmem:[%s795 + $0x38] sm:$0x3] %vm431, %v794
    %v804 = vadd.f32 %v787, %v789
    %v805 = vadd.f32 %v804, %v791
    %v806 = vsel %vm435, %v793, 0.0
    %v807 = vadd.f32 %v805, %v806
    %v808 = vrot.slane %v807, 4
    %v809 = vadd.f32 %v807, %v808
    %v810 = vrot.slane %v809, 2
    %v811 = vadd.f32 %v809, %v810
    %v812 = vrot.slane %v811, 1
    %v813 = vadd.f32 %v811, %v812
    %v814 = vsel %vm424, %v788, 0.0
    %v815 = vsel %vm424, %v790, 0.0
    %v816 = vadd.f32 %v814, %v815
    %v817 = vsel %vm424, %v792, 0.0
    %v818 = vadd.f32 %v816, %v817
    %v819 = vsel %vm431, %v794, 0.0
    %v820 = vadd.f32 %v818, %v819
    %v821 = vrot.slane %v820, 4
    %v822 = vadd.f32 %v820, %v821
    %v823 = vrot.slane %v822, 2
    %v824 = vadd.f32 %v822, %v823
    %v825 = vrot.slane %v824, 1
    %v826 = vadd.f32 %v824, %v825
    %v827 = vld [vmem:[%s5] sm:$0xff]
    %v828 = vld [vmem:[%s5 + $0x8] sm:$0xff]
    %v829 = vld [vmem:[%s5 + $0x10] sm:$0xff]
    %v830 = vld [vmem:[%s5 + $0x18] sm:$0xff]
    %v831 = vld [vmem:[%s5 + $0x20] sm:$0xff]
    %v832 = vld [vmem:[%s5 + $0x28] sm:$0xff]
    %v833 = vld [vmem:[%s5 + $0x30] sm:$0xff]
    %v834 = vld [vmem:[%s5 + $0x38] sm:$0xff]
    %v835 = vld [vmem:[%s5 + $0x40] sm:$0xff]
    %v836 = vld [vmem:[%s5 + $0x48] sm:$0xff]
    %v837 = vld [vmem:[%s5 + $0x50] sm:$0xff]
    %v838 = vld [vmem:[%s5 + $0x58] sm:$0xff]
    %v839 = vld [vmem:[%s5 + $0x60] sm:$0xff]
    %v840 = vld [vmem:[%s5 + $0x68] sm:$0xff]
    %v841 = vld [vmem:[%s5 + $0x70] sm:$0xff]
    %v842 = vld [vmem:[%s5 + $0x78] sm:$0xff]
    %v843 = vld [vmem:[%s5 + $0x80] sm:$0xff]
    %v844 = vld [vmem:[%s5 + $0x88] sm:$0xff]
    %v845 = vld [vmem:[%s5 + $0x90] sm:$0xff]
    %v846 = vld [vmem:[%s5 + $0x98] sm:$0xff]
    %v847 = vld [vmem:[%s5 + $0xa0] sm:$0xff]
    %v848 = vld [vmem:[%s5 + $0xa8] sm:$0xff]
    %v849 = vld [vmem:[%s5 + $0xb0] sm:$0xff]
    %v850 = vld [vmem:[%s5 + $0xb8] sm:$0xff]
    %v851 = vld [vmem:[%s5 + $0xc0] sm:$0xff]
    %v852 = vld [vmem:[%s5 + $0xc8] sm:$0xff]
    %v854 = vsel %vm424, %v826, 0
    %856 = vmatpush.msra.mxu0 %v842
    %857 = vmatpush.msra.mxu0 %v841
    %858 = vmatpush.msra.mxu0 %v840
    %859 = vmatpush.msra.mxu0 %v839
    %860 = vmatpush.msra.mxu0 %v838
    %861 = vmatpush.msra.mxu0 %v837
    %862 = vmatpush.msra.mxu0 %v836
    %863 = vmatpush.msra.mxu0 %v835
    %864 = vmatpush.msra.mxu0 %v834
    %865 = vmatpush.msra.mxu0 %v833
    %866 = vmatpush.msra.mxu0 %v832
    %867 = vmatpush.msra.mxu0 %v831
    %868 = vmatpush.msra.mxu0 %v830
    %869 = vmatpush.msra.mxu0 %v829
    %870 = vmatpush.msra.mxu0 %v828
    %871 = vmatpush.msra.mxu0 %v827
    %872 = vmatmul.f32.gmra.mxu0 %v813
    %v873 = vpop.f32.mrf.mxu0
    %v874 = vadd.f32 0.0, %v873
    %875 = vdwg.mxu0
    %876 = vmatpush.msra.mxu0 0.0
    %877 = vmatpush.msra.mxu0 0.0
    %878 = vmatpush.msra.mxu0 0.0
    %879 = vmatpush.msra.mxu0 0.0
    %880 = vmatpush.msra.mxu0 0.0
    %881 = vmatpush.msra.mxu0 0.0
    %882 = vmatpush.msra.mxu0 %v852
    %883 = vmatpush.msra.mxu0 %v851
    %884 = vmatpush.msra.mxu0 %v850
    %885 = vmatpush.msra.mxu0 %v849
    %886 = vmatpush.msra.mxu0 %v848
    %887 = vmatpush.msra.mxu0 %v847
    %888 = vmatpush.msra.mxu0 %v846
    %889 = vmatpush.msra.mxu0 %v845
    %890 = vmatpush.msra.mxu0 %v844
    %891 = vmatpush.msra.mxu0 %v843
    %892 = vmatmul.f32.gmra.mxu0 %v854
    %v893 = vpop.f32.mrf.mxu0
    %v894 = vadd.f32 %v874, %v893
    %895 = vdwg.mxu0
    %v897 = vsel %vm424, %v456, 0
    %899 = vmatpush.msra.mxu0 %v472
    %900 = vmatpush.msra.mxu0 %v471
    %901 = vmatpush.msra.mxu0 %v470
    %902 = vmatpush.msra.mxu0 %v469
    %903 = vmatpush.msra.mxu0 %v468
    %904 = vmatpush.msra.mxu0 %v467
    %905 = vmatpush.msra.mxu0 %v466
    %906 = vmatpush.msra.mxu0 %v465
    %907 = vmatpush.msra.mxu0 %v464
    %908 = vmatpush.msra.mxu0 %v463
    %909 = vmatpush.msra.mxu0 %v462
    %910 = vmatpush.msra.mxu0 %v461
    %911 = vmatpush.msra.mxu0 %v460
    %912 = vmatpush.msra.mxu0 %v459
    %913 = vmatpush.msra.mxu0 %v458
    %914 = vmatpush.msra.mxu0 %v457
    %915 = vmatmul.f32.gmra.mxu0 %v443
    %v916 = vpop.f32.mrf.mxu0
    %v917 = vadd.f32 %v894, %v916
    %918 = vdwg.mxu0
    %919 = vmatpush.msra.mxu0 0.0
    %920 = vmatpush.msra.mxu0 0.0
    %921 = vmatpush.msra.mxu0 0.0
    %922 = vmatpush.msra.mxu0 0.0
    %923 = vmatpush.msra.mxu0 0.0
    %924 = vmatpush.msra.mxu0 0.0
    %925 = vmatpush.msra.mxu0 %v482
    %926 = vmatpush.msra.mxu0 %v481
    %927 = vmatpush.msra.mxu0 %v480
    %928 = vmatpush.msra.mxu0 %v479
    %929 = vmatpush.msra.mxu0 %v478
    %930 = vmatpush.msra.mxu0 %v477
    %931 = vmatpush.msra.mxu0 %v476
    %932 = vmatpush.msra.mxu0 %v475
    %933 = vmatpush.msra.mxu0 %v474
    %934 = vmatpush.msra.mxu0 %v473
    %935 = vmatmul.f32.gmra.mxu0 %v897
    %v936 = vpop.f32.mrf.mxu0
    %v937 = vadd.f32 %v917, %v936
    %938 = vdwg.mxu0
    %v939 = vmul.f32 %v787, %v787
    %v940 = vmul.f32 %v788, %v788
    %v941 = vmul.f32 %v789, %v789
    %v942 = vmul.f32 %v790, %v790
    %v943 = vmul.f32 %v791, %v791
    %v944 = vmul.f32 %v792, %v792
    %v945 = vmul.f32 %v793, %v793
    %v946 = vmul.f32 %v794, %v794
    %v947 = vadd.f32 %v939, %v941
    %v948 = vadd.f32 %v947, %v943
    %v949 = vsel %vm435, %v945, 0.0
    %v950 = vadd.f32 %v948, %v949
    %v951 = vrot.slane %v950, 4
    %v952 = vadd.f32 %v950, %v951
    %v953 = vrot.slane %v952, 2
    %v954 = vadd.f32 %v952, %v953
    %v955 = vrot.slane %v954, 1
    %v956 = vadd.f32 %v954, %v955
    %v957 = vsel %vm424, %v940, 0.0
    %v958 = vsel %vm424, %v942, 0.0
    %v959 = vadd.f32 %v957, %v958
    %v960 = vsel %vm424, %v944, 0.0
    %v961 = vadd.f32 %v959, %v960
    %v962 = vsel %vm431, %v946, 0.0
    %v963 = vadd.f32 %v961, %v962
    %v964 = vrot.slane %v963, 4
    %v965 = vadd.f32 %v963, %v964
    %v966 = vrot.slane %v965, 2
    %v967 = vadd.f32 %v965, %v966
    %v968 = vrot.slane %v967, 1
    %v969 = vadd.f32 %v967, %v968
    %v971 = vsel %vm424, %v969, 0
    %973 = vmatpush.msra.mxu0 %v842
    %974 = vmatpush.msra.mxu0 %v841
    %975 = vmatpush.msra.mxu0 %v840
    %976 = vmatpush.msra.mxu0 %v839
    %977 = vmatpush.msra.mxu0 %v838
    %978 = vmatpush.msra.mxu0 %v837
    %979 = vmatpush.msra.mxu0 %v836
    %980 = vmatpush.msra.mxu0 %v835
    %981 = vmatpush.msra.mxu0 %v834
    %982 = vmatpush.msra.mxu0 %v833
    %983 = vmatpush.msra.mxu0 %v832
    %984 = vmatpush.msra.mxu0 %v831
    %985 = vmatpush.msra.mxu0 %v830
    %986 = vmatpush.msra.mxu0 %v829
    %987 = vmatpush.msra.mxu0 %v828
    %988 = vmatpush.msra.mxu0 %v827
    %989 = vmatmul.f32.gmra.mxu0 %v956
    %v990 = vpop.f32.mrf.mxu0
    %v991 = vadd.f32 0.0, %v990
    %992 = vdwg.mxu0
    %993 = vmatpush.msra.mxu0 0.0
    %994 = vmatpush.msra.mxu0 0.0
    %995 = vmatpush.msra.mxu0 0.0
    %996 = vmatpush.msra.mxu0 0.0
    %997 = vmatpush.msra.mxu0 0.0
    %998 = vmatpush.msra.mxu0 0.0
    %999 = vmatpush.msra.mxu0 %v852
    %1000 = vmatpush.msra.mxu0 %v851
    %1001 = vmatpush.msra.mxu0 %v850
    %1002 = vmatpush.msra.mxu0 %v849
    %1003 = vmatpush.msra.mxu0 %v848
    %1004 = vmatpush.msra.mxu0 %v847
    %1005 = vmatpush.msra.mxu0 %v846
    %1006 = vmatpush.msra.mxu0 %v845
    %1007 = vmatpush.msra.mxu0 %v844
    %1008 = vmatpush.msra.mxu0 %v843
    %1009 = vmatmul.f32.gmra.mxu0 %v971
    %v1010 = vpop.f32.mrf.mxu0
    %v1011 = vadd.f32 %v991, %v1010
    %1012 = vdwg.mxu0
    %v1014 = vsel %vm424, %v513, 0
    %1016 = vmatpush.msra.mxu0 %v472
    %1017 = vmatpush.msra.mxu0 %v471
    %1018 = vmatpush.msra.mxu0 %v470
    %1019 = vmatpush.msra.mxu0 %v469
    %1020 = vmatpush.msra.mxu0 %v468
    %1021 = vmatpush.msra.mxu0 %v467
    %1022 = vmatpush.msra.mxu0 %v466
    %1023 = vmatpush.msra.mxu0 %v465
    %1024 = vmatpush.msra.mxu0 %v464
    %1025 = vmatpush.msra.mxu0 %v463
    %1026 = vmatpush.msra.mxu0 %v462
    %1027 = vmatpush.msra.mxu0 %v461
    %1028 = vmatpush.msra.mxu0 %v460
    %1029 = vmatpush.msra.mxu0 %v459
    %1030 = vmatpush.msra.mxu0 %v458
    %1031 = vmatpush.msra.mxu0 %v457
    %1032 = vmatmul.f32.gmra.mxu0 %v500
    %v1033 = vpop.f32.mrf.mxu0
    %v1034 = vadd.f32 %v1011, %v1033
    %1035 = vdwg.mxu0
    %1036 = vmatpush.msra.mxu0 0.0
    %1037 = vmatpush.msra.mxu0 0.0
    %1038 = vmatpush.msra.mxu0 0.0
    %1039 = vmatpush.msra.mxu0 0.0
    %1040 = vmatpush.msra.mxu0 0.0
    %1041 = vmatpush.msra.mxu0 0.0
    %1042 = vmatpush.msra.mxu0 %v482
    %1043 = vmatpush.msra.mxu0 %v481
    %1044 = vmatpush.msra.mxu0 %v480
    %1045 = vmatpush.msra.mxu0 %v479
    %1046 = vmatpush.msra.mxu0 %v478
    %1047 = vmatpush.msra.mxu0 %v477
    %1048 = vmatpush.msra.mxu0 %v476
    %1049 = vmatpush.msra.mxu0 %v475
    %1050 = vmatpush.msra.mxu0 %v474
    %1051 = vmatpush.msra.mxu0 %v473
    %1052 = vmatmul.f32.gmra.mxu0 %v1014
    %v1053 = vpop.f32.mrf.mxu0
    %v1054 = vadd.f32 %v1034, %v1053
    %1055 = vdwg.mxu0
    %v1056 = vmul.f32 %v937, 0.000739645
    %v1057 = vmul.f32 %v1054, 0.000739645
    %v1058 = vmul.f32 %v1056, %v1056
    %v1059 = vsub.f32 %v1057, %v1058
    %v1060 = vld [vmem:[%s9] sm:$0x1]
    %v1061 = vadd.f32 %v1059, 1e-05
    %v1062 = vrsqrt.pop %v1061
    %v1063 = vmul.f32 %v1062, %v1061
    %v1064 = vmul.f32 %v1063, %v1062
    %v1065 = vmul.f32 0.5, %v1064
    %v1066 = vsub.f32 1.5, %v1065
    %v1067 = vmul.f32 %v1062, %v1066
    %vm1068 = vweird.f32 %v1061
    %vm1069 = vweird.f32 %v1062
    %vm1070 = vmor %vm1068, %vm1069
    %v1071 = vsel %vm1070, %v1062, %v1067
    %v1072 = vmul.f32 %v1060, %v1071
    %v1073 = vld [vmem:[%s11] sm:$0x1]
    %v1074 = vmul.f32 %v1056, %v1072
    %v1075 = vsub.f32 %v1073, %v1074
    %v1076 = vld [vmem:[%s7] sm:$0xff]
    %v1077 = vld [vmem:[%s7 + $0x8] sm:$0xff]
    %vm1078 = vcmask 64512
    %v1080 = vsel %vm1078, %v1072, 0
    %1082 = vmatpush.msra.mxu0 0.0
    %1083 = vmatpush.msra.mxu0 0.0
    %1084 = vmatpush.msra.mxu0 0.0
    %1085 = vmatpush.msra.mxu0 0.0
    %1086 = vmatpush.msra.mxu0 0.0
    %1087 = vmatpush.msra.mxu0 0.0
    %1088 = vmatpush.msra.mxu0 0.0
    %1089 = vmatpush.msra.mxu0 0.0
    %1090 = vmatpush.msra.mxu0 0.0
    %1091 = vmatpush.msra.mxu0 0.0
    %1092 = vmatpush.msra.mxu0 0.0
    %1093 = vmatpush.msra.mxu0 0.0
    %1094 = vmatpush.msra.mxu0 0.0
    %1095 = vmatpush.msra.mxu0 0.0
    %1096 = vmatpush.msra.mxu0 0.0
    %1097 = vmatpush.msra.mxu0 %v1076
    %1098 = vmatmul.f32.gmra.mxu0 %v1080
    %v1099 = vpop.f32.mrf.mxu0
    %v1100 = vadd.f32 0.0, %v1099
    %1101 = vdwg.mxu0
    %1102 = vmatpush.msra.mxu0 0.0
    %1103 = vmatpush.msra.mxu0 0.0
    %1104 = vmatpush.msra.mxu0 0.0
    %1105 = vmatpush.msra.mxu0 0.0
    %1106 = vmatpush.msra.mxu0 0.0
    %1107 = vmatpush.msra.mxu0 0.0
    %1108 = vmatpush.msra.mxu0 0.0
    %1109 = vmatpush.msra.mxu0 0.0
    %1110 = vmatpush.msra.mxu0 0.0
    %1111 = vmatpush.msra.mxu0 0.0
    %1112 = vmatpush.msra.mxu0 0.0
    %1113 = vmatpush.msra.mxu0 0.0
    %1114 = vmatpush.msra.mxu0 0.0
    %1115 = vmatpush.msra.mxu0 0.0
    %1116 = vmatpush.msra.mxu0 0.0
    %1117 = vmatpush.msra.mxu0 %v1077
    %1118 = vmatmul.f32.gmra.mxu0 %v1080
    %v1119 = vpop.f32.mrf.mxu0
    %v1120 = vadd.f32 0.0, %v1119
    %1121 = vdwg.mxu0
    %v1123 = vsel %vm1078, %v1075, 0
    %1125 = vmatpush.msra.mxu0 0.0
    %1126 = vmatpush.msra.mxu0 0.0
    %1127 = vmatpush.msra.mxu0 0.0
    %1128 = vmatpush.msra.mxu0 0.0
    %1129 = vmatpush.msra.mxu0 0.0
    %1130 = vmatpush.msra.mxu0 0.0
    %1131 = vmatpush.msra.mxu0 0.0
    %1132 = vmatpush.msra.mxu0 0.0
    %1133 = vmatpush.msra.mxu0 0.0
    %1134 = vmatpush.msra.mxu0 0.0
    %1135 = vmatpush.msra.mxu0 0.0
    %1136 = vmatpush.msra.mxu0 0.0
    %1137 = vmatpush.msra.mxu0 0.0
    %1138 = vmatpush.msra.mxu0 0.0
    %1139 = vmatpush.msra.mxu0 0.0
    %1140 = vmatpush.msra.mxu0 %v1076
    %1141 = vmatmul.f32.gmra.mxu0 %v1123
    %v1142 = vpop.f32.mrf.mxu0
    %v1143 = vadd.f32 0.0, %v1142
    %1144 = vdwg.mxu0
    %1145 = vmatpush.msra.mxu0 0.0
    %1146 = vmatpush.msra.mxu0 0.0
    %1147 = vmatpush.msra.mxu0 0.0
    %1148 = vmatpush.msra.mxu0 0.0
    %1149 = vmatpush.msra.mxu0 0.0
    %1150 = vmatpush.msra.mxu0 0.0
    %1151 = vmatpush.msra.mxu0 0.0
    %1152 = vmatpush.msra.mxu0 0.0
    %1153 = vmatpush.msra.mxu0 0.0
    %1154 = vmatpush.msra.mxu0 0.0
    %1155 = vmatpush.msra.mxu0 0.0
    %1156 = vmatpush.msra.mxu0 0.0
    %1157 = vmatpush.msra.mxu0 0.0
    %1158 = vmatpush.msra.mxu0 0.0
    %1159 = vmatpush.msra.mxu0 0.0
    %1160 = vmatpush.msra.mxu0 %v1077
    %1161 = vmatmul.f32.gmra.mxu0 %v1123
    %v1162 = vpop.f32.mrf.mxu0
    %v1163 = vadd.f32 0.0, %v1162
    %1164 = vdwg.mxu0
    %v1165 = vld [vmem:[#allocation2] sm:$0xff]
    %v1166 = vld [vmem:[#allocation2 + $0x8] sm:$0xff]
    %v1167 = vld [vmem:[#allocation2 + $0x10] sm:$0xff]
    %v1168 = vld [vmem:[#allocation2 + $0x18] sm:$0xff]
    %v1169 = vld [vmem:[#allocation2 + $0x20] sm:$0xff]
    %v1170 = vld [vmem:[#allocation2 + $0x28] sm:$0xff]
    %v1171 = vld [vmem:[#allocation2 + $0x30] sm:$0x3]
    %v1172 = vld [vmem:[#allocation2 + $0x38] sm:$0x3]
    %v1173 = vperm.slane %v1100, 0
    %v1174 = vperm.slane %v1120, 0
    %v1175 = vmul.f32 %v1165, %v1173
    %v1176 = vmul.f32 %v1166, %v1174
    %v1177 = vmul.f32 %v1167, %v1173
    %v1178 = vmul.f32 %v1168, %v1174
    %v1179 = vmul.f32 %v1169, %v1173
    %v1180 = vmul.f32 %v1170, %v1174
    %v1181 = vmul.f32 %v1171, %v1173
    %v1182 = vmul.f32 %v1172, %v1174
    %v1183 = vperm.slane %v1143, 0
    %v1184 = vperm.slane %v1163, 0
    %v1185 = vadd.f32 %v1175, %v1183
    %v1186 = vadd.f32 %v1176, %v1184
    %v1187 = vadd.f32 %v1177, %v1183
    %v1188 = vadd.f32 %v1178, %v1184
    %v1189 = vadd.f32 %v1179, %v1183
    %v1190 = vadd.f32 %v1180, %v1184
    %v1191 = vadd.f32 %v1181, %v1183
    %v1192 = vadd.f32 %v1182, %v1184
    %1193 = vst [vmem:[#allocation2] sm:$0xff] %v1185
    %1194 = vst.msk [vmem:[#allocation2 + $0x8] sm:$0xff] %vm424, %v1186
    %1195 = vst [vmem:[#allocation2 + $0x10] sm:$0xff] %v1187
    %1196 = vst.msk [vmem:[#allocation2 + $0x18] sm:$0xff] %vm424, %v1188
    %1197 = vst [vmem:[#allocation2 + $0x20] sm:$0xff] %v1189
    %1198 = vst.msk [vmem:[#allocation2 + $0x28] sm:$0xff] %vm424, %v1190
    %1199 = vst [vmem:[#allocation2 + $0x30] sm:$0x3] %v1191
    %1200 = vst.msk [vmem:[#allocation2 + $0x38] sm:$0x3] %vm431, %v1192
    %v1201 = vld [vmem:[%s795] sm:$0xff]
    %v1202 = vld [vmem:[%s795 + $0x8] sm:$0xff]
    %v1203 = vld [vmem:[%s795 + $0x10] sm:$0xff]
    %v1204 = vld [vmem:[%s795 + $0x18] sm:$0xff]
    %v1205 = vld [vmem:[%s795 + $0x20] sm:$0xff]
    %v1206 = vld [vmem:[%s795 + $0x28] sm:$0xff]
    %v1207 = vld [vmem:[%s795 + $0x30] sm:$0x3]
    %v1208 = vld [vmem:[%s795 + $0x38] sm:$0x3]
    %v1209 = vmul.f32 %v1201, %v1173
    %v1210 = vmul.f32 %v1202, %v1174
    %v1211 = vmul.f32 %v1203, %v1173
    %v1212 = vmul.f32 %v1204, %v1174
    %v1213 = vmul.f32 %v1205, %v1173
    %v1214 = vmul.f32 %v1206, %v1174
    %v1215 = vmul.f32 %v1207, %v1173
    %v1216 = vmul.f32 %v1208, %v1174
    %v1217 = vadd.f32 %v1209, %v1183
    %v1218 = vadd.f32 %v1210, %v1184
    %v1219 = vadd.f32 %v1211, %v1183
    %v1220 = vadd.f32 %v1212, %v1184
    %v1221 = vadd.f32 %v1213, %v1183
    %v1222 = vadd.f32 %v1214, %v1184
    %v1223 = vadd.f32 %v1215, %v1183
    %v1224 = vadd.f32 %v1216, %v1184
    %1225 = vst [vmem:[%s795] sm:$0xff] %v1217
    %1226 = vst.msk [vmem:[%s795 + $0x8] sm:$0xff] %vm424, %v1218
    %1227 = vst [vmem:[%s795 + $0x10] sm:$0xff] %v1219
    %1228 = vst.msk [vmem:[%s795 + $0x18] sm:$0xff] %vm424, %v1220
    %1229 = vst [vmem:[%s795 + $0x20] sm:$0xff] %v1221
    %1230 = vst.msk [vmem:[%s795 + $0x28] sm:$0xff] %vm424, %v1222
    %1231 = vst [vmem:[%s795 + $0x30] sm:$0x3] %v1223
    %1232 = vst.msk [vmem:[%s795 + $0x38] sm:$0x3] %vm431, %v1224
    %v1233 = vld [vmem:[#allocation2] sm:$0xff]
    %v1234 = vld [vmem:[#allocation2 + $0x8] sm:$0xff]
    %v1235 = vld [vmem:[#allocation2 + $0x10] sm:$0xff]
    %v1236 = vld [vmem:[#allocation2 + $0x18] sm:$0xff]
    %v1237 = vld [vmem:[#allocation2 + $0x20] sm:$0xff]
    %v1238 = vld [vmem:[#allocation2 + $0x28] sm:$0xff]
    %v1239 = vld [vmem:[%s13] sm:$0xff]
    %v1240 = vld [vmem:[%s13 + $0x8] sm:$0xff]
    %v1241 = vld [vmem:[%s13 + $0x10] sm:$0xff]
    %v1242 = vld [vmem:[%s13 + $0x18] sm:$0xff]
    %v1243 = vld [vmem:[%s13 + $0x20] sm:$0xff]
    %v1244 = vld [vmem:[%s13 + $0x28] sm:$0xff]
    %v1245 = vld [vmem:[%s13 + $0x30] sm:$0xff]
    %v1246 = vld [vmem:[%s13 + $0x38] sm:$0xff]
    %v1247 = vld [vmem:[%s13 + $0x40] sm:$0xff]
    %v1248 = vld [vmem:[%s13 + $0x48] sm:$0xff]
    %v1249 = vld [vmem:[%s13 + $0x50] sm:$0xff]
    %v1250 = vld [vmem:[%s13 + $0x58] sm:$0xff]
    %v1251 = vld [vmem:[%s13 + $0x60] sm:$0xff]
    %v1252 = vld [vmem:[%s13 + $0x68] sm:$0xff]
    %v1253 = vld [vmem:[%s13 + $0x70] sm:$0xff]
    %v1254 = vld [vmem:[%s13 + $0x78] sm:$0xff]
    %v1255 = vld [vmem:[%s13 + $0x80] sm:$0xff]
    %v1256 = vld [vmem:[%s13 + $0x88] sm:$0xff]
    %v1257 = vld [vmem:[%s13 + $0x90] sm:$0xff]
    %v1258 = vld [vmem:[%s13 + $0x98] sm:$0xff]
    %v1259 = vld [vmem:[%s13 + $0xa0] sm:$0xff]
    %v1260 = vld [vmem:[%s13 + $0xa8] sm:$0xff]
    %v1261 = vld [vmem:[%s13 + $0xb0] sm:$0xff]
    %v1262 = vld [vmem:[%s13 + $0xb8] sm:$0xff]
    %v1263 = vld [vmem:[%s13 + $0xc0] sm:$0xff]
    %v1264 = vld [vmem:[%s13 + $0xc8] sm:$0xff]
    %v1265 = vld [vmem:[%s13 + $0xd0] sm:$0xff]
    %v1266 = vld [vmem:[%s13 + $0xd8] sm:$0xff]
    %v1267 = vld [vmem:[%s13 + $0xe0] sm:$0xff]
    %v1268 = vld [vmem:[%s13 + $0xe8] sm:$0xff]
    %v1269 = vld [vmem:[%s13 + $0xf0] sm:$0xff]
    %v1270 = vld [vmem:[%s13 + $0xf8] sm:$0xff]
    %v1271 = vld [vmem:[%s13 + $0x100] sm:$0xff]
    %v1272 = vld [vmem:[%s13 + $0x108] sm:$0xff]
    %v1273 = vld [vmem:[%s13 + $0x110] sm:$0xff]
    %v1274 = vld [vmem:[%s13 + $0x118] sm:$0xff]
    %v1275 = vld [vmem:[%s13 + $0x120] sm:$0xff]
    %v1276 = vld [vmem:[%s13 + $0x128] sm:$0xff]
    %v1277 = vld [vmem:[%s13 + $0x130] sm:$0xff]
    %v1278 = vld [vmem:[%s13 + $0x138] sm:$0xff]
    %v1279 = vld [vmem:[%s13 + $0x140] sm:$0xff]
    %v1280 = vld [vmem:[%s13 + $0x148] sm:$0xff]
    %v1281 = vld [vmem:[%s13 + $0x150] sm:$0xff]
    %v1282 = vld [vmem:[%s13 + $0x158] sm:$0xff]
    %v1283 = vld [vmem:[%s13 + $0x160] sm:$0xff]
    %v1284 = vld [vmem:[%s13 + $0x168] sm:$0xff]
    %v1285 = vld [vmem:[%s13 + $0x170] sm:$0xff]
    %v1286 = vld [vmem:[%s13 + $0x178] sm:$0xff]
    %v1287 = vld [vmem:[%s13 + $0x180] sm:$0xff]
    %v1288 = vld [vmem:[%s13 + $0x188] sm:$0xff]
    %v1289 = vld [vmem:[%s13 + $0x190] sm:$0xff]
    %v1290 = vld [vmem:[%s13 + $0x198] sm:$0xff]
    %v1291 = vld [vmem:[%s13 + $0x1a0] sm:$0xff]
    %v1292 = vld [vmem:[%s13 + $0x1a8] sm:$0xff]
    %v1293 = vld [vmem:[%s13 + $0x1b0] sm:$0xff]
    %v1294 = vld [vmem:[%s13 + $0x1b8] sm:$0xff]
    %v1295 = vld [vmem:[%s13 + $0x1c0] sm:$0xff]
    %v1296 = vld [vmem:[%s13 + $0x1c8] sm:$0xff]
    %v1297 = vld [vmem:[%s13 + $0x1d0] sm:$0xff]
    %v1298 = vld [vmem:[%s13 + $0x1d8] sm:$0xff]
    %v1299 = vld [vmem:[%s13 + $0x1e0] sm:$0xff]
    %v1300 = vld [vmem:[%s13 + $0x1e8] sm:$0xff]
    %v1301 = vld [vmem:[%s13 + $0x1f0] sm:$0xff]
    %v1302 = vld [vmem:[%s13 + $0x1f8] sm:$0xff]
    %v1303 = vld [vmem:[%s13 + $0x200] sm:$0xff]
    %v1304 = vld [vmem:[%s13 + $0x208] sm:$0xff]
    %v1305 = vld [vmem:[%s13 + $0x210] sm:$0xff]
    %v1306 = vld [vmem:[%s13 + $0x218] sm:$0xff]
    %v1307 = vld [vmem:[%s13 + $0x220] sm:$0xff]
    %v1308 = vld [vmem:[%s13 + $0x228] sm:$0xff]
    %v1309 = vld [vmem:[%s13 + $0x230] sm:$0xff]
    %v1310 = vld [vmem:[%s13 + $0x238] sm:$0xff]
    %v1311 = vld [vmem:[%s13 + $0x240] sm:$0xff]
    %v1312 = vld [vmem:[%s13 + $0x248] sm:$0xff]
    %v1313 = vld [vmem:[%s13 + $0x250] sm:$0xff]
    %v1314 = vld [vmem:[%s13 + $0x258] sm:$0xff]
    %v1315 = vld [vmem:[%s13 + $0x260] sm:$0xff]
    %v1316 = vld [vmem:[%s13 + $0x268] sm:$0xff]
    %v1317 = vld [vmem:[#allocation2] sm:$0xfe]
    %v1318 = vld [vmem:[#allocation2 + $0x8] sm:$0xfe]
    %v1319 = vld [vmem:[#allocation2 + $0x30] sm:$0x1]
    %v1320 = vld [vmem:[#allocation2 + $0x38] sm:$0x1]
    %s1321 = scalar_lea.vmem %s13, 624
    %v1322 = vld [vmem:[%s1321] sm:$0xff]
    %v1323 = vld [vmem:[%s1321 + $0x8] sm:$0xff]
    %v1324 = vld [vmem:[%s1321 + $0x10] sm:$0xff]
    %v1325 = vld [vmem:[%s1321 + $0x18] sm:$0xff]
    %v1326 = vld [vmem:[%s1321 + $0x20] sm:$0xff]
    %v1327 = vld [vmem:[%s1321 + $0x28] sm:$0xff]
    %v1328 = vld [vmem:[%s1321 + $0x30] sm:$0xff]
    %v1329 = vld [vmem:[%s1321 + $0x38] sm:$0xff]
    %v1330 = vld [vmem:[%s1321 + $0x40] sm:$0xff]
    %v1331 = vld [vmem:[%s1321 + $0x48] sm:$0xff]
    %v1332 = vld [vmem:[%s1321 + $0x50] sm:$0xff]
    %v1333 = vld [vmem:[%s1321 + $0x58] sm:$0xff]
    %v1334 = vld [vmem:[%s1321 + $0x60] sm:$0xff]
    %v1335 = vld [vmem:[%s1321 + $0x68] sm:$0xff]
    %v1336 = vld [vmem:[%s1321 + $0x70] sm:$0xff]
    %v1337 = vld [vmem:[%s1321 + $0x78] sm:$0xff]
    %v1338 = vld [vmem:[%s1321 + $0x80] sm:$0xff]
    %v1339 = vld [vmem:[%s1321 + $0x88] sm:$0xff]
    %v1340 = vld [vmem:[%s1321 + $0x90] sm:$0xff]
    %v1341 = vld [vmem:[%s1321 + $0x98] sm:$0xff]
    %v1342 = vld [vmem:[%s1321 + $0xa0] sm:$0xff]
    %v1343 = vld [vmem:[%s1321 + $0xa8] sm:$0xff]
    %v1344 = vld [vmem:[%s1321 + $0xb0] sm:$0xff]
    %v1345 = vld [vmem:[%s1321 + $0xb8] sm:$0xff]
    %v1346 = vld [vmem:[%s1321 + $0xc0] sm:$0xff]
    %v1347 = vld [vmem:[%s1321 + $0xc8] sm:$0xff]
    %v1348 = vld [vmem:[%s1321 + $0xd0] sm:$0xff]
    %v1349 = vld [vmem:[%s1321 + $0xd8] sm:$0xff]
    %v1350 = vld [vmem:[%s1321 + $0xe0] sm:$0xff]
    %v1351 = vld [vmem:[%s1321 + $0xe8] sm:$0xff]
    %v1352 = vld [vmem:[%s1321 + $0xf0] sm:$0xff]
    %v1353 = vld [vmem:[%s1321 + $0xf8] sm:$0xff]
    %v1354 = vld [vmem:[%s1321 + $0x100] sm:$0xff]
    %v1355 = vld [vmem:[%s1321 + $0x108] sm:$0xff]
    %v1356 = vld [vmem:[%s1321 + $0x110] sm:$0xff]
    %v1357 = vld [vmem:[%s1321 + $0x118] sm:$0xff]
    %v1358 = vld [vmem:[%s1321 + $0x120] sm:$0xff]
    %v1359 = vld [vmem:[%s1321 + $0x128] sm:$0xff]
    %v1360 = vld [vmem:[%s1321 + $0x130] sm:$0xff]
    %v1361 = vld [vmem:[%s1321 + $0x138] sm:$0xff]
    %v1362 = vld [vmem:[%s1321 + $0x140] sm:$0xff]
    %v1363 = vld [vmem:[%s1321 + $0x148] sm:$0xff]
    %v1364 = vld [vmem:[%s1321 + $0x150] sm:$0xff]
    %v1365 = vld [vmem:[%s1321 + $0x158] sm:$0xff]
    %v1366 = vld [vmem:[%s1321 + $0x160] sm:$0xff]
    %v1367 = vld [vmem:[%s1321 + $0x168] sm:$0xff]
    %v1368 = vld [vmem:[%s1321 + $0x170] sm:$0xff]
    %v1369 = vld [vmem:[%s1321 + $0x178] sm:$0xff]
    %v1370 = vld [vmem:[%s1321 + $0x180] sm:$0xff]
    %v1371 = vld [vmem:[%s1321 + $0x188] sm:$0xff]
    %v1372 = vld [vmem:[%s1321 + $0x190] sm:$0xff]
    %v1373 = vld [vmem:[%s1321 + $0x198] sm:$0xff]
    %v1374 = vld [vmem:[%s1321 + $0x1a0] sm:$0xff]
    %v1375 = vld [vmem:[%s1321 + $0x1a8] sm:$0xff]
    %v1376 = vld [vmem:[%s1321 + $0x1b0] sm:$0xff]
    %v1377 = vld [vmem:[%s1321 + $0x1b8] sm:$0xff]
    %v1378 = vld [vmem:[%s1321 + $0x1c0] sm:$0xff]
    %v1379 = vld [vmem:[%s1321 + $0x1c8] sm:$0xff]
    %v1380 = vld [vmem:[%s1321 + $0x1d0] sm:$0xff]
    %v1381 = vld [vmem:[%s1321 + $0x1d8] sm:$0xff]
    %v1382 = vld [vmem:[%s1321 + $0x1e0] sm:$0xff]
    %v1383 = vld [vmem:[%s1321 + $0x1e8] sm:$0xff]
    %v1384 = vld [vmem:[%s1321 + $0x1f0] sm:$0xff]
    %v1385 = vld [vmem:[%s1321 + $0x1f8] sm:$0xff]
    %v1386 = vld [vmem:[%s1321 + $0x200] sm:$0xff]
    %v1387 = vld [vmem:[%s1321 + $0x208] sm:$0xff]
    %v1388 = vld [vmem:[%s1321 + $0x210] sm:$0xff]
    %v1389 = vld [vmem:[%s1321 + $0x218] sm:$0xff]
    %v1390 = vld [vmem:[%s1321 + $0x220] sm:$0xff]
    %v1391 = vld [vmem:[%s1321 + $0x228] sm:$0xff]
    %v1392 = vld [vmem:[%s1321 + $0x230] sm:$0xff]
    %v1393 = vld [vmem:[%s1321 + $0x238] sm:$0xff]
    %v1394 = vld [vmem:[%s1321 + $0x240] sm:$0xff]
    %v1395 = vld [vmem:[%s1321 + $0x248] sm:$0xff]
    %v1396 = vld [vmem:[%s1321 + $0x250] sm:$0xff]
    %v1397 = vld [vmem:[%s1321 + $0x258] sm:$0xff]
    %v1398 = vld [vmem:[%s1321 + $0x260] sm:$0xff]
    %v1399 = vld [vmem:[%s1321 + $0x268] sm:$0xff]
    %vm1408 = vcmask 1046528
    %v1409 = vrot.slane %v1317, 1
    %v1410 = vrot.slane %v1235, 1
    %v1411 = vsel %vm1408, %v1409, %v1410
    %v1412 = vrot.slane %v1318, 1
    %v1413 = vrot.slane %v1236, 1
    %v1414 = vsel %vm1408, %v1412, %v1413
    %v1415 = vrot.slane %v1237, 1
    %v1416 = vsel %vm1408, %v1410, %v1415
    %v1417 = vrot.slane %v1238, 1
    %v1418 = vsel %vm1408, %v1413, %v1417
    %v1419 = vrot.slane %v1319, 1
    %v1420 = vsel %vm1408, %v1415, %v1419
    %v1421 = vrot.slane %v1320, 1
    %v1422 = vsel %vm1408, %v1417, %v1421
    %v1426 = vsel %vm424, %v1414, 0
    %v1428 = vsel %vm424, %v1418, 0
    %v1430 = vsel %vm424, %v1422, 0
    %1432 = vmatpush.msra.mxu0 %v1367
    %1433 = vmatpush.msra.mxu0 %v1364
    %1434 = vmatpush.msra.mxu0 %v1361
    %1435 = vmatpush.msra.mxu0 %v1358
    %1436 = vmatpush.msra.mxu0 %v1355
    %1437 = vmatpush.msra.mxu0 %v1352
    %1438 = vmatpush.msra.mxu0 %v1349
    %1439 = vmatpush.msra.mxu0 %v1346
    %1440 = vmatpush.msra.mxu0 %v1343
    %1441 = vmatpush.msra.mxu0 %v1340
    %1442 = vmatpush.msra.mxu0 %v1337
    %1443 = vmatpush.msra.mxu0 %v1334
    %1444 = vmatpush.msra.mxu0 %v1331
    %1445 = vmatpush.msra.mxu0 %v1328
    %1446 = vmatpush.msra.mxu0 %v1325
    %1447 = vmatpush.msra.mxu0 %v1322
    %1448 = vmatmul.f32.gmra.mxu0 %v1411
    %v1449 = vpop.f32.mrf.mxu0
    %v1450 = vadd.f32 0.0, %v1449
    %1451 = vmatmul.f32.gmra.mxu0 %v1416
    %v1452 = vpop.f32.mrf.mxu0
    %v1453 = vadd.f32 0.0, %v1452
    %1454 = vmatmul.f32.gmra.mxu0 %v1420
    %v1455 = vpop.f32.mrf.mxu0
    %v1456 = vadd.f32 0.0, %v1455
    %1457 = vdwg.mxu0
    %1458 = vmatpush.msra.mxu0 0.0
    %1459 = vmatpush.msra.mxu0 0.0
    %1460 = vmatpush.msra.mxu0 0.0
    %1461 = vmatpush.msra.mxu0 0.0
    %1462 = vmatpush.msra.mxu0 0.0
    %1463 = vmatpush.msra.mxu0 0.0
    %1464 = vmatpush.msra.mxu0 %v1397
    %1465 = vmatpush.msra.mxu0 %v1394
    %1466 = vmatpush.msra.mxu0 %v1391
    %1467 = vmatpush.msra.mxu0 %v1388
    %1468 = vmatpush.msra.mxu0 %v1385
    %1469 = vmatpush.msra.mxu0 %v1382
    %1470 = vmatpush.msra.mxu0 %v1379
    %1471 = vmatpush.msra.mxu0 %v1376
    %1472 = vmatpush.msra.mxu0 %v1373
    %1473 = vmatpush.msra.mxu0 %v1370
    %1474 = vmatmul.f32.gmra.mxu0 %v1426
    %v1475 = vpop.f32.mrf.mxu0
    %v1476 = vadd.f32 %v1450, %v1475
    %1477 = vmatmul.f32.gmra.mxu0 %v1428
    %v1478 = vpop.f32.mrf.mxu0
    %v1479 = vadd.f32 %v1453, %v1478
    %1480 = vmatmul.f32.gmra.mxu0 %v1430
    %v1481 = vpop.f32.mrf.mxu0
    %v1482 = vadd.f32 %v1456, %v1481
    %1483 = vdwg.mxu0
    %1484 = vmatpush.msra.mxu0 %v1368
    %1485 = vmatpush.msra.mxu0 %v1365
    %1486 = vmatpush.msra.mxu0 %v1362
    %1487 = vmatpush.msra.mxu0 %v1359
    %1488 = vmatpush.msra.mxu0 %v1356
    %1489 = vmatpush.msra.mxu0 %v1353
    %1490 = vmatpush.msra.mxu0 %v1350
    %1491 = vmatpush.msra.mxu0 %v1347
    %1492 = vmatpush.msra.mxu0 %v1344
    %1493 = vmatpush.msra.mxu0 %v1341
    %1494 = vmatpush.msra.mxu0 %v1338
    %1495 = vmatpush.msra.mxu0 %v1335
    %1496 = vmatpush.msra.mxu0 %v1332
    %1497 = vmatpush.msra.mxu0 %v1329
    %1498 = vmatpush.msra.mxu0 %v1326
    %1499 = vmatpush.msra.mxu0 %v1323
    %1500 = vmatmul.f32.gmra.mxu0 %v1411
    %v1501 = vpop.f32.mrf.mxu0
    %v1502 = vadd.f32 0.0, %v1501
    %1503 = vmatmul.f32.gmra.mxu0 %v1416
    %v1504 = vpop.f32.mrf.mxu0
    %v1505 = vadd.f32 0.0, %v1504
    %1506 = vmatmul.f32.gmra.mxu0 %v1420
    %v1507 = vpop.f32.mrf.mxu0
    %v1508 = vadd.f32 0.0, %v1507
    %1509 = vdwg.mxu0
    %1510 = vmatpush.msra.mxu0 0.0
    %1511 = vmatpush.msra.mxu0 0.0
    %1512 = vmatpush.msra.mxu0 0.0
    %1513 = vmatpush.msra.mxu0 0.0
    %1514 = vmatpush.msra.mxu0 0.0
    %1515 = vmatpush.msra.mxu0 0.0
    %1516 = vmatpush.msra.mxu0 %v1398
    %1517 = vmatpush.msra.mxu0 %v1395
    %1518 = vmatpush.msra.mxu0 %v1392
    %1519 = vmatpush.msra.mxu0 %v1389
    %1520 = vmatpush.msra.mxu0 %v1386
    %1521 = vmatpush.msra.mxu0 %v1383
    %1522 = vmatpush.msra.mxu0 %v1380
    %1523 = vmatpush.msra.mxu0 %v1377
    %1524 = vmatpush.msra.mxu0 %v1374
    %1525 = vmatpush.msra.mxu0 %v1371
    %1526 = vmatmul.f32.gmra.mxu0 %v1426
    %v1527 = vpop.f32.mrf.mxu0
    %v1528 = vadd.f32 %v1502, %v1527
    %1529 = vmatmul.f32.gmra.mxu0 %v1428
    %v1530 = vpop.f32.mrf.mxu0
    %v1531 = vadd.f32 %v1505, %v1530
    %1532 = vmatmul.f32.gmra.mxu0 %v1430
    %v1533 = vpop.f32.mrf.mxu0
    %v1534 = vadd.f32 %v1508, %v1533
    %1535 = vdwg.mxu0
    %1536 = vmatpush.msra.mxu0 %v1369
    %1537 = vmatpush.msra.mxu0 %v1366
    %1538 = vmatpush.msra.mxu0 %v1363
    %1539 = vmatpush.msra.mxu0 %v1360
    %1540 = vmatpush.msra.mxu0 %v1357
    %1541 = vmatpush.msra.mxu0 %v1354
    %1542 = vmatpush.msra.mxu0 %v1351
    %1543 = vmatpush.msra.mxu0 %v1348
    %1544 = vmatpush.msra.mxu0 %v1345
    %1545 = vmatpush.msra.mxu0 %v1342
    %1546 = vmatpush.msra.mxu0 %v1339
    %1547 = vmatpush.msra.mxu0 %v1336
    %1548 = vmatpush.msra.mxu0 %v1333
    %1549 = vmatpush.msra.mxu0 %v1330
    %1550 = vmatpush.msra.mxu0 %v1327
    %1551 = vmatpush.msra.mxu0 %v1324
    %1552 = vmatmul.f32.gmra.mxu0 %v1411
    %v1553 = vpop.f32.mrf.mxu0
    %v1554 = vadd.f32 0.0, %v1553
    %1555 = vmatmul.f32.gmra.mxu0 %v1416
    %v1556 = vpop.f32.mrf.mxu0
    %v1557 = vadd.f32 0.0, %v1556
    %1558 = vmatmul.f32.gmra.mxu0 %v1420
    %v1559 = vpop.f32.mrf.mxu0
    %v1560 = vadd.f32 0.0, %v1559
    %1561 = vdwg.mxu0
    %1562 = vmatpush.msra.mxu0 0.0
    %1563 = vmatpush.msra.mxu0 0.0
    %1564 = vmatpush.msra.mxu0 0.0
    %1565 = vmatpush.msra.mxu0 0.0
    %1566 = vmatpush.msra.mxu0 0.0
    %1567 = vmatpush.msra.mxu0 0.0
    %1568 = vmatpush.msra.mxu0 %v1399
    %1569 = vmatpush.msra.mxu0 %v1396
    %1570 = vmatpush.msra.mxu0 %v1393
    %1571 = vmatpush.msra.mxu0 %v1390
    %1572 = vmatpush.msra.mxu0 %v1387
    %1573 = vmatpush.msra.mxu0 %v1384
    %1574 = vmatpush.msra.mxu0 %v1381
    %1575 = vmatpush.msra.mxu0 %v1378
    %1576 = vmatpush.msra.mxu0 %v1375
    %1577 = vmatpush.msra.mxu0 %v1372
    %1578 = vmatmul.f32.gmra.mxu0 %v1426
    %v1579 = vpop.f32.mrf.mxu0
    %v1580 = vadd.f32 %v1554, %v1579
    %1581 = vmatmul.f32.gmra.mxu0 %v1428
    %v1582 = vpop.f32.mrf.mxu0
    %v1583 = vadd.f32 %v1557, %v1582
    %1584 = vmatmul.f32.gmra.mxu0 %v1430
    %v1585 = vpop.f32.mrf.mxu0
    %v1586 = vadd.f32 %v1560, %v1585
    %1587 = vdwg.mxu0
    %v1589 = vsel %vm424, %v1234, 0
    %v1591 = vsel %vm424, %v1236, 0
    %v1593 = vsel %vm424, %v1238, 0
    %1595 = vmatpush.msra.mxu0 %v1284
    %1596 = vmatpush.msra.mxu0 %v1281
    %1597 = vmatpush.msra.mxu0 %v1278
    %1598 = vmatpush.msra.mxu0 %v1275
    %1599 = vmatpush.msra.mxu0 %v1272
    %1600 = vmatpush.msra.mxu0 %v1269
    %1601 = vmatpush.msra.mxu0 %v1266
    %1602 = vmatpush.msra.mxu0 %v1263
    %1603 = vmatpush.msra.mxu0 %v1260
    %1604 = vmatpush.msra.mxu0 %v1257
    %1605 = vmatpush.msra.mxu0 %v1254
    %1606 = vmatpush.msra.mxu0 %v1251
    %1607 = vmatpush.msra.mxu0 %v1248
    %1608 = vmatpush.msra.mxu0 %v1245
    %1609 = vmatpush.msra.mxu0 %v1242
    %1610 = vmatpush.msra.mxu0 %v1239
    %1611 = vmatmul.f32.gmra.mxu0 %v1233
    %v1612 = vpop.f32.mrf.mxu0
    %v1613 = vadd.f32 %v1476, %v1612
    %1614 = vmatmul.f32.gmra.mxu0 %v1235
    %v1615 = vpop.f32.mrf.mxu0
    %v1616 = vadd.f32 %v1479, %v1615
    %1617 = vmatmul.f32.gmra.mxu0 %v1237
    %v1618 = vpop.f32.mrf.mxu0
    %v1619 = vadd.f32 %v1482, %v1618
    %1620 = vdwg.mxu0
    %1621 = vmatpush.msra.mxu0 0.0
    %1622 = vmatpush.msra.mxu0 0.0
    %1623 = vmatpush.msra.mxu0 0.0
    %1624 = vmatpush.msra.mxu0 0.0
    %1625 = vmatpush.msra.mxu0 0.0
    %1626 = vmatpush.msra.mxu0 0.0
    %1627 = vmatpush.msra.mxu0 %v1314
    %1628 = vmatpush.msra.mxu0 %v1311
    %1629 = vmatpush.msra.mxu0 %v1308
    %1630 = vmatpush.msra.mxu0 %v1305
    %1631 = vmatpush.msra.mxu0 %v1302
    %1632 = vmatpush.msra.mxu0 %v1299
    %1633 = vmatpush.msra.mxu0 %v1296
    %1634 = vmatpush.msra.mxu0 %v1293
    %1635 = vmatpush.msra.mxu0 %v1290
    %1636 = vmatpush.msra.mxu0 %v1287
    %1637 = vmatmul.f32.gmra.mxu0 %v1589
    %v1638 = vpop.f32.mrf.mxu0
    %v1639 = vadd.f32 %v1613, %v1638
    %1640 = vmatmul.f32.gmra.mxu0 %v1591
    %v1641 = vpop.f32.mrf.mxu0
    %v1642 = vadd.f32 %v1616, %v1641
    %1643 = vmatmul.f32.gmra.mxu0 %v1593
    %v1644 = vpop.f32.mrf.mxu0
    %v1645 = vadd.f32 %v1619, %v1644
    %1646 = vdwg.mxu0
    %1647 = vmatpush.msra.mxu0 %v1285
    %1648 = vmatpush.msra.mxu0 %v1282
    %1649 = vmatpush.msra.mxu0 %v1279
    %1650 = vmatpush.msra.mxu0 %v1276
    %1651 = vmatpush.msra.mxu0 %v1273
    %1652 = vmatpush.msra.mxu0 %v1270
    %1653 = vmatpush.msra.mxu0 %v1267
    %1654 = vmatpush.msra.mxu0 %v1264
    %1655 = vmatpush.msra.mxu0 %v1261
    %1656 = vmatpush.msra.mxu0 %v1258
    %1657 = vmatpush.msra.mxu0 %v1255
    %1658 = vmatpush.msra.mxu0 %v1252
    %1659 = vmatpush.msra.mxu0 %v1249
    %1660 = vmatpush.msra.mxu0 %v1246
    %1661 = vmatpush.msra.mxu0 %v1243
    %1662 = vmatpush.msra.mxu0 %v1240
    %1663 = vmatmul.f32.gmra.mxu0 %v1233
    %v1664 = vpop.f32.mrf.mxu0
    %v1665 = vadd.f32 %v1528, %v1664
    %1666 = vmatmul.f32.gmra.mxu0 %v1235
    %v1667 = vpop.f32.mrf.mxu0
    %v1668 = vadd.f32 %v1531, %v1667
    %1669 = vmatmul.f32.gmra.mxu0 %v1237
    %v1670 = vpop.f32.mrf.mxu0
    %v1671 = vadd.f32 %v1534, %v1670
    %1672 = vdwg.mxu0
    %1673 = vmatpush.msra.mxu0 0.0
    %1674 = vmatpush.msra.mxu0 0.0
    %1675 = vmatpush.msra.mxu0 0.0
    %1676 = vmatpush.msra.mxu0 0.0
    %1677 = vmatpush.msra.mxu0 0.0
    %1678 = vmatpush.msra.mxu0 0.0
    %1679 = vmatpush.msra.mxu0 %v1315
    %1680 = vmatpush.msra.mxu0 %v1312
    %1681 = vmatpush.msra.mxu0 %v1309
    %1682 = vmatpush.msra.mxu0 %v1306
    %1683 = vmatpush.msra.mxu0 %v1303
    %1684 = vmatpush.msra.mxu0 %v1300
    %1685 = vmatpush.msra.mxu0 %v1297
    %1686 = vmatpush.msra.mxu0 %v1294
    %1687 = vmatpush.msra.mxu0 %v1291
    %1688 = vmatpush.msra.mxu0 %v1288
    %1689 = vmatmul.f32.gmra.mxu0 %v1589
    %v1690 = vpop.f32.mrf.mxu0
    %v1691 = vadd.f32 %v1665, %v1690
    %1692 = vmatmul.f32.gmra.mxu0 %v1591
    %v1693 = vpop.f32.mrf.mxu0
    %v1694 = vadd.f32 %v1668, %v1693
    %1695 = vmatmul.f32.gmra.mxu0 %v1593
    %v1696 = vpop.f32.mrf.mxu0
    %v1697 = vadd.f32 %v1671, %v1696
    %1698 = vdwg.mxu0
    %1699 = vmatpush.msra.mxu0 %v1286
    %1700 = vmatpush.msra.mxu0 %v1283
    %1701 = vmatpush.msra.mxu0 %v1280
    %1702 = vmatpush.msra.mxu0 %v1277
    %1703 = vmatpush.msra.mxu0 %v1274
    %1704 = vmatpush.msra.mxu0 %v1271
    %1705 = vmatpush.msra.mxu0 %v1268
    %1706 = vmatpush.msra.mxu0 %v1265
    %1707 = vmatpush.msra.mxu0 %v1262
    %1708 = vmatpush.msra.mxu0 %v1259
    %1709 = vmatpush.msra.mxu0 %v1256
    %1710 = vmatpush.msra.mxu0 %v1253
    %1711 = vmatpush.msra.mxu0 %v1250
    %1712 = vmatpush.msra.mxu0 %v1247
    %1713 = vmatpush.msra.mxu0 %v1244
    %1714 = vmatpush.msra.mxu0 %v1241
    %1715 = vmatmul.f32.gmra.mxu0 %v1233
    %v1716 = vpop.f32.mrf.mxu0
    %v1717 = vadd.f32 %v1580, %v1716
    %1718 = vmatmul.f32.gmra.mxu0 %v1235
    %v1719 = vpop.f32.mrf.mxu0
    %v1720 = vadd.f32 %v1583, %v1719
    %1721 = vmatmul.f32.gmra.mxu0 %v1237
    %v1722 = vpop.f32.mrf.mxu0
    %v1723 = vadd.f32 %v1586, %v1722
    %1724 = vdwg.mxu0
    %1725 = vmatpush.msra.mxu0 0.0
    %1726 = vmatpush.msra.mxu0 0.0
    %1727 = vmatpush.msra.mxu0 0.0
    %1728 = vmatpush.msra.mxu0 0.0
    %1729 = vmatpush.msra.mxu0 0.0
    %1730 = vmatpush.msra.mxu0 0.0
    %1731 = vmatpush.msra.mxu0 %v1316
    %1732 = vmatpush.msra.mxu0 %v1313
    %1733 = vmatpush.msra.mxu0 %v1310
    %1734 = vmatpush.msra.mxu0 %v1307
    %1735 = vmatpush.msra.mxu0 %v1304
    %1736 = vmatpush.msra.mxu0 %v1301
    %1737 = vmatpush.msra.mxu0 %v1298
    %1738 = vmatpush.msra.mxu0 %v1295
    %1739 = vmatpush.msra.mxu0 %v1292
    %1740 = vmatpush.msra.mxu0 %v1289
    %1741 = vmatmul.f32.gmra.mxu0 %v1589
    %v1742 = vpop.f32.mrf.mxu0
    %v1743 = vadd.f32 %v1717, %v1742
    %1744 = vmatmul.f32.gmra.mxu0 %v1591
    %v1745 = vpop.f32.mrf.mxu0
    %v1746 = vadd.f32 %v1720, %v1745
    %1747 = vmatmul.f32.gmra.mxu0 %v1593
    %v1748 = vpop.f32.mrf.mxu0
    %v1749 = vadd.f32 %v1723, %v1748
    %1750 = vdwg.mxu0
    %v1751 = vld [vmem:[#allocation2] sm:$0xfc]
    %v1752 = vld [vmem:[#allocation2 + $0x8] sm:$0xfc]
    %v1753 = vld [vmem:[#allocation2 + $0x30] sm:$0x3]
    %v1754 = vld [vmem:[#allocation2 + $0x38] sm:$0x3]
    %s1755 = scalar_lea.vmem %s13, 1248
    %v1756 = vld [vmem:[%s1755] sm:$0xff]
    %v1757 = vld [vmem:[%s1755 + $0x8] sm:$0xff]
    %v1758 = vld [vmem:[%s1755 + $0x10] sm:$0xff]
    %v1759 = vld [vmem:[%s1755 + $0x18] sm:$0xff]
    %v1760 = vld [vmem:[%s1755 + $0x20] sm:$0xff]
    %v1761 = vld [vmem:[%s1755 + $0x28] sm:$0xff]
    %v1762 = vld [vmem:[%s1755 + $0x30] sm:$0xff]
    %v1763 = vld [vmem:[%s1755 + $0x38] sm:$0xff]
    %v1764 = vld [vmem:[%s1755 + $0x40] sm:$0xff]
    %v1765 = vld [vmem:[%s1755 + $0x48] sm:$0xff]
    %v1766 = vld [vmem:[%s1755 + $0x50] sm:$0xff]
    %v1767 = vld [vmem:[%s1755 + $0x58] sm:$0xff]
    %v1768 = vld [vmem:[%s1755 + $0x60] sm:$0xff]
    %v1769 = vld [vmem:[%s1755 + $0x68] sm:$0xff]
    %v1770 = vld [vmem:[%s1755 + $0x70] sm:$0xff]
    %v1771 = vld [vmem:[%s1755 + $0x78] sm:$0xff]
    %v1772 = vld [vmem:[%s1755 + $0x80] sm:$0xff]
    %v1773 = vld [vmem:[%s1755 + $0x88] sm:$0xff]
    %v1774 = vld [vmem:[%s1755 + $0x90] sm:$0xff]
    %v1775 = vld [vmem:[%s1755 + $0x98] sm:$0xff]
    %v1776 = vld [vmem:[%s1755 + $0xa0] sm:$0xff]
    %v1777 = vld [vmem:[%s1755 + $0xa8] sm:$0xff]
    %v1778 = vld [vmem:[%s1755 + $0xb0] sm:$0xff]
    %v1779 = vld [vmem:[%s1755 + $0xb8] sm:$0xff]
    %v1780 = vld [vmem:[%s1755 + $0xc0] sm:$0xff]
    %v1781 = vld [vmem:[%s1755 + $0xc8] sm:$0xff]
    %v1782 = vld [vmem:[%s1755 + $0xd0] sm:$0xff]
    %v1783 = vld [vmem:[%s1755 + $0xd8] sm:$0xff]
    %v1784 = vld [vmem:[%s1755 + $0xe0] sm:$0xff]
    %v1785 = vld [vmem:[%s1755 + $0xe8] sm:$0xff]
    %v1786 = vld [vmem:[%s1755 + $0xf0] sm:$0xff]
    %v1787 = vld [vmem:[%s1755 + $0xf8] sm:$0xff]
    %v1788 = vld [vmem:[%s1755 + $0x100] sm:$0xff]
    %v1789 = vld [vmem:[%s1755 + $0x108] sm:$0xff]
    %v1790 = vld [vmem:[%s1755 + $0x110] sm:$0xff]
    %v1791 = vld [vmem:[%s1755 + $0x118] sm:$0xff]
    %v1792 = vld [vmem:[%s1755 + $0x120] sm:$0xff]
    %v1793 = vld [vmem:[%s1755 + $0x128] sm:$0xff]
    %v1794 = vld [vmem:[%s1755 + $0x130] sm:$0xff]
    %v1795 = vld [vmem:[%s1755 + $0x138] sm:$0xff]
    %v1796 = vld [vmem:[%s1755 + $0x140] sm:$0xff]
    %v1797 = vld [vmem:[%s1755 + $0x148] sm:$0xff]
    %v1798 = vld [vmem:[%s1755 + $0x150] sm:$0xff]
    %v1799 = vld [vmem:[%s1755 + $0x158] sm:$0xff]
    %v1800 = vld [vmem:[%s1755 + $0x160] sm:$0xff]
    %v1801 = vld [vmem:[%s1755 + $0x168] sm:$0xff]
    %v1802 = vld [vmem:[%s1755 + $0x170] sm:$0xff]
    %v1803 = vld [vmem:[%s1755 + $0x178] sm:$0xff]
    %v1804 = vld [vmem:[%s1755 + $0x180] sm:$0xff]
    %v1805 = vld [vmem:[%s1755 + $0x188] sm:$0xff]
    %v1806 = vld [vmem:[%s1755 + $0x190] sm:$0xff]
    %v1807 = vld [vmem:[%s1755 + $0x198] sm:$0xff]
    %v1808 = vld [vmem:[%s1755 + $0x1a0] sm:$0xff]
    %v1809 = vld [vmem:[%s1755 + $0x1a8] sm:$0xff]
    %v1810 = vld [vmem:[%s1755 + $0x1b0] sm:$0xff]
    %v1811 = vld [vmem:[%s1755 + $0x1b8] sm:$0xff]
    %v1812 = vld [vmem:[%s1755 + $0x1c0] sm:$0xff]
    %v1813 = vld [vmem:[%s1755 + $0x1c8] sm:$0xff]
    %v1814 = vld [vmem:[%s1755 + $0x1d0] sm:$0xff]
    %v1815 = vld [vmem:[%s1755 + $0x1d8] sm:$0xff]
    %v1816 = vld [vmem:[%s1755 + $0x1e0] sm:$0xff]
    %v1817 = vld [vmem:[%s1755 + $0x1e8] sm:$0xff]
    %v1818 = vld [vmem:[%s1755 + $0x1f0] sm:$0xff]
    %v1819 = vld [vmem:[%s1755 + $0x1f8] sm:$0xff]
    %v1820 = vld [vmem:[%s1755 + $0x200] sm:$0xff]
    %v1821 = vld [vmem:[%s1755 + $0x208] sm:$0xff]
    %v1822 = vld [vmem:[%s1755 + $0x210] sm:$0xff]
    %v1823 = vld [vmem:[%s1755 + $0x218] sm:$0xff]
    %v1824 = vld [vmem:[%s1755 + $0x220] sm:$0xff]
    %v1825 = vld [vmem:[%s1755 + $0x228] sm:$0xff]
    %v1826 = vld [vmem:[%s1755 + $0x230] sm:$0xff]
    %v1827 = vld [vmem:[%s1755 + $0x238] sm:$0xff]
    %v1828 = vld [vmem:[%s1755 + $0x240] sm:$0xff]
    %v1829 = vld [vmem:[%s1755 + $0x248] sm:$0xff]
    %v1830 = vld [vmem:[%s1755 + $0x250] sm:$0xff]
    %v1831 = vld [vmem:[%s1755 + $0x258] sm:$0xff]
    %v1832 = vld [vmem:[%s1755 + $0x260] sm:$0xff]
    %v1833 = vld [vmem:[%s1755 + $0x268] sm:$0xff]
    %vm1838 = vcmask 1045504
    %v1839 = vrot.slane %v1751, 2
    %v1840 = vrot.slane %v1235, 2
    %v1841 = vsel %vm1838, %v1839, %v1840
    %v1842 = vrot.slane %v1752, 2
    %v1843 = vrot.slane %v1236, 2
    %v1844 = vsel %vm1838, %v1842, %v1843
    %v1845 = vrot.slane %v1237, 2
    %v1846 = vsel %vm1838, %v1840, %v1845
    %v1847 = vrot.slane %v1238, 2
    %v1848 = vsel %vm1838, %v1843, %v1847
    %v1849 = vrot.slane %v1753, 2
    %v1850 = vsel %vm1838, %v1845, %v1849
    %v1851 = vrot.slane %v1754, 2
    %v1852 = vsel %vm1838, %v1847, %v1851
    %v1856 = vsel %vm424, %v1844, 0
    %v1858 = vsel %vm424, %v1848, 0
    %v1860 = vsel %vm424, %v1852, 0
    %1862 = vmatpush.msra.mxu0 %v1801
    %1863 = vmatpush.msra.mxu0 %v1798
    %1864 = vmatpush.msra.mxu0 %v1795
    %1865 = vmatpush.msra.mxu0 %v1792
    %1866 = vmatpush.msra.mxu0 %v1789
    %1867 = vmatpush.msra.mxu0 %v1786
    %1868 = vmatpush.msra.mxu0 %v1783
    %1869 = vmatpush.msra.mxu0 %v1780
    %1870 = vmatpush.msra.mxu0 %v1777
    %1871 = vmatpush.msra.mxu0 %v1774
    %1872 = vmatpush.msra.mxu0 %v1771
    %1873 = vmatpush.msra.mxu0 %v1768
    %1874 = vmatpush.msra.mxu0 %v1765
    %1875 = vmatpush.msra.mxu0 %v1762
    %1876 = vmatpush.msra.mxu0 %v1759
    %1877 = vmatpush.msra.mxu0 %v1756
    %1878 = vmatmul.f32.gmra.mxu0 %v1841
    %v1879 = vpop.f32.mrf.mxu0
    %v1880 = vadd.f32 0.0, %v1879
    %1881 = vmatmul.f32.gmra.mxu0 %v1846
    %v1882 = vpop.f32.mrf.mxu0
    %v1883 = vadd.f32 0.0, %v1882
    %1884 = vmatmul.f32.gmra.mxu0 %v1850
    %v1885 = vpop.f32.mrf.mxu0
    %v1886 = vadd.f32 0.0, %v1885
    %1887 = vdwg.mxu0
    %1888 = vmatpush.msra.mxu0 0.0
    %1889 = vmatpush.msra.mxu0 0.0
    %1890 = vmatpush.msra.mxu0 0.0
    %1891 = vmatpush.msra.mxu0 0.0
    %1892 = vmatpush.msra.mxu0 0.0
    %1893 = vmatpush.msra.mxu0 0.0
    %1894 = vmatpush.msra.mxu0 %v1831
    %1895 = vmatpush.msra.mxu0 %v1828
    %1896 = vmatpush.msra.mxu0 %v1825
    %1897 = vmatpush.msra.mxu0 %v1822
    %1898 = vmatpush.msra.mxu0 %v1819
    %1899 = vmatpush.msra.mxu0 %v1816
    %1900 = vmatpush.msra.mxu0 %v1813
    %1901 = vmatpush.msra.mxu0 %v1810
    %1902 = vmatpush.msra.mxu0 %v1807
    %1903 = vmatpush.msra.mxu0 %v1804
    %1904 = vmatmul.f32.gmra.mxu0 %v1856
    %v1905 = vpop.f32.mrf.mxu0
    %v1906 = vadd.f32 %v1880, %v1905
    %1907 = vmatmul.f32.gmra.mxu0 %v1858
    %v1908 = vpop.f32.mrf.mxu0
    %v1909 = vadd.f32 %v1883, %v1908
    %1910 = vmatmul.f32.gmra.mxu0 %v1860
    %v1911 = vpop.f32.mrf.mxu0
    %v1912 = vadd.f32 %v1886, %v1911
    %1913 = vdwg.mxu0
    %1914 = vmatpush.msra.mxu0 %v1802
    %1915 = vmatpush.msra.mxu0 %v1799
    %1916 = vmatpush.msra.mxu0 %v1796
    %1917 = vmatpush.msra.mxu0 %v1793
    %1918 = vmatpush.msra.mxu0 %v1790
    %1919 = vmatpush.msra.mxu0 %v1787
    %1920 = vmatpush.msra.mxu0 %v1784
    %1921 = vmatpush.msra.mxu0 %v1781
    %1922 = vmatpush.msra.mxu0 %v1778
    %1923 = vmatpush.msra.mxu0 %v1775
    %1924 = vmatpush.msra.mxu0 %v1772
    %1925 = vmatpush.msra.mxu0 %v1769
    %1926 = vmatpush.msra.mxu0 %v1766
    %1927 = vmatpush.msra.mxu0 %v1763
    %1928 = vmatpush.msra.mxu0 %v1760
    %1929 = vmatpush.msra.mxu0 %v1757
    %1930 = vmatmul.f32.gmra.mxu0 %v1841
    %v1931 = vpop.f32.mrf.mxu0
    %v1932 = vadd.f32 0.0, %v1931
    %1933 = vmatmul.f32.gmra.mxu0 %v1846
    %v1934 = vpop.f32.mrf.mxu0
    %v1935 = vadd.f32 0.0, %v1934
    %1936 = vmatmul.f32.gmra.mxu0 %v1850
    %v1937 = vpop.f32.mrf.mxu0
    %v1938 = vadd.f32 0.0, %v1937
    %1939 = vdwg.mxu0
    %1940 = vmatpush.msra.mxu0 0.0
    %1941 = vmatpush.msra.mxu0 0.0
    %1942 = vmatpush.msra.mxu0 0.0
    %1943 = vmatpush.msra.mxu0 0.0
    %1944 = vmatpush.msra.mxu0 0.0
    %1945 = vmatpush.msra.mxu0 0.0
    %1946 = vmatpush.msra.mxu0 %v1832
    %1947 = vmatpush.msra.mxu0 %v1829
    %1948 = vmatpush.msra.mxu0 %v1826
    %1949 = vmatpush.msra.mxu0 %v1823
    %1950 = vmatpush.msra.mxu0 %v1820
    %1951 = vmatpush.msra.mxu0 %v1817
    %1952 = vmatpush.msra.mxu0 %v1814
    %1953 = vmatpush.msra.mxu0 %v1811
    %1954 = vmatpush.msra.mxu0 %v1808
    %1955 = vmatpush.msra.mxu0 %v1805
    %1956 = vmatmul.f32.gmra.mxu0 %v1856
    %v1957 = vpop.f32.mrf.mxu0
    %v1958 = vadd.f32 %v1932, %v1957
    %1959 = vmatmul.f32.gmra.mxu0 %v1858
    %v1960 = vpop.f32.mrf.mxu0
    %v1961 = vadd.f32 %v1935, %v1960
    %1962 = vmatmul.f32.gmra.mxu0 %v1860
    %v1963 = vpop.f32.mrf.mxu0
    %v1964 = vadd.f32 %v1938, %v1963
    %1965 = vdwg.mxu0
    %1966 = vmatpush.msra.mxu0 %v1803
    %1967 = vmatpush.msra.mxu0 %v1800
    %1968 = vmatpush.msra.mxu0 %v1797
    %1969 = vmatpush.msra.mxu0 %v1794
    %1970 = vmatpush.msra.mxu0 %v1791
    %1971 = vmatpush.msra.mxu0 %v1788
    %1972 = vmatpush.msra.mxu0 %v1785
    %1973 = vmatpush.msra.mxu0 %v1782
    %1974 = vmatpush.msra.mxu0 %v1779
    %1975 = vmatpush.msra.mxu0 %v1776
    %1976 = vmatpush.msra.mxu0 %v1773
    %1977 = vmatpush.msra.mxu0 %v1770
    %1978 = vmatpush.msra.mxu0 %v1767
    %1979 = vmatpush.msra.mxu0 %v1764
    %1980 = vmatpush.msra.mxu0 %v1761
    %1981 = vmatpush.msra.mxu0 %v1758
    %1982 = vmatmul.f32.gmra.mxu0 %v1841
    %v1983 = vpop.f32.mrf.mxu0
    %v1984 = vadd.f32 0.0, %v1983
    %1985 = vmatmul.f32.gmra.mxu0 %v1846
    %v1986 = vpop.f32.mrf.mxu0
    %v1987 = vadd.f32 0.0, %v1986
    %1988 = vmatmul.f32.gmra.mxu0 %v1850
    %v1989 = vpop.f32.mrf.mxu0
    %v1990 = vadd.f32 0.0, %v1989
    %1991 = vdwg.mxu0
    %1992 = vmatpush.msra.mxu0 0.0
    %1993 = vmatpush.msra.mxu0 0.0
    %1994 = vmatpush.msra.mxu0 0.0
    %1995 = vmatpush.msra.mxu0 0.0
    %1996 = vmatpush.msra.mxu0 0.0
    %1997 = vmatpush.msra.mxu0 0.0
    %1998 = vmatpush.msra.mxu0 %v1833
    %1999 = vmatpush.msra.mxu0 %v1830
    %2000 = vmatpush.msra.mxu0 %v1827
    %2001 = vmatpush.msra.mxu0 %v1824
    %2002 = vmatpush.msra.mxu0 %v1821
    %2003 = vmatpush.msra.mxu0 %v1818
    %2004 = vmatpush.msra.mxu0 %v1815
    %2005 = vmatpush.msra.mxu0 %v1812
    %2006 = vmatpush.msra.mxu0 %v1809
    %2007 = vmatpush.msra.mxu0 %v1806
    %2008 = vmatmul.f32.gmra.mxu0 %v1856
    %v2009 = vpop.f32.mrf.mxu0
    %v2010 = vadd.f32 %v1984, %v2009
    %2011 = vmatmul.f32.gmra.mxu0 %v1858
    %v2012 = vpop.f32.mrf.mxu0
    %v2013 = vadd.f32 %v1987, %v2012
    %2014 = vmatmul.f32.gmra.mxu0 %v1860
    %v2015 = vpop.f32.mrf.mxu0
    %v2016 = vadd.f32 %v1990, %v2015
    %2017 = vdwg.mxu0
    %v2018 = vadd.f32 %v1639, %v1906
    %v2019 = vadd.f32 %v1691, %v1958
    %v2020 = vadd.f32 %v1743, %v2010
    %v2021 = vadd.f32 %v1642, %v1909
    %v2022 = vadd.f32 %v1694, %v1961
    %v2023 = vadd.f32 %v1746, %v2013
    %v2024 = vadd.f32 %v1645, %v1912
    %v2025 = vadd.f32 %v1697, %v1964
    %v2026 = vadd.f32 %v1749, %v2016
    %v2027 = vmax.f32 %v2018, 0.0
    %v2028 = vmax.f32 %v2019, 0.0
    %v2029 = vmax.f32 %v2020, 0.0
    %v2030 = vmax.f32 %v2021, 0.0
    %v2031 = vmax.f32 %v2022, 0.0
    %v2032 = vmax.f32 %v2023, 0.0
    %v2033 = vmax.f32 %v2024, 0.0
    %v2034 = vmax.f32 %v2025, 0.0
    %v2035 = vmax.f32 %v2026, 0.0
    %2036 = vst [vmem:[#allocation3] sm:$0xff] %v2027
    %2037 = vst [vmem:[#allocation3 + $0x8] sm:$0xff] %v2028
    %vm2038 = vcmask 261120
    %2039 = vst.msk [vmem:[#allocation3 + $0x10] sm:$0xff] %vm2038, %v2029
    %2040 = vst [vmem:[#allocation3 + $0x18] sm:$0xff] %v2030
    %2041 = vst [vmem:[#allocation3 + $0x20] sm:$0xff] %v2031
    %2042 = vst.msk [vmem:[#allocation3 + $0x28] sm:$0xff] %vm2038, %v2032
    %2043 = vst [vmem:[#allocation3 + $0x30] sm:$0xff] %v2033
    %2044 = vst [vmem:[#allocation3 + $0x38] sm:$0xff] %v2034
    %2045 = vst.msk [vmem:[#allocation3 + $0x40] sm:$0xff] %vm2038, %v2035
    %v2046 = vadd.f32 %v2027, %v2030
    %v2047 = vadd.f32 %v2046, %v2033
    %v2048 = vrot.slane %v2047, 4
    %v2049 = vadd.f32 %v2047, %v2048
    %v2050 = vrot.slane %v2049, 2
    %v2051 = vadd.f32 %v2049, %v2050
    %v2052 = vrot.slane %v2051, 1
    %v2053 = vadd.f32 %v2051, %v2052
    %v2054 = vadd.f32 %v2028, %v2031
    %v2055 = vadd.f32 %v2054, %v2034
    %v2056 = vrot.slane %v2055, 4
    %v2057 = vadd.f32 %v2055, %v2056
    %v2058 = vrot.slane %v2057, 2
    %v2059 = vadd.f32 %v2057, %v2058
    %v2060 = vrot.slane %v2059, 1
    %v2061 = vadd.f32 %v2059, %v2060
    %v2062 = vsel %vm2038, %v2029, 0.0
    %v2063 = vsel %vm2038, %v2032, 0.0
    %v2064 = vadd.f32 %v2062, %v2063
    %v2065 = vsel %vm2038, %v2035, 0.0
    %v2066 = vadd.f32 %v2064, %v2065
    %v2067 = vrot.slane %v2066, 4
    %v2068 = vadd.f32 %v2066, %v2067
    %v2069 = vrot.slane %v2068, 2
    %v2070 = vadd.f32 %v2068, %v2069
    %v2071 = vrot.slane %v2070, 1
    %v2072 = vadd.f32 %v2070, %v2071
    %v2073 = vld [vmem:[%s15] sm:$0xff]
    %v2074 = vld [vmem:[%s15 + $0x8] sm:$0xff]
    %v2075 = vld [vmem:[%s15 + $0x10] sm:$0xff]
    %v2076 = vld [vmem:[%s15 + $0x18] sm:$0xff]
    %v2077 = vld [vmem:[%s15 + $0x20] sm:$0xff]
    %v2078 = vld [vmem:[%s15 + $0x28] sm:$0xff]
    %v2079 = vld [vmem:[%s15 + $0x30] sm:$0xff]
    %v2080 = vld [vmem:[%s15 + $0x38] sm:$0xff]
    %v2081 = vld [vmem:[%s15 + $0x40] sm:$0xff]
    %v2082 = vld [vmem:[%s15 + $0x48] sm:$0xff]
    %v2083 = vld [vmem:[%s15 + $0x50] sm:$0xff]
    %v2084 = vld [vmem:[%s15 + $0x58] sm:$0xff]
    %v2085 = vld [vmem:[%s15 + $0x60] sm:$0xff]
    %v2086 = vld [vmem:[%s15 + $0x68] sm:$0xff]
    %v2087 = vld [vmem:[%s15 + $0x70] sm:$0xff]
    %v2088 = vld [vmem:[%s15 + $0x78] sm:$0xff]
    %v2089 = vld [vmem:[%s15 + $0x80] sm:$0xff]
    %v2090 = vld [vmem:[%s15 + $0x88] sm:$0xff]
    %v2091 = vld [vmem:[%s15 + $0x90] sm:$0xff]
    %v2092 = vld [vmem:[%s15 + $0x98] sm:$0xff]
    %v2093 = vld [vmem:[%s15 + $0xa0] sm:$0xff]
    %v2094 = vld [vmem:[%s15 + $0xa8] sm:$0xff]
    %v2095 = vld [vmem:[%s15 + $0xb0] sm:$0xff]
    %v2096 = vld [vmem:[%s15 + $0xb8] sm:$0xff]
    %v2097 = vld [vmem:[%s15 + $0xc0] sm:$0xff]
    %v2098 = vld [vmem:[%s15 + $0xc8] sm:$0xff]
    %v2099 = vld [vmem:[%s15 + $0xd0] sm:$0xff]
    %v2100 = vld [vmem:[%s15 + $0xd8] sm:$0xff]
    %v2101 = vld [vmem:[%s15 + $0xe0] sm:$0xff]
    %v2102 = vld [vmem:[%s15 + $0xe8] sm:$0xff]
    %v2103 = vld [vmem:[%s15 + $0xf0] sm:$0xff]
    %v2104 = vld [vmem:[%s15 + $0xf8] sm:$0xff]
    %v2105 = vld [vmem:[%s15 + $0x100] sm:$0xff]
    %v2106 = vld [vmem:[%s15 + $0x108] sm:$0xff]
    %v2107 = vld [vmem:[%s15 + $0x110] sm:$0xff]
    %v2108 = vld [vmem:[%s15 + $0x118] sm:$0xff]
    %v2109 = vmul.f32 %v2027, %v2027
    %v2110 = vmul.f32 %v2028, %v2028
    %v2111 = vmul.f32 %v2029, %v2029
    %v2112 = vmul.f32 %v2030, %v2030
    %v2113 = vmul.f32 %v2031, %v2031
    %v2114 = vmul.f32 %v2032, %v2032
    %v2115 = vmul.f32 %v2033, %v2033
    %v2116 = vmul.f32 %v2034, %v2034
    %v2117 = vmul.f32 %v2035, %v2035
    %v2118 = vadd.f32 %v2109, %v2112
    %v2119 = vadd.f32 %v2118, %v2115
    %v2120 = vrot.slane %v2119, 4
    %v2121 = vadd.f32 %v2119, %v2120
    %v2122 = vrot.slane %v2121, 2
    %v2123 = vadd.f32 %v2121, %v2122
    %v2124 = vrot.slane %v2123, 1
    %v2125 = vadd.f32 %v2123, %v2124
    %v2126 = vadd.f32 %v2110, %v2113
    %v2127 = vadd.f32 %v2126, %v2116
    %v2128 = vrot.slane %v2127, 4
    %v2129 = vadd.f32 %v2127, %v2128
    %v2130 = vrot.slane %v2129, 2
    %v2131 = vadd.f32 %v2129, %v2130
    %v2132 = vrot.slane %v2131, 1
    %v2133 = vadd.f32 %v2131, %v2132
    %v2134 = vsel %vm2038, %v2111, 0.0
    %v2135 = vsel %vm2038, %v2114, 0.0
    %v2136 = vadd.f32 %v2134, %v2135
    %v2137 = vsel %vm2038, %v2117, 0.0
    %v2138 = vadd.f32 %v2136, %v2137
    %v2139 = vrot.slane %v2138, 4
    %v2140 = vadd.f32 %v2138, %v2139
    %v2141 = vrot.slane %v2140, 2
    %v2142 = vadd.f32 %v2140, %v2141
    %v2143 = vrot.slane %v2142, 1
    %v2144 = vadd.f32 %v2142, %v2143
    %v2145 = vld [vmem:[%s795] sm:$0xff]
    %v2146 = vld [vmem:[%s795 + $0x8] sm:$0xff]
    %v2147 = vld [vmem:[%s795 + $0x10] sm:$0xff]
    %v2148 = vld [vmem:[%s795 + $0x18] sm:$0xff]
    %v2149 = vld [vmem:[%s795 + $0x20] sm:$0xff]
    %v2150 = vld [vmem:[%s795 + $0x28] sm:$0xff]
    %v2151 = vld [vmem:[%s13] sm:$0xff]
    %v2152 = vld [vmem:[%s13 + $0x8] sm:$0xff]
    %v2153 = vld [vmem:[%s13 + $0x10] sm:$0xff]
    %v2154 = vld [vmem:[%s13 + $0x18] sm:$0xff]
    %v2155 = vld [vmem:[%s13 + $0x20] sm:$0xff]
    %v2156 = vld [vmem:[%s13 + $0x28] sm:$0xff]
    %v2157 = vld [vmem:[%s13 + $0x30] sm:$0xff]
    %v2158 = vld [vmem:[%s13 + $0x38] sm:$0xff]
    %v2159 = vld [vmem:[%s13 + $0x40] sm:$0xff]
    %v2160 = vld [vmem:[%s13 + $0x48] sm:$0xff]
    %v2161 = vld [vmem:[%s13 + $0x50] sm:$0xff]
    %v2162 = vld [vmem:[%s13 + $0x58] sm:$0xff]
    %v2163 = vld [vmem:[%s13 + $0x60] sm:$0xff]
    %v2164 = vld [vmem:[%s13 + $0x68] sm:$0xff]
    %v2165 = vld [vmem:[%s13 + $0x70] sm:$0xff]
    %v2166 = vld [vmem:[%s13 + $0x78] sm:$0xff]
    %v2167 = vld [vmem:[%s13 + $0x80] sm:$0xff]
    %v2168 = vld [vmem:[%s13 + $0x88] sm:$0xff]
    %v2169 = vld [vmem:[%s13 + $0x90] sm:$0xff]
    %v2170 = vld [vmem:[%s13 + $0x98] sm:$0xff]
    %v2171 = vld [vmem:[%s13 + $0xa0] sm:$0xff]
    %v2172 = vld [vmem:[%s13 + $0xa8] sm:$0xff]
    %v2173 = vld [vmem:[%s13 + $0xb0] sm:$0xff]
    %v2174 = vld [vmem:[%s13 + $0xb8] sm:$0xff]
    %v2175 = vld [vmem:[%s13 + $0xc0] sm:$0xff]
    %v2176 = vld [vmem:[%s13 + $0xc8] sm:$0xff]
    %v2177 = vld [vmem:[%s13 + $0xd0] sm:$0xff]
    %v2178 = vld [vmem:[%s13 + $0xd8] sm:$0xff]
    %v2179 = vld [vmem:[%s13 + $0xe0] sm:$0xff]
    %v2180 = vld [vmem:[%s13 + $0xe8] sm:$0xff]
    %v2181 = vld [vmem:[%s13 + $0xf0] sm:$0xff]
    %v2182 = vld [vmem:[%s13 + $0xf8] sm:$0xff]
    %v2183 = vld [vmem:[%s13 + $0x100] sm:$0xff]
    %v2184 = vld [vmem:[%s13 + $0x108] sm:$0xff]
    %v2185 = vld [vmem:[%s13 + $0x110] sm:$0xff]
    %v2186 = vld [vmem:[%s13 + $0x118] sm:$0xff]
    %v2187 = vld [vmem:[%s13 + $0x120] sm:$0xff]
    %v2188 = vld [vmem:[%s13 + $0x128] sm:$0xff]
    %v2189 = vld [vmem:[%s13 + $0x130] sm:$0xff]
    %v2190 = vld [vmem:[%s13 + $0x138] sm:$0xff]
    %v2191 = vld [vmem:[%s13 + $0x140] sm:$0xff]
    %v2192 = vld [vmem:[%s13 + $0x148] sm:$0xff]
    %v2193 = vld [vmem:[%s13 + $0x150] sm:$0xff]
    %v2194 = vld [vmem:[%s13 + $0x158] sm:$0xff]
    %v2195 = vld [vmem:[%s13 + $0x160] sm:$0xff]
    %v2196 = vld [vmem:[%s13 + $0x168] sm:$0xff]
    %v2197 = vld [vmem:[%s13 + $0x170] sm:$0xff]
    %v2198 = vld [vmem:[%s13 + $0x178] sm:$0xff]
    %v2199 = vld [vmem:[%s13 + $0x180] sm:$0xff]
    %v2200 = vld [vmem:[%s13 + $0x188] sm:$0xff]
    %v2201 = vld [vmem:[%s13 + $0x190] sm:$0xff]
    %v2202 = vld [vmem:[%s13 + $0x198] sm:$0xff]
    %v2203 = vld [vmem:[%s13 + $0x1a0] sm:$0xff]
    %v2204 = vld [vmem:[%s13 + $0x1a8] sm:$0xff]
    %v2205 = vld [vmem:[%s13 + $0x1b0] sm:$0xff]
    %v2206 = vld [vmem:[%s13 + $0x1b8] sm:$0xff]
    %v2207 = vld [vmem:[%s13 + $0x1c0] sm:$0xff]
    %v2208 = vld [vmem:[%s13 + $0x1c8] sm:$0xff]
    %v2209 = vld [vmem:[%s13 + $0x1d0] sm:$0xff]
    %v2210 = vld [vmem:[%s13 + $0x1d8] sm:$0xff]
    %v2211 = vld [vmem:[%s13 + $0x1e0] sm:$0xff]
    %v2212 = vld [vmem:[%s13 + $0x1e8] sm:$0xff]
    %v2213 = vld [vmem:[%s13 + $0x1f0] sm:$0xff]
    %v2214 = vld [vmem:[%s13 + $0x1f8] sm:$0xff]
    %v2215 = vld [vmem:[%s13 + $0x200] sm:$0xff]
    %v2216 = vld [vmem:[%s13 + $0x208] sm:$0xff]
    %v2217 = vld [vmem:[%s13 + $0x210] sm:$0xff]
    %v2218 = vld [vmem:[%s13 + $0x218] sm:$0xff]
    %v2219 = vld [vmem:[%s13 + $0x220] sm:$0xff]
    %v2220 = vld [vmem:[%s13 + $0x228] sm:$0xff]
    %v2221 = vld [vmem:[%s13 + $0x230] sm:$0xff]
    %v2222 = vld [vmem:[%s13 + $0x238] sm:$0xff]
    %v2223 = vld [vmem:[%s13 + $0x240] sm:$0xff]
    %v2224 = vld [vmem:[%s13 + $0x248] sm:$0xff]
    %v2225 = vld [vmem:[%s13 + $0x250] sm:$0xff]
    %v2226 = vld [vmem:[%s13 + $0x258] sm:$0xff]
    %v2227 = vld [vmem:[%s13 + $0x260] sm:$0xff]
    %v2228 = vld [vmem:[%s13 + $0x268] sm:$0xff]
    %v2229 = vld [vmem:[%s795] sm:$0xfe]
    %v2230 = vld [vmem:[%s795 + $0x8] sm:$0xfe]
    %v2231 = vld [vmem:[%s795 + $0x30] sm:$0x1]
    %v2232 = vld [vmem:[%s795 + $0x38] sm:$0x1]
    %v2233 = vld [vmem:[%s1321] sm:$0xff]
    %v2234 = vld [vmem:[%s1321 + $0x8] sm:$0xff]
    %v2235 = vld [vmem:[%s1321 + $0x10] sm:$0xff]
    %v2236 = vld [vmem:[%s1321 + $0x18] sm:$0xff]
    %v2237 = vld [vmem:[%s1321 + $0x20] sm:$0xff]
    %v2238 = vld [vmem:[%s1321 + $0x28] sm:$0xff]
    %v2239 = vld [vmem:[%s1321 + $0x30] sm:$0xff]
    %v2240 = vld [vmem:[%s1321 + $0x38] sm:$0xff]
    %v2241 = vld [vmem:[%s1321 + $0x40] sm:$0xff]
    %v2242 = vld [vmem:[%s1321 + $0x48] sm:$0xff]
    %v2243 = vld [vmem:[%s1321 + $0x50] sm:$0xff]
    %v2244 = vld [vmem:[%s1321 + $0x58] sm:$0xff]
    %v2245 = vld [vmem:[%s1321 + $0x60] sm:$0xff]
    %v2246 = vld [vmem:[%s1321 + $0x68] sm:$0xff]
    %v2247 = vld [vmem:[%s1321 + $0x70] sm:$0xff]
    %v2248 = vld [vmem:[%s1321 + $0x78] sm:$0xff]
    %v2249 = vld [vmem:[%s1321 + $0x80] sm:$0xff]
    %v2250 = vld [vmem:[%s1321 + $0x88] sm:$0xff]
    %v2251 = vld [vmem:[%s1321 + $0x90] sm:$0xff]
    %v2252 = vld [vmem:[%s1321 + $0x98] sm:$0xff]
    %v2253 = vld [vmem:[%s1321 + $0xa0] sm:$0xff]
    %v2254 = vld [vmem:[%s1321 + $0xa8] sm:$0xff]
    %v2255 = vld [vmem:[%s1321 + $0xb0] sm:$0xff]
    %v2256 = vld [vmem:[%s1321 + $0xb8] sm:$0xff]
    %v2257 = vld [vmem:[%s1321 + $0xc0] sm:$0xff]
    %v2258 = vld [vmem:[%s1321 + $0xc8] sm:$0xff]
    %v2259 = vld [vmem:[%s1321 + $0xd0] sm:$0xff]
    %v2260 = vld [vmem:[%s1321 + $0xd8] sm:$0xff]
    %v2261 = vld [vmem:[%s1321 + $0xe0] sm:$0xff]
    %v2262 = vld [vmem:[%s1321 + $0xe8] sm:$0xff]
    %v2263 = vld [vmem:[%s1321 + $0xf0] sm:$0xff]
    %v2264 = vld [vmem:[%s1321 + $0xf8] sm:$0xff]
    %v2265 = vld [vmem:[%s1321 + $0x100] sm:$0xff]
    %v2266 = vld [vmem:[%s1321 + $0x108] sm:$0xff]
    %v2267 = vld [vmem:[%s1321 + $0x110] sm:$0xff]
    %v2268 = vld [vmem:[%s1321 + $0x118] sm:$0xff]
    %v2269 = vld [vmem:[%s1321 + $0x120] sm:$0xff]
    %v2270 = vld [vmem:[%s1321 + $0x128] sm:$0xff]
    %v2271 = vld [vmem:[%s1321 + $0x130] sm:$0xff]
    %v2272 = vld [vmem:[%s1321 + $0x138] sm:$0xff]
    %v2273 = vld [vmem:[%s1321 + $0x140] sm:$0xff]
    %v2274 = vld [vmem:[%s1321 + $0x148] sm:$0xff]
    %v2275 = vld [vmem:[%s1321 + $0x150] sm:$0xff]
    %v2276 = vld [vmem:[%s1321 + $0x158] sm:$0xff]
    %v2277 = vld [vmem:[%s1321 + $0x160] sm:$0xff]
    %v2278 = vld [vmem:[%s1321 + $0x168] sm:$0xff]
    %v2279 = vld [vmem:[%s1321 + $0x170] sm:$0xff]
    %v2280 = vld [vmem:[%s1321 + $0x178] sm:$0xff]
    %v2281 = vld [vmem:[%s1321 + $0x180] sm:$0xff]
    %v2282 = vld [vmem:[%s1321 + $0x188] sm:$0xff]
    %v2283 = vld [vmem:[%s1321 + $0x190] sm:$0xff]
    %v2284 = vld [vmem:[%s1321 + $0x198] sm:$0xff]
    %v2285 = vld [vmem:[%s1321 + $0x1a0] sm:$0xff]
    %v2286 = vld [vmem:[%s1321 + $0x1a8] sm:$0xff]
    %v2287 = vld [vmem:[%s1321 + $0x1b0] sm:$0xff]
    %v2288 = vld [vmem:[%s1321 + $0x1b8] sm:$0xff]
    %v2289 = vld [vmem:[%s1321 + $0x1c0] sm:$0xff]
    %v2290 = vld [vmem:[%s1321 + $0x1c8] sm:$0xff]
    %v2291 = vld [vmem:[%s1321 + $0x1d0] sm:$0xff]
    %v2292 = vld [vmem:[%s1321 + $0x1d8] sm:$0xff]
    %v2293 = vld [vmem:[%s1321 + $0x1e0] sm:$0xff]
    %v2294 = vld [vmem:[%s1321 + $0x1e8] sm:$0xff]
    %v2295 = vld [vmem:[%s1321 + $0x1f0] sm:$0xff]
    %v2296 = vld [vmem:[%s1321 + $0x1f8] sm:$0xff]
    %v2297 = vld [vmem:[%s1321 + $0x200] sm:$0xff]
    %v2298 = vld [vmem:[%s1321 + $0x208] sm:$0xff]
    %v2299 = vld [vmem:[%s1321 + $0x210] sm:$0xff]
    %v2300 = vld [vmem:[%s1321 + $0x218] sm:$0xff]
    %v2301 = vld [vmem:[%s1321 + $0x220] sm:$0xff]
    %v2302 = vld [vmem:[%s1321 + $0x228] sm:$0xff]
    %v2303 = vld [vmem:[%s1321 + $0x230] sm:$0xff]
    %v2304 = vld [vmem:[%s1321 + $0x238] sm:$0xff]
    %v2305 = vld [vmem:[%s1321 + $0x240] sm:$0xff]
    %v2306 = vld [vmem:[%s1321 + $0x248] sm:$0xff]
    %v2307 = vld [vmem:[%s1321 + $0x250] sm:$0xff]
    %v2308 = vld [vmem:[%s1321 + $0x258] sm:$0xff]
    %v2309 = vld [vmem:[%s1321 + $0x260] sm:$0xff]
    %v2310 = vld [vmem:[%s1321 + $0x268] sm:$0xff]
    %v2319 = vrot.slane %v2229, 1
    %v2320 = vrot.slane %v2147, 1
    %v2321 = vsel %vm1408, %v2319, %v2320
    %v2322 = vrot.slane %v2230, 1
    %v2323 = vrot.slane %v2148, 1
    %v2324 = vsel %vm1408, %v2322, %v2323
    %v2325 = vrot.slane %v2149, 1
    %v2326 = vsel %vm1408, %v2320, %v2325
    %v2327 = vrot.slane %v2150, 1
    %v2328 = vsel %vm1408, %v2323, %v2327
    %v2329 = vrot.slane %v2231, 1
    %v2330 = vsel %vm1408, %v2325, %v2329
    %v2331 = vrot.slane %v2232, 1
    %v2332 = vsel %vm1408, %v2327, %v2331
    %v2336 = vsel %vm424, %v2324, 0
    %v2338 = vsel %vm424, %v2328, 0
    %v2340 = vsel %vm424, %v2332, 0
    %2342 = vmatpush.msra.mxu0 %v2278
    %2343 = vmatpush.msra.mxu0 %v2275
    %2344 = vmatpush.msra.mxu0 %v2272
    %2345 = vmatpush.msra.mxu0 %v2269
    %2346 = vmatpush.msra.mxu0 %v2266
    %2347 = vmatpush.msra.mxu0 %v2263
    %2348 = vmatpush.msra.mxu0 %v2260
    %2349 = vmatpush.msra.mxu0 %v2257
    %2350 = vmatpush.msra.mxu0 %v2254
    %2351 = vmatpush.msra.mxu0 %v2251
    %2352 = vmatpush.msra.mxu0 %v2248
    %2353 = vmatpush.msra.mxu0 %v2245
    %2354 = vmatpush.msra.mxu0 %v2242
    %2355 = vmatpush.msra.mxu0 %v2239
    %2356 = vmatpush.msra.mxu0 %v2236
    %2357 = vmatpush.msra.mxu0 %v2233
    %2358 = vmatmul.f32.gmra.mxu0 %v2321
    %v2359 = vpop.f32.mrf.mxu0
    %v2360 = vadd.f32 0.0, %v2359
    %2361 = vmatmul.f32.gmra.mxu0 %v2326
    %v2362 = vpop.f32.mrf.mxu0
    %v2363 = vadd.f32 0.0, %v2362
    %2364 = vmatmul.f32.gmra.mxu0 %v2330
    %v2365 = vpop.f32.mrf.mxu0
    %v2366 = vadd.f32 0.0, %v2365
    %2367 = vdwg.mxu0
    %2368 = vmatpush.msra.mxu0 0.0
    %2369 = vmatpush.msra.mxu0 0.0
    %2370 = vmatpush.msra.mxu0 0.0
    %2371 = vmatpush.msra.mxu0 0.0
    %2372 = vmatpush.msra.mxu0 0.0
    %2373 = vmatpush.msra.mxu0 0.0
    %2374 = vmatpush.msra.mxu0 %v2308
    %2375 = vmatpush.msra.mxu0 %v2305
    %2376 = vmatpush.msra.mxu0 %v2302
    %2377 = vmatpush.msra.mxu0 %v2299
    %2378 = vmatpush.msra.mxu0 %v2296
    %2379 = vmatpush.msra.mxu0 %v2293
    %2380 = vmatpush.msra.mxu0 %v2290
    %2381 = vmatpush.msra.mxu0 %v2287
    %2382 = vmatpush.msra.mxu0 %v2284
    %2383 = vmatpush.msra.mxu0 %v2281
    %2384 = vmatmul.f32.gmra.mxu0 %v2336
    %v2385 = vpop.f32.mrf.mxu0
    %v2386 = vadd.f32 %v2360, %v2385
    %2387 = vmatmul.f32.gmra.mxu0 %v2338
    %v2388 = vpop.f32.mrf.mxu0
    %v2389 = vadd.f32 %v2363, %v2388
    %2390 = vmatmul.f32.gmra.mxu0 %v2340
    %v2391 = vpop.f32.mrf.mxu0
    %v2392 = vadd.f32 %v2366, %v2391
    %2393 = vdwg.mxu0
    %2394 = vmatpush.msra.mxu0 %v2279
    %2395 = vmatpush.msra.mxu0 %v2276
    %2396 = vmatpush.msra.mxu0 %v2273
    %2397 = vmatpush.msra.mxu0 %v2270
    %2398 = vmatpush.msra.mxu0 %v2267
    %2399 = vmatpush.msra.mxu0 %v2264
    %2400 = vmatpush.msra.mxu0 %v2261
    %2401 = vmatpush.msra.mxu0 %v2258
    %2402 = vmatpush.msra.mxu0 %v2255
    %2403 = vmatpush.msra.mxu0 %v2252
    %2404 = vmatpush.msra.mxu0 %v2249
    %2405 = vmatpush.msra.mxu0 %v2246
    %2406 = vmatpush.msra.mxu0 %v2243
    %2407 = vmatpush.msra.mxu0 %v2240
    %2408 = vmatpush.msra.mxu0 %v2237
    %2409 = vmatpush.msra.mxu0 %v2234
    %2410 = vmatmul.f32.gmra.mxu0 %v2321
    %v2411 = vpop.f32.mrf.mxu0
    %v2412 = vadd.f32 0.0, %v2411
    %2413 = vmatmul.f32.gmra.mxu0 %v2326
    %v2414 = vpop.f32.mrf.mxu0
    %v2415 = vadd.f32 0.0, %v2414
    %2416 = vmatmul.f32.gmra.mxu0 %v2330
    %v2417 = vpop.f32.mrf.mxu0
    %v2418 = vadd.f32 0.0, %v2417
    %2419 = vdwg.mxu0
    %2420 = vmatpush.msra.mxu0 0.0
    %2421 = vmatpush.msra.mxu0 0.0
    %2422 = vmatpush.msra.mxu0 0.0
    %2423 = vmatpush.msra.mxu0 0.0
    %2424 = vmatpush.msra.mxu0 0.0
    %2425 = vmatpush.msra.mxu0 0.0
    %2426 = vmatpush.msra.mxu0 %v2309
    %2427 = vmatpush.msra.mxu0 %v2306
    %2428 = vmatpush.msra.mxu0 %v2303
    %2429 = vmatpush.msra.mxu0 %v2300
    %2430 = vmatpush.msra.mxu0 %v2297
    %2431 = vmatpush.msra.mxu0 %v2294
    %2432 = vmatpush.msra.mxu0 %v2291
    %2433 = vmatpush.msra.mxu0 %v2288
    %2434 = vmatpush.msra.mxu0 %v2285
    %2435 = vmatpush.msra.mxu0 %v2282
    %2436 = vmatmul.f32.gmra.mxu0 %v2336
    %v2437 = vpop.f32.mrf.mxu0
    %v2438 = vadd.f32 %v2412, %v2437
    %2439 = vmatmul.f32.gmra.mxu0 %v2338
    %v2440 = vpop.f32.mrf.mxu0
    %v2441 = vadd.f32 %v2415, %v2440
    %2442 = vmatmul.f32.gmra.mxu0 %v2340
    %v2443 = vpop.f32.mrf.mxu0
    %v2444 = vadd.f32 %v2418, %v2443
    %2445 = vdwg.mxu0
    %2446 = vmatpush.msra.mxu0 %v2280
    %2447 = vmatpush.msra.mxu0 %v2277
    %2448 = vmatpush.msra.mxu0 %v2274
    %2449 = vmatpush.msra.mxu0 %v2271
    %2450 = vmatpush.msra.mxu0 %v2268
    %2451 = vmatpush.msra.mxu0 %v2265
    %2452 = vmatpush.msra.mxu0 %v2262
    %2453 = vmatpush.msra.mxu0 %v2259
    %2454 = vmatpush.msra.mxu0 %v2256
    %2455 = vmatpush.msra.mxu0 %v2253
    %2456 = vmatpush.msra.mxu0 %v2250
    %2457 = vmatpush.msra.mxu0 %v2247
    %2458 = vmatpush.msra.mxu0 %v2244
    %2459 = vmatpush.msra.mxu0 %v2241
    %2460 = vmatpush.msra.mxu0 %v2238
    %2461 = vmatpush.msra.mxu0 %v2235
    %2462 = vmatmul.f32.gmra.mxu0 %v2321
    %v2463 = vpop.f32.mrf.mxu0
    %v2464 = vadd.f32 0.0, %v2463
    %2465 = vmatmul.f32.gmra.mxu0 %v2326
    %v2466 = vpop.f32.mrf.mxu0
    %v2467 = vadd.f32 0.0, %v2466
    %2468 = vmatmul.f32.gmra.mxu0 %v2330
    %v2469 = vpop.f32.mrf.mxu0
    %v2470 = vadd.f32 0.0, %v2469
    %2471 = vdwg.mxu0
    %2472 = vmatpush.msra.mxu0 0.0
    %2473 = vmatpush.msra.mxu0 0.0
    %2474 = vmatpush.msra.mxu0 0.0
    %2475 = vmatpush.msra.mxu0 0.0
    %2476 = vmatpush.msra.mxu0 0.0
    %2477 = vmatpush.msra.mxu0 0.0
    %2478 = vmatpush.msra.mxu0 %v2310
    %2479 = vmatpush.msra.mxu0 %v2307
    %2480 = vmatpush.msra.mxu0 %v2304
    %2481 = vmatpush.msra.mxu0 %v2301
    %2482 = vmatpush.msra.mxu0 %v2298
    %2483 = vmatpush.msra.mxu0 %v2295
    %2484 = vmatpush.msra.mxu0 %v2292
    %2485 = vmatpush.msra.mxu0 %v2289
    %2486 = vmatpush.msra.mxu0 %v2286
    %2487 = vmatpush.msra.mxu0 %v2283
    %2488 = vmatmul.f32.gmra.mxu0 %v2336
    %v2489 = vpop.f32.mrf.mxu0
    %v2490 = vadd.f32 %v2464, %v2489
    %2491 = vmatmul.f32.gmra.mxu0 %v2338
    %v2492 = vpop.f32.mrf.mxu0
    %v2493 = vadd.f32 %v2467, %v2492
    %2494 = vmatmul.f32.gmra.mxu0 %v2340
    %v2495 = vpop.f32.mrf.mxu0
    %v2496 = vadd.f32 %v2470, %v2495
    %2497 = vdwg.mxu0
    %v2499 = vsel %vm424, %v2146, 0
    %v2501 = vsel %vm424, %v2148, 0
    %v2503 = vsel %vm424, %v2150, 0
    %2505 = vmatpush.msra.mxu0 %v2196
    %2506 = vmatpush.msra.mxu0 %v2193
    %2507 = vmatpush.msra.mxu0 %v2190
    %2508 = vmatpush.msra.mxu0 %v2187
    %2509 = vmatpush.msra.mxu0 %v2184
    %2510 = vmatpush.msra.mxu0 %v2181
    %2511 = vmatpush.msra.mxu0 %v2178
    %2512 = vmatpush.msra.mxu0 %v2175
    %2513 = vmatpush.msra.mxu0 %v2172
    %2514 = vmatpush.msra.mxu0 %v2169
    %2515 = vmatpush.msra.mxu0 %v2166
    %2516 = vmatpush.msra.mxu0 %v2163
    %2517 = vmatpush.msra.mxu0 %v2160
    %2518 = vmatpush.msra.mxu0 %v2157
    %2519 = vmatpush.msra.mxu0 %v2154
    %2520 = vmatpush.msra.mxu0 %v2151
    %2521 = vmatmul.f32.gmra.mxu0 %v2145
    %v2522 = vpop.f32.mrf.mxu0
    %v2523 = vadd.f32 %v2386, %v2522
    %2524 = vmatmul.f32.gmra.mxu0 %v2147
    %v2525 = vpop.f32.mrf.mxu0
    %v2526 = vadd.f32 %v2389, %v2525
    %2527 = vmatmul.f32.gmra.mxu0 %v2149
    %v2528 = vpop.f32.mrf.mxu0
    %v2529 = vadd.f32 %v2392, %v2528
    %2530 = vdwg.mxu0
    %2531 = vmatpush.msra.mxu0 0.0
    %2532 = vmatpush.msra.mxu0 0.0
    %2533 = vmatpush.msra.mxu0 0.0
    %2534 = vmatpush.msra.mxu0 0.0
    %2535 = vmatpush.msra.mxu0 0.0
    %2536 = vmatpush.msra.mxu0 0.0
    %2537 = vmatpush.msra.mxu0 %v2226
    %2538 = vmatpush.msra.mxu0 %v2223
    %2539 = vmatpush.msra.mxu0 %v2220
    %2540 = vmatpush.msra.mxu0 %v2217
    %2541 = vmatpush.msra.mxu0 %v2214
    %2542 = vmatpush.msra.mxu0 %v2211
    %2543 = vmatpush.msra.mxu0 %v2208
    %2544 = vmatpush.msra.mxu0 %v2205
    %2545 = vmatpush.msra.mxu0 %v2202
    %2546 = vmatpush.msra.mxu0 %v2199
    %2547 = vmatmul.f32.gmra.mxu0 %v2499
    %v2548 = vpop.f32.mrf.mxu0
    %v2549 = vadd.f32 %v2523, %v2548
    %2550 = vmatmul.f32.gmra.mxu0 %v2501
    %v2551 = vpop.f32.mrf.mxu0
    %v2552 = vadd.f32 %v2526, %v2551
    %2553 = vmatmul.f32.gmra.mxu0 %v2503
    %v2554 = vpop.f32.mrf.mxu0
    %v2555 = vadd.f32 %v2529, %v2554
    %2556 = vdwg.mxu0
    %2557 = vmatpush.msra.mxu0 %v2197
    %2558 = vmatpush.msra.mxu0 %v2194
    %2559 = vmatpush.msra.mxu0 %v2191
    %2560 = vmatpush.msra.mxu0 %v2188
    %2561 = vmatpush.msra.mxu0 %v2185
    %2562 = vmatpush.msra.mxu0 %v2182
    %2563 = vmatpush.msra.mxu0 %v2179
    %2564 = vmatpush.msra.mxu0 %v2176
    %2565 = vmatpush.msra.mxu0 %v2173
    %2566 = vmatpush.msra.mxu0 %v2170
    %2567 = vmatpush.msra.mxu0 %v2167
    %2568 = vmatpush.msra.mxu0 %v2164
    %2569 = vmatpush.msra.mxu0 %v2161
    %2570 = vmatpush.msra.mxu0 %v2158
    %2571 = vmatpush.msra.mxu0 %v2155
    %2572 = vmatpush.msra.mxu0 %v2152
    %2573 = vmatmul.f32.gmra.mxu0 %v2145
    %v2574 = vpop.f32.mrf.mxu0
    %v2575 = vadd.f32 %v2438, %v2574
    %2576 = vmatmul.f32.gmra.mxu0 %v2147
    %v2577 = vpop.f32.mrf.mxu0
    %v2578 = vadd.f32 %v2441, %v2577
    %2579 = vmatmul.f32.gmra.mxu0 %v2149
    %v2580 = vpop.f32.mrf.mxu0
    %v2581 = vadd.f32 %v2444, %v2580
    %2582 = vdwg.mxu0
    %2583 = vmatpush.msra.mxu0 0.0
    %2584 = vmatpush.msra.mxu0 0.0
    %2585 = vmatpush.msra.mxu0 0.0
    %2586 = vmatpush.msra.mxu0 0.0
    %2587 = vmatpush.msra.mxu0 0.0
    %2588 = vmatpush.msra.mxu0 0.0
    %2589 = vmatpush.msra.mxu0 %v2227
    %2590 = vmatpush.msra.mxu0 %v2224
    %2591 = vmatpush.msra.mxu0 %v2221
    %2592 = vmatpush.msra.mxu0 %v2218
    %2593 = vmatpush.msra.mxu0 %v2215
    %2594 = vmatpush.msra.mxu0 %v2212
    %2595 = vmatpush.msra.mxu0 %v2209
    %2596 = vmatpush.msra.mxu0 %v2206
    %2597 = vmatpush.msra.mxu0 %v2203
    %2598 = vmatpush.msra.mxu0 %v2200
    %2599 = vmatmul.f32.gmra.mxu0 %v2499
    %v2600 = vpop.f32.mrf.mxu0
    %v2601 = vadd.f32 %v2575, %v2600
    %2602 = vmatmul.f32.gmra.mxu0 %v2501
    %v2603 = vpop.f32.mrf.mxu0
    %v2604 = vadd.f32 %v2578, %v2603
    %2605 = vmatmul.f32.gmra.mxu0 %v2503
    %v2606 = vpop.f32.mrf.mxu0
    %v2607 = vadd.f32 %v2581, %v2606
    %2608 = vdwg.mxu0
    %2609 = vmatpush.msra.mxu0 %v2198
    %2610 = vmatpush.msra.mxu0 %v2195
    %2611 = vmatpush.msra.mxu0 %v2192
    %2612 = vmatpush.msra.mxu0 %v2189
    %2613 = vmatpush.msra.mxu0 %v2186
    %2614 = vmatpush.msra.mxu0 %v2183
    %2615 = vmatpush.msra.mxu0 %v2180
    %2616 = vmatpush.msra.mxu0 %v2177
    %2617 = vmatpush.msra.mxu0 %v2174
    %2618 = vmatpush.msra.mxu0 %v2171
    %2619 = vmatpush.msra.mxu0 %v2168
    %2620 = vmatpush.msra.mxu0 %v2165
    %2621 = vmatpush.msra.mxu0 %v2162
    %2622 = vmatpush.msra.mxu0 %v2159
    %2623 = vmatpush.msra.mxu0 %v2156
    %2624 = vmatpush.msra.mxu0 %v2153
    %2625 = vmatmul.f32.gmra.mxu0 %v2145
    %v2626 = vpop.f32.mrf.mxu0
    %v2627 = vadd.f32 %v2490, %v2626
    %2628 = vmatmul.f32.gmra.mxu0 %v2147
    %v2629 = vpop.f32.mrf.mxu0
    %v2630 = vadd.f32 %v2493, %v2629
    %2631 = vmatmul.f32.gmra.mxu0 %v2149
    %v2632 = vpop.f32.mrf.mxu0
    %v2633 = vadd.f32 %v2496, %v2632
    %2634 = vdwg.mxu0
    %2635 = vmatpush.msra.mxu0 0.0
    %2636 = vmatpush.msra.mxu0 0.0
    %2637 = vmatpush.msra.mxu0 0.0
    %2638 = vmatpush.msra.mxu0 0.0
    %2639 = vmatpush.msra.mxu0 0.0
    %2640 = vmatpush.msra.mxu0 0.0
    %2641 = vmatpush.msra.mxu0 %v2228
    %2642 = vmatpush.msra.mxu0 %v2225
    %2643 = vmatpush.msra.mxu0 %v2222
    %2644 = vmatpush.msra.mxu0 %v2219
    %2645 = vmatpush.msra.mxu0 %v2216
    %2646 = vmatpush.msra.mxu0 %v2213
    %2647 = vmatpush.msra.mxu0 %v2210
    %2648 = vmatpush.msra.mxu0 %v2207
    %2649 = vmatpush.msra.mxu0 %v2204
    %2650 = vmatpush.msra.mxu0 %v2201
    %2651 = vmatmul.f32.gmra.mxu0 %v2499
    %v2652 = vpop.f32.mrf.mxu0
    %v2653 = vadd.f32 %v2627, %v2652
    %2654 = vmatmul.f32.gmra.mxu0 %v2501
    %v2655 = vpop.f32.mrf.mxu0
    %v2656 = vadd.f32 %v2630, %v2655
    %2657 = vmatmul.f32.gmra.mxu0 %v2503
    %v2658 = vpop.f32.mrf.mxu0
    %v2659 = vadd.f32 %v2633, %v2658
    %2660 = vdwg.mxu0
    %v2661 = vld [vmem:[%s795] sm:$0xfc]
    %v2662 = vld [vmem:[%s795 + $0x8] sm:$0xfc]
    %v2663 = vld [vmem:[%s795 + $0x30] sm:$0x3]
    %v2664 = vld [vmem:[%s795 + $0x38] sm:$0x3]
    %v2665 = vld [vmem:[%s1755] sm:$0xff]
    %v2666 = vld [vmem:[%s1755 + $0x8] sm:$0xff]
    %v2667 = vld [vmem:[%s1755 + $0x10] sm:$0xff]
    %v2668 = vld [vmem:[%s1755 + $0x18] sm:$0xff]
    %v2669 = vld [vmem:[%s1755 + $0x20] sm:$0xff]
    %v2670 = vld [vmem:[%s1755 + $0x28] sm:$0xff]
    %v2671 = vld [vmem:[%s1755 + $0x30] sm:$0xff]
    %v2672 = vld [vmem:[%s1755 + $0x38] sm:$0xff]
    %v2673 = vld [vmem:[%s1755 + $0x40] sm:$0xff]
    %v2674 = vld [vmem:[%s1755 + $0x48] sm:$0xff]
    %v2675 = vld [vmem:[%s1755 + $0x50] sm:$0xff]
    %v2676 = vld [vmem:[%s1755 + $0x58] sm:$0xff]
    %v2677 = vld [vmem:[%s1755 + $0x60] sm:$0xff]
    %v2678 = vld [vmem:[%s1755 + $0x68] sm:$0xff]
    %v2679 = vld [vmem:[%s1755 + $0x70] sm:$0xff]
    %v2680 = vld [vmem:[%s1755 + $0x78] sm:$0xff]
    %v2681 = vld [vmem:[%s1755 + $0x80] sm:$0xff]
    %v2682 = vld [vmem:[%s1755 + $0x88] sm:$0xff]
    %v2683 = vld [vmem:[%s1755 + $0x90] sm:$0xff]
    %v2684 = vld [vmem:[%s1755 + $0x98] sm:$0xff]
    %v2685 = vld [vmem:[%s1755 + $0xa0] sm:$0xff]
    %v2686 = vld [vmem:[%s1755 + $0xa8] sm:$0xff]
    %v2687 = vld [vmem:[%s1755 + $0xb0] sm:$0xff]
    %v2688 = vld [vmem:[%s1755 + $0xb8] sm:$0xff]
    %v2689 = vld [vmem:[%s1755 + $0xc0] sm:$0xff]
    %v2690 = vld [vmem:[%s1755 + $0xc8] sm:$0xff]
    %v2691 = vld [vmem:[%s1755 + $0xd0] sm:$0xff]
    %v2692 = vld [vmem:[%s1755 + $0xd8] sm:$0xff]
    %v2693 = vld [vmem:[%s1755 + $0xe0] sm:$0xff]
    %v2694 = vld [vmem:[%s1755 + $0xe8] sm:$0xff]
    %v2695 = vld [vmem:[%s1755 + $0xf0] sm:$0xff]
    %v2696 = vld [vmem:[%s1755 + $0xf8] sm:$0xff]
    %v2697 = vld [vmem:[%s1755 + $0x100] sm:$0xff]
    %v2698 = vld [vmem:[%s1755 + $0x108] sm:$0xff]
    %v2699 = vld [vmem:[%s1755 + $0x110] sm:$0xff]
    %v2700 = vld [vmem:[%s1755 + $0x118] sm:$0xff]
    %v2701 = vld [vmem:[%s1755 + $0x120] sm:$0xff]
    %v2702 = vld [vmem:[%s1755 + $0x128] sm:$0xff]
    %v2703 = vld [vmem:[%s1755 + $0x130] sm:$0xff]
    %v2704 = vld [vmem:[%s1755 + $0x138] sm:$0xff]
    %v2705 = vld [vmem:[%s1755 + $0x140] sm:$0xff]
    %v2706 = vld [vmem:[%s1755 + $0x148] sm:$0xff]
    %v2707 = vld [vmem:[%s1755 + $0x150] sm:$0xff]
    %v2708 = vld [vmem:[%s1755 + $0x158] sm:$0xff]
    %v2709 = vld [vmem:[%s1755 + $0x160] sm:$0xff]
    %v2710 = vld [vmem:[%s1755 + $0x168] sm:$0xff]
    %v2711 = vld [vmem:[%s1755 + $0x170] sm:$0xff]
    %v2712 = vld [vmem:[%s1755 + $0x178] sm:$0xff]
    %v2713 = vld [vmem:[%s1755 + $0x180] sm:$0xff]
    %v2714 = vld [vmem:[%s1755 + $0x188] sm:$0xff]
    %v2715 = vld [vmem:[%s1755 + $0x190] sm:$0xff]
    %v2716 = vld [vmem:[%s1755 + $0x198] sm:$0xff]
    %v2717 = vld [vmem:[%s1755 + $0x1a0] sm:$0xff]
    %v2718 = vld [vmem:[%s1755 + $0x1a8] sm:$0xff]
    %v2719 = vld [vmem:[%s1755 + $0x1b0] sm:$0xff]
    %v2720 = vld [vmem:[%s1755 + $0x1b8] sm:$0xff]
    %v2721 = vld [vmem:[%s1755 + $0x1c0] sm:$0xff]
    %v2722 = vld [vmem:[%s1755 + $0x1c8] sm:$0xff]
    %v2723 = vld [vmem:[%s1755 + $0x1d0] sm:$0xff]
    %v2724 = vld [vmem:[%s1755 + $0x1d8] sm:$0xff]
    %v2725 = vld [vmem:[%s1755 + $0x1e0] sm:$0xff]
    %v2726 = vld [vmem:[%s1755 + $0x1e8] sm:$0xff]
    %v2727 = vld [vmem:[%s1755 + $0x1f0] sm:$0xff]
    %v2728 = vld [vmem:[%s1755 + $0x1f8] sm:$0xff]
    %v2729 = vld [vmem:[%s1755 + $0x200] sm:$0xff]
    %v2730 = vld [vmem:[%s1755 + $0x208] sm:$0xff]
    %v2731 = vld [vmem:[%s1755 + $0x210] sm:$0xff]
    %v2732 = vld [vmem:[%s1755 + $0x218] sm:$0xff]
    %v2733 = vld [vmem:[%s1755 + $0x220] sm:$0xff]
    %v2734 = vld [vmem:[%s1755 + $0x228] sm:$0xff]
    %v2735 = vld [vmem:[%s1755 + $0x230] sm:$0xff]
    %v2736 = vld [vmem:[%s1755 + $0x238] sm:$0xff]
    %v2737 = vld [vmem:[%s1755 + $0x240] sm:$0xff]
    %v2738 = vld [vmem:[%s1755 + $0x248] sm:$0xff]
    %v2739 = vld [vmem:[%s1755 + $0x250] sm:$0xff]
    %v2740 = vld [vmem:[%s1755 + $0x258] sm:$0xff]
    %v2741 = vld [vmem:[%s1755 + $0x260] sm:$0xff]
    %v2742 = vld [vmem:[%s1755 + $0x268] sm:$0xff]
    %v2747 = vrot.slane %v2661, 2
    %v2748 = vrot.slane %v2147, 2
    %v2749 = vsel %vm1838, %v2747, %v2748
    %v2750 = vrot.slane %v2662, 2
    %v2751 = vrot.slane %v2148, 2
    %v2752 = vsel %vm1838, %v2750, %v2751
    %v2753 = vrot.slane %v2149, 2
    %v2754 = vsel %vm1838, %v2748, %v2753
    %v2755 = vrot.slane %v2150, 2
    %v2756 = vsel %vm1838, %v2751, %v2755
    %v2757 = vrot.slane %v2663, 2
    %v2758 = vsel %vm1838, %v2753, %v2757
    %v2759 = vrot.slane %v2664, 2
    %v2760 = vsel %vm1838, %v2755, %v2759
    %v2764 = vsel %vm424, %v2752, 0
    %v2766 = vsel %vm424, %v2756, 0
    %v2768 = vsel %vm424, %v2760, 0
    %2770 = vmatpush.msra.mxu0 %v2710
    %2771 = vmatpush.msra.mxu0 %v2707
    %2772 = vmatpush.msra.mxu0 %v2704
    %2773 = vmatpush.msra.mxu0 %v2701
    %2774 = vmatpush.msra.mxu0 %v2698
    %2775 = vmatpush.msra.mxu0 %v2695
    %2776 = vmatpush.msra.mxu0 %v2692
    %2777 = vmatpush.msra.mxu0 %v2689
    %2778 = vmatpush.msra.mxu0 %v2686
    %2779 = vmatpush.msra.mxu0 %v2683
    %2780 = vmatpush.msra.mxu0 %v2680
    %2781 = vmatpush.msra.mxu0 %v2677
    %2782 = vmatpush.msra.mxu0 %v2674
    %2783 = vmatpush.msra.mxu0 %v2671
    %2784 = vmatpush.msra.mxu0 %v2668
    %2785 = vmatpush.msra.mxu0 %v2665
    %2786 = vmatmul.f32.gmra.mxu0 %v2749
    %v2787 = vpop.f32.mrf.mxu0
    %v2788 = vadd.f32 0.0, %v2787
    %2789 = vmatmul.f32.gmra.mxu0 %v2754
    %v2790 = vpop.f32.mrf.mxu0
    %v2791 = vadd.f32 0.0, %v2790
    %2792 = vmatmul.f32.gmra.mxu0 %v2758
    %v2793 = vpop.f32.mrf.mxu0
    %v2794 = vadd.f32 0.0, %v2793
    %2795 = vdwg.mxu0
    %2796 = vmatpush.msra.mxu0 0.0
    %2797 = vmatpush.msra.mxu0 0.0
    %2798 = vmatpush.msra.mxu0 0.0
    %2799 = vmatpush.msra.mxu0 0.0
    %2800 = vmatpush.msra.mxu0 0.0
    %2801 = vmatpush.msra.mxu0 0.0
    %2802 = vmatpush.msra.mxu0 %v2740
    %2803 = vmatpush.msra.mxu0 %v2737
    %2804 = vmatpush.msra.mxu0 %v2734
    %2805 = vmatpush.msra.mxu0 %v2731
    %2806 = vmatpush.msra.mxu0 %v2728
    %2807 = vmatpush.msra.mxu0 %v2725
    %2808 = vmatpush.msra.mxu0 %v2722
    %2809 = vmatpush.msra.mxu0 %v2719
    %2810 = vmatpush.msra.mxu0 %v2716
    %2811 = vmatpush.msra.mxu0 %v2713
    %2812 = vmatmul.f32.gmra.mxu0 %v2764
    %v2813 = vpop.f32.mrf.mxu0
    %v2814 = vadd.f32 %v2788, %v2813
    %2815 = vmatmul.f32.gmra.mxu0 %v2766
    %v2816 = vpop.f32.mrf.mxu0
    %v2817 = vadd.f32 %v2791, %v2816
    %2818 = vmatmul.f32.gmra.mxu0 %v2768
    %v2819 = vpop.f32.mrf.mxu0
    %v2820 = vadd.f32 %v2794, %v2819
    %2821 = vdwg.mxu0
    %2822 = vmatpush.msra.mxu0 %v2711
    %2823 = vmatpush.msra.mxu0 %v2708
    %2824 = vmatpush.msra.mxu0 %v2705
    %2825 = vmatpush.msra.mxu0 %v2702
    %2826 = vmatpush.msra.mxu0 %v2699
    %2827 = vmatpush.msra.mxu0 %v2696
    %2828 = vmatpush.msra.mxu0 %v2693
    %2829 = vmatpush.msra.mxu0 %v2690
    %2830 = vmatpush.msra.mxu0 %v2687
    %2831 = vmatpush.msra.mxu0 %v2684
    %2832 = vmatpush.msra.mxu0 %v2681
    %2833 = vmatpush.msra.mxu0 %v2678
    %2834 = vmatpush.msra.mxu0 %v2675
    %2835 = vmatpush.msra.mxu0 %v2672
    %2836 = vmatpush.msra.mxu0 %v2669
    %2837 = vmatpush.msra.mxu0 %v2666
    %2838 = vmatmul.f32.gmra.mxu0 %v2749
    %v2839 = vpop.f32.mrf.mxu0
    %v2840 = vadd.f32 0.0, %v2839
    %2841 = vmatmul.f32.gmra.mxu0 %v2754
    %v2842 = vpop.f32.mrf.mxu0
    %v2843 = vadd.f32 0.0, %v2842
    %2844 = vmatmul.f32.gmra.mxu0 %v2758
    %v2845 = vpop.f32.mrf.mxu0
    %v2846 = vadd.f32 0.0, %v2845
    %2847 = vdwg.mxu0
    %2848 = vmatpush.msra.mxu0 0.0
    %2849 = vmatpush.msra.mxu0 0.0
    %2850 = vmatpush.msra.mxu0 0.0
    %2851 = vmatpush.msra.mxu0 0.0
    %2852 = vmatpush.msra.mxu0 0.0
    %2853 = vmatpush.msra.mxu0 0.0
    %2854 = vmatpush.msra.mxu0 %v2741
    %2855 = vmatpush.msra.mxu0 %v2738
    %2856 = vmatpush.msra.mxu0 %v2735
    %2857 = vmatpush.msra.mxu0 %v2732
    %2858 = vmatpush.msra.mxu0 %v2729
    %2859 = vmatpush.msra.mxu0 %v2726
    %2860 = vmatpush.msra.mxu0 %v2723
    %2861 = vmatpush.msra.mxu0 %v2720
    %2862 = vmatpush.msra.mxu0 %v2717
    %2863 = vmatpush.msra.mxu0 %v2714
    %2864 = vmatmul.f32.gmra.mxu0 %v2764
    %v2865 = vpop.f32.mrf.mxu0
    %v2866 = vadd.f32 %v2840, %v2865
    %2867 = vmatmul.f32.gmra.mxu0 %v2766
    %v2868 = vpop.f32.mrf.mxu0
    %v2869 = vadd.f32 %v2843, %v2868
    %2870 = vmatmul.f32.gmra.mxu0 %v2768
    %v2871 = vpop.f32.mrf.mxu0
    %v2872 = vadd.f32 %v2846, %v2871
    %2873 = vdwg.mxu0
    %2874 = vmatpush.msra.mxu0 %v2712
    %2875 = vmatpush.msra.mxu0 %v2709
    %2876 = vmatpush.msra.mxu0 %v2706
    %2877 = vmatpush.msra.mxu0 %v2703
    %2878 = vmatpush.msra.mxu0 %v2700
    %2879 = vmatpush.msra.mxu0 %v2697
    %2880 = vmatpush.msra.mxu0 %v2694
    %2881 = vmatpush.msra.mxu0 %v2691
    %2882 = vmatpush.msra.mxu0 %v2688
    %2883 = vmatpush.msra.mxu0 %v2685
    %2884 = vmatpush.msra.mxu0 %v2682
    %2885 = vmatpush.msra.mxu0 %v2679
    %2886 = vmatpush.msra.mxu0 %v2676
    %2887 = vmatpush.msra.mxu0 %v2673
    %2888 = vmatpush.msra.mxu0 %v2670
    %2889 = vmatpush.msra.mxu0 %v2667
    %2890 = vmatmul.f32.gmra.mxu0 %v2749
    %v2891 = vpop.f32.mrf.mxu0
    %v2892 = vadd.f32 0.0, %v2891
    %2893 = vmatmul.f32.gmra.mxu0 %v2754
    %v2894 = vpop.f32.mrf.mxu0
    %v2895 = vadd.f32 0.0, %v2894
    %2896 = vmatmul.f32.gmra.mxu0 %v2758
    %v2897 = vpop.f32.mrf.mxu0
    %v2898 = vadd.f32 0.0, %v2897
    %2899 = vdwg.mxu0
    %2900 = vmatpush.msra.mxu0 0.0
    %2901 = vmatpush.msra.mxu0 0.0
    %2902 = vmatpush.msra.mxu0 0.0
    %2903 = vmatpush.msra.mxu0 0.0
    %2904 = vmatpush.msra.mxu0 0.0
    %2905 = vmatpush.msra.mxu0 0.0
    %2906 = vmatpush.msra.mxu0 %v2742
    %2907 = vmatpush.msra.mxu0 %v2739
    %2908 = vmatpush.msra.mxu0 %v2736
    %2909 = vmatpush.msra.mxu0 %v2733
    %2910 = vmatpush.msra.mxu0 %v2730
    %2911 = vmatpush.msra.mxu0 %v2727
    %2912 = vmatpush.msra.mxu0 %v2724
    %2913 = vmatpush.msra.mxu0 %v2721
    %2914 = vmatpush.msra.mxu0 %v2718
    %2915 = vmatpush.msra.mxu0 %v2715
    %2916 = vmatmul.f32.gmra.mxu0 %v2764
    %v2917 = vpop.f32.mrf.mxu0
    %v2918 = vadd.f32 %v2892, %v2917
    %2919 = vmatmul.f32.gmra.mxu0 %v2766
    %v2920 = vpop.f32.mrf.mxu0
    %v2921 = vadd.f32 %v2895, %v2920
    %2922 = vmatmul.f32.gmra.mxu0 %v2768
    %v2923 = vpop.f32.mrf.mxu0
    %v2924 = vadd.f32 %v2898, %v2923
    %2925 = vdwg.mxu0
    %v2926 = vadd.f32 %v2549, %v2814
    %v2927 = vadd.f32 %v2601, %v2866
    %v2928 = vadd.f32 %v2653, %v2918
    %v2929 = vadd.f32 %v2552, %v2817
    %v2930 = vadd.f32 %v2604, %v2869
    %v2931 = vadd.f32 %v2656, %v2921
    %v2932 = vadd.f32 %v2555, %v2820
    %v2933 = vadd.f32 %v2607, %v2872
    %v2934 = vadd.f32 %v2659, %v2924
    %v2935 = vmax.f32 %v2926, 0.0
    %v2936 = vmax.f32 %v2927, 0.0
    %v2937 = vmax.f32 %v2928, 0.0
    %v2938 = vmax.f32 %v2929, 0.0
    %v2939 = vmax.f32 %v2930, 0.0
    %v2940 = vmax.f32 %v2931, 0.0
    %v2941 = vmax.f32 %v2932, 0.0
    %v2942 = vmax.f32 %v2933, 0.0
    %v2943 = vmax.f32 %v2934, 0.0
    %s2944 = scalar_lea.vmem [#allocation3], 72
    %2945 = vst [vmem:[%s2944] sm:$0xff] %v2935
    %2946 = vst [vmem:[%s2944 + $0x8] sm:$0xff] %v2936
    %2947 = vst.msk [vmem:[%s2944 + $0x10] sm:$0xff] %vm2038, %v2937
    %2948 = vst [vmem:[%s2944 + $0x18] sm:$0xff] %v2938
    %2949 = vst [vmem:[%s2944 + $0x20] sm:$0xff] %v2939
    %2950 = vst.msk [vmem:[%s2944 + $0x28] sm:$0xff] %vm2038, %v2940
    %2951 = vst [vmem:[%s2944 + $0x30] sm:$0xff] %v2941
    %2952 = vst [vmem:[%s2944 + $0x38] sm:$0xff] %v2942
    %2953 = vst.msk [vmem:[%s2944 + $0x40] sm:$0xff] %vm2038, %v2943
    %v2954 = vadd.f32 %v2935, %v2938
    %v2955 = vadd.f32 %v2954, %v2941
    %v2956 = vrot.slane %v2955, 4
    %v2957 = vadd.f32 %v2955, %v2956
    %v2958 = vrot.slane %v2957, 2
    %v2959 = vadd.f32 %v2957, %v2958
    %v2960 = vrot.slane %v2959, 1
    %v2961 = vadd.f32 %v2959, %v2960
    %v2962 = vadd.f32 %v2936, %v2939
    %v2963 = vadd.f32 %v2962, %v2942
    %v2964 = vrot.slane %v2963, 4
    %v2965 = vadd.f32 %v2963, %v2964
    %v2966 = vrot.slane %v2965, 2
    %v2967 = vadd.f32 %v2965, %v2966
    %v2968 = vrot.slane %v2967, 1
    %v2969 = vadd.f32 %v2967, %v2968
    %v2970 = vsel %vm2038, %v2937, 0.0
    %v2971 = vsel %vm2038, %v2940, 0.0
    %v2972 = vadd.f32 %v2970, %v2971
    %v2973 = vsel %vm2038, %v2943, 0.0
    %v2974 = vadd.f32 %v2972, %v2973
    %v2975 = vrot.slane %v2974, 4
    %v2976 = vadd.f32 %v2974, %v2975
    %v2977 = vrot.slane %v2976, 2
    %v2978 = vadd.f32 %v2976, %v2977
    %v2979 = vrot.slane %v2978, 1
    %v2980 = vadd.f32 %v2978, %v2979
    %v2981 = vld [vmem:[%s15] sm:$0xff]
    %v2982 = vld [vmem:[%s15 + $0x8] sm:$0xff]
    %v2983 = vld [vmem:[%s15 + $0x10] sm:$0xff]
    %v2984 = vld [vmem:[%s15 + $0x18] sm:$0xff]
    %v2985 = vld [vmem:[%s15 + $0x20] sm:$0xff]
    %v2986 = vld [vmem:[%s15 + $0x28] sm:$0xff]
    %v2987 = vld [vmem:[%s15 + $0x30] sm:$0xff]
    %v2988 = vld [vmem:[%s15 + $0x38] sm:$0xff]
    %v2989 = vld [vmem:[%s15 + $0x40] sm:$0xff]
    %v2990 = vld [vmem:[%s15 + $0x48] sm:$0xff]
    %v2991 = vld [vmem:[%s15 + $0x50] sm:$0xff]
    %v2992 = vld [vmem:[%s15 + $0x58] sm:$0xff]
    %v2993 = vld [vmem:[%s15 + $0x60] sm:$0xff]
    %v2994 = vld [vmem:[%s15 + $0x68] sm:$0xff]
    %v2995 = vld [vmem:[%s15 + $0x70] sm:$0xff]
    %v2996 = vld [vmem:[%s15 + $0x78] sm:$0xff]
    %v2997 = vld [vmem:[%s15 + $0x80] sm:$0xff]
    %v2998 = vld [vmem:[%s15 + $0x88] sm:$0xff]
    %v2999 = vld [vmem:[%s15 + $0x90] sm:$0xff]
    %v3000 = vld [vmem:[%s15 + $0x98] sm:$0xff]
    %v3001 = vld [vmem:[%s15 + $0xa0] sm:$0xff]
    %v3002 = vld [vmem:[%s15 + $0xa8] sm:$0xff]
    %v3003 = vld [vmem:[%s15 + $0xb0] sm:$0xff]
    %v3004 = vld [vmem:[%s15 + $0xb8] sm:$0xff]
    %v3005 = vld [vmem:[%s15 + $0xc0] sm:$0xff]
    %v3006 = vld [vmem:[%s15 + $0xc8] sm:$0xff]
    %v3007 = vld [vmem:[%s15 + $0xd0] sm:$0xff]
    %v3008 = vld [vmem:[%s15 + $0xd8] sm:$0xff]
    %v3009 = vld [vmem:[%s15 + $0xe0] sm:$0xff]
    %v3010 = vld [vmem:[%s15 + $0xe8] sm:$0xff]
    %v3011 = vld [vmem:[%s15 + $0xf0] sm:$0xff]
    %v3012 = vld [vmem:[%s15 + $0xf8] sm:$0xff]
    %v3013 = vld [vmem:[%s15 + $0x100] sm:$0xff]
    %v3014 = vld [vmem:[%s15 + $0x108] sm:$0xff]
    %v3015 = vld [vmem:[%s15 + $0x110] sm:$0xff]
    %v3016 = vld [vmem:[%s15 + $0x118] sm:$0xff]
    %v3018 = vsel %vm2038, %v2980, 0
    %3020 = vmatpush.msra.mxu0 %v2996
    %3021 = vmatpush.msra.mxu0 %v2995
    %3022 = vmatpush.msra.mxu0 %v2994
    %3023 = vmatpush.msra.mxu0 %v2993
    %3024 = vmatpush.msra.mxu0 %v2992
    %3025 = vmatpush.msra.mxu0 %v2991
    %3026 = vmatpush.msra.mxu0 %v2990
    %3027 = vmatpush.msra.mxu0 %v2989
    %3028 = vmatpush.msra.mxu0 %v2988
    %3029 = vmatpush.msra.mxu0 %v2987
    %3030 = vmatpush.msra.mxu0 %v2986
    %3031 = vmatpush.msra.mxu0 %v2985
    %3032 = vmatpush.msra.mxu0 %v2984
    %3033 = vmatpush.msra.mxu0 %v2983
    %3034 = vmatpush.msra.mxu0 %v2982
    %3035 = vmatpush.msra.mxu0 %v2981
    %3036 = vmatmul.f32.gmra.mxu0 %v2961
    %v3037 = vpop.f32.mrf.mxu0
    %v3038 = vadd.f32 0.0, %v3037
    %3039 = vdwg.mxu0
    %3040 = vmatpush.msra.mxu0 %v3012
    %3041 = vmatpush.msra.mxu0 %v3011
    %3042 = vmatpush.msra.mxu0 %v3010
    %3043 = vmatpush.msra.mxu0 %v3009
    %3044 = vmatpush.msra.mxu0 %v3008
    %3045 = vmatpush.msra.mxu0 %v3007
    %3046 = vmatpush.msra.mxu0 %v3006
    %3047 = vmatpush.msra.mxu0 %v3005
    %3048 = vmatpush.msra.mxu0 %v3004
    %3049 = vmatpush.msra.mxu0 %v3003
    %3050 = vmatpush.msra.mxu0 %v3002
    %3051 = vmatpush.msra.mxu0 %v3001
    %3052 = vmatpush.msra.mxu0 %v3000
    %3053 = vmatpush.msra.mxu0 %v2999
    %3054 = vmatpush.msra.mxu0 %v2998
    %3055 = vmatpush.msra.mxu0 %v2997
    %3056 = vmatmul.f32.gmra.mxu0 %v2969
    %v3057 = vpop.f32.mrf.mxu0
    %v3058 = vadd.f32 %v3038, %v3057
    %3059 = vdwg.mxu0
    %3060 = vmatpush.msra.mxu0 0.0
    %3061 = vmatpush.msra.mxu0 0.0
    %3062 = vmatpush.msra.mxu0 0.0
    %3063 = vmatpush.msra.mxu0 0.0
    %3064 = vmatpush.msra.mxu0 0.0
    %3065 = vmatpush.msra.mxu0 0.0
    %3066 = vmatpush.msra.mxu0 0.0
    %3067 = vmatpush.msra.mxu0 0.0
    %3068 = vmatpush.msra.mxu0 0.0
    %3069 = vmatpush.msra.mxu0 0.0
    %3070 = vmatpush.msra.mxu0 0.0
    %3071 = vmatpush.msra.mxu0 0.0
    %3072 = vmatpush.msra.mxu0 %v3016
    %3073 = vmatpush.msra.mxu0 %v3015
    %3074 = vmatpush.msra.mxu0 %v3014
    %3075 = vmatpush.msra.mxu0 %v3013
    %3076 = vmatmul.f32.gmra.mxu0 %v3018
    %v3077 = vpop.f32.mrf.mxu0
    %v3078 = vadd.f32 %v3058, %v3077
    %3079 = vdwg.mxu0
    %v3081 = vsel %vm2038, %v2072, 0
    %3083 = vmatpush.msra.mxu0 %v2088
    %3084 = vmatpush.msra.mxu0 %v2087
    %3085 = vmatpush.msra.mxu0 %v2086
    %3086 = vmatpush.msra.mxu0 %v2085
    %3087 = vmatpush.msra.mxu0 %v2084
    %3088 = vmatpush.msra.mxu0 %v2083
    %3089 = vmatpush.msra.mxu0 %v2082
    %3090 = vmatpush.msra.mxu0 %v2081
    %3091 = vmatpush.msra.mxu0 %v2080
    %3092 = vmatpush.msra.mxu0 %v2079
    %3093 = vmatpush.msra.mxu0 %v2078
    %3094 = vmatpush.msra.mxu0 %v2077
    %3095 = vmatpush.msra.mxu0 %v2076
    %3096 = vmatpush.msra.mxu0 %v2075
    %3097 = vmatpush.msra.mxu0 %v2074
    %3098 = vmatpush.msra.mxu0 %v2073
    %3099 = vmatmul.f32.gmra.mxu0 %v2053
    %v3100 = vpop.f32.mrf.mxu0
    %v3101 = vadd.f32 %v3078, %v3100
    %3102 = vdwg.mxu0
    %3103 = vmatpush.msra.mxu0 %v2104
    %3104 = vmatpush.msra.mxu0 %v2103
    %3105 = vmatpush.msra.mxu0 %v2102
    %3106 = vmatpush.msra.mxu0 %v2101
    %3107 = vmatpush.msra.mxu0 %v2100
    %3108 = vmatpush.msra.mxu0 %v2099
    %3109 = vmatpush.msra.mxu0 %v2098
    %3110 = vmatpush.msra.mxu0 %v2097
    %3111 = vmatpush.msra.mxu0 %v2096
    %3112 = vmatpush.msra.mxu0 %v2095
    %3113 = vmatpush.msra.mxu0 %v2094
    %3114 = vmatpush.msra.mxu0 %v2093
    %3115 = vmatpush.msra.mxu0 %v2092
    %3116 = vmatpush.msra.mxu0 %v2091
    %3117 = vmatpush.msra.mxu0 %v2090
    %3118 = vmatpush.msra.mxu0 %v2089
    %3119 = vmatmul.f32.gmra.mxu0 %v2061
    %v3120 = vpop.f32.mrf.mxu0
    %v3121 = vadd.f32 %v3101, %v3120
    %3122 = vdwg.mxu0
    %3123 = vmatpush.msra.mxu0 0.0
    %3124 = vmatpush.msra.mxu0 0.0
    %3125 = vmatpush.msra.mxu0 0.0
    %3126 = vmatpush.msra.mxu0 0.0
    %3127 = vmatpush.msra.mxu0 0.0
    %3128 = vmatpush.msra.mxu0 0.0
    %3129 = vmatpush.msra.mxu0 0.0
    %3130 = vmatpush.msra.mxu0 0.0
    %3131 = vmatpush.msra.mxu0 0.0
    %3132 = vmatpush.msra.mxu0 0.0
    %3133 = vmatpush.msra.mxu0 0.0
    %3134 = vmatpush.msra.mxu0 0.0
    %3135 = vmatpush.msra.mxu0 %v2108
    %3136 = vmatpush.msra.mxu0 %v2107
    %3137 = vmatpush.msra.mxu0 %v2106
    %3138 = vmatpush.msra.mxu0 %v2105
    %3139 = vmatmul.f32.gmra.mxu0 %v3081
    %v3140 = vpop.f32.mrf.mxu0
    %v3141 = vadd.f32 %v3121, %v3140
    %3142 = vdwg.mxu0
    %v3143 = vmul.f32 %v2935, %v2935
    %v3144 = vmul.f32 %v2936, %v2936
    %v3145 = vmul.f32 %v2937, %v2937
    %v3146 = vmul.f32 %v2938, %v2938
    %v3147 = vmul.f32 %v2939, %v2939
    %v3148 = vmul.f32 %v2940, %v2940
    %v3149 = vmul.f32 %v2941, %v2941
    %v3150 = vmul.f32 %v2942, %v2942
    %v3151 = vmul.f32 %v2943, %v2943
    %v3152 = vadd.f32 %v3143, %v3146
    %v3153 = vadd.f32 %v3152, %v3149
    %v3154 = vrot.slane %v3153, 4
    %v3155 = vadd.f32 %v3153, %v3154
    %v3156 = vrot.slane %v3155, 2
    %v3157 = vadd.f32 %v3155, %v3156
    %v3158 = vrot.slane %v3157, 1
    %v3159 = vadd.f32 %v3157, %v3158
    %v3160 = vadd.f32 %v3144, %v3147
    %v3161 = vadd.f32 %v3160, %v3150
    %v3162 = vrot.slane %v3161, 4
    %v3163 = vadd.f32 %v3161, %v3162
    %v3164 = vrot.slane %v3163, 2
    %v3165 = vadd.f32 %v3163, %v3164
    %v3166 = vrot.slane %v3165, 1
    %v3167 = vadd.f32 %v3165, %v3166
    %v3168 = vsel %vm2038, %v3145, 0.0
    %v3169 = vsel %vm2038, %v3148, 0.0
    %v3170 = vadd.f32 %v3168, %v3169
    %v3171 = vsel %vm2038, %v3151, 0.0
    %v3172 = vadd.f32 %v3170, %v3171
    %v3173 = vrot.slane %v3172, 4
    %v3174 = vadd.f32 %v3172, %v3173
    %v3175 = vrot.slane %v3174, 2
    %v3176 = vadd.f32 %v3174, %v3175
    %v3177 = vrot.slane %v3176, 1
    %v3178 = vadd.f32 %v3176, %v3177
    %v3180 = vsel %vm2038, %v3178, 0
    %3182 = vmatpush.msra.mxu0 %v2996
    %3183 = vmatpush.msra.mxu0 %v2995
    %3184 = vmatpush.msra.mxu0 %v2994
    %3185 = vmatpush.msra.mxu0 %v2993
    %3186 = vmatpush.msra.mxu0 %v2992
    %3187 = vmatpush.msra.mxu0 %v2991
    %3188 = vmatpush.msra.mxu0 %v2990
    %3189 = vmatpush.msra.mxu0 %v2989
    %3190 = vmatpush.msra.mxu0 %v2988
    %3191 = vmatpush.msra.mxu0 %v2987
    %3192 = vmatpush.msra.mxu0 %v2986
    %3193 = vmatpush.msra.mxu0 %v2985
    %3194 = vmatpush.msra.mxu0 %v2984
    %3195 = vmatpush.msra.mxu0 %v2983
    %3196 = vmatpush.msra.mxu0 %v2982
    %3197 = vmatpush.msra.mxu0 %v2981
    %3198 = vmatmul.f32.gmra.mxu0 %v3159
    %v3199 = vpop.f32.mrf.mxu0
    %v3200 = vadd.f32 0.0, %v3199
    %3201 = vdwg.mxu0
    %3202 = vmatpush.msra.mxu0 %v3012
    %3203 = vmatpush.msra.mxu0 %v3011
    %3204 = vmatpush.msra.mxu0 %v3010
    %3205 = vmatpush.msra.mxu0 %v3009
    %3206 = vmatpush.msra.mxu0 %v3008
    %3207 = vmatpush.msra.mxu0 %v3007
    %3208 = vmatpush.msra.mxu0 %v3006
    %3209 = vmatpush.msra.mxu0 %v3005
    %3210 = vmatpush.msra.mxu0 %v3004
    %3211 = vmatpush.msra.mxu0 %v3003
    %3212 = vmatpush.msra.mxu0 %v3002
    %3213 = vmatpush.msra.mxu0 %v3001
    %3214 = vmatpush.msra.mxu0 %v3000
    %3215 = vmatpush.msra.mxu0 %v2999
    %3216 = vmatpush.msra.mxu0 %v2998
    %3217 = vmatpush.msra.mxu0 %v2997
    %3218 = vmatmul.f32.gmra.mxu0 %v3167
    %v3219 = vpop.f32.mrf.mxu0
    %v3220 = vadd.f32 %v3200, %v3219
    %3221 = vdwg.mxu0
    %3222 = vmatpush.msra.mxu0 0.0
    %3223 = vmatpush.msra.mxu0 0.0
    %3224 = vmatpush.msra.mxu0 0.0
    %3225 = vmatpush.msra.mxu0 0.0
    %3226 = vmatpush.msra.mxu0 0.0
    %3227 = vmatpush.msra.mxu0 0.0
    %3228 = vmatpush.msra.mxu0 0.0
    %3229 = vmatpush.msra.mxu0 0.0
    %3230 = vmatpush.msra.mxu0 0.0
    %3231 = vmatpush.msra.mxu0 0.0
    %3232 = vmatpush.msra.mxu0 0.0
    %3233 = vmatpush.msra.mxu0 0.0
    %3234 = vmatpush.msra.mxu0 %v3016
    %3235 = vmatpush.msra.mxu0 %v3015
    %3236 = vmatpush.msra.mxu0 %v3014
    %3237 = vmatpush.msra.mxu0 %v3013
    %3238 = vmatmul.f32.gmra.mxu0 %v3180
    %v3239 = vpop.f32.mrf.mxu0
    %v3240 = vadd.f32 %v3220, %v3239
    %3241 = vdwg.mxu0
    %v3243 = vsel %vm2038, %v2144, 0
    %3245 = vmatpush.msra.mxu0 %v2088
    %3246 = vmatpush.msra.mxu0 %v2087
    %3247 = vmatpush.msra.mxu0 %v2086
    %3248 = vmatpush.msra.mxu0 %v2085
    %3249 = vmatpush.msra.mxu0 %v2084
    %3250 = vmatpush.msra.mxu0 %v2083
    %3251 = vmatpush.msra.mxu0 %v2082
    %3252 = vmatpush.msra.mxu0 %v2081
    %3253 = vmatpush.msra.mxu0 %v2080
    %3254 = vmatpush.msra.mxu0 %v2079
    %3255 = vmatpush.msra.mxu0 %v2078
    %3256 = vmatpush.msra.mxu0 %v2077
    %3257 = vmatpush.msra.mxu0 %v2076
    %3258 = vmatpush.msra.mxu0 %v2075
    %3259 = vmatpush.msra.mxu0 %v2074
    %3260 = vmatpush.msra.mxu0 %v2073
    %3261 = vmatmul.f32.gmra.mxu0 %v2125
    %v3262 = vpop.f32.mrf.mxu0
    %v3263 = vadd.f32 %v3240, %v3262
    %3264 = vdwg.mxu0
    %3265 = vmatpush.msra.mxu0 %v2104
    %3266 = vmatpush.msra.mxu0 %v2103
    %3267 = vmatpush.msra.mxu0 %v2102
    %3268 = vmatpush.msra.mxu0 %v2101
    %3269 = vmatpush.msra.mxu0 %v2100
    %3270 = vmatpush.msra.mxu0 %v2099
    %3271 = vmatpush.msra.mxu0 %v2098
    %3272 = vmatpush.msra.mxu0 %v2097
    %3273 = vmatpush.msra.mxu0 %v2096
    %3274 = vmatpush.msra.mxu0 %v2095
    %3275 = vmatpush.msra.mxu0 %v2094
    %3276 = vmatpush.msra.mxu0 %v2093
    %3277 = vmatpush.msra.mxu0 %v2092
    %3278 = vmatpush.msra.mxu0 %v2091
    %3279 = vmatpush.msra.mxu0 %v2090
    %3280 = vmatpush.msra.mxu0 %v2089
    %3281 = vmatmul.f32.gmra.mxu0 %v2133
    %v3282 = vpop.f32.mrf.mxu0
    %v3283 = vadd.f32 %v3263, %v3282
    %3284 = vdwg.mxu0
    %3285 = vmatpush.msra.mxu0 0.0
    %3286 = vmatpush.msra.mxu0 0.0
    %3287 = vmatpush.msra.mxu0 0.0
    %3288 = vmatpush.msra.mxu0 0.0
    %3289 = vmatpush.msra.mxu0 0.0
    %3290 = vmatpush.msra.mxu0 0.0
    %3291 = vmatpush.msra.mxu0 0.0
    %3292 = vmatpush.msra.mxu0 0.0
    %3293 = vmatpush.msra.mxu0 0.0
    %3294 = vmatpush.msra.mxu0 0.0
    %3295 = vmatpush.msra.mxu0 0.0
    %3296 = vmatpush.msra.mxu0 0.0
    %3297 = vmatpush.msra.mxu0 %v2108
    %3298 = vmatpush.msra.mxu0 %v2107
    %3299 = vmatpush.msra.mxu0 %v2106
    %3300 = vmatpush.msra.mxu0 %v2105
    %3301 = vmatmul.f32.gmra.mxu0 %v3243
    %v3302 = vpop.f32.mrf.mxu0
    %v3303 = vadd.f32 %v3283, %v3302
    %3304 = vdwg.mxu0
    %v3305 = vmul.f32 %v3141, 0.00086805556
    %v3306 = vmul.f32 %v3303, 0.00086805556
    %v3307 = vmul.f32 %v3305, %v3305
    %v3308 = vsub.f32 %v3306, %v3307
    %v3309 = vld [vmem:[%s19] sm:$0x1]
    %v3310 = vadd.f32 %v3308, 1e-05
    %v3311 = vrsqrt.pop %v3310
    %v3312 = vmul.f32 %v3311, %v3310
    %v3313 = vmul.f32 %v3312, %v3311
    %v3314 = vmul.f32 0.5, %v3313
    %v3315 = vsub.f32 1.5, %v3314
    %v3316 = vmul.f32 %v3311, %v3315
    %vm3317 = vweird.f32 %v3310
    %vm3318 = vweird.f32 %v3311
    %vm3319 = vmor %vm3317, %vm3318
    %v3320 = vsel %vm3319, %v3311, %v3316
    %v3321 = vmul.f32 %v3309, %v3320
    %v3322 = vld [vmem:[%s21] sm:$0x1]
    %v3323 = vmul.f32 %v3305, %v3321
    %v3324 = vsub.f32 %v3322, %v3323
    %v3325 = vld [vmem:[%s17] sm:$0xff]
    %v3326 = vld [vmem:[%s17 + $0x8] sm:$0xff]
    %v3327 = vld [vmem:[%s17 + $0x10] sm:$0xff]
    %v3328 = vld [vmem:[%s17 + $0x18] sm:$0xf]
    %v3329 = vld [vmem:[%s17 + $0x20] sm:$0xf]
    %v3330 = vld [vmem:[%s17 + $0x28] sm:$0xf]
    %vm3331 = vcmask 97280
    %v3333 = vsel %vm3331, %v3321, 0
    %v3336 = vsel %vm177, %v3328, 0
    %v3339 = vsel %vm177, %v3329, 0
    %v3342 = vsel %vm177, %v3330, 0
    %3344 = vmatpush.msra.mxu0 0.0
    %3345 = vmatpush.msra.mxu0 0.0
    %3346 = vmatpush.msra.mxu0 0.0
    %3347 = vmatpush.msra.mxu0 0.0
    %3348 = vmatpush.msra.mxu0 0.0
    %3349 = vmatpush.msra.mxu0 0.0
    %3350 = vmatpush.msra.mxu0 0.0
    %3351 = vmatpush.msra.mxu0 0.0
    %3352 = vmatpush.msra.mxu0 0.0
    %3353 = vmatpush.msra.mxu0 0.0
    %3354 = vmatpush.msra.mxu0 0.0
    %3355 = vmatpush.msra.mxu0 0.0
    %3356 = vmatpush.msra.mxu0 0.0
    %3357 = vmatpush.msra.mxu0 0.0
    %3358 = vmatpush.msra.mxu0 %v3336
    %3359 = vmatpush.msra.mxu0 %v3325
    %3360 = vmatmul.f32.gmra.mxu0 %v3333
    %v3361 = vpop.f32.mrf.mxu0
    %v3362 = vadd.f32 0.0, %v3361
    %3363 = vdwg.mxu0
    %3364 = vmatpush.msra.mxu0 0.0
    %3365 = vmatpush.msra.mxu0 0.0
    %3366 = vmatpush.msra.mxu0 0.0
    %3367 = vmatpush.msra.mxu0 0.0
    %3368 = vmatpush.msra.mxu0 0.0
    %3369 = vmatpush.msra.mxu0 0.0
    %3370 = vmatpush.msra.mxu0 0.0
    %3371 = vmatpush.msra.mxu0 0.0
    %3372 = vmatpush.msra.mxu0 0.0
    %3373 = vmatpush.msra.mxu0 0.0
    %3374 = vmatpush.msra.mxu0 0.0
    %3375 = vmatpush.msra.mxu0 0.0
    %3376 = vmatpush.msra.mxu0 0.0
    %3377 = vmatpush.msra.mxu0 0.0
    %3378 = vmatpush.msra.mxu0 %v3339
    %3379 = vmatpush.msra.mxu0 %v3326
    %3380 = vmatmul.f32.gmra.mxu0 %v3333
    %v3381 = vpop.f32.mrf.mxu0
    %v3382 = vadd.f32 0.0, %v3381
    %3383 = vdwg.mxu0
    %3384 = vmatpush.msra.mxu0 0.0
    %3385 = vmatpush.msra.mxu0 0.0
    %3386 = vmatpush.msra.mxu0 0.0
    %3387 = vmatpush.msra.mxu0 0.0
    %3388 = vmatpush.msra.mxu0 0.0
    %3389 = vmatpush.msra.mxu0 0.0
    %3390 = vmatpush.msra.mxu0 0.0
    %3391 = vmatpush.msra.mxu0 0.0
    %3392 = vmatpush.msra.mxu0 0.0
    %3393 = vmatpush.msra.mxu0 0.0
    %3394 = vmatpush.msra.mxu0 0.0
    %3395 = vmatpush.msra.mxu0 0.0
    %3396 = vmatpush.msra.mxu0 0.0
    %3397 = vmatpush.msra.mxu0 0.0
    %3398 = vmatpush.msra.mxu0 %v3342
    %3399 = vmatpush.msra.mxu0 %v3327
    %3400 = vmatmul.f32.gmra.mxu0 %v3333
    %v3401 = vpop.f32.mrf.mxu0
    %v3402 = vadd.f32 0.0, %v3401
    %3403 = vdwg.mxu0
    %v3405 = vsel %vm3331, %v3324, 0
    %3407 = vmatpush.msra.mxu0 0.0
    %3408 = vmatpush.msra.mxu0 0.0
    %3409 = vmatpush.msra.mxu0 0.0
    %3410 = vmatpush.msra.mxu0 0.0
    %3411 = vmatpush.msra.mxu0 0.0
    %3412 = vmatpush.msra.mxu0 0.0
    %3413 = vmatpush.msra.mxu0 0.0
    %3414 = vmatpush.msra.mxu0 0.0
    %3415 = vmatpush.msra.mxu0 0.0
    %3416 = vmatpush.msra.mxu0 0.0
    %3417 = vmatpush.msra.mxu0 0.0
    %3418 = vmatpush.msra.mxu0 0.0
    %3419 = vmatpush.msra.mxu0 0.0
    %3420 = vmatpush.msra.mxu0 0.0
    %3421 = vmatpush.msra.mxu0 %v3336
    %3422 = vmatpush.msra.mxu0 %v3325
    %3423 = vmatmul.f32.gmra.mxu0 %v3405
    %v3424 = vpop.f32.mrf.mxu0
    %v3425 = vadd.f32 0.0, %v3424
    %3426 = vdwg.mxu0
    %3427 = vmatpush.msra.mxu0 0.0
    %3428 = vmatpush.msra.mxu0 0.0
    %3429 = vmatpush.msra.mxu0 0.0
    %3430 = vmatpush.msra.mxu0 0.0
    %3431 = vmatpush.msra.mxu0 0.0
    %3432 = vmatpush.msra.mxu0 0.0
    %3433 = vmatpush.msra.mxu0 0.0
    %3434 = vmatpush.msra.mxu0 0.0
    %3435 = vmatpush.msra.mxu0 0.0
    %3436 = vmatpush.msra.mxu0 0.0
    %3437 = vmatpush.msra.mxu0 0.0
    %3438 = vmatpush.msra.mxu0 0.0
    %3439 = vmatpush.msra.mxu0 0.0
    %3440 = vmatpush.msra.mxu0 0.0
    %3441 = vmatpush.msra.mxu0 %v3339
    %3442 = vmatpush.msra.mxu0 %v3326
    %3443 = vmatmul.f32.gmra.mxu0 %v3405
    %v3444 = vpop.f32.mrf.mxu0
    %v3445 = vadd.f32 0.0, %v3444
    %3446 = vdwg.mxu0
    %3447 = vmatpush.msra.mxu0 0.0
    %3448 = vmatpush.msra.mxu0 0.0
    %3449 = vmatpush.msra.mxu0 0.0
    %3450 = vmatpush.msra.mxu0 0.0
    %3451 = vmatpush.msra.mxu0 0.0
    %3452 = vmatpush.msra.mxu0 0.0
    %3453 = vmatpush.msra.mxu0 0.0
    %3454 = vmatpush.msra.mxu0 0.0
    %3455 = vmatpush.msra.mxu0 0.0
    %3456 = vmatpush.msra.mxu0 0.0
    %3457 = vmatpush.msra.mxu0 0.0
    %3458 = vmatpush.msra.mxu0 0.0
    %3459 = vmatpush.msra.mxu0 0.0
    %3460 = vmatpush.msra.mxu0 0.0
    %3461 = vmatpush.msra.mxu0 %v3342
    %3462 = vmatpush.msra.mxu0 %v3327
    %3463 = vmatmul.f32.gmra.mxu0 %v3405
    %v3464 = vpop.f32.mrf.mxu0
    %v3465 = vadd.f32 0.0, %v3464
    %3466 = vdwg.mxu0
    %v3467 = vld [vmem:[#allocation3] sm:$0xff]
    %v3468 = vld [vmem:[#allocation3 + $0x8] sm:$0xff]
    %v3469 = vld [vmem:[#allocation3 + $0x10] sm:$0xff]
    %v3470 = vld [vmem:[#allocation3 + $0x18] sm:$0xff]
    %v3471 = vld [vmem:[#allocation3 + $0x20] sm:$0xff]
    %v3472 = vld [vmem:[#allocation3 + $0x28] sm:$0xff]
    %v3473 = vld [vmem:[#allocation3 + $0x30] sm:$0xff]
    %v3474 = vld [vmem:[#allocation3 + $0x38] sm:$0xff]
    %v3475 = vld [vmem:[#allocation3 + $0x40] sm:$0xff]
    %v3476 = vperm.slane %v3362, 0
    %v3477 = vperm.slane %v3382, 0
    %v3478 = vperm.slane %v3402, 0
    %v3479 = vmul.f32 %v3467, %v3476
    %v3480 = vmul.f32 %v3468, %v3477
    %v3481 = vmul.f32 %v3469, %v3478
    %v3482 = vmul.f32 %v3470, %v3476
    %v3483 = vmul.f32 %v3471, %v3477
    %v3484 = vmul.f32 %v3472, %v3478
    %v3485 = vmul.f32 %v3473, %v3476
    %v3486 = vmul.f32 %v3474, %v3477
    %v3487 = vmul.f32 %v3475, %v3478
    %v3488 = vperm.slane %v3425, 0
    %v3489 = vperm.slane %v3445, 0
    %v3490 = vperm.slane %v3465, 0
    %v3491 = vadd.f32 %v3479, %v3488
    %v3492 = vadd.f32 %v3480, %v3489
    %v3493 = vadd.f32 %v3481, %v3490
    %v3494 = vadd.f32 %v3482, %v3488
    %v3495 = vadd.f32 %v3483, %v3489
    %v3496 = vadd.f32 %v3484, %v3490
    %v3497 = vadd.f32 %v3485, %v3488
    %v3498 = vadd.f32 %v3486, %v3489
    %v3499 = vadd.f32 %v3487, %v3490
    %3500 = vst [vmem:[#allocation3] sm:$0xff] %v3491
    %3501 = vst [vmem:[#allocation3 + $0x8] sm:$0xff] %v3492
    %3502 = vst.msk [vmem:[#allocation3 + $0x10] sm:$0xff] %vm2038, %v3493
    %3503 = vst [vmem:[#allocation3 + $0x18] sm:$0xff] %v3494
    %3504 = vst [vmem:[#allocation3 + $0x20] sm:$0xff] %v3495
    %3505 = vst.msk [vmem:[#allocation3 + $0x28] sm:$0xff] %vm2038, %v3496
    %3506 = vst [vmem:[#allocation3 + $0x30] sm:$0xff] %v3497
    %3507 = vst [vmem:[#allocation3 + $0x38] sm:$0xff] %v3498
    %3508 = vst.msk [vmem:[#allocation3 + $0x40] sm:$0xff] %vm2038, %v3499
    %v3509 = vld [vmem:[%s2944] sm:$0xff]
    %v3510 = vld [vmem:[%s2944 + $0x8] sm:$0xff]
    %v3511 = vld [vmem:[%s2944 + $0x10] sm:$0xff]
    %v3512 = vld [vmem:[%s2944 + $0x18] sm:$0xff]
    %v3513 = vld [vmem:[%s2944 + $0x20] sm:$0xff]
    %v3514 = vld [vmem:[%s2944 + $0x28] sm:$0xff]
    %v3515 = vld [vmem:[%s2944 + $0x30] sm:$0xff]
    %v3516 = vld [vmem:[%s2944 + $0x38] sm:$0xff]
    %v3517 = vld [vmem:[%s2944 + $0x40] sm:$0xff]
    %v3518 = vmul.f32 %v3509, %v3476
    %v3519 = vmul.f32 %v3510, %v3477
    %v3520 = vmul.f32 %v3511, %v3478
    %v3521 = vmul.f32 %v3512, %v3476
    %v3522 = vmul.f32 %v3513, %v3477
    %v3523 = vmul.f32 %v3514, %v3478
    %v3524 = vmul.f32 %v3515, %v3476
    %v3525 = vmul.f32 %v3516, %v3477
    %v3526 = vmul.f32 %v3517, %v3478
    %v3527 = vadd.f32 %v3518, %v3488
    %v3528 = vadd.f32 %v3519, %v3489
    %v3529 = vadd.f32 %v3520, %v3490
    %v3530 = vadd.f32 %v3521, %v3488
    %v3531 = vadd.f32 %v3522, %v3489
    %v3532 = vadd.f32 %v3523, %v3490
    %v3533 = vadd.f32 %v3524, %v3488
    %v3534 = vadd.f32 %v3525, %v3489
    %v3535 = vadd.f32 %v3526, %v3490
    %3536 = vst [vmem:[%s2944] sm:$0xff] %v3527
    %3537 = vst [vmem:[%s2944 + $0x8] sm:$0xff] %v3528
    %3538 = vst.msk [vmem:[%s2944 + $0x10] sm:$0xff] %vm2038, %v3529
    %3539 = vst [vmem:[%s2944 + $0x18] sm:$0xff] %v3530
    %3540 = vst [vmem:[%s2944 + $0x20] sm:$0xff] %v3531
    %3541 = vst.msk [vmem:[%s2944 + $0x28] sm:$0xff] %vm2038, %v3532
    %3542 = vst [vmem:[%s2944 + $0x30] sm:$0xff] %v3533
    %3543 = vst [vmem:[%s2944 + $0x38] sm:$0xff] %v3534
    %3544 = vst.msk [vmem:[%s2944 + $0x40] sm:$0xff] %vm2038, %v3535
    %v3545 = vld [vmem:[#allocation3] sm:$0xff]
    %v3546 = vld [vmem:[#allocation3 + $0x8] sm:$0xff]
    %v3547 = vld [vmem:[#allocation3 + $0x10] sm:$0xff]
    %v3548 = vld [vmem:[#allocation3 + $0x18] sm:$0xff]
    %v3549 = vld [vmem:[#allocation3 + $0x20] sm:$0xff]
    %v3550 = vld [vmem:[#allocation3 + $0x28] sm:$0xff]
    %v3551 = vld [vmem:[#allocation3 + $0x30] sm:$0xff]
    %v3552 = vld [vmem:[#allocation3 + $0x38] sm:$0xff]
    %v3553 = vld [vmem:[#allocation3 + $0x40] sm:$0xff]
    %v3554 = vld [vmem:[%s23] sm:$0xff]
    %v3555 = vld [vmem:[%s23 + $0x8] sm:$0xff]
    %v3556 = vld [vmem:[%s23 + $0x10] sm:$0xff]
    %v3557 = vld [vmem:[%s23 + $0x18] sm:$0xff]
    %v3558 = vld [vmem:[%s23 + $0x20] sm:$0xff]
    %v3559 = vld [vmem:[%s23 + $0x28] sm:$0xff]
    %v3560 = vld [vmem:[%s23 + $0x30] sm:$0xff]
    %v3561 = vld [vmem:[%s23 + $0x38] sm:$0xff]
    %v3562 = vld [vmem:[%s23 + $0x40] sm:$0xff]
    %v3563 = vld [vmem:[%s23 + $0x48] sm:$0xff]
    %v3564 = vld [vmem:[%s23 + $0x50] sm:$0xff]
    %v3565 = vld [vmem:[%s23 + $0x58] sm:$0xff]
    %v3566 = vld [vmem:[%s23 + $0x60] sm:$0xff]
    %v3567 = vld [vmem:[%s23 + $0x68] sm:$0xff]
    %v3568 = vld [vmem:[%s23 + $0x70] sm:$0xff]
    %v3569 = vld [vmem:[%s23 + $0x78] sm:$0xff]
    %v3570 = vld [vmem:[%s23 + $0x80] sm:$0xff]
    %v3571 = vld [vmem:[%s23 + $0x88] sm:$0xff]
    %v3572 = vld [vmem:[%s23 + $0x90] sm:$0xff]
    %v3573 = vld [vmem:[%s23 + $0x98] sm:$0xff]
    %v3574 = vld [vmem:[%s23 + $0xa0] sm:$0xff]
    %v3575 = vld [vmem:[%s23 + $0xa8] sm:$0xff]
    %v3576 = vld [vmem:[%s23 + $0xb0] sm:$0xff]
    %v3577 = vld [vmem:[%s23 + $0xb8] sm:$0xff]
    %v3578 = vld [vmem:[%s23 + $0xc0] sm:$0xff]
    %v3579 = vld [vmem:[%s23 + $0xc8] sm:$0xff]
    %v3580 = vld [vmem:[%s23 + $0xd0] sm:$0xff]
    %v3581 = vld [vmem:[%s23 + $0xd8] sm:$0xff]
    %v3582 = vld [vmem:[%s23 + $0xe0] sm:$0xff]
    %v3583 = vld [vmem:[%s23 + $0xe8] sm:$0xff]
    %v3584 = vld [vmem:[%s23 + $0xf0] sm:$0xff]
    %v3585 = vld [vmem:[%s23 + $0xf8] sm:$0xff]
    %v3586 = vld [vmem:[%s23 + $0x100] sm:$0xff]
    %v3587 = vld [vmem:[%s23 + $0x108] sm:$0xff]
    %v3588 = vld [vmem:[%s23 + $0x110] sm:$0xff]
    %v3589 = vld [vmem:[%s23 + $0x118] sm:$0xff]
    %v3590 = vld [vmem:[%s23 + $0x120] sm:$0xff]
    %v3591 = vld [vmem:[%s23 + $0x128] sm:$0xff]
    %v3592 = vld [vmem:[%s23 + $0x130] sm:$0xff]
    %v3593 = vld [vmem:[%s23 + $0x138] sm:$0xff]
    %v3594 = vld [vmem:[%s23 + $0x140] sm:$0xff]
    %v3595 = vld [vmem:[%s23 + $0x148] sm:$0xff]
    %v3596 = vld [vmem:[%s23 + $0x150] sm:$0xff]
    %v3597 = vld [vmem:[%s23 + $0x158] sm:$0xff]
    %v3598 = vld [vmem:[%s23 + $0x160] sm:$0xff]
    %v3599 = vld [vmem:[%s23 + $0x168] sm:$0xff]
    %v3600 = vld [vmem:[%s23 + $0x170] sm:$0xff]
    %v3601 = vld [vmem:[%s23 + $0x178] sm:$0xff]
    %v3602 = vld [vmem:[%s23 + $0x180] sm:$0xff]
    %v3603 = vld [vmem:[%s23 + $0x188] sm:$0xff]
    %v3604 = vld [vmem:[%s23 + $0x190] sm:$0xff]
    %v3605 = vld [vmem:[%s23 + $0x198] sm:$0xff]
    %v3606 = vld [vmem:[%s23 + $0x1a0] sm:$0xff]
    %v3607 = vld [vmem:[%s23 + $0x1a8] sm:$0xff]
    %v3608 = vld [vmem:[%s23 + $0x1b0] sm:$0xff]
    %v3609 = vld [vmem:[%s23 + $0x1b8] sm:$0xff]
    %v3610 = vld [vmem:[%s23 + $0x1c0] sm:$0xff]
    %v3611 = vld [vmem:[%s23 + $0x1c8] sm:$0xff]
    %v3612 = vld [vmem:[%s23 + $0x1d0] sm:$0xff]
    %v3613 = vld [vmem:[%s23 + $0x1d8] sm:$0xff]
    %v3614 = vld [vmem:[%s23 + $0x1e0] sm:$0xff]
    %v3615 = vld [vmem:[%s23 + $0x1e8] sm:$0xff]
    %v3616 = vld [vmem:[%s23 + $0x1f0] sm:$0xff]
    %v3617 = vld [vmem:[%s23 + $0x1f8] sm:$0xff]
    %v3618 = vld [vmem:[%s23 + $0x200] sm:$0xff]
    %v3619 = vld [vmem:[%s23 + $0x208] sm:$0xff]
    %v3620 = vld [vmem:[%s23 + $0x210] sm:$0xff]
    %v3621 = vld [vmem:[%s23 + $0x218] sm:$0xff]
    %v3622 = vld [vmem:[%s23 + $0x220] sm:$0xff]
    %v3623 = vld [vmem:[%s23 + $0x228] sm:$0xff]
    %v3624 = vld [vmem:[%s23 + $0x230] sm:$0xff]
    %v3625 = vld [vmem:[%s23 + $0x238] sm:$0xff]
    %v3627 = vsel %vm2038, %v3547, 0
    %v3630 = vsel %vm2038, %v3550, 0
    %v3633 = vsel %vm2038, %v3553, 0
    %3635 = vmatpush.msra.mxu0 %v3584
    %3636 = vmatpush.msra.mxu0 %v3582
    %3637 = vmatpush.msra.mxu0 %v3580
    %3638 = vmatpush.msra.mxu0 %v3578
    %3639 = vmatpush.msra.mxu0 %v3576
    %3640 = vmatpush.msra.mxu0 %v3574
    %3641 = vmatpush.msra.mxu0 %v3572
    %3642 = vmatpush.msra.mxu0 %v3570
    %3643 = vmatpush.msra.mxu0 %v3568
    %3644 = vmatpush.msra.mxu0 %v3566
    %3645 = vmatpush.msra.mxu0 %v3564
    %3646 = vmatpush.msra.mxu0 %v3562
    %3647 = vmatpush.msra.mxu0 %v3560
    %3648 = vmatpush.msra.mxu0 %v3558
    %3649 = vmatpush.msra.mxu0 %v3556
    %3650 = vmatpush.msra.mxu0 %v3554
    %3651 = vmatmul.f32.gmra.mxu0 %v3545
    %v3652 = vpop.f32.mrf.mxu0
    %v3653 = vadd.f32 0.0, %v3652
    %3654 = vmatmul.f32.gmra.mxu0 %v3548
    %v3655 = vpop.f32.mrf.mxu0
    %v3656 = vadd.f32 0.0, %v3655
    %3657 = vmatmul.f32.gmra.mxu0 %v3551
    %v3658 = vpop.f32.mrf.mxu0
    %v3659 = vadd.f32 0.0, %v3658
    %3660 = vdwg.mxu0
    %3661 = vmatpush.msra.mxu0 %v3616
    %3662 = vmatpush.msra.mxu0 %v3614
    %3663 = vmatpush.msra.mxu0 %v3612
    %3664 = vmatpush.msra.mxu0 %v3610
    %3665 = vmatpush.msra.mxu0 %v3608
    %3666 = vmatpush.msra.mxu0 %v3606
    %3667 = vmatpush.msra.mxu0 %v3604
    %3668 = vmatpush.msra.mxu0 %v3602
    %3669 = vmatpush.msra.mxu0 %v3600
    %3670 = vmatpush.msra.mxu0 %v3598
    %3671 = vmatpush.msra.mxu0 %v3596
    %3672 = vmatpush.msra.mxu0 %v3594
    %3673 = vmatpush.msra.mxu0 %v3592
    %3674 = vmatpush.msra.mxu0 %v3590
    %3675 = vmatpush.msra.mxu0 %v3588
    %3676 = vmatpush.msra.mxu0 %v3586
    %3677 = vmatmul.f32.gmra.mxu0 %v3546
    %v3678 = vpop.f32.mrf.mxu0
    %v3679 = vadd.f32 %v3653, %v3678
    %3680 = vmatmul.f32.gmra.mxu0 %v3549
    %v3681 = vpop.f32.mrf.mxu0
    %v3682 = vadd.f32 %v3656, %v3681
    %3683 = vmatmul.f32.gmra.mxu0 %v3552
    %v3684 = vpop.f32.mrf.mxu0
    %v3685 = vadd.f32 %v3659, %v3684
    %3686 = vdwg.mxu0
    %3687 = vmatpush.msra.mxu0 0.0
    %3688 = vmatpush.msra.mxu0 0.0
    %3689 = vmatpush.msra.mxu0 0.0
    %3690 = vmatpush.msra.mxu0 0.0
    %3691 = vmatpush.msra.mxu0 0.0
    %3692 = vmatpush.msra.mxu0 0.0
    %3693 = vmatpush.msra.mxu0 0.0
    %3694 = vmatpush.msra.mxu0 0.0
    %3695 = vmatpush.msra.mxu0 0.0
    %3696 = vmatpush.msra.mxu0 0.0
    %3697 = vmatpush.msra.mxu0 0.0
    %3698 = vmatpush.msra.mxu0 0.0
    %3699 = vmatpush.msra.mxu0 %v3624
    %3700 = vmatpush.msra.mxu0 %v3622
    %3701 = vmatpush.msra.mxu0 %v3620
    %3702 = vmatpush.msra.mxu0 %v3618
    %3703 = vmatmul.f32.gmra.mxu0 %v3627
    %v3704 = vpop.f32.mrf.mxu0
    %v3705 = vadd.f32 %v3679, %v3704
    %3706 = vmatmul.f32.gmra.mxu0 %v3630
    %v3707 = vpop.f32.mrf.mxu0
    %v3708 = vadd.f32 %v3682, %v3707
    %3709 = vmatmul.f32.gmra.mxu0 %v3633
    %v3710 = vpop.f32.mrf.mxu0
    %v3711 = vadd.f32 %v3685, %v3710
    %3712 = vdwg.mxu0
    %3713 = vmatpush.msra.mxu0 %v3585
    %3714 = vmatpush.msra.mxu0 %v3583
    %3715 = vmatpush.msra.mxu0 %v3581
    %3716 = vmatpush.msra.mxu0 %v3579
    %3717 = vmatpush.msra.mxu0 %v3577
    %3718 = vmatpush.msra.mxu0 %v3575
    %3719 = vmatpush.msra.mxu0 %v3573
    %3720 = vmatpush.msra.mxu0 %v3571
    %3721 = vmatpush.msra.mxu0 %v3569
    %3722 = vmatpush.msra.mxu0 %v3567
    %3723 = vmatpush.msra.mxu0 %v3565
    %3724 = vmatpush.msra.mxu0 %v3563
    %3725 = vmatpush.msra.mxu0 %v3561
    %3726 = vmatpush.msra.mxu0 %v3559
    %3727 = vmatpush.msra.mxu0 %v3557
    %3728 = vmatpush.msra.mxu0 %v3555
    %3729 = vmatmul.f32.gmra.mxu0 %v3545
    %v3730 = vpop.f32.mrf.mxu0
    %v3731 = vadd.f32 0.0, %v3730
    %3732 = vmatmul.f32.gmra.mxu0 %v3548
    %v3733 = vpop.f32.mrf.mxu0
    %v3734 = vadd.f32 0.0, %v3733
    %3735 = vmatmul.f32.gmra.mxu0 %v3551
    %v3736 = vpop.f32.mrf.mxu0
    %v3737 = vadd.f32 0.0, %v3736
    %3738 = vdwg.mxu0
    %3739 = vmatpush.msra.mxu0 %v3617
    %3740 = vmatpush.msra.mxu0 %v3615
    %3741 = vmatpush.msra.mxu0 %v3613
    %3742 = vmatpush.msra.mxu0 %v3611
    %3743 = vmatpush.msra.mxu0 %v3609
    %3744 = vmatpush.msra.mxu0 %v3607
    %3745 = vmatpush.msra.mxu0 %v3605
    %3746 = vmatpush.msra.mxu0 %v3603
    %3747 = vmatpush.msra.mxu0 %v3601
    %3748 = vmatpush.msra.mxu0 %v3599
    %3749 = vmatpush.msra.mxu0 %v3597
    %3750 = vmatpush.msra.mxu0 %v3595
    %3751 = vmatpush.msra.mxu0 %v3593
    %3752 = vmatpush.msra.mxu0 %v3591
    %3753 = vmatpush.msra.mxu0 %v3589
    %3754 = vmatpush.msra.mxu0 %v3587
    %3755 = vmatmul.f32.gmra.mxu0 %v3546
    %v3756 = vpop.f32.mrf.mxu0
    %v3757 = vadd.f32 %v3731, %v3756
    %3758 = vmatmul.f32.gmra.mxu0 %v3549
    %v3759 = vpop.f32.mrf.mxu0
    %v3760 = vadd.f32 %v3734, %v3759
    %3761 = vmatmul.f32.gmra.mxu0 %v3552
    %v3762 = vpop.f32.mrf.mxu0
    %v3763 = vadd.f32 %v3737, %v3762
    %3764 = vdwg.mxu0
    %3765 = vmatpush.msra.mxu0 0.0
    %3766 = vmatpush.msra.mxu0 0.0
    %3767 = vmatpush.msra.mxu0 0.0
    %3768 = vmatpush.msra.mxu0 0.0
    %3769 = vmatpush.msra.mxu0 0.0
    %3770 = vmatpush.msra.mxu0 0.0
    %3771 = vmatpush.msra.mxu0 0.0
    %3772 = vmatpush.msra.mxu0 0.0
    %3773 = vmatpush.msra.mxu0 0.0
    %3774 = vmatpush.msra.mxu0 0.0
    %3775 = vmatpush.msra.mxu0 0.0
    %3776 = vmatpush.msra.mxu0 0.0
    %3777 = vmatpush.msra.mxu0 %v3625
    %3778 = vmatpush.msra.mxu0 %v3623
    %3779 = vmatpush.msra.mxu0 %v3621
    %3780 = vmatpush.msra.mxu0 %v3619
    %3781 = vmatmul.f32.gmra.mxu0 %v3627
    %v3782 = vpop.f32.mrf.mxu0
    %v3783 = vadd.f32 %v3757, %v3782
    %3784 = vmatmul.f32.gmra.mxu0 %v3630
    %v3785 = vpop.f32.mrf.mxu0
    %v3786 = vadd.f32 %v3760, %v3785
    %3787 = vmatmul.f32.gmra.mxu0 %v3633
    %v3788 = vpop.f32.mrf.mxu0
    %v3789 = vadd.f32 %v3763, %v3788
    %3790 = vdwg.mxu0
    %v3791 = vld [vmem:[%s25] sm:$0xff]
    %v3792 = vld [vmem:[%s25 + $0x8] sm:$0xf]
    %vm3793 = vcmask 195584
    %v3795 = vsel %vm3793, %v3791, 0
    %v3798 = vsel %vm3793, %v3792, 0
    %3800 = vmatpush.msra.mxu0 0.0
    %3801 = vmatpush.msra.mxu0 0.0
    %3802 = vmatpush.msra.mxu0 0.0
    %3803 = vmatpush.msra.mxu0 0.0
    %3804 = vmatpush.msra.mxu0 0.0
    %3805 = vmatpush.msra.mxu0 0.0
    %3806 = vmatpush.msra.mxu0 0.0
    %3807 = vmatpush.msra.mxu0 0.0
    %3808 = vmatpush.msra.mxu0 0.0
    %3809 = vmatpush.msra.mxu0 0.0
    %3810 = vmatpush.msra.mxu0 0.0
    %3811 = vmatpush.msra.mxu0 0.0
    %3812 = vmatpush.msra.mxu0 0.0
    %3813 = vmatpush.msra.mxu0 %v3711
    %3814 = vmatpush.msra.mxu0 %v3708
    %3815 = vmatpush.msra.mxu0 %v3705
    %3816 = vmatmul.f32.gmra.mxu0 %v3795
    %v3817 = vpop.f32.mrf.mxu0
    %v3818 = vadd.f32 0.0, %v3817
    %3819 = vmatmul.f32.gmra.mxu0 %v3798
    %v3820 = vpop.f32.mrf.mxu0
    %v3821 = vadd.f32 0.0, %v3820
    %3822 = vdwg.mxu0
    %3823 = vmatpush.msra.mxu0 0.0
    %3824 = vmatpush.msra.mxu0 0.0
    %3825 = vmatpush.msra.mxu0 0.0
    %3826 = vmatpush.msra.mxu0 0.0
    %3827 = vmatpush.msra.mxu0 0.0
    %3828 = vmatpush.msra.mxu0 0.0
    %3829 = vmatpush.msra.mxu0 0.0
    %3830 = vmatpush.msra.mxu0 0.0
    %3831 = vmatpush.msra.mxu0 0.0
    %3832 = vmatpush.msra.mxu0 0.0
    %3833 = vmatpush.msra.mxu0 0.0
    %3834 = vmatpush.msra.mxu0 0.0
    %3835 = vmatpush.msra.mxu0 0.0
    %3836 = vmatpush.msra.mxu0 %v3789
    %3837 = vmatpush.msra.mxu0 %v3786
    %3838 = vmatpush.msra.mxu0 %v3783
    %3839 = vmatmul.f32.gmra.mxu0 %v3795
    %v3840 = vpop.f32.mrf.mxu0
    %v3841 = vadd.f32 0.0, %v3840
    %3842 = vmatmul.f32.gmra.mxu0 %v3798
    %v3843 = vpop.f32.mrf.mxu0
    %v3844 = vadd.f32 0.0, %v3843
    %3845 = vdwg.mxu0
    %v3846 = vld [vmem:[%s27] sm:$0xff]
    %v3847 = vld [vmem:[%s27 + $0x8] sm:$0xf]
    %v3849 = vsel %vm3793, %v3846, 0
    %v3852 = vsel %vm3793, %v3847, 0
    %3854 = vmatpush.msra.mxu0 0.0
    %3855 = vmatpush.msra.mxu0 0.0
    %3856 = vmatpush.msra.mxu0 0.0
    %3857 = vmatpush.msra.mxu0 0.0
    %3858 = vmatpush.msra.mxu0 0.0
    %3859 = vmatpush.msra.mxu0 0.0
    %3860 = vmatpush.msra.mxu0 0.0
    %3861 = vmatpush.msra.mxu0 0.0
    %3862 = vmatpush.msra.mxu0 0.0
    %3863 = vmatpush.msra.mxu0 0.0
    %3864 = vmatpush.msra.mxu0 0.0
    %3865 = vmatpush.msra.mxu0 0.0
    %3866 = vmatpush.msra.mxu0 0.0
    %3867 = vmatpush.msra.mxu0 %v3711
    %3868 = vmatpush.msra.mxu0 %v3708
    %3869 = vmatpush.msra.mxu0 %v3705
    %3870 = vmatmul.f32.gmra.mxu0 %v3849
    %v3871 = vpop.f32.mrf.mxu0
    %v3872 = vadd.f32 0.0, %v3871
    %3873 = vmatmul.f32.gmra.mxu0 %v3852
    %v3874 = vpop.f32.mrf.mxu0
    %v3875 = vadd.f32 0.0, %v3874
    %3876 = vdwg.mxu0
    %3877 = vmatpush.msra.mxu0 0.0
    %3878 = vmatpush.msra.mxu0 0.0
    %3879 = vmatpush.msra.mxu0 0.0
    %3880 = vmatpush.msra.mxu0 0.0
    %3881 = vmatpush.msra.mxu0 0.0
    %3882 = vmatpush.msra.mxu0 0.0
    %3883 = vmatpush.msra.mxu0 0.0
    %3884 = vmatpush.msra.mxu0 0.0
    %3885 = vmatpush.msra.mxu0 0.0
    %3886 = vmatpush.msra.mxu0 0.0
    %3887 = vmatpush.msra.mxu0 0.0
    %3888 = vmatpush.msra.mxu0 0.0
    %3889 = vmatpush.msra.mxu0 0.0
    %3890 = vmatpush.msra.mxu0 %v3789
    %3891 = vmatpush.msra.mxu0 %v3786
    %3892 = vmatpush.msra.mxu0 %v3783
    %3893 = vmatmul.f32.gmra.mxu0 %v3849
    %v3894 = vpop.f32.mrf.mxu0
    %v3895 = vadd.f32 0.0, %v3894
    %3896 = vmatmul.f32.gmra.mxu0 %v3852
    %v3897 = vpop.f32.mrf.mxu0
    %v3898 = vadd.f32 0.0, %v3897
    %3899 = vdwg.mxu0
    %v3900 = vmax.f32 %v3818, %v3872
    %v3901 = vmax.f32 %v3841, %v3895
    %v3902 = vmax.f32 %v3821, %v3875
    %v3903 = vmax.f32 %v3844, %v3898
    %v3904 = vld [vmem:[%s29] sm:$0xff]
    %v3905 = vld [vmem:[%s29 + $0x8] sm:$0xff]
    %v3906 = vld [vmem:[%s29 + $0x10] sm:$0xff]
    %v3907 = vld [vmem:[%s29 + $0x18] sm:$0xff]
    %v3908 = vld [vmem:[%s29 + $0x20] sm:$0xff]
    %v3909 = vld [vmem:[%s29 + $0x28] sm:$0xff]
    %v3910 = vld [vmem:[%s29 + $0x30] sm:$0xff]
    %v3911 = vld [vmem:[%s29 + $0x38] sm:$0xff]
    %v3912 = vld [vmem:[%s29 + $0x40] sm:$0xff]
    %v3913 = vld [vmem:[%s29 + $0x48] sm:$0xff]
    %v3914 = vld [vmem:[%s29 + $0x50] sm:$0xff]
    %v3915 = vld [vmem:[%s29 + $0x58] sm:$0xff]
    %v3916 = vld [vmem:[%s29 + $0x60] sm:$0xff]
    %v3917 = vld [vmem:[%s29 + $0x68] sm:$0xff]
    %v3918 = vld [vmem:[%s29 + $0x70] sm:$0xff]
    %v3919 = vld [vmem:[%s29 + $0x78] sm:$0xff]
    %v3920 = vld [vmem:[%s29 + $0x80] sm:$0xff]
    %v3921 = vld [vmem:[%s29 + $0x88] sm:$0xff]
    %v3922 = vld [vmem:[%s29 + $0x90] sm:$0xff]
    %v3923 = vld [vmem:[%s29 + $0x98] sm:$0xff]
    %v3924 = vld [vmem:[%s29 + $0xa0] sm:$0xff]
    %v3925 = vld [vmem:[%s29 + $0xa8] sm:$0xff]
    %v3926 = vld [vmem:[%s29 + $0xb0] sm:$0xff]
    %v3927 = vld [vmem:[%s29 + $0xb8] sm:$0xff]
    %v3928 = vld [vmem:[%s29 + $0xc0] sm:$0xff]
    %v3929 = vld [vmem:[%s29 + $0xc8] sm:$0xff]
    %v3930 = vld [vmem:[%s29 + $0xd0] sm:$0xff]
    %v3931 = vld [vmem:[%s29 + $0xd8] sm:$0xff]
    %v3932 = vld [vmem:[%s29 + $0xe0] sm:$0xff]
    %v3933 = vld [vmem:[%s29 + $0xe8] sm:$0xff]
    %vm3934 = vcmask 916480
    %v3936 = vsel %vm3934, %v3901, 0
    %v3939 = vsel %vm3934, %v3903, 0
    %3941 = vmatpush.msra.mxu0 %v3919
    %3942 = vmatpush.msra.mxu0 %v3918
    %3943 = vmatpush.msra.mxu0 %v3917
    %3944 = vmatpush.msra.mxu0 %v3916
    %3945 = vmatpush.msra.mxu0 %v3915
    %3946 = vmatpush.msra.mxu0 %v3914
    %3947 = vmatpush.msra.mxu0 %v3913
    %3948 = vmatpush.msra.mxu0 %v3912
    %3949 = vmatpush.msra.mxu0 %v3911
    %3950 = vmatpush.msra.mxu0 %v3910
    %3951 = vmatpush.msra.mxu0 %v3909
    %3952 = vmatpush.msra.mxu0 %v3908
    %3953 = vmatpush.msra.mxu0 %v3907
    %3954 = vmatpush.msra.mxu0 %v3906
    %3955 = vmatpush.msra.mxu0 %v3905
    %3956 = vmatpush.msra.mxu0 %v3904
    %3957 = vmatmul.f32.gmra.mxu0 %v3900
    %v3958 = vpop.f32.mrf.mxu0
    %v3959 = vadd.f32 0.0, %v3958
    %3960 = vmatmul.f32.gmra.mxu0 %v3902
    %v3961 = vpop.f32.mrf.mxu0
    %v3962 = vadd.f32 0.0, %v3961
    %3963 = vdwg.mxu0
    %3964 = vmatpush.msra.mxu0 0.0
    %3965 = vmatpush.msra.mxu0 0.0
    %3966 = vmatpush.msra.mxu0 %v3933
    %3967 = vmatpush.msra.mxu0 %v3932
    %3968 = vmatpush.msra.mxu0 %v3931
    %3969 = vmatpush.msra.mxu0 %v3930
    %3970 = vmatpush.msra.mxu0 %v3929
    %3971 = vmatpush.msra.mxu0 %v3928
    %3972 = vmatpush.msra.mxu0 %v3927
    %3973 = vmatpush.msra.mxu0 %v3926
    %3974 = vmatpush.msra.mxu0 %v3925
    %3975 = vmatpush.msra.mxu0 %v3924
    %3976 = vmatpush.msra.mxu0 %v3923
    %3977 = vmatpush.msra.mxu0 %v3922
    %3978 = vmatpush.msra.mxu0 %v3921
    %3979 = vmatpush.msra.mxu0 %v3920
    %3980 = vmatmul.f32.gmra.mxu0 %v3936
    %v3981 = vpop.f32.mrf.mxu0
    %v3982 = vadd.f32 %v3959, %v3981
    %3983 = vmatmul.f32.gmra.mxu0 %v3939
    %v3984 = vpop.f32.mrf.mxu0
    %v3985 = vadd.f32 %v3962, %v3984
    %3986 = vdwg.mxu0
    %v3987 = vld [vmem:[%s31] sm:$0xff]
    %v3988 = vld [vmem:[%s31 + $0x8] sm:$0xff]
    %v3989 = vld [vmem:[%s31 + $0x10] sm:$0xff]
    %v3990 = vld [vmem:[%s31 + $0x18] sm:$0xff]
    %v3991 = vld [vmem:[%s31 + $0x20] sm:$0xff]
    %v3992 = vld [vmem:[%s31 + $0x28] sm:$0xff]
    %v3993 = vld [vmem:[%s31 + $0x30] sm:$0xff]
    %v3994 = vld [vmem:[%s31 + $0x38] sm:$0xff]
    %v3995 = vld [vmem:[%s31 + $0x40] sm:$0xff]
    %v3996 = vld [vmem:[%s31 + $0x48] sm:$0xff]
    %v3997 = vld [vmem:[%s31 + $0x50] sm:$0xff]
    %v3998 = vld [vmem:[%s31 + $0x58] sm:$0xff]
    %v3999 = vld [vmem:[%s31 + $0x60] sm:$0xff]
    %v4000 = vld [vmem:[%s31 + $0x68] sm:$0xff]
    %v4001 = vld [vmem:[%s31 + $0x70] sm:$0xff]
    %v4002 = vld [vmem:[%s31 + $0x78] sm:$0xff]
    %v4003 = vld [vmem:[%s31 + $0x80] sm:$0xff]
    %v4004 = vld [vmem:[%s31 + $0x88] sm:$0xff]
    %v4005 = vld [vmem:[%s31 + $0x90] sm:$0xff]
    %v4006 = vld [vmem:[%s31 + $0x98] sm:$0xff]
    %v4007 = vld [vmem:[%s31 + $0xa0] sm:$0xff]
    %v4008 = vld [vmem:[%s31 + $0xa8] sm:$0xff]
    %v4009 = vld [vmem:[%s31 + $0xb0] sm:$0xff]
    %v4010 = vld [vmem:[%s31 + $0xb8] sm:$0xff]
    %v4011 = vld [vmem:[%s31 + $0xc0] sm:$0xff]
    %v4012 = vld [vmem:[%s31 + $0xc8] sm:$0xff]
    %v4013 = vld [vmem:[%s31 + $0xd0] sm:$0xff]
    %v4014 = vld [vmem:[%s31 + $0xd8] sm:$0xff]
    %v4015 = vld [vmem:[%s31 + $0xe0] sm:$0xff]
    %v4016 = vld [vmem:[%s31 + $0xe8] sm:$0xff]
    %4017 = vmatpush.msra.mxu0 %v4002
    %4018 = vmatpush.msra.mxu0 %v4001
    %4019 = vmatpush.msra.mxu0 %v4000
    %4020 = vmatpush.msra.mxu0 %v3999
    %4021 = vmatpush.msra.mxu0 %v3998
    %4022 = vmatpush.msra.mxu0 %v3997
    %4023 = vmatpush.msra.mxu0 %v3996
    %4024 = vmatpush.msra.mxu0 %v3995
    %4025 = vmatpush.msra.mxu0 %v3994
    %4026 = vmatpush.msra.mxu0 %v3993
    %4027 = vmatpush.msra.mxu0 %v3992
    %4028 = vmatpush.msra.mxu0 %v3991
    %4029 = vmatpush.msra.mxu0 %v3990
    %4030 = vmatpush.msra.mxu0 %v3989
    %4031 = vmatpush.msra.mxu0 %v3988
    %4032 = vmatpush.msra.mxu0 %v3987
    %4033 = vmatmul.f32.gmra.mxu0 %v3900
    %v4034 = vpop.f32.mrf.mxu0
    %v4035 = vadd.f32 0.0, %v4034
    %4036 = vmatmul.f32.gmra.mxu0 %v3902
    %v4037 = vpop.f32.mrf.mxu0
    %v4038 = vadd.f32 0.0, %v4037
    %4039 = vdwg.mxu0
    %4040 = vmatpush.msra.mxu0 0.0
    %4041 = vmatpush.msra.mxu0 0.0
    %4042 = vmatpush.msra.mxu0 %v4016
    %4043 = vmatpush.msra.mxu0 %v4015
    %4044 = vmatpush.msra.mxu0 %v4014
    %4045 = vmatpush.msra.mxu0 %v4013
    %4046 = vmatpush.msra.mxu0 %v4012
    %4047 = vmatpush.msra.mxu0 %v4011
    %4048 = vmatpush.msra.mxu0 %v4010
    %4049 = vmatpush.msra.mxu0 %v4009
    %4050 = vmatpush.msra.mxu0 %v4008
    %4051 = vmatpush.msra.mxu0 %v4007
    %4052 = vmatpush.msra.mxu0 %v4006
    %4053 = vmatpush.msra.mxu0 %v4005
    %4054 = vmatpush.msra.mxu0 %v4004
    %4055 = vmatpush.msra.mxu0 %v4003
    %4056 = vmatmul.f32.gmra.mxu0 %v3936
    %v4057 = vpop.f32.mrf.mxu0
    %v4058 = vadd.f32 %v4035, %v4057
    %4059 = vmatmul.f32.gmra.mxu0 %v3939
    %v4060 = vpop.f32.mrf.mxu0
    %v4061 = vadd.f32 %v4038, %v4060
    %4062 = vdwg.mxu0
    %v4063 = vmax.f32 %v3982, %v4058
    %v4064 = vmax.f32 %v3985, %v4061
    %vm4065 = vcmask 982016
    %4066 = vst.msk [vmem:[#allocation4] sm:$0xff] %vm4065, %v4063
    %vm4067 = vcmask 977920
    %4068 = vst.msk [vmem:[#allocation4 + $0x8] sm:$0xf] %vm4067, %v4064
    %v4069 = vld [vmem:[%s2944] sm:$0xff]
    %v4070 = vld [vmem:[%s2944 + $0x8] sm:$0xff]
    %v4071 = vld [vmem:[%s2944 + $0x10] sm:$0xff]
    %v4072 = vld [vmem:[%s2944 + $0x18] sm:$0xff]
    %v4073 = vld [vmem:[%s2944 + $0x20] sm:$0xff]
    %v4074 = vld [vmem:[%s2944 + $0x28] sm:$0xff]
    %v4075 = vld [vmem:[%s2944 + $0x30] sm:$0xff]
    %v4076 = vld [vmem:[%s2944 + $0x38] sm:$0xff]
    %v4077 = vld [vmem:[%s2944 + $0x40] sm:$0xff]
    %v4078 = vld [vmem:[%s23] sm:$0xff]
    %v4079 = vld [vmem:[%s23 + $0x8] sm:$0xff]
    %v4080 = vld [vmem:[%s23 + $0x10] sm:$0xff]
    %v4081 = vld [vmem:[%s23 + $0x18] sm:$0xff]
    %v4082 = vld [vmem:[%s23 + $0x20] sm:$0xff]
    %v4083 = vld [vmem:[%s23 + $0x28] sm:$0xff]
    %v4084 = vld [vmem:[%s23 + $0x30] sm:$0xff]
    %v4085 = vld [vmem:[%s23 + $0x38] sm:$0xff]
    %v4086 = vld [vmem:[%s23 + $0x40] sm:$0xff]
    %v4087 = vld [vmem:[%s23 + $0x48] sm:$0xff]
    %v4088 = vld [vmem:[%s23 + $0x50] sm:$0xff]
    %v4089 = vld [vmem:[%s23 + $0x58] sm:$0xff]
    %v4090 = vld [vmem:[%s23 + $0x60] sm:$0xff]
    %v4091 = vld [vmem:[%s23 + $0x68] sm:$0xff]
    %v4092 = vld [vmem:[%s23 + $0x70] sm:$0xff]
    %v4093 = vld [vmem:[%s23 + $0x78] sm:$0xff]
    %v4094 = vld [vmem:[%s23 + $0x80] sm:$0xff]
    %v4095 = vld [vmem:[%s23 + $0x88] sm:$0xff]
    %v4096 = vld [vmem:[%s23 + $0x90] sm:$0xff]
    %v4097 = vld [vmem:[%s23 + $0x98] sm:$0xff]
    %v4098 = vld [vmem:[%s23 + $0xa0] sm:$0xff]
    %v4099 = vld [vmem:[%s23 + $0xa8] sm:$0xff]
    %v4100 = vld [vmem:[%s23 + $0xb0] sm:$0xff]
    %v4101 = vld [vmem:[%s23 + $0xb8] sm:$0xff]
    %v4102 = vld [vmem:[%s23 + $0xc0] sm:$0xff]
    %v4103 = vld [vmem:[%s23 + $0xc8] sm:$0xff]
    %v4104 = vld [vmem:[%s23 + $0xd0] sm:$0xff]
    %v4105 = vld [vmem:[%s23 + $0xd8] sm:$0xff]
    %v4106 = vld [vmem:[%s23 + $0xe0] sm:$0xff]
    %v4107 = vld [vmem:[%s23 + $0xe8] sm:$0xff]
    %v4108 = vld [vmem:[%s23 + $0xf0] sm:$0xff]
    %v4109 = vld [vmem:[%s23 + $0xf8] sm:$0xff]
    %v4110 = vld [vmem:[%s23 + $0x100] sm:$0xff]
    %v4111 = vld [vmem:[%s23 + $0x108] sm:$0xff]
    %v4112 = vld [vmem:[%s23 + $0x110] sm:$0xff]
    %v4113 = vld [vmem:[%s23 + $0x118] sm:$0xff]
    %v4114 = vld [vmem:[%s23 + $0x120] sm:$0xff]
    %v4115 = vld [vmem:[%s23 + $0x128] sm:$0xff]
    %v4116 = vld [vmem:[%s23 + $0x130] sm:$0xff]
    %v4117 = vld [vmem:[%s23 + $0x138] sm:$0xff]
    %v4118 = vld [vmem:[%s23 + $0x140] sm:$0xff]
    %v4119 = vld [vmem:[%s23 + $0x148] sm:$0xff]
    %v4120 = vld [vmem:[%s23 + $0x150] sm:$0xff]
    %v4121 = vld [vmem:[%s23 + $0x158] sm:$0xff]
    %v4122 = vld [vmem:[%s23 + $0x160] sm:$0xff]
    %v4123 = vld [vmem:[%s23 + $0x168] sm:$0xff]
    %v4124 = vld [vmem:[%s23 + $0x170] sm:$0xff]
    %v4125 = vld [vmem:[%s23 + $0x178] sm:$0xff]
    %v4126 = vld [vmem:[%s23 + $0x180] sm:$0xff]
    %v4127 = vld [vmem:[%s23 + $0x188] sm:$0xff]
    %v4128 = vld [vmem:[%s23 + $0x190] sm:$0xff]
    %v4129 = vld [vmem:[%s23 + $0x198] sm:$0xff]
    %v4130 = vld [vmem:[%s23 + $0x1a0] sm:$0xff]
    %v4131 = vld [vmem:[%s23 + $0x1a8] sm:$0xff]
    %v4132 = vld [vmem:[%s23 + $0x1b0] sm:$0xff]
    %v4133 = vld [vmem:[%s23 + $0x1b8] sm:$0xff]
    %v4134 = vld [vmem:[%s23 + $0x1c0] sm:$0xff]
    %v4135 = vld [vmem:[%s23 + $0x1c8] sm:$0xff]
    %v4136 = vld [vmem:[%s23 + $0x1d0] sm:$0xff]
    %v4137 = vld [vmem:[%s23 + $0x1d8] sm:$0xff]
    %v4138 = vld [vmem:[%s23 + $0x1e0] sm:$0xff]
    %v4139 = vld [vmem:[%s23 + $0x1e8] sm:$0xff]
    %v4140 = vld [vmem:[%s23 + $0x1f0] sm:$0xff]
    %v4141 = vld [vmem:[%s23 + $0x1f8] sm:$0xff]
    %v4142 = vld [vmem:[%s23 + $0x200] sm:$0xff]
    %v4143 = vld [vmem:[%s23 + $0x208] sm:$0xff]
    %v4144 = vld [vmem:[%s23 + $0x210] sm:$0xff]
    %v4145 = vld [vmem:[%s23 + $0x218] sm:$0xff]
    %v4146 = vld [vmem:[%s23 + $0x220] sm:$0xff]
    %v4147 = vld [vmem:[%s23 + $0x228] sm:$0xff]
    %v4148 = vld [vmem:[%s23 + $0x230] sm:$0xff]
    %v4149 = vld [vmem:[%s23 + $0x238] sm:$0xff]
    %v4151 = vsel %vm2038, %v4071, 0
    %v4154 = vsel %vm2038, %v4074, 0
    %v4157 = vsel %vm2038, %v4077, 0
    %4159 = vmatpush.msra.mxu0 %v4108
    %4160 = vmatpush.msra.mxu0 %v4106
    %4161 = vmatpush.msra.mxu0 %v4104
    %4162 = vmatpush.msra.mxu0 %v4102
    %4163 = vmatpush.msra.mxu0 %v4100
    %4164 = vmatpush.msra.mxu0 %v4098
    %4165 = vmatpush.msra.mxu0 %v4096
    %4166 = vmatpush.msra.mxu0 %v4094
    %4167 = vmatpush.msra.mxu0 %v4092
    %4168 = vmatpush.msra.mxu0 %v4090
    %4169 = vmatpush.msra.mxu0 %v4088
    %4170 = vmatpush.msra.mxu0 %v4086
    %4171 = vmatpush.msra.mxu0 %v4084
    %4172 = vmatpush.msra.mxu0 %v4082
    %4173 = vmatpush.msra.mxu0 %v4080
    %4174 = vmatpush.msra.mxu0 %v4078
    %4175 = vmatmul.f32.gmra.mxu0 %v4069
    %v4176 = vpop.f32.mrf.mxu0
    %v4177 = vadd.f32 0.0, %v4176
    %4178 = vmatmul.f32.gmra.mxu0 %v4072
    %v4179 = vpop.f32.mrf.mxu0
    %v4180 = vadd.f32 0.0, %v4179
    %4181 = vmatmul.f32.gmra.mxu0 %v4075
    %v4182 = vpop.f32.mrf.mxu0
    %v4183 = vadd.f32 0.0, %v4182
    %4184 = vdwg.mxu0
    %4185 = vmatpush.msra.mxu0 %v4140
    %4186 = vmatpush.msra.mxu0 %v4138
    %4187 = vmatpush.msra.mxu0 %v4136
    %4188 = vmatpush.msra.mxu0 %v4134
    %4189 = vmatpush.msra.mxu0 %v4132
    %4190 = vmatpush.msra.mxu0 %v4130
    %4191 = vmatpush.msra.mxu0 %v4128
    %4192 = vmatpush.msra.mxu0 %v4126
    %4193 = vmatpush.msra.mxu0 %v4124
    %4194 = vmatpush.msra.mxu0 %v4122
    %4195 = vmatpush.msra.mxu0 %v4120
    %4196 = vmatpush.msra.mxu0 %v4118
    %4197 = vmatpush.msra.mxu0 %v4116
    %4198 = vmatpush.msra.mxu0 %v4114
    %4199 = vmatpush.msra.mxu0 %v4112
    %4200 = vmatpush.msra.mxu0 %v4110
    %4201 = vmatmul.f32.gmra.mxu0 %v4070
    %v4202 = vpop.f32.mrf.mxu0
    %v4203 = vadd.f32 %v4177, %v4202
    %4204 = vmatmul.f32.gmra.mxu0 %v4073
    %v4205 = vpop.f32.mrf.mxu0
    %v4206 = vadd.f32 %v4180, %v4205
    %4207 = vmatmul.f32.gmra.mxu0 %v4076
    %v4208 = vpop.f32.mrf.mxu0
    %v4209 = vadd.f32 %v4183, %v4208
    %4210 = vdwg.mxu0
    %4211 = vmatpush.msra.mxu0 0.0
    %4212 = vmatpush.msra.mxu0 0.0
    %4213 = vmatpush.msra.mxu0 0.0
    %4214 = vmatpush.msra.mxu0 0.0
    %4215 = vmatpush.msra.mxu0 0.0
    %4216 = vmatpush.msra.mxu0 0.0
    %4217 = vmatpush.msra.mxu0 0.0
    %4218 = vmatpush.msra.mxu0 0.0
    %4219 = vmatpush.msra.mxu0 0.0
    %4220 = vmatpush.msra.mxu0 0.0
    %4221 = vmatpush.msra.mxu0 0.0
    %4222 = vmatpush.msra.mxu0 0.0
    %4223 = vmatpush.msra.mxu0 %v4148
    %4224 = vmatpush.msra.mxu0 %v4146
    %4225 = vmatpush.msra.mxu0 %v4144
    %4226 = vmatpush.msra.mxu0 %v4142
    %4227 = vmatmul.f32.gmra.mxu0 %v4151
    %v4228 = vpop.f32.mrf.mxu0
    %v4229 = vadd.f32 %v4203, %v4228
    %4230 = vmatmul.f32.gmra.mxu0 %v4154
    %v4231 = vpop.f32.mrf.mxu0
    %v4232 = vadd.f32 %v4206, %v4231
    %4233 = vmatmul.f32.gmra.mxu0 %v4157
    %v4234 = vpop.f32.mrf.mxu0
    %v4235 = vadd.f32 %v4209, %v4234
    %4236 = vdwg.mxu0
    %4237 = vmatpush.msra.mxu0 %v4109
    %4238 = vmatpush.msra.mxu0 %v4107
    %4239 = vmatpush.msra.mxu0 %v4105
    %4240 = vmatpush.msra.mxu0 %v4103
    %4241 = vmatpush.msra.mxu0 %v4101
    %4242 = vmatpush.msra.mxu0 %v4099
    %4243 = vmatpush.msra.mxu0 %v4097
    %4244 = vmatpush.msra.mxu0 %v4095
    %4245 = vmatpush.msra.mxu0 %v4093
    %4246 = vmatpush.msra.mxu0 %v4091
    %4247 = vmatpush.msra.mxu0 %v4089
    %4248 = vmatpush.msra.mxu0 %v4087
    %4249 = vmatpush.msra.mxu0 %v4085
    %4250 = vmatpush.msra.mxu0 %v4083
    %4251 = vmatpush.msra.mxu0 %v4081
    %4252 = vmatpush.msra.mxu0 %v4079
    %4253 = vmatmul.f32.gmra.mxu0 %v4069
    %v4254 = vpop.f32.mrf.mxu0
    %v4255 = vadd.f32 0.0, %v4254
    %4256 = vmatmul.f32.gmra.mxu0 %v4072
    %v4257 = vpop.f32.mrf.mxu0
    %v4258 = vadd.f32 0.0, %v4257
    %4259 = vmatmul.f32.gmra.mxu0 %v4075
    %v4260 = vpop.f32.mrf.mxu0
    %v4261 = vadd.f32 0.0, %v4260
    %4262 = vdwg.mxu0
    %4263 = vmatpush.msra.mxu0 %v4141
    %4264 = vmatpush.msra.mxu0 %v4139
    %4265 = vmatpush.msra.mxu0 %v4137
    %4266 = vmatpush.msra.mxu0 %v4135
    %4267 = vmatpush.msra.mxu0 %v4133
    %4268 = vmatpush.msra.mxu0 %v4131
    %4269 = vmatpush.msra.mxu0 %v4129
    %4270 = vmatpush.msra.mxu0 %v4127
    %4271 = vmatpush.msra.mxu0 %v4125
    %4272 = vmatpush.msra.mxu0 %v4123
    %4273 = vmatpush.msra.mxu0 %v4121
    %4274 = vmatpush.msra.mxu0 %v4119
    %4275 = vmatpush.msra.mxu0 %v4117
    %4276 = vmatpush.msra.mxu0 %v4115
    %4277 = vmatpush.msra.mxu0 %v4113
    %4278 = vmatpush.msra.mxu0 %v4111
    %4279 = vmatmul.f32.gmra.mxu0 %v4070
    %v4280 = vpop.f32.mrf.mxu0
    %v4281 = vadd.f32 %v4255, %v4280
    %4282 = vmatmul.f32.gmra.mxu0 %v4073
    %v4283 = vpop.f32.mrf.mxu0
    %v4284 = vadd.f32 %v4258, %v4283
    %4285 = vmatmul.f32.gmra.mxu0 %v4076
    %v4286 = vpop.f32.mrf.mxu0
    %v4287 = vadd.f32 %v4261, %v4286
    %4288 = vdwg.mxu0
    %4289 = vmatpush.msra.mxu0 0.0
    %4290 = vmatpush.msra.mxu0 0.0
    %4291 = vmatpush.msra.mxu0 0.0
    %4292 = vmatpush.msra.mxu0 0.0
    %4293 = vmatpush.msra.mxu0 0.0
    %4294 = vmatpush.msra.mxu0 0.0
    %4295 = vmatpush.msra.mxu0 0.0
    %4296 = vmatpush.msra.mxu0 0.0
    %4297 = vmatpush.msra.mxu0 0.0
    %4298 = vmatpush.msra.mxu0 0.0
    %4299 = vmatpush.msra.mxu0 0.0
    %4300 = vmatpush.msra.mxu0 0.0
    %4301 = vmatpush.msra.mxu0 %v4149
    %4302 = vmatpush.msra.mxu0 %v4147
    %4303 = vmatpush.msra.mxu0 %v4145
    %4304 = vmatpush.msra.mxu0 %v4143
    %4305 = vmatmul.f32.gmra.mxu0 %v4151
    %v4306 = vpop.f32.mrf.mxu0
    %v4307 = vadd.f32 %v4281, %v4306
    %4308 = vmatmul.f32.gmra.mxu0 %v4154
    %v4309 = vpop.f32.mrf.mxu0
    %v4310 = vadd.f32 %v4284, %v4309
    %4311 = vmatmul.f32.gmra.mxu0 %v4157
    %v4312 = vpop.f32.mrf.mxu0
    %v4313 = vadd.f32 %v4287, %v4312
    %4314 = vdwg.mxu0
    %v4315 = vld [vmem:[%s25] sm:$0xff]
    %v4316 = vld [vmem:[%s25 + $0x8] sm:$0xf]
    %v4318 = vsel %vm3793, %v4315, 0
    %v4321 = vsel %vm3793, %v4316, 0
    %4323 = vmatpush.msra.mxu0 0.0
    %4324 = vmatpush.msra.mxu0 0.0
    %4325 = vmatpush.msra.mxu0 0.0
    %4326 = vmatpush.msra.mxu0 0.0
    %4327 = vmatpush.msra.mxu0 0.0
    %4328 = vmatpush.msra.mxu0 0.0
    %4329 = vmatpush.msra.mxu0 0.0
    %4330 = vmatpush.msra.mxu0 0.0
    %4331 = vmatpush.msra.mxu0 0.0
    %4332 = vmatpush.msra.mxu0 0.0
    %4333 = vmatpush.msra.mxu0 0.0
    %4334 = vmatpush.msra.mxu0 0.0
    %4335 = vmatpush.msra.mxu0 0.0
    %4336 = vmatpush.msra.mxu0 %v4235
    %4337 = vmatpush.msra.mxu0 %v4232
    %4338 = vmatpush.msra.mxu0 %v4229
    %4339 = vmatmul.f32.gmra.mxu0 %v4318
    %v4340 = vpop.f32.mrf.mxu0
    %v4341 = vadd.f32 0.0, %v4340
    %4342 = vmatmul.f32.gmra.mxu0 %v4321
    %v4343 = vpop.f32.mrf.mxu0
    %v4344 = vadd.f32 0.0, %v4343
    %4345 = vdwg.mxu0
    %4346 = vmatpush.msra.mxu0 0.0
    %4347 = vmatpush.msra.mxu0 0.0
    %4348 = vmatpush.msra.mxu0 0.0
    %4349 = vmatpush.msra.mxu0 0.0
    %4350 = vmatpush.msra.mxu0 0.0
    %4351 = vmatpush.msra.mxu0 0.0
    %4352 = vmatpush.msra.mxu0 0.0
    %4353 = vmatpush.msra.mxu0 0.0
    %4354 = vmatpush.msra.mxu0 0.0
    %4355 = vmatpush.msra.mxu0 0.0
    %4356 = vmatpush.msra.mxu0 0.0
    %4357 = vmatpush.msra.mxu0 0.0
    %4358 = vmatpush.msra.mxu0 0.0
    %4359 = vmatpush.msra.mxu0 %v4313
    %4360 = vmatpush.msra.mxu0 %v4310
    %4361 = vmatpush.msra.mxu0 %v4307
    %4362 = vmatmul.f32.gmra.mxu0 %v4318
    %v4363 = vpop.f32.mrf.mxu0
    %v4364 = vadd.f32 0.0, %v4363
    %4365 = vmatmul.f32.gmra.mxu0 %v4321
    %v4366 = vpop.f32.mrf.mxu0
    %v4367 = vadd.f32 0.0, %v4366
    %4368 = vdwg.mxu0
    %v4369 = vld [vmem:[%s27] sm:$0xff]
    %v4370 = vld [vmem:[%s27 + $0x8] sm:$0xf]
    %v4372 = vsel %vm3793, %v4369, 0
    %v4375 = vsel %vm3793, %v4370, 0
    %4377 = vmatpush.msra.mxu0 0.0
    %4378 = vmatpush.msra.mxu0 0.0
    %4379 = vmatpush.msra.mxu0 0.0
    %4380 = vmatpush.msra.mxu0 0.0
    %4381 = vmatpush.msra.mxu0 0.0
    %4382 = vmatpush.msra.mxu0 0.0
    %4383 = vmatpush.msra.mxu0 0.0
    %4384 = vmatpush.msra.mxu0 0.0
    %4385 = vmatpush.msra.mxu0 0.0
    %4386 = vmatpush.msra.mxu0 0.0
    %4387 = vmatpush.msra.mxu0 0.0
    %4388 = vmatpush.msra.mxu0 0.0
    %4389 = vmatpush.msra.mxu0 0.0
    %4390 = vmatpush.msra.mxu0 %v4235
    %4391 = vmatpush.msra.mxu0 %v4232
    %4392 = vmatpush.msra.mxu0 %v4229
    %4393 = vmatmul.f32.gmra.mxu0 %v4372
    %v4394 = vpop.f32.mrf.mxu0
    %v4395 = vadd.f32 0.0, %v4394
    %4396 = vmatmul.f32.gmra.mxu0 %v4375
    %v4397 = vpop.f32.mrf.mxu0
    %v4398 = vadd.f32 0.0, %v4397
    %4399 = vdwg.mxu0
    %4400 = vmatpush.msra.mxu0 0.0
    %4401 = vmatpush.msra.mxu0 0.0
    %4402 = vmatpush.msra.mxu0 0.0
    %4403 = vmatpush.msra.mxu0 0.0
    %4404 = vmatpush.msra.mxu0 0.0
    %4405 = vmatpush.msra.mxu0 0.0
    %4406 = vmatpush.msra.mxu0 0.0
    %4407 = vmatpush.msra.mxu0 0.0
    %4408 = vmatpush.msra.mxu0 0.0
    %4409 = vmatpush.msra.mxu0 0.0
    %4410 = vmatpush.msra.mxu0 0.0
    %4411 = vmatpush.msra.mxu0 0.0
    %4412 = vmatpush.msra.mxu0 0.0
    %4413 = vmatpush.msra.mxu0 %v4313
    %4414 = vmatpush.msra.mxu0 %v4310
    %4415 = vmatpush.msra.mxu0 %v4307
    %4416 = vmatmul.f32.gmra.mxu0 %v4372
    %v4417 = vpop.f32.mrf.mxu0
    %v4418 = vadd.f32 0.0, %v4417
    %4419 = vmatmul.f32.gmra.mxu0 %v4375
    %v4420 = vpop.f32.mrf.mxu0
    %v4421 = vadd.f32 0.0, %v4420
    %4422 = vdwg.mxu0
    %v4423 = vmax.f32 %v4341, %v4395
    %v4424 = vmax.f32 %v4364, %v4418
    %v4425 = vmax.f32 %v4344, %v4398
    %v4426 = vmax.f32 %v4367, %v4421
    %v4427 = vld [vmem:[%s29] sm:$0xff]
    %v4428 = vld [vmem:[%s29 + $0x8] sm:$0xff]
    %v4429 = vld [vmem:[%s29 + $0x10] sm:$0xff]
    %v4430 = vld [vmem:[%s29 + $0x18] sm:$0xff]
    %v4431 = vld [vmem:[%s29 + $0x20] sm:$0xff]
    %v4432 = vld [vmem:[%s29 + $0x28] sm:$0xff]
    %v4433 = vld [vmem:[%s29 + $0x30] sm:$0xff]
    %v4434 = vld [vmem:[%s29 + $0x38] sm:$0xff]
    %v4435 = vld [vmem:[%s29 + $0x40] sm:$0xff]
    %v4436 = vld [vmem:[%s29 + $0x48] sm:$0xff]
    %v4437 = vld [vmem:[%s29 + $0x50] sm:$0xff]
    %v4438 = vld [vmem:[%s29 + $0x58] sm:$0xff]
    %v4439 = vld [vmem:[%s29 + $0x60] sm:$0xff]
    %v4440 = vld [vmem:[%s29 + $0x68] sm:$0xff]
    %v4441 = vld [vmem:[%s29 + $0x70] sm:$0xff]
    %v4442 = vld [vmem:[%s29 + $0x78] sm:$0xff]
    %v4443 = vld [vmem:[%s29 + $0x80] sm:$0xff]
    %v4444 = vld [vmem:[%s29 + $0x88] sm:$0xff]
    %v4445 = vld [vmem:[%s29 + $0x90] sm:$0xff]
    %v4446 = vld [vmem:[%s29 + $0x98] sm:$0xff]
    %v4447 = vld [vmem:[%s29 + $0xa0] sm:$0xff]
    %v4448 = vld [vmem:[%s29 + $0xa8] sm:$0xff]
    %v4449 = vld [vmem:[%s29 + $0xb0] sm:$0xff]
    %v4450 = vld [vmem:[%s29 + $0xb8] sm:$0xff]
    %v4451 = vld [vmem:[%s29 + $0xc0] sm:$0xff]
    %v4452 = vld [vmem:[%s29 + $0xc8] sm:$0xff]
    %v4453 = vld [vmem:[%s29 + $0xd0] sm:$0xff]
    %v4454 = vld [vmem:[%s29 + $0xd8] sm:$0xff]
    %v4455 = vld [vmem:[%s29 + $0xe0] sm:$0xff]
    %v4456 = vld [vmem:[%s29 + $0xe8] sm:$0xff]
    %v4458 = vsel %vm3934, %v4424, 0
    %v4461 = vsel %vm3934, %v4426, 0
    %4463 = vmatpush.msra.mxu0 %v4442
    %4464 = vmatpush.msra.mxu0 %v4441
    %4465 = vmatpush.msra.mxu0 %v4440
    %4466 = vmatpush.msra.mxu0 %v4439
    %4467 = vmatpush.msra.mxu0 %v4438
    %4468 = vmatpush.msra.mxu0 %v4437
    %4469 = vmatpush.msra.mxu0 %v4436
    %4470 = vmatpush.msra.mxu0 %v4435
    %4471 = vmatpush.msra.mxu0 %v4434
    %4472 = vmatpush.msra.mxu0 %v4433
    %4473 = vmatpush.msra.mxu0 %v4432
    %4474 = vmatpush.msra.mxu0 %v4431
    %4475 = vmatpush.msra.mxu0 %v4430
    %4476 = vmatpush.msra.mxu0 %v4429
    %4477 = vmatpush.msra.mxu0 %v4428
    %4478 = vmatpush.msra.mxu0 %v4427
    %4479 = vmatmul.f32.gmra.mxu0 %v4423
    %v4480 = vpop.f32.mrf.mxu0
    %v4481 = vadd.f32 0.0, %v4480
    %4482 = vmatmul.f32.gmra.mxu0 %v4425
    %v4483 = vpop.f32.mrf.mxu0
    %v4484 = vadd.f32 0.0, %v4483
    %4485 = vdwg.mxu0
    %4486 = vmatpush.msra.mxu0 0.0
    %4487 = vmatpush.msra.mxu0 0.0
    %4488 = vmatpush.msra.mxu0 %v4456
    %4489 = vmatpush.msra.mxu0 %v4455
    %4490 = vmatpush.msra.mxu0 %v4454
    %4491 = vmatpush.msra.mxu0 %v4453
    %4492 = vmatpush.msra.mxu0 %v4452
    %4493 = vmatpush.msra.mxu0 %v4451
    %4494 = vmatpush.msra.mxu0 %v4450
    %4495 = vmatpush.msra.mxu0 %v4449
    %4496 = vmatpush.msra.mxu0 %v4448
    %4497 = vmatpush.msra.mxu0 %v4447
    %4498 = vmatpush.msra.mxu0 %v4446
    %4499 = vmatpush.msra.mxu0 %v4445
    %4500 = vmatpush.msra.mxu0 %v4444
    %4501 = vmatpush.msra.mxu0 %v4443
    %4502 = vmatmul.f32.gmra.mxu0 %v4458
    %v4503 = vpop.f32.mrf.mxu0
    %v4504 = vadd.f32 %v4481, %v4503
    %4505 = vmatmul.f32.gmra.mxu0 %v4461
    %v4506 = vpop.f32.mrf.mxu0
    %v4507 = vadd.f32 %v4484, %v4506
    %4508 = vdwg.mxu0
    %v4509 = vld [vmem:[%s31] sm:$0xff]
    %v4510 = vld [vmem:[%s31 + $0x8] sm:$0xff]
    %v4511 = vld [vmem:[%s31 + $0x10] sm:$0xff]
    %v4512 = vld [vmem:[%s31 + $0x18] sm:$0xff]
    %v4513 = vld [vmem:[%s31 + $0x20] sm:$0xff]
    %v4514 = vld [vmem:[%s31 + $0x28] sm:$0xff]
    %v4515 = vld [vmem:[%s31 + $0x30] sm:$0xff]
    %v4516 = vld [vmem:[%s31 + $0x38] sm:$0xff]
    %v4517 = vld [vmem:[%s31 + $0x40] sm:$0xff]
    %v4518 = vld [vmem:[%s31 + $0x48] sm:$0xff]
    %v4519 = vld [vmem:[%s31 + $0x50] sm:$0xff]
    %v4520 = vld [vmem:[%s31 + $0x58] sm:$0xff]
    %v4521 = vld [vmem:[%s31 + $0x60] sm:$0xff]
    %v4522 = vld [vmem:[%s31 + $0x68] sm:$0xff]
    %v4523 = vld [vmem:[%s31 + $0x70] sm:$0xff]
    %v4524 = vld [vmem:[%s31 + $0x78] sm:$0xff]
    %v4525 = vld [vmem:[%s31 + $0x80] sm:$0xff]
    %v4526 = vld [vmem:[%s31 + $0x88] sm:$0xff]
    %v4527 = vld [vmem:[%s31 + $0x90] sm:$0xff]
    %v4528 = vld [vmem:[%s31 + $0x98] sm:$0xff]
    %v4529 = vld [vmem:[%s31 + $0xa0] sm:$0xff]
    %v4530 = vld [vmem:[%s31 + $0xa8] sm:$0xff]
    %v4531 = vld [vmem:[%s31 + $0xb0] sm:$0xff]
    %v4532 = vld [vmem:[%s31 + $0xb8] sm:$0xff]
    %v4533 = vld [vmem:[%s31 + $0xc0] sm:$0xff]
    %v4534 = vld [vmem:[%s31 + $0xc8] sm:$0xff]
    %v4535 = vld [vmem:[%s31 + $0xd0] sm:$0xff]
    %v4536 = vld [vmem:[%s31 + $0xd8] sm:$0xff]
    %v4537 = vld [vmem:[%s31 + $0xe0] sm:$0xff]
    %v4538 = vld [vmem:[%s31 + $0xe8] sm:$0xff]
    %4539 = vmatpush.msra.mxu0 %v4524
    %4540 = vmatpush.msra.mxu0 %v4523
    %4541 = vmatpush.msra.mxu0 %v4522
    %4542 = vmatpush.msra.mxu0 %v4521
    %4543 = vmatpush.msra.mxu0 %v4520
    %4544 = vmatpush.msra.mxu0 %v4519
    %4545 = vmatpush.msra.mxu0 %v4518
    %4546 = vmatpush.msra.mxu0 %v4517
    %4547 = vmatpush.msra.mxu0 %v4516
    %4548 = vmatpush.msra.mxu0 %v4515
    %4549 = vmatpush.msra.mxu0 %v4514
    %4550 = vmatpush.msra.mxu0 %v4513
    %4551 = vmatpush.msra.mxu0 %v4512
    %4552 = vmatpush.msra.mxu0 %v4511
    %4553 = vmatpush.msra.mxu0 %v4510
    %4554 = vmatpush.msra.mxu0 %v4509
    %4555 = vmatmul.f32.gmra.mxu0 %v4423
    %v4556 = vpop.f32.mrf.mxu0
    %v4557 = vadd.f32 0.0, %v4556
    %4558 = vmatmul.f32.gmra.mxu0 %v4425
    %v4559 = vpop.f32.mrf.mxu0
    %v4560 = vadd.f32 0.0, %v4559
    %4561 = vdwg.mxu0
    %4562 = vmatpush.msra.mxu0 0.0
    %4563 = vmatpush.msra.mxu0 0.0
    %4564 = vmatpush.msra.mxu0 %v4538
    %4565 = vmatpush.msra.mxu0 %v4537
    %4566 = vmatpush.msra.mxu0 %v4536
    %4567 = vmatpush.msra.mxu0 %v4535
    %4568 = vmatpush.msra.mxu0 %v4534
    %4569 = vmatpush.msra.mxu0 %v4533
    %4570 = vmatpush.msra.mxu0 %v4532
    %4571 = vmatpush.msra.mxu0 %v4531
    %4572 = vmatpush.msra.mxu0 %v4530
    %4573 = vmatpush.msra.mxu0 %v4529
    %4574 = vmatpush.msra.mxu0 %v4528
    %4575 = vmatpush.msra.mxu0 %v4527
    %4576 = vmatpush.msra.mxu0 %v4526
    %4577 = vmatpush.msra.mxu0 %v4525
    %4578 = vmatmul.f32.gmra.mxu0 %v4458
    %v4579 = vpop.f32.mrf.mxu0
    %v4580 = vadd.f32 %v4557, %v4579
    %4581 = vmatmul.f32.gmra.mxu0 %v4461
    %v4582 = vpop.f32.mrf.mxu0
    %v4583 = vadd.f32 %v4560, %v4582
    %4584 = vdwg.mxu0
    %v4585 = vmax.f32 %v4504, %v4580
    %v4586 = vmax.f32 %v4507, %v4583
    %s4587 = scalar_lea.vmem [#allocation4], 16
    %4588 = vst.msk [vmem:[%s4587] sm:$0xff] %vm4065, %v4585
    %4589 = vst.msk [vmem:[%s4587 + $0x8] sm:$0xf] %vm4067, %v4586
    %v4590 = vld [vmem:[#allocation4] sm:$0xff]
    %v4591 = vld [vmem:[#allocation4 + $0x8] sm:$0x3]
    %v4592 = vld [vmem:[%s33] sm:$0xff]
    %v4593 = vld [vmem:[%s33 + $0x8] sm:$0xff]
    %v4594 = vld [vmem:[%s33 + $0x10] sm:$0xff]
    %v4595 = vld [vmem:[%s33 + $0x18] sm:$0xff]
    %v4596 = vld [vmem:[%s33 + $0x20] sm:$0xff]
    %v4597 = vld [vmem:[%s33 + $0x28] sm:$0xff]
    %v4598 = vld [vmem:[%s33 + $0x30] sm:$0xff]
    %v4599 = vld [vmem:[%s33 + $0x38] sm:$0xff]
    %v4600 = vld [vmem:[%s33 + $0x40] sm:$0xff]
    %v4601 = vld [vmem:[%s33 + $0x48] sm:$0xff]
    %v4602 = vld [vmem:[%s33 + $0x50] sm:$0xff]
    %v4603 = vld [vmem:[%s33 + $0x58] sm:$0xff]
    %v4604 = vld [vmem:[%s33 + $0x60] sm:$0xff]
    %v4605 = vld [vmem:[%s33 + $0x68] sm:$0xff]
    %v4606 = vld [vmem:[%s33 + $0x70] sm:$0xff]
    %v4607 = vld [vmem:[%s33 + $0x78] sm:$0xff]
    %v4608 = vld [vmem:[%s33 + $0x80] sm:$0xff]
    %v4609 = vld [vmem:[%s33 + $0x88] sm:$0xff]
    %v4610 = vld [vmem:[%s33 + $0x90] sm:$0xff]
    %v4611 = vld [vmem:[%s33 + $0x98] sm:$0xff]
    %v4612 = vld [vmem:[%s33 + $0xa0] sm:$0xff]
    %v4613 = vld [vmem:[%s33 + $0xa8] sm:$0xff]
    %v4614 = vld [vmem:[%s33 + $0xb0] sm:$0xff]
    %v4615 = vld [vmem:[%s33 + $0xb8] sm:$0xff]
    %v4616 = vld [vmem:[%s33 + $0xc0] sm:$0xff]
    %v4617 = vld [vmem:[%s33 + $0xc8] sm:$0xff]
    %v4618 = vld [vmem:[%s33 + $0xd0] sm:$0xff]
    %v4619 = vld [vmem:[%s33 + $0xd8] sm:$0xff]
    %v4620 = vld [vmem:[%s33 + $0xe0] sm:$0xff]
    %v4621 = vld [vmem:[%s33 + $0xe8] sm:$0xff]
    %v4622 = vld [vmem:[#allocation4 + $0x1] sm:$0xff]
    %v4623 = vld [vmem:[#allocation4 + $0x9] sm:$0x3]
    %s4624 = scalar_lea.vmem %s33, 240
    %v4625 = vld [vmem:[%s4624] sm:$0xff]
    %v4626 = vld [vmem:[%s4624 + $0x8] sm:$0xff]
    %v4627 = vld [vmem:[%s4624 + $0x10] sm:$0xff]
    %v4628 = vld [vmem:[%s4624 + $0x18] sm:$0xff]
    %v4629 = vld [vmem:[%s4624 + $0x20] sm:$0xff]
    %v4630 = vld [vmem:[%s4624 + $0x28] sm:$0xff]
    %v4631 = vld [vmem:[%s4624 + $0x30] sm:$0xff]
    %v4632 = vld [vmem:[%s4624 + $0x38] sm:$0xff]
    %v4633 = vld [vmem:[%s4624 + $0x40] sm:$0xff]
    %v4634 = vld [vmem:[%s4624 + $0x48] sm:$0xff]
    %v4635 = vld [vmem:[%s4624 + $0x50] sm:$0xff]
    %v4636 = vld [vmem:[%s4624 + $0x58] sm:$0xff]
    %v4637 = vld [vmem:[%s4624 + $0x60] sm:$0xff]
    %v4638 = vld [vmem:[%s4624 + $0x68] sm:$0xff]
    %v4639 = vld [vmem:[%s4624 + $0x70] sm:$0xff]
    %v4640 = vld [vmem:[%s4624 + $0x78] sm:$0xff]
    %v4641 = vld [vmem:[%s4624 + $0x80] sm:$0xff]
    %v4642 = vld [vmem:[%s4624 + $0x88] sm:$0xff]
    %v4643 = vld [vmem:[%s4624 + $0x90] sm:$0xff]
    %v4644 = vld [vmem:[%s4624 + $0x98] sm:$0xff]
    %v4645 = vld [vmem:[%s4624 + $0xa0] sm:$0xff]
    %v4646 = vld [vmem:[%s4624 + $0xa8] sm:$0xff]
    %v4647 = vld [vmem:[%s4624 + $0xb0] sm:$0xff]
    %v4648 = vld [vmem:[%s4624 + $0xb8] sm:$0xff]
    %v4649 = vld [vmem:[%s4624 + $0xc0] sm:$0xff]
    %v4650 = vld [vmem:[%s4624 + $0xc8] sm:$0xff]
    %v4651 = vld [vmem:[%s4624 + $0xd0] sm:$0xff]
    %v4652 = vld [vmem:[%s4624 + $0xd8] sm:$0xff]
    %v4653 = vld [vmem:[%s4624 + $0xe0] sm:$0xff]
    %v4654 = vld [vmem:[%s4624 + $0xe8] sm:$0xff]
    %v4656 = vsel %vm4065, %v4622, 0
    %v4659 = vsel %vm4065, %v4623, 0
    %4661 = vmatpush.msra.mxu0 0.0
    %4662 = vmatpush.msra.mxu0 %v4653
    %4663 = vmatpush.msra.mxu0 %v4651
    %4664 = vmatpush.msra.mxu0 %v4649
    %4665 = vmatpush.msra.mxu0 %v4647
    %4666 = vmatpush.msra.mxu0 %v4645
    %4667 = vmatpush.msra.mxu0 %v4643
    %4668 = vmatpush.msra.mxu0 %v4641
    %4669 = vmatpush.msra.mxu0 %v4639
    %4670 = vmatpush.msra.mxu0 %v4637
    %4671 = vmatpush.msra.mxu0 %v4635
    %4672 = vmatpush.msra.mxu0 %v4633
    %4673 = vmatpush.msra.mxu0 %v4631
    %4674 = vmatpush.msra.mxu0 %v4629
    %4675 = vmatpush.msra.mxu0 %v4627
    %4676 = vmatpush.msra.mxu0 %v4625
    %4677 = vmatmul.f32.gmra.mxu0 %v4656
    %v4678 = vpop.f32.mrf.mxu0
    %v4679 = vadd.f32 0.0, %v4678
    %4680 = vmatmul.f32.gmra.mxu0 %v4659
    %v4681 = vpop.f32.mrf.mxu0
    %v4682 = vadd.f32 0.0, %v4681
    %4683 = vdwg.mxu0
    %4684 = vmatpush.msra.mxu0 0.0
    %4685 = vmatpush.msra.mxu0 %v4654
    %4686 = vmatpush.msra.mxu0 %v4652
    %4687 = vmatpush.msra.mxu0 %v4650
    %4688 = vmatpush.msra.mxu0 %v4648
    %4689 = vmatpush.msra.mxu0 %v4646
    %4690 = vmatpush.msra.mxu0 %v4644
    %4691 = vmatpush.msra.mxu0 %v4642
    %4692 = vmatpush.msra.mxu0 %v4640
    %4693 = vmatpush.msra.mxu0 %v4638
    %4694 = vmatpush.msra.mxu0 %v4636
    %4695 = vmatpush.msra.mxu0 %v4634
    %4696 = vmatpush.msra.mxu0 %v4632
    %4697 = vmatpush.msra.mxu0 %v4630
    %4698 = vmatpush.msra.mxu0 %v4628
    %4699 = vmatpush.msra.mxu0 %v4626
    %4700 = vmatmul.f32.gmra.mxu0 %v4656
    %v4701 = vpop.f32.mrf.mxu0
    %v4702 = vadd.f32 0.0, %v4701
    %4703 = vmatmul.f32.gmra.mxu0 %v4659
    %v4704 = vpop.f32.mrf.mxu0
    %v4705 = vadd.f32 0.0, %v4704
    %4706 = vdwg.mxu0
    %v4708 = vsel %vm4065, %v4590, 0
    %v4711 = vsel %vm4065, %v4591, 0
    %4713 = vmatpush.msra.mxu0 0.0
    %4714 = vmatpush.msra.mxu0 %v4620
    %4715 = vmatpush.msra.mxu0 %v4618
    %4716 = vmatpush.msra.mxu0 %v4616
    %4717 = vmatpush.msra.mxu0 %v4614
    %4718 = vmatpush.msra.mxu0 %v4612
    %4719 = vmatpush.msra.mxu0 %v4610
    %4720 = vmatpush.msra.mxu0 %v4608
    %4721 = vmatpush.msra.mxu0 %v4606
    %4722 = vmatpush.msra.mxu0 %v4604
    %4723 = vmatpush.msra.mxu0 %v4602
    %4724 = vmatpush.msra.mxu0 %v4600
    %4725 = vmatpush.msra.mxu0 %v4598
    %4726 = vmatpush.msra.mxu0 %v4596
    %4727 = vmatpush.msra.mxu0 %v4594
    %4728 = vmatpush.msra.mxu0 %v4592
    %4729 = vmatmul.f32.gmra.mxu0 %v4708
    %v4730 = vpop.f32.mrf.mxu0
    %v4731 = vadd.f32 %v4679, %v4730
    %4732 = vmatmul.f32.gmra.mxu0 %v4711
    %v4733 = vpop.f32.mrf.mxu0
    %v4734 = vadd.f32 %v4682, %v4733
    %4735 = vdwg.mxu0
    %4736 = vmatpush.msra.mxu0 0.0
    %4737 = vmatpush.msra.mxu0 %v4621
    %4738 = vmatpush.msra.mxu0 %v4619
    %4739 = vmatpush.msra.mxu0 %v4617
    %4740 = vmatpush.msra.mxu0 %v4615
    %4741 = vmatpush.msra.mxu0 %v4613
    %4742 = vmatpush.msra.mxu0 %v4611
    %4743 = vmatpush.msra.mxu0 %v4609
    %4744 = vmatpush.msra.mxu0 %v4607
    %4745 = vmatpush.msra.mxu0 %v4605
    %4746 = vmatpush.msra.mxu0 %v4603
    %4747 = vmatpush.msra.mxu0 %v4601
    %4748 = vmatpush.msra.mxu0 %v4599
    %4749 = vmatpush.msra.mxu0 %v4597
    %4750 = vmatpush.msra.mxu0 %v4595
    %4751 = vmatpush.msra.mxu0 %v4593
    %4752 = vmatmul.f32.gmra.mxu0 %v4708
    %v4753 = vpop.f32.mrf.mxu0
    %v4754 = vadd.f32 %v4702, %v4753
    %4755 = vmatmul.f32.gmra.mxu0 %v4711
    %v4756 = vpop.f32.mrf.mxu0
    %v4757 = vadd.f32 %v4705, %v4756
    %4758 = vdwg.mxu0
    %v4759 = vld [vmem:[#allocation4 + $0x2] sm:$0xff]
    %v4760 = vld [vmem:[#allocation4 + $0xa] sm:$0x3]
    %s4761 = scalar_lea.vmem %s33, 480
    %v4762 = vld [vmem:[%s4761] sm:$0xff]
    %v4763 = vld [vmem:[%s4761 + $0x8] sm:$0xff]
    %v4764 = vld [vmem:[%s4761 + $0x10] sm:$0xff]
    %v4765 = vld [vmem:[%s4761 + $0x18] sm:$0xff]
    %v4766 = vld [vmem:[%s4761 + $0x20] sm:$0xff]
    %v4767 = vld [vmem:[%s4761 + $0x28] sm:$0xff]
    %v4768 = vld [vmem:[%s4761 + $0x30] sm:$0xff]
    %v4769 = vld [vmem:[%s4761 + $0x38] sm:$0xff]
    %v4770 = vld [vmem:[%s4761 + $0x40] sm:$0xff]
    %v4771 = vld [vmem:[%s4761 + $0x48] sm:$0xff]
    %v4772 = vld [vmem:[%s4761 + $0x50] sm:$0xff]
    %v4773 = vld [vmem:[%s4761 + $0x58] sm:$0xff]
    %v4774 = vld [vmem:[%s4761 + $0x60] sm:$0xff]
    %v4775 = vld [vmem:[%s4761 + $0x68] sm:$0xff]
    %v4776 = vld [vmem:[%s4761 + $0x70] sm:$0xff]
    %v4777 = vld [vmem:[%s4761 + $0x78] sm:$0xff]
    %v4778 = vld [vmem:[%s4761 + $0x80] sm:$0xff]
    %v4779 = vld [vmem:[%s4761 + $0x88] sm:$0xff]
    %v4780 = vld [vmem:[%s4761 + $0x90] sm:$0xff]
    %v4781 = vld [vmem:[%s4761 + $0x98] sm:$0xff]
    %v4782 = vld [vmem:[%s4761 + $0xa0] sm:$0xff]
    %v4783 = vld [vmem:[%s4761 + $0xa8] sm:$0xff]
    %v4784 = vld [vmem:[%s4761 + $0xb0] sm:$0xff]
    %v4785 = vld [vmem:[%s4761 + $0xb8] sm:$0xff]
    %v4786 = vld [vmem:[%s4761 + $0xc0] sm:$0xff]
    %v4787 = vld [vmem:[%s4761 + $0xc8] sm:$0xff]
    %v4788 = vld [vmem:[%s4761 + $0xd0] sm:$0xff]
    %v4789 = vld [vmem:[%s4761 + $0xd8] sm:$0xff]
    %v4790 = vld [vmem:[%s4761 + $0xe0] sm:$0xff]
    %v4791 = vld [vmem:[%s4761 + $0xe8] sm:$0xff]
    %v4793 = vsel %vm4065, %v4759, 0
    %v4796 = vsel %vm4065, %v4760, 0
    %4798 = vmatpush.msra.mxu0 0.0
    %4799 = vmatpush.msra.mxu0 %v4790
    %4800 = vmatpush.msra.mxu0 %v4788
    %4801 = vmatpush.msra.mxu0 %v4786
    %4802 = vmatpush.msra.mxu0 %v4784
    %4803 = vmatpush.msra.mxu0 %v4782
    %4804 = vmatpush.msra.mxu0 %v4780
    %4805 = vmatpush.msra.mxu0 %v4778
    %4806 = vmatpush.msra.mxu0 %v4776
    %4807 = vmatpush.msra.mxu0 %v4774
    %4808 = vmatpush.msra.mxu0 %v4772
    %4809 = vmatpush.msra.mxu0 %v4770
    %4810 = vmatpush.msra.mxu0 %v4768
    %4811 = vmatpush.msra.mxu0 %v4766
    %4812 = vmatpush.msra.mxu0 %v4764
    %4813 = vmatpush.msra.mxu0 %v4762
    %4814 = vmatmul.f32.gmra.mxu0 %v4793
    %v4815 = vpop.f32.mrf.mxu0
    %v4816 = vadd.f32 0.0, %v4815
    %4817 = vmatmul.f32.gmra.mxu0 %v4796
    %v4818 = vpop.f32.mrf.mxu0
    %v4819 = vadd.f32 0.0, %v4818
    %4820 = vdwg.mxu0
    %4821 = vmatpush.msra.mxu0 0.0
    %4822 = vmatpush.msra.mxu0 %v4791
    %4823 = vmatpush.msra.mxu0 %v4789
    %4824 = vmatpush.msra.mxu0 %v4787
    %4825 = vmatpush.msra.mxu0 %v4785
    %4826 = vmatpush.msra.mxu0 %v4783
    %4827 = vmatpush.msra.mxu0 %v4781
    %4828 = vmatpush.msra.mxu0 %v4779
    %4829 = vmatpush.msra.mxu0 %v4777
    %4830 = vmatpush.msra.mxu0 %v4775
    %4831 = vmatpush.msra.mxu0 %v4773
    %4832 = vmatpush.msra.mxu0 %v4771
    %4833 = vmatpush.msra.mxu0 %v4769
    %4834 = vmatpush.msra.mxu0 %v4767
    %4835 = vmatpush.msra.mxu0 %v4765
    %4836 = vmatpush.msra.mxu0 %v4763
    %4837 = vmatmul.f32.gmra.mxu0 %v4793
    %v4838 = vpop.f32.mrf.mxu0
    %v4839 = vadd.f32 0.0, %v4838
    %4840 = vmatmul.f32.gmra.mxu0 %v4796
    %v4841 = vpop.f32.mrf.mxu0
    %v4842 = vadd.f32 0.0, %v4841
    %4843 = vdwg.mxu0
    %v4844 = vadd.f32 %v4731, %v4816
    %v4845 = vadd.f32 %v4754, %v4839
    %v4846 = vadd.f32 %v4734, %v4819
    %v4847 = vadd.f32 %v4757, %v4842
    %v4848 = vmax.f32 %v4844, 0.0
    %v4849 = vmax.f32 %v4845, 0.0
    %v4850 = vmax.f32 %v4846, 0.0
    %v4851 = vmax.f32 %v4847, 0.0
    %4852 = vst [vmem:[#allocation5] sm:$0xff] %v4848
    %4853 = vst.msk [vmem:[#allocation5 + $0x8] sm:$0xff] %vm3331, %v4849
    %4854 = vst [vmem:[#allocation5 + $0x10] sm:$0x3] %v4850
    %vm4855 = vcmask 91136
    %4856 = vst.msk [vmem:[#allocation5 + $0x18] sm:$0x3] %vm4855, %v4851
    %v4857 = vsel %vm435, %v4850, 0.0
    %v4858 = vadd.f32 %v4848, %v4857
    %v4859 = vrot.slane %v4858, 4
    %v4860 = vadd.f32 %v4858, %v4859
    %v4861 = vrot.slane %v4860, 2
    %v4862 = vadd.f32 %v4860, %v4861
    %v4863 = vrot.slane %v4862, 1
    %v4864 = vadd.f32 %v4862, %v4863
    %v4865 = vsel %vm3331, %v4849, 0.0
    %v4866 = vsel %vm4855, %v4851, 0.0
    %v4867 = vadd.f32 %v4865, %v4866
    %v4868 = vrot.slane %v4867, 4
    %v4869 = vadd.f32 %v4867, %v4868
    %v4870 = vrot.slane %v4869, 2
    %v4871 = vadd.f32 %v4869, %v4870
    %v4872 = vrot.slane %v4871, 1
    %v4873 = vadd.f32 %v4871, %v4872
    %v4874 = vld [vmem:[%s35] sm:$0xff]
    %v4875 = vld [vmem:[%s35 + $0x8] sm:$0xff]
    %v4876 = vld [vmem:[%s35 + $0x10] sm:$0xff]
    %v4877 = vld [vmem:[%s35 + $0x18] sm:$0xff]
    %v4878 = vld [vmem:[%s35 + $0x20] sm:$0xff]
    %v4879 = vld [vmem:[%s35 + $0x28] sm:$0xff]
    %v4880 = vld [vmem:[%s35 + $0x30] sm:$0xff]
    %v4881 = vld [vmem:[%s35 + $0x38] sm:$0xff]
    %v4882 = vld [vmem:[%s35 + $0x40] sm:$0xff]
    %v4883 = vld [vmem:[%s35 + $0x48] sm:$0xff]
    %v4884 = vld [vmem:[%s35 + $0x50] sm:$0xff]
    %v4885 = vld [vmem:[%s35 + $0x58] sm:$0xff]
    %v4886 = vld [vmem:[%s35 + $0x60] sm:$0xff]
    %v4887 = vld [vmem:[%s35 + $0x68] sm:$0xff]
    %v4888 = vld [vmem:[%s35 + $0x70] sm:$0xff]
    %v4889 = vld [vmem:[%s35 + $0x78] sm:$0xff]
    %v4890 = vld [vmem:[%s35 + $0x80] sm:$0xff]
    %v4891 = vld [vmem:[%s35 + $0x88] sm:$0xf]
    %v4892 = vmul.f32 %v4848, %v4848
    %v4893 = vmul.f32 %v4849, %v4849
    %v4894 = vmul.f32 %v4850, %v4850
    %v4895 = vmul.f32 %v4851, %v4851
    %v4896 = vsel %vm435, %v4894, 0.0
    %v4897 = vadd.f32 %v4892, %v4896
    %v4898 = vrot.slane %v4897, 4
    %v4899 = vadd.f32 %v4897, %v4898
    %v4900 = vrot.slane %v4899, 2
    %v4901 = vadd.f32 %v4899, %v4900
    %v4902 = vrot.slane %v4901, 1
    %v4903 = vadd.f32 %v4901, %v4902
    %v4904 = vsel %vm3331, %v4893, 0.0
    %v4905 = vsel %vm4855, %v4895, 0.0
    %v4906 = vadd.f32 %v4904, %v4905
    %v4907 = vrot.slane %v4906, 4
    %v4908 = vadd.f32 %v4906, %v4907
    %v4909 = vrot.slane %v4908, 2
    %v4910 = vadd.f32 %v4908, %v4909
    %v4911 = vrot.slane %v4910, 1
    %v4912 = vadd.f32 %v4910, %v4911
    %v4913 = vld [vmem:[%s4587] sm:$0xff]
    %v4914 = vld [vmem:[%s4587 + $0x8] sm:$0x3]
    %v4915 = vld [vmem:[%s33] sm:$0xff]
    %v4916 = vld [vmem:[%s33 + $0x8] sm:$0xff]
    %v4917 = vld [vmem:[%s33 + $0x10] sm:$0xff]
    %v4918 = vld [vmem:[%s33 + $0x18] sm:$0xff]
    %v4919 = vld [vmem:[%s33 + $0x20] sm:$0xff]
    %v4920 = vld [vmem:[%s33 + $0x28] sm:$0xff]
    %v4921 = vld [vmem:[%s33 + $0x30] sm:$0xff]
    %v4922 = vld [vmem:[%s33 + $0x38] sm:$0xff]
    %v4923 = vld [vmem:[%s33 + $0x40] sm:$0xff]
    %v4924 = vld [vmem:[%s33 + $0x48] sm:$0xff]
    %v4925 = vld [vmem:[%s33 + $0x50] sm:$0xff]
    %v4926 = vld [vmem:[%s33 + $0x58] sm:$0xff]
    %v4927 = vld [vmem:[%s33 + $0x60] sm:$0xff]
    %v4928 = vld [vmem:[%s33 + $0x68] sm:$0xff]
    %v4929 = vld [vmem:[%s33 + $0x70] sm:$0xff]
    %v4930 = vld [vmem:[%s33 + $0x78] sm:$0xff]
    %v4931 = vld [vmem:[%s33 + $0x80] sm:$0xff]
    %v4932 = vld [vmem:[%s33 + $0x88] sm:$0xff]
    %v4933 = vld [vmem:[%s33 + $0x90] sm:$0xff]
    %v4934 = vld [vmem:[%s33 + $0x98] sm:$0xff]
    %v4935 = vld [vmem:[%s33 + $0xa0] sm:$0xff]
    %v4936 = vld [vmem:[%s33 + $0xa8] sm:$0xff]
    %v4937 = vld [vmem:[%s33 + $0xb0] sm:$0xff]
    %v4938 = vld [vmem:[%s33 + $0xb8] sm:$0xff]
    %v4939 = vld [vmem:[%s33 + $0xc0] sm:$0xff]
    %v4940 = vld [vmem:[%s33 + $0xc8] sm:$0xff]
    %v4941 = vld [vmem:[%s33 + $0xd0] sm:$0xff]
    %v4942 = vld [vmem:[%s33 + $0xd8] sm:$0xff]
    %v4943 = vld [vmem:[%s33 + $0xe0] sm:$0xff]
    %v4944 = vld [vmem:[%s33 + $0xe8] sm:$0xff]
    %v4945 = vld [vmem:[%s4587 + $0x1] sm:$0xff]
    %v4946 = vld [vmem:[%s4587 + $0x9] sm:$0x3]
    %v4947 = vld [vmem:[%s4624] sm:$0xff]
    %v4948 = vld [vmem:[%s4624 + $0x8] sm:$0xff]
    %v4949 = vld [vmem:[%s4624 + $0x10] sm:$0xff]
    %v4950 = vld [vmem:[%s4624 + $0x18] sm:$0xff]
    %v4951 = vld [vmem:[%s4624 + $0x20] sm:$0xff]
    %v4952 = vld [vmem:[%s4624 + $0x28] sm:$0xff]
    %v4953 = vld [vmem:[%s4624 + $0x30] sm:$0xff]
    %v4954 = vld [vmem:[%s4624 + $0x38] sm:$0xff]
    %v4955 = vld [vmem:[%s4624 + $0x40] sm:$0xff]
    %v4956 = vld [vmem:[%s4624 + $0x48] sm:$0xff]
    %v4957 = vld [vmem:[%s4624 + $0x50] sm:$0xff]
    %v4958 = vld [vmem:[%s4624 + $0x58] sm:$0xff]
    %v4959 = vld [vmem:[%s4624 + $0x60] sm:$0xff]
    %v4960 = vld [vmem:[%s4624 + $0x68] sm:$0xff]
    %v4961 = vld [vmem:[%s4624 + $0x70] sm:$0xff]
    %v4962 = vld [vmem:[%s4624 + $0x78] sm:$0xff]
    %v4963 = vld [vmem:[%s4624 + $0x80] sm:$0xff]
    %v4964 = vld [vmem:[%s4624 + $0x88] sm:$0xff]
    %v4965 = vld [vmem:[%s4624 + $0x90] sm:$0xff]
    %v4966 = vld [vmem:[%s4624 + $0x98] sm:$0xff]
    %v4967 = vld [vmem:[%s4624 + $0xa0] sm:$0xff]
    %v4968 = vld [vmem:[%s4624 + $0xa8] sm:$0xff]
    %v4969 = vld [vmem:[%s4624 + $0xb0] sm:$0xff]
    %v4970 = vld [vmem:[%s4624 + $0xb8] sm:$0xff]
    %v4971 = vld [vmem:[%s4624 + $0xc0] sm:$0xff]
    %v4972 = vld [vmem:[%s4624 + $0xc8] sm:$0xff]
    %v4973 = vld [vmem:[%s4624 + $0xd0] sm:$0xff]
    %v4974 = vld [vmem:[%s4624 + $0xd8] sm:$0xff]
    %v4975 = vld [vmem:[%s4624 + $0xe0] sm:$0xff]
    %v4976 = vld [vmem:[%s4624 + $0xe8] sm:$0xff]
    %v4978 = vsel %vm4065, %v4945, 0
    %v4981 = vsel %vm4065, %v4946, 0
    %4983 = vmatpush.msra.mxu0 0.0
    %4984 = vmatpush.msra.mxu0 %v4975
    %4985 = vmatpush.msra.mxu0 %v4973
    %4986 = vmatpush.msra.mxu0 %v4971
    %4987 = vmatpush.msra.mxu0 %v4969
    %4988 = vmatpush.msra.mxu0 %v4967
    %4989 = vmatpush.msra.mxu0 %v4965
    %4990 = vmatpush.msra.mxu0 %v4963
    %4991 = vmatpush.msra.mxu0 %v4961
    %4992 = vmatpush.msra.mxu0 %v4959
    %4993 = vmatpush.msra.mxu0 %v4957
    %4994 = vmatpush.msra.mxu0 %v4955
    %4995 = vmatpush.msra.mxu0 %v4953
    %4996 = vmatpush.msra.mxu0 %v4951
    %4997 = vmatpush.msra.mxu0 %v4949
    %4998 = vmatpush.msra.mxu0 %v4947
    %4999 = vmatmul.f32.gmra.mxu0 %v4978
    %v5000 = vpop.f32.mrf.mxu0
    %v5001 = vadd.f32 0.0, %v5000
    %5002 = vmatmul.f32.gmra.mxu0 %v4981
    %v5003 = vpop.f32.mrf.mxu0
    %v5004 = vadd.f32 0.0, %v5003
    %5005 = vdwg.mxu0
    %5006 = vmatpush.msra.mxu0 0.0
    %5007 = vmatpush.msra.mxu0 %v4976
    %5008 = vmatpush.msra.mxu0 %v4974
    %5009 = vmatpush.msra.mxu0 %v4972
    %5010 = vmatpush.msra.mxu0 %v4970
    %5011 = vmatpush.msra.mxu0 %v4968
    %5012 = vmatpush.msra.mxu0 %v4966
    %5013 = vmatpush.msra.mxu0 %v4964
    %5014 = vmatpush.msra.mxu0 %v4962
    %5015 = vmatpush.msra.mxu0 %v4960
    %5016 = vmatpush.msra.mxu0 %v4958
    %5017 = vmatpush.msra.mxu0 %v4956
    %5018 = vmatpush.msra.mxu0 %v4954
    %5019 = vmatpush.msra.mxu0 %v4952
    %5020 = vmatpush.msra.mxu0 %v4950
    %5021 = vmatpush.msra.mxu0 %v4948
    %5022 = vmatmul.f32.gmra.mxu0 %v4978
    %v5023 = vpop.f32.mrf.mxu0
    %v5024 = vadd.f32 0.0, %v5023
    %5025 = vmatmul.f32.gmra.mxu0 %v4981
    %v5026 = vpop.f32.mrf.mxu0
    %v5027 = vadd.f32 0.0, %v5026
    %5028 = vdwg.mxu0
    %v5030 = vsel %vm4065, %v4913, 0
    %v5033 = vsel %vm4065, %v4914, 0
    %5035 = vmatpush.msra.mxu0 0.0
    %5036 = vmatpush.msra.mxu0 %v4943
    %5037 = vmatpush.msra.mxu0 %v4941
    %5038 = vmatpush.msra.mxu0 %v4939
    %5039 = vmatpush.msra.mxu0 %v4937
    %5040 = vmatpush.msra.mxu0 %v4935
    %5041 = vmatpush.msra.mxu0 %v4933
    %5042 = vmatpush.msra.mxu0 %v4931
    %5043 = vmatpush.msra.mxu0 %v4929
    %5044 = vmatpush.msra.mxu0 %v4927
    %5045 = vmatpush.msra.mxu0 %v4925
    %5046 = vmatpush.msra.mxu0 %v4923
    %5047 = vmatpush.msra.mxu0 %v4921
    %5048 = vmatpush.msra.mxu0 %v4919
    %5049 = vmatpush.msra.mxu0 %v4917
    %5050 = vmatpush.msra.mxu0 %v4915
    %5051 = vmatmul.f32.gmra.mxu0 %v5030
    %v5052 = vpop.f32.mrf.mxu0
    %v5053 = vadd.f32 %v5001, %v5052
    %5054 = vmatmul.f32.gmra.mxu0 %v5033
    %v5055 = vpop.f32.mrf.mxu0
    %v5056 = vadd.f32 %v5004, %v5055
    %5057 = vdwg.mxu0
    %5058 = vmatpush.msra.mxu0 0.0
    %5059 = vmatpush.msra.mxu0 %v4944
    %5060 = vmatpush.msra.mxu0 %v4942
    %5061 = vmatpush.msra.mxu0 %v4940
    %5062 = vmatpush.msra.mxu0 %v4938
    %5063 = vmatpush.msra.mxu0 %v4936
    %5064 = vmatpush.msra.mxu0 %v4934
    %5065 = vmatpush.msra.mxu0 %v4932
    %5066 = vmatpush.msra.mxu0 %v4930
    %5067 = vmatpush.msra.mxu0 %v4928
    %5068 = vmatpush.msra.mxu0 %v4926
    %5069 = vmatpush.msra.mxu0 %v4924
    %5070 = vmatpush.msra.mxu0 %v4922
    %5071 = vmatpush.msra.mxu0 %v4920
    %5072 = vmatpush.msra.mxu0 %v4918
    %5073 = vmatpush.msra.mxu0 %v4916
    %5074 = vmatmul.f32.gmra.mxu0 %v5030
    %v5075 = vpop.f32.mrf.mxu0
    %v5076 = vadd.f32 %v5024, %v5075
    %5077 = vmatmul.f32.gmra.mxu0 %v5033
    %v5078 = vpop.f32.mrf.mxu0
    %v5079 = vadd.f32 %v5027, %v5078
    %5080 = vdwg.mxu0
    %v5081 = vld [vmem:[%s4587 + $0x2] sm:$0xff]
    %v5082 = vld [vmem:[%s4587 + $0xa] sm:$0x3]
    %v5083 = vld [vmem:[%s4761] sm:$0xff]
    %v5084 = vld [vmem:[%s4761 + $0x8] sm:$0xff]
    %v5085 = vld [vmem:[%s4761 + $0x10] sm:$0xff]
    %v5086 = vld [vmem:[%s4761 + $0x18] sm:$0xff]
    %v5087 = vld [vmem:[%s4761 + $0x20] sm:$0xff]
    %v5088 = vld [vmem:[%s4761 + $0x28] sm:$0xff]
    %v5089 = vld [vmem:[%s4761 + $0x30] sm:$0xff]
    %v5090 = vld [vmem:[%s4761 + $0x38] sm:$0xff]
    %v5091 = vld [vmem:[%s4761 + $0x40] sm:$0xff]
    %v5092 = vld [vmem:[%s4761 + $0x48] sm:$0xff]
    %v5093 = vld [vmem:[%s4761 + $0x50] sm:$0xff]
    %v5094 = vld [vmem:[%s4761 + $0x58] sm:$0xff]
    %v5095 = vld [vmem:[%s4761 + $0x60] sm:$0xff]
    %v5096 = vld [vmem:[%s4761 + $0x68] sm:$0xff]
    %v5097 = vld [vmem:[%s4761 + $0x70] sm:$0xff]
    %v5098 = vld [vmem:[%s4761 + $0x78] sm:$0xff]
    %v5099 = vld [vmem:[%s4761 + $0x80] sm:$0xff]
    %v5100 = vld [vmem:[%s4761 + $0x88] sm:$0xff]
    %v5101 = vld [vmem:[%s4761 + $0x90] sm:$0xff]
    %v5102 = vld [vmem:[%s4761 + $0x98] sm:$0xff]
    %v5103 = vld [vmem:[%s4761 + $0xa0] sm:$0xff]
    %v5104 = vld [vmem:[%s4761 + $0xa8] sm:$0xff]
    %v5105 = vld [vmem:[%s4761 + $0xb0] sm:$0xff]
    %v5106 = vld [vmem:[%s4761 + $0xb8] sm:$0xff]
    %v5107 = vld [vmem:[%s4761 + $0xc0] sm:$0xff]
    %v5108 = vld [vmem:[%s4761 + $0xc8] sm:$0xff]
    %v5109 = vld [vmem:[%s4761 + $0xd0] sm:$0xff]
    %v5110 = vld [vmem:[%s4761 + $0xd8] sm:$0xff]
    %v5111 = vld [vmem:[%s4761 + $0xe0] sm:$0xff]
    %v5112 = vld [vmem:[%s4761 + $0xe8] sm:$0xff]
    %v5114 = vsel %vm4065, %v5081, 0
    %v5117 = vsel %vm4065, %v5082, 0
    %5119 = vmatpush.msra.mxu0 0.0
    %5120 = vmatpush.msra.mxu0 %v5111
    %5121 = vmatpush.msra.mxu0 %v5109
    %5122 = vmatpush.msra.mxu0 %v5107
    %5123 = vmatpush.msra.mxu0 %v5105
    %5124 = vmatpush.msra.mxu0 %v5103
    %5125 = vmatpush.msra.mxu0 %v5101
    %5126 = vmatpush.msra.mxu0 %v5099
    %5127 = vmatpush.msra.mxu0 %v5097
    %5128 = vmatpush.msra.mxu0 %v5095
    %5129 = vmatpush.msra.mxu0 %v5093
    %5130 = vmatpush.msra.mxu0 %v5091
    %5131 = vmatpush.msra.mxu0 %v5089
    %5132 = vmatpush.msra.mxu0 %v5087
    %5133 = vmatpush.msra.mxu0 %v5085
    %5134 = vmatpush.msra.mxu0 %v5083
    %5135 = vmatmul.f32.gmra.mxu0 %v5114
    %v5136 = vpop.f32.mrf.mxu0
    %v5137 = vadd.f32 0.0, %v5136
    %5138 = vmatmul.f32.gmra.mxu0 %v5117
    %v5139 = vpop.f32.mrf.mxu0
    %v5140 = vadd.f32 0.0, %v5139
    %5141 = vdwg.mxu0
    %5142 = vmatpush.msra.mxu0 0.0
    %5143 = vmatpush.msra.mxu0 %v5112
    %5144 = vmatpush.msra.mxu0 %v5110
    %5145 = vmatpush.msra.mxu0 %v5108
    %5146 = vmatpush.msra.mxu0 %v5106
    %5147 = vmatpush.msra.mxu0 %v5104
    %5148 = vmatpush.msra.mxu0 %v5102
    %5149 = vmatpush.msra.mxu0 %v5100
    %5150 = vmatpush.msra.mxu0 %v5098
    %5151 = vmatpush.msra.mxu0 %v5096
    %5152 = vmatpush.msra.mxu0 %v5094
    %5153 = vmatpush.msra.mxu0 %v5092
    %5154 = vmatpush.msra.mxu0 %v5090
    %5155 = vmatpush.msra.mxu0 %v5088
    %5156 = vmatpush.msra.mxu0 %v5086
    %5157 = vmatpush.msra.mxu0 %v5084
    %5158 = vmatmul.f32.gmra.mxu0 %v5114
    %v5159 = vpop.f32.mrf.mxu0
    %v5160 = vadd.f32 0.0, %v5159
    %5161 = vmatmul.f32.gmra.mxu0 %v5117
    %v5162 = vpop.f32.mrf.mxu0
    %v5163 = vadd.f32 0.0, %v5162
    %5164 = vdwg.mxu0
    %v5165 = vadd.f32 %v5053, %v5137
    %v5166 = vadd.f32 %v5076, %v5160
    %v5167 = vadd.f32 %v5056, %v5140
    %v5168 = vadd.f32 %v5079, %v5163
    %v5169 = vmax.f32 %v5165, 0.0
    %v5170 = vmax.f32 %v5166, 0.0
    %v5171 = vmax.f32 %v5167, 0.0
    %v5172 = vmax.f32 %v5168, 0.0
    %s5173 = scalar_lea.vmem [#allocation5], 32
    %5174 = vst [vmem:[%s5173] sm:$0xff] %v5169
    %5175 = vst.msk [vmem:[%s5173 + $0x8] sm:$0xff] %vm3331, %v5170
    %5176 = vst [vmem:[%s5173 + $0x10] sm:$0x3] %v5171
    %5177 = vst.msk [vmem:[%s5173 + $0x18] sm:$0x3] %vm4855, %v5172
    %v5178 = vsel %vm435, %v5171, 0.0
    %v5179 = vadd.f32 %v5169, %v5178
    %v5180 = vrot.slane %v5179, 4
    %v5181 = vadd.f32 %v5179, %v5180
    %v5182 = vrot.slane %v5181, 2
    %v5183 = vadd.f32 %v5181, %v5182
    %v5184 = vrot.slane %v5183, 1
    %v5185 = vadd.f32 %v5183, %v5184
    %v5186 = vsel %vm3331, %v5170, 0.0
    %v5187 = vsel %vm4855, %v5172, 0.0
    %v5188 = vadd.f32 %v5186, %v5187
    %v5189 = vrot.slane %v5188, 4
    %v5190 = vadd.f32 %v5188, %v5189
    %v5191 = vrot.slane %v5190, 2
    %v5192 = vadd.f32 %v5190, %v5191
    %v5193 = vrot.slane %v5192, 1
    %v5194 = vadd.f32 %v5192, %v5193
    %v5195 = vld [vmem:[%s35] sm:$0xff]
    %v5196 = vld [vmem:[%s35 + $0x8] sm:$0xff]
    %v5197 = vld [vmem:[%s35 + $0x10] sm:$0xff]
    %v5198 = vld [vmem:[%s35 + $0x18] sm:$0xff]
    %v5199 = vld [vmem:[%s35 + $0x20] sm:$0xff]
    %v5200 = vld [vmem:[%s35 + $0x28] sm:$0xff]
    %v5201 = vld [vmem:[%s35 + $0x30] sm:$0xff]
    %v5202 = vld [vmem:[%s35 + $0x38] sm:$0xff]
    %v5203 = vld [vmem:[%s35 + $0x40] sm:$0xff]
    %v5204 = vld [vmem:[%s35 + $0x48] sm:$0xff]
    %v5205 = vld [vmem:[%s35 + $0x50] sm:$0xff]
    %v5206 = vld [vmem:[%s35 + $0x58] sm:$0xff]
    %v5207 = vld [vmem:[%s35 + $0x60] sm:$0xff]
    %v5208 = vld [vmem:[%s35 + $0x68] sm:$0xff]
    %v5209 = vld [vmem:[%s35 + $0x70] sm:$0xff]
    %v5210 = vld [vmem:[%s35 + $0x78] sm:$0xff]
    %v5211 = vld [vmem:[%s35 + $0x80] sm:$0xff]
    %v5212 = vld [vmem:[%s35 + $0x88] sm:$0xf]
    %v5214 = vsel %vm3331, %v5194, 0
    %v5217 = vsel %vm177, %v5212, 0
    %5219 = vmatpush.msra.mxu0 %v5210
    %5220 = vmatpush.msra.mxu0 %v5209
    %5221 = vmatpush.msra.mxu0 %v5208
    %5222 = vmatpush.msra.mxu0 %v5207
    %5223 = vmatpush.msra.mxu0 %v5206
    %5224 = vmatpush.msra.mxu0 %v5205
    %5225 = vmatpush.msra.mxu0 %v5204
    %5226 = vmatpush.msra.mxu0 %v5203
    %5227 = vmatpush.msra.mxu0 %v5202
    %5228 = vmatpush.msra.mxu0 %v5201
    %5229 = vmatpush.msra.mxu0 %v5200
    %5230 = vmatpush.msra.mxu0 %v5199
    %5231 = vmatpush.msra.mxu0 %v5198
    %5232 = vmatpush.msra.mxu0 %v5197
    %5233 = vmatpush.msra.mxu0 %v5196
    %5234 = vmatpush.msra.mxu0 %v5195
    %5235 = vmatmul.f32.gmra.mxu0 %v5185
    %v5236 = vpop.f32.mrf.mxu0
    %v5237 = vadd.f32 0.0, %v5236
    %5238 = vdwg.mxu0
    %5239 = vmatpush.msra.mxu0 0.0
    %5240 = vmatpush.msra.mxu0 0.0
    %5241 = vmatpush.msra.mxu0 0.0
    %5242 = vmatpush.msra.mxu0 0.0
    %5243 = vmatpush.msra.mxu0 0.0
    %5244 = vmatpush.msra.mxu0 0.0
    %5245 = vmatpush.msra.mxu0 0.0
    %5246 = vmatpush.msra.mxu0 0.0
    %5247 = vmatpush.msra.mxu0 0.0
    %5248 = vmatpush.msra.mxu0 0.0
    %5249 = vmatpush.msra.mxu0 0.0
    %5250 = vmatpush.msra.mxu0 0.0
    %5251 = vmatpush.msra.mxu0 0.0
    %5252 = vmatpush.msra.mxu0 0.0
    %5253 = vmatpush.msra.mxu0 %v5217
    %5254 = vmatpush.msra.mxu0 %v5211
    %5255 = vmatmul.f32.gmra.mxu0 %v5214
    %v5256 = vpop.f32.mrf.mxu0
    %v5257 = vadd.f32 %v5237, %v5256
    %5258 = vdwg.mxu0
    %v5260 = vsel %vm3331, %v4873, 0
    %v5263 = vsel %vm177, %v4891, 0
    %5265 = vmatpush.msra.mxu0 %v4889
    %5266 = vmatpush.msra.mxu0 %v4888
    %5267 = vmatpush.msra.mxu0 %v4887
    %5268 = vmatpush.msra.mxu0 %v4886
    %5269 = vmatpush.msra.mxu0 %v4885
    %5270 = vmatpush.msra.mxu0 %v4884
    %5271 = vmatpush.msra.mxu0 %v4883
    %5272 = vmatpush.msra.mxu0 %v4882
    %5273 = vmatpush.msra.mxu0 %v4881
    %5274 = vmatpush.msra.mxu0 %v4880
    %5275 = vmatpush.msra.mxu0 %v4879
    %5276 = vmatpush.msra.mxu0 %v4878
    %5277 = vmatpush.msra.mxu0 %v4877
    %5278 = vmatpush.msra.mxu0 %v4876
    %5279 = vmatpush.msra.mxu0 %v4875
    %5280 = vmatpush.msra.mxu0 %v4874
    %5281 = vmatmul.f32.gmra.mxu0 %v4864
    %v5282 = vpop.f32.mrf.mxu0
    %v5283 = vadd.f32 %v5257, %v5282
    %5284 = vdwg.mxu0
    %5285 = vmatpush.msra.mxu0 0.0
    %5286 = vmatpush.msra.mxu0 0.0
    %5287 = vmatpush.msra.mxu0 0.0
    %5288 = vmatpush.msra.mxu0 0.0
    %5289 = vmatpush.msra.mxu0 0.0
    %5290 = vmatpush.msra.mxu0 0.0
    %5291 = vmatpush.msra.mxu0 0.0
    %5292 = vmatpush.msra.mxu0 0.0
    %5293 = vmatpush.msra.mxu0 0.0
    %5294 = vmatpush.msra.mxu0 0.0
    %5295 = vmatpush.msra.mxu0 0.0
    %5296 = vmatpush.msra.mxu0 0.0
    %5297 = vmatpush.msra.mxu0 0.0
    %5298 = vmatpush.msra.mxu0 0.0
    %5299 = vmatpush.msra.mxu0 %v5263
    %5300 = vmatpush.msra.mxu0 %v4890
    %5301 = vmatmul.f32.gmra.mxu0 %v5260
    %v5302 = vpop.f32.mrf.mxu0
    %v5303 = vadd.f32 %v5283, %v5302
    %5304 = vdwg.mxu0
    %v5305 = vmul.f32 %v5169, %v5169
    %v5306 = vmul.f32 %v5170, %v5170
    %v5307 = vmul.f32 %v5171, %v5171
    %v5308 = vmul.f32 %v5172, %v5172
    %v5309 = vsel %vm435, %v5307, 0.0
    %v5310 = vadd.f32 %v5305, %v5309
    %v5311 = vrot.slane %v5310, 4
    %v5312 = vadd.f32 %v5310, %v5311
    %v5313 = vrot.slane %v5312, 2
    %v5314 = vadd.f32 %v5312, %v5313
    %v5315 = vrot.slane %v5314, 1
    %v5316 = vadd.f32 %v5314, %v5315
    %v5317 = vsel %vm3331, %v5306, 0.0
    %v5318 = vsel %vm4855, %v5308, 0.0
    %v5319 = vadd.f32 %v5317, %v5318
    %v5320 = vrot.slane %v5319, 4
    %v5321 = vadd.f32 %v5319, %v5320
    %v5322 = vrot.slane %v5321, 2
    %v5323 = vadd.f32 %v5321, %v5322
    %v5324 = vrot.slane %v5323, 1
    %v5325 = vadd.f32 %v5323, %v5324
    %v5327 = vsel %vm3331, %v5325, 0
    %5329 = vmatpush.msra.mxu0 %v5210
    %5330 = vmatpush.msra.mxu0 %v5209
    %5331 = vmatpush.msra.mxu0 %v5208
    %5332 = vmatpush.msra.mxu0 %v5207
    %5333 = vmatpush.msra.mxu0 %v5206
    %5334 = vmatpush.msra.mxu0 %v5205
    %5335 = vmatpush.msra.mxu0 %v5204
    %5336 = vmatpush.msra.mxu0 %v5203
    %5337 = vmatpush.msra.mxu0 %v5202
    %5338 = vmatpush.msra.mxu0 %v5201
    %5339 = vmatpush.msra.mxu0 %v5200
    %5340 = vmatpush.msra.mxu0 %v5199
    %5341 = vmatpush.msra.mxu0 %v5198
    %5342 = vmatpush.msra.mxu0 %v5197
    %5343 = vmatpush.msra.mxu0 %v5196
    %5344 = vmatpush.msra.mxu0 %v5195
    %5345 = vmatmul.f32.gmra.mxu0 %v5316
    %v5346 = vpop.f32.mrf.mxu0
    %v5347 = vadd.f32 0.0, %v5346
    %5348 = vdwg.mxu0
    %5349 = vmatpush.msra.mxu0 0.0
    %5350 = vmatpush.msra.mxu0 0.0
    %5351 = vmatpush.msra.mxu0 0.0
    %5352 = vmatpush.msra.mxu0 0.0
    %5353 = vmatpush.msra.mxu0 0.0
    %5354 = vmatpush.msra.mxu0 0.0
    %5355 = vmatpush.msra.mxu0 0.0
    %5356 = vmatpush.msra.mxu0 0.0
    %5357 = vmatpush.msra.mxu0 0.0
    %5358 = vmatpush.msra.mxu0 0.0
    %5359 = vmatpush.msra.mxu0 0.0
    %5360 = vmatpush.msra.mxu0 0.0
    %5361 = vmatpush.msra.mxu0 0.0
    %5362 = vmatpush.msra.mxu0 0.0
    %5363 = vmatpush.msra.mxu0 %v5217
    %5364 = vmatpush.msra.mxu0 %v5211
    %5365 = vmatmul.f32.gmra.mxu0 %v5327
    %v5366 = vpop.f32.mrf.mxu0
    %v5367 = vadd.f32 %v5347, %v5366
    %5368 = vdwg.mxu0
    %v5370 = vsel %vm3331, %v4912, 0
    %5372 = vmatpush.msra.mxu0 %v4889
    %5373 = vmatpush.msra.mxu0 %v4888
    %5374 = vmatpush.msra.mxu0 %v4887
    %5375 = vmatpush.msra.mxu0 %v4886
    %5376 = vmatpush.msra.mxu0 %v4885
    %5377 = vmatpush.msra.mxu0 %v4884
    %5378 = vmatpush.msra.mxu0 %v4883
    %5379 = vmatpush.msra.mxu0 %v4882
    %5380 = vmatpush.msra.mxu0 %v4881
    %5381 = vmatpush.msra.mxu0 %v4880
    %5382 = vmatpush.msra.mxu0 %v4879
    %5383 = vmatpush.msra.mxu0 %v4878
    %5384 = vmatpush.msra.mxu0 %v4877
    %5385 = vmatpush.msra.mxu0 %v4876
    %5386 = vmatpush.msra.mxu0 %v4875
    %5387 = vmatpush.msra.mxu0 %v4874
    %5388 = vmatmul.f32.gmra.mxu0 %v4903
    %v5389 = vpop.f32.mrf.mxu0
    %v5390 = vadd.f32 %v5367, %v5389
    %5391 = vdwg.mxu0
    %5392 = vmatpush.msra.mxu0 0.0
    %5393 = vmatpush.msra.mxu0 0.0
    %5394 = vmatpush.msra.mxu0 0.0
    %5395 = vmatpush.msra.mxu0 0.0
    %5396 = vmatpush.msra.mxu0 0.0
    %5397 = vmatpush.msra.mxu0 0.0
    %5398 = vmatpush.msra.mxu0 0.0
    %5399 = vmatpush.msra.mxu0 0.0
    %5400 = vmatpush.msra.mxu0 0.0
    %5401 = vmatpush.msra.mxu0 0.0
    %5402 = vmatpush.msra.mxu0 0.0
    %5403 = vmatpush.msra.mxu0 0.0
    %5404 = vmatpush.msra.mxu0 0.0
    %5405 = vmatpush.msra.mxu0 0.0
    %5406 = vmatpush.msra.mxu0 %v5263
    %5407 = vmatpush.msra.mxu0 %v4890
    %5408 = vmatmul.f32.gmra.mxu0 %v5370
    %v5409 = vpop.f32.mrf.mxu0
    %v5410 = vadd.f32 %v5390, %v5409
    %5411 = vdwg.mxu0
    %v5412 = vmul.f32 %v5303, 0.005
    %v5413 = vmul.f32 %v5410, 0.005
    %v5414 = vmul.f32 %v5412, %v5412
    %v5415 = vsub.f32 %v5413, %v5414
    %v5416 = vld [vmem:[%s39] sm:$0x1]
    %v5417 = vadd.f32 %v5415, 1e-05
    %v5418 = vrsqrt.pop %v5417
    %v5419 = vmul.f32 %v5418, %v5417
    %v5420 = vmul.f32 %v5419, %v5418
    %v5421 = vmul.f32 0.5, %v5420
    %v5422 = vsub.f32 1.5, %v5421
    %v5423 = vmul.f32 %v5418, %v5422
    %vm5424 = vweird.f32 %v5417
    %vm5425 = vweird.f32 %v5418
    %vm5426 = vmor %vm5424, %vm5425
    %v5427 = vsel %vm5426, %v5418, %v5423
    %v5428 = vmul.f32 %v5416, %v5427
    %v5429 = vld [vmem:[%s41] sm:$0x1]
    %v5430 = vmul.f32 %v5412, %v5428
    %v5431 = vsub.f32 %v5429, %v5430
    %v5432 = vld [vmem:[%s37] sm:$0xff]
    %v5433 = vld [vmem:[%s37 + $0x8] sm:$0xff]
    %v5434 = vld [vmem:[%s37 + $0x10] sm:$0x3f]
    %v5435 = vld [vmem:[%s37 + $0x18] sm:$0x3f]
    %vm5436 = vcmask 113664
    %v5438 = vsel %vm5436, %v5428, 0
    %v5441 = vsel %vm1838, %v5434, 0
    %v5444 = vsel %vm1838, %v5435, 0
    %5446 = vmatpush.msra.mxu0 0.0
    %5447 = vmatpush.msra.mxu0 0.0
    %5448 = vmatpush.msra.mxu0 0.0
    %5449 = vmatpush.msra.mxu0 0.0
    %5450 = vmatpush.msra.mxu0 0.0
    %5451 = vmatpush.msra.mxu0 0.0
    %5452 = vmatpush.msra.mxu0 0.0
    %5453 = vmatpush.msra.mxu0 0.0
    %5454 = vmatpush.msra.mxu0 0.0
    %5455 = vmatpush.msra.mxu0 0.0
    %5456 = vmatpush.msra.mxu0 0.0
    %5457 = vmatpush.msra.mxu0 0.0
    %5458 = vmatpush.msra.mxu0 0.0
    %5459 = vmatpush.msra.mxu0 0.0
    %5460 = vmatpush.msra.mxu0 %v5441
    %5461 = vmatpush.msra.mxu0 %v5432
    %5462 = vmatmul.f32.gmra.mxu0 %v5438
    %v5463 = vpop.f32.mrf.mxu0
    %v5464 = vadd.f32 0.0, %v5463
    %5465 = vdwg.mxu0
    %5466 = vmatpush.msra.mxu0 0.0
    %5467 = vmatpush.msra.mxu0 0.0
    %5468 = vmatpush.msra.mxu0 0.0
    %5469 = vmatpush.msra.mxu0 0.0
    %5470 = vmatpush.msra.mxu0 0.0
    %5471 = vmatpush.msra.mxu0 0.0
    %5472 = vmatpush.msra.mxu0 0.0
    %5473 = vmatpush.msra.mxu0 0.0
    %5474 = vmatpush.msra.mxu0 0.0
    %5475 = vmatpush.msra.mxu0 0.0
    %5476 = vmatpush.msra.mxu0 0.0
    %5477 = vmatpush.msra.mxu0 0.0
    %5478 = vmatpush.msra.mxu0 0.0
    %5479 = vmatpush.msra.mxu0 0.0
    %5480 = vmatpush.msra.mxu0 %v5444
    %5481 = vmatpush.msra.mxu0 %v5433
    %5482 = vmatmul.f32.gmra.mxu0 %v5438
    %v5483 = vpop.f32.mrf.mxu0
    %v5484 = vadd.f32 0.0, %v5483
    %5485 = vdwg.mxu0
    %v5487 = vsel %vm5436, %v5431, 0
    %5489 = vmatpush.msra.mxu0 0.0
    %5490 = vmatpush.msra.mxu0 0.0
    %5491 = vmatpush.msra.mxu0 0.0
    %5492 = vmatpush.msra.mxu0 0.0
    %5493 = vmatpush.msra.mxu0 0.0
    %5494 = vmatpush.msra.mxu0 0.0
    %5495 = vmatpush.msra.mxu0 0.0
    %5496 = vmatpush.msra.mxu0 0.0
    %5497 = vmatpush.msra.mxu0 0.0
    %5498 = vmatpush.msra.mxu0 0.0
    %5499 = vmatpush.msra.mxu0 0.0
    %5500 = vmatpush.msra.mxu0 0.0
    %5501 = vmatpush.msra.mxu0 0.0
    %5502 = vmatpush.msra.mxu0 0.0
    %5503 = vmatpush.msra.mxu0 %v5441
    %5504 = vmatpush.msra.mxu0 %v5432
    %5505 = vmatmul.f32.gmra.mxu0 %v5487
    %v5506 = vpop.f32.mrf.mxu0
    %v5507 = vadd.f32 0.0, %v5506
    %5508 = vdwg.mxu0
    %5509 = vmatpush.msra.mxu0 0.0
    %5510 = vmatpush.msra.mxu0 0.0
    %5511 = vmatpush.msra.mxu0 0.0
    %5512 = vmatpush.msra.mxu0 0.0
    %5513 = vmatpush.msra.mxu0 0.0
    %5514 = vmatpush.msra.mxu0 0.0
    %5515 = vmatpush.msra.mxu0 0.0
    %5516 = vmatpush.msra.mxu0 0.0
    %5517 = vmatpush.msra.mxu0 0.0
    %5518 = vmatpush.msra.mxu0 0.0
    %5519 = vmatpush.msra.mxu0 0.0
    %5520 = vmatpush.msra.mxu0 0.0
    %5521 = vmatpush.msra.mxu0 0.0
    %5522 = vmatpush.msra.mxu0 0.0
    %5523 = vmatpush.msra.mxu0 %v5444
    %5524 = vmatpush.msra.mxu0 %v5433
    %5525 = vmatmul.f32.gmra.mxu0 %v5487
    %v5526 = vpop.f32.mrf.mxu0
    %v5527 = vadd.f32 0.0, %v5526
    %5528 = vdwg.mxu0
    %v5529 = vld [vmem:[#allocation5] sm:$0xff]
    %v5530 = vld [vmem:[#allocation5 + $0x8] sm:$0xff]
    %v5531 = vld [vmem:[#allocation5 + $0x10] sm:$0x3]
    %v5532 = vld [vmem:[#allocation5 + $0x18] sm:$0x3]
    %v5533 = vperm.slane %v5464, 0
    %v5534 = vperm.slane %v5484, 0
    %v5535 = vmul.f32 %v5529, %v5533
    %v5536 = vmul.f32 %v5530, %v5534
    %v5537 = vmul.f32 %v5531, %v5533
    %v5538 = vmul.f32 %v5532, %v5534
    %v5539 = vperm.slane %v5507, 0
    %v5540 = vperm.slane %v5527, 0
    %v5541 = vadd.f32 %v5535, %v5539
    %v5542 = vadd.f32 %v5536, %v5540
    %v5543 = vadd.f32 %v5537, %v5539
    %v5544 = vadd.f32 %v5538, %v5540
    %5545 = vst [vmem:[#allocation5] sm:$0xff] %v5541
    %5546 = vst.msk [vmem:[#allocation5 + $0x8] sm:$0xff] %vm3331, %v5542
    %5547 = vst [vmem:[#allocation5 + $0x10] sm:$0x3] %v5543
    %5548 = vst.msk [vmem:[#allocation5 + $0x18] sm:$0x3] %vm4855, %v5544
    %v5549 = vld [vmem:[%s5173] sm:$0xff]
    %v5550 = vld [vmem:[%s5173 + $0x8] sm:$0xff]
    %v5551 = vld [vmem:[%s5173 + $0x10] sm:$0x3]
    %v5552 = vld [vmem:[%s5173 + $0x18] sm:$0x3]
    %v5553 = vmul.f32 %v5549, %v5533
    %v5554 = vmul.f32 %v5550, %v5534
    %v5555 = vmul.f32 %v5551, %v5533
    %v5556 = vmul.f32 %v5552, %v5534
    %v5557 = vadd.f32 %v5553, %v5539
    %v5558 = vadd.f32 %v5554, %v5540
    %v5559 = vadd.f32 %v5555, %v5539
    %v5560 = vadd.f32 %v5556, %v5540
    %5561 = vst [vmem:[%s5173] sm:$0xff] %v5557
    %5562 = vst.msk [vmem:[%s5173 + $0x8] sm:$0xff] %vm3331, %v5558
    %5563 = vst [vmem:[%s5173 + $0x10] sm:$0x3] %v5559
    %5564 = vst.msk [vmem:[%s5173 + $0x18] sm:$0x3] %vm4855, %v5560
    %v5565 = vld [vmem:[#allocation5] sm:$0xff]
    %v5566 = vld [vmem:[#allocation5 + $0x8] sm:$0xff]
    %v5567 = vld [vmem:[%s43] sm:$0xff]
    %v5568 = vld [vmem:[%s43 + $0x8] sm:$0xff]
    %v5569 = vld [vmem:[%s43 + $0x10] sm:$0xff]
    %v5570 = vld [vmem:[%s43 + $0x18] sm:$0xff]
    %v5571 = vld [vmem:[%s43 + $0x20] sm:$0xff]
    %v5572 = vld [vmem:[%s43 + $0x28] sm:$0xff]
    %v5573 = vld [vmem:[%s43 + $0x30] sm:$0xff]
    %v5574 = vld [vmem:[%s43 + $0x38] sm:$0xff]
    %v5575 = vld [vmem:[%s43 + $0x40] sm:$0xff]
    %v5576 = vld [vmem:[%s43 + $0x48] sm:$0xff]
    %v5577 = vld [vmem:[%s43 + $0x50] sm:$0xff]
    %v5578 = vld [vmem:[%s43 + $0x58] sm:$0xff]
    %v5579 = vld [vmem:[%s43 + $0x60] sm:$0xff]
    %v5580 = vld [vmem:[%s43 + $0x68] sm:$0xff]
    %v5581 = vld [vmem:[%s43 + $0x70] sm:$0xff]
    %v5582 = vld [vmem:[%s43 + $0x78] sm:$0xff]
    %v5583 = vld [vmem:[%s43 + $0x80] sm:$0xff]
    %v5584 = vld [vmem:[%s43 + $0x88] sm:$0xf]
    %v5585 = vld [vmem:[#allocation5] sm:$0xfe]
    %v5586 = vld [vmem:[#allocation5 + $0x8] sm:$0xfe]
    %v5587 = vld [vmem:[#allocation5 + $0x10] sm:$0x1]
    %v5588 = vld [vmem:[#allocation5 + $0x18] sm:$0x1]
    %s5589 = scalar_lea.vmem %s43, 144
    %v5590 = vld [vmem:[%s5589] sm:$0xff]
    %v5591 = vld [vmem:[%s5589 + $0x8] sm:$0xff]
    %v5592 = vld [vmem:[%s5589 + $0x10] sm:$0xff]
    %v5593 = vld [vmem:[%s5589 + $0x18] sm:$0xff]
    %v5594 = vld [vmem:[%s5589 + $0x20] sm:$0xff]
    %v5595 = vld [vmem:[%s5589 + $0x28] sm:$0xff]
    %v5596 = vld [vmem:[%s5589 + $0x30] sm:$0xff]
    %v5597 = vld [vmem:[%s5589 + $0x38] sm:$0xff]
    %v5598 = vld [vmem:[%s5589 + $0x40] sm:$0xff]
    %v5599 = vld [vmem:[%s5589 + $0x48] sm:$0xff]
    %v5600 = vld [vmem:[%s5589 + $0x50] sm:$0xff]
    %v5601 = vld [vmem:[%s5589 + $0x58] sm:$0xff]
    %v5602 = vld [vmem:[%s5589 + $0x60] sm:$0xff]
    %v5603 = vld [vmem:[%s5589 + $0x68] sm:$0xff]
    %v5604 = vld [vmem:[%s5589 + $0x70] sm:$0xff]
    %v5605 = vld [vmem:[%s5589 + $0x78] sm:$0xff]
    %v5606 = vld [vmem:[%s5589 + $0x80] sm:$0xff]
    %v5607 = vld [vmem:[%s5589 + $0x88] sm:$0xf]
    %v5612 = vrot.slane %v5585, 1
    %v5613 = vrot.slane %v5587, 1
    %v5614 = vsel %vm1408, %v5612, %v5613
    %v5615 = vrot.slane %v5586, 1
    %v5616 = vrot.slane %v5588, 1
    %v5617 = vsel %vm1408, %v5615, %v5616
    %v5619 = vsel %vm3331, %v5617, 0
    %v5622 = vsel %vm177, %v5607, 0
    %5624 = vmatpush.msra.mxu0 %v5605
    %5625 = vmatpush.msra.mxu0 %v5604
    %5626 = vmatpush.msra.mxu0 %v5603
    %5627 = vmatpush.msra.mxu0 %v5602
    %5628 = vmatpush.msra.mxu0 %v5601
    %5629 = vmatpush.msra.mxu0 %v5600
    %5630 = vmatpush.msra.mxu0 %v5599
    %5631 = vmatpush.msra.mxu0 %v5598
    %5632 = vmatpush.msra.mxu0 %v5597
    %5633 = vmatpush.msra.mxu0 %v5596
    %5634 = vmatpush.msra.mxu0 %v5595
    %5635 = vmatpush.msra.mxu0 %v5594
    %5636 = vmatpush.msra.mxu0 %v5593
    %5637 = vmatpush.msra.mxu0 %v5592
    %5638 = vmatpush.msra.mxu0 %v5591
    %5639 = vmatpush.msra.mxu0 %v5590
    %5640 = vmatmul.f32.gmra.mxu0 %v5614
    %v5641 = vpop.f32.mrf.mxu0
    %v5642 = vadd.f32 0.0, %v5641
    %5643 = vdwg.mxu0
    %5644 = vmatpush.msra.mxu0 0.0
    %5645 = vmatpush.msra.mxu0 0.0
    %5646 = vmatpush.msra.mxu0 0.0
    %5647 = vmatpush.msra.mxu0 0.0
    %5648 = vmatpush.msra.mxu0 0.0
    %5649 = vmatpush.msra.mxu0 0.0
    %5650 = vmatpush.msra.mxu0 0.0
    %5651 = vmatpush.msra.mxu0 0.0
    %5652 = vmatpush.msra.mxu0 0.0
    %5653 = vmatpush.msra.mxu0 0.0
    %5654 = vmatpush.msra.mxu0 0.0
    %5655 = vmatpush.msra.mxu0 0.0
    %5656 = vmatpush.msra.mxu0 0.0
    %5657 = vmatpush.msra.mxu0 0.0
    %5658 = vmatpush.msra.mxu0 %v5622
    %5659 = vmatpush.msra.mxu0 %v5606
    %5660 = vmatmul.f32.gmra.mxu0 %v5619
    %v5661 = vpop.f32.mrf.mxu0
    %v5662 = vadd.f32 %v5642, %v5661
    %5663 = vdwg.mxu0
    %v5665 = vsel %vm3331, %v5566, 0
    %v5668 = vsel %vm177, %v5584, 0
    %5670 = vmatpush.msra.mxu0 %v5582
    %5671 = vmatpush.msra.mxu0 %v5581
    %5672 = vmatpush.msra.mxu0 %v5580
    %5673 = vmatpush.msra.mxu0 %v5579
    %5674 = vmatpush.msra.mxu0 %v5578
    %5675 = vmatpush.msra.mxu0 %v5577
    %5676 = vmatpush.msra.mxu0 %v5576
    %5677 = vmatpush.msra.mxu0 %v5575
    %5678 = vmatpush.msra.mxu0 %v5574
    %5679 = vmatpush.msra.mxu0 %v5573
    %5680 = vmatpush.msra.mxu0 %v5572
    %5681 = vmatpush.msra.mxu0 %v5571
    %5682 = vmatpush.msra.mxu0 %v5570
    %5683 = vmatpush.msra.mxu0 %v5569
    %5684 = vmatpush.msra.mxu0 %v5568
    %5685 = vmatpush.msra.mxu0 %v5567
    %5686 = vmatmul.f32.gmra.mxu0 %v5565
    %v5687 = vpop.f32.mrf.mxu0
    %v5688 = vadd.f32 %v5662, %v5687
    %5689 = vdwg.mxu0
    %5690 = vmatpush.msra.mxu0 0.0
    %5691 = vmatpush.msra.mxu0 0.0
    %5692 = vmatpush.msra.mxu0 0.0
    %5693 = vmatpush.msra.mxu0 0.0
    %5694 = vmatpush.msra.mxu0 0.0
    %5695 = vmatpush.msra.mxu0 0.0
    %5696 = vmatpush.msra.mxu0 0.0
    %5697 = vmatpush.msra.mxu0 0.0
    %5698 = vmatpush.msra.mxu0 0.0
    %5699 = vmatpush.msra.mxu0 0.0
    %5700 = vmatpush.msra.mxu0 0.0
    %5701 = vmatpush.msra.mxu0 0.0
    %5702 = vmatpush.msra.mxu0 0.0
    %5703 = vmatpush.msra.mxu0 0.0
    %5704 = vmatpush.msra.mxu0 %v5668
    %5705 = vmatpush.msra.mxu0 %v5583
    %5706 = vmatmul.f32.gmra.mxu0 %v5665
    %v5707 = vpop.f32.mrf.mxu0
    %v5708 = vadd.f32 %v5688, %v5707
    %5709 = vdwg.mxu0
    %v5710 = vld [vmem:[#allocation5] sm:$0xfc]
    %v5711 = vld [vmem:[#allocation5 + $0x8] sm:$0xfc]
    %v5712 = vld [vmem:[#allocation5 + $0x10] sm:$0x3]
    %v5713 = vld [vmem:[#allocation5 + $0x18] sm:$0x3]
    %s5714 = scalar_lea.vmem %s43, 288
    %v5715 = vld [vmem:[%s5714] sm:$0xff]
    %v5716 = vld [vmem:[%s5714 + $0x8] sm:$0xff]
    %v5717 = vld [vmem:[%s5714 + $0x10] sm:$0xff]
    %v5718 = vld [vmem:[%s5714 + $0x18] sm:$0xff]
    %v5719 = vld [vmem:[%s5714 + $0x20] sm:$0xff]
    %v5720 = vld [vmem:[%s5714 + $0x28] sm:$0xff]
    %v5721 = vld [vmem:[%s5714 + $0x30] sm:$0xff]
    %v5722 = vld [vmem:[%s5714 + $0x38] sm:$0xff]
    %v5723 = vld [vmem:[%s5714 + $0x40] sm:$0xff]
    %v5724 = vld [vmem:[%s5714 + $0x48] sm:$0xff]
    %v5725 = vld [vmem:[%s5714 + $0x50] sm:$0xff]
    %v5726 = vld [vmem:[%s5714 + $0x58] sm:$0xff]
    %v5727 = vld [vmem:[%s5714 + $0x60] sm:$0xff]
    %v5728 = vld [vmem:[%s5714 + $0x68] sm:$0xff]
    %v5729 = vld [vmem:[%s5714 + $0x70] sm:$0xff]
    %v5730 = vld [vmem:[%s5714 + $0x78] sm:$0xff]
    %v5731 = vld [vmem:[%s5714 + $0x80] sm:$0xff]
    %v5732 = vld [vmem:[%s5714 + $0x88] sm:$0xf]
    %v5737 = vrot.slane %v5710, 2
    %v5738 = vrot.slane %v5712, 2
    %v5739 = vsel %vm1838, %v5737, %v5738
    %v5740 = vrot.slane %v5711, 2
    %v5741 = vrot.slane %v5713, 2
    %v5742 = vsel %vm1838, %v5740, %v5741
    %v5744 = vsel %vm3331, %v5742, 0
    %v5747 = vsel %vm177, %v5732, 0
    %5749 = vmatpush.msra.mxu0 %v5730
    %5750 = vmatpush.msra.mxu0 %v5729
    %5751 = vmatpush.msra.mxu0 %v5728
    %5752 = vmatpush.msra.mxu0 %v5727
    %5753 = vmatpush.msra.mxu0 %v5726
    %5754 = vmatpush.msra.mxu0 %v5725
    %5755 = vmatpush.msra.mxu0 %v5724
    %5756 = vmatpush.msra.mxu0 %v5723
    %5757 = vmatpush.msra.mxu0 %v5722
    %5758 = vmatpush.msra.mxu0 %v5721
    %5759 = vmatpush.msra.mxu0 %v5720
    %5760 = vmatpush.msra.mxu0 %v5719
    %5761 = vmatpush.msra.mxu0 %v5718
    %5762 = vmatpush.msra.mxu0 %v5717
    %5763 = vmatpush.msra.mxu0 %v5716
    %5764 = vmatpush.msra.mxu0 %v5715
    %5765 = vmatmul.f32.gmra.mxu0 %v5739
    %v5766 = vpop.f32.mrf.mxu0
    %v5767 = vadd.f32 0.0, %v5766
    %5768 = vdwg.mxu0
    %5769 = vmatpush.msra.mxu0 0.0
    %5770 = vmatpush.msra.mxu0 0.0
    %5771 = vmatpush.msra.mxu0 0.0
    %5772 = vmatpush.msra.mxu0 0.0
    %5773 = vmatpush.msra.mxu0 0.0
    %5774 = vmatpush.msra.mxu0 0.0
    %5775 = vmatpush.msra.mxu0 0.0
    %5776 = vmatpush.msra.mxu0 0.0
    %5777 = vmatpush.msra.mxu0 0.0
    %5778 = vmatpush.msra.mxu0 0.0
    %5779 = vmatpush.msra.mxu0 0.0
    %5780 = vmatpush.msra.mxu0 0.0
    %5781 = vmatpush.msra.mxu0 0.0
    %5782 = vmatpush.msra.mxu0 0.0
    %5783 = vmatpush.msra.mxu0 %v5747
    %5784 = vmatpush.msra.mxu0 %v5731
    %5785 = vmatmul.f32.gmra.mxu0 %v5744
    %v5786 = vpop.f32.mrf.mxu0
    %v5787 = vadd.f32 %v5767, %v5786
    %5788 = vdwg.mxu0
    %v5789 = vadd.f32 %v5708, %v5787
    %v5790 = vmax.f32 %v5789, 0.0
    %5791 = vst [vmem:[#allocation6] sm:$0xff] %v5790
    %v5792 = vrot.slane %v5790, 4
    %v5793 = vadd.f32 %v5790, %v5792
    %v5794 = vrot.slane %v5793, 2
    %v5795 = vadd.f32 %v5793, %v5794
    %v5796 = vrot.slane %v5795, 1
    %v5797 = vadd.f32 %v5795, %v5796
    %v5798 = vld [vmem:[%s45] sm:$0xff]
    %v5799 = vld [vmem:[%s45 + $0x8] sm:$0xff]
    %v5800 = vld [vmem:[%s45 + $0x10] sm:$0xff]
    %v5801 = vld [vmem:[%s45 + $0x18] sm:$0xff]
    %v5802 = vld [vmem:[%s45 + $0x20] sm:$0xff]
    %v5803 = vld [vmem:[%s45 + $0x28] sm:$0xff]
    %v5804 = vld [vmem:[%s45 + $0x30] sm:$0xff]
    %v5805 = vld [vmem:[%s45 + $0x38] sm:$0xff]
    %v5806 = vld [vmem:[%s45 + $0x40] sm:$0xff]
    %v5807 = vld [vmem:[%s45 + $0x48] sm:$0xff]
    %v5808 = vld [vmem:[%s45 + $0x50] sm:$0xff]
    %v5809 = vld [vmem:[%s45 + $0x58] sm:$0xff]
    %v5810 = vld [vmem:[%s45 + $0x60] sm:$0xff]
    %v5811 = vld [vmem:[%s45 + $0x68] sm:$0xff]
    %v5812 = vld [vmem:[%s45 + $0x70] sm:$0xff]
    %v5813 = vld [vmem:[%s45 + $0x78] sm:$0xff]
    %v5814 = vmul.f32 %v5790, %v5790
    %v5815 = vrot.slane %v5814, 4
    %v5816 = vadd.f32 %v5814, %v5815
    %v5817 = vrot.slane %v5816, 2
    %v5818 = vadd.f32 %v5816, %v5817
    %v5819 = vrot.slane %v5818, 1
    %v5820 = vadd.f32 %v5818, %v5819
    %v5821 = vld [vmem:[%s5173] sm:$0xff]
    %v5822 = vld [vmem:[%s5173 + $0x8] sm:$0xff]
    %v5823 = vld [vmem:[%s43] sm:$0xff]
    %v5824 = vld [vmem:[%s43 + $0x8] sm:$0xff]
    %v5825 = vld [vmem:[%s43 + $0x10] sm:$0xff]
    %v5826 = vld [vmem:[%s43 + $0x18] sm:$0xff]
    %v5827 = vld [vmem:[%s43 + $0x20] sm:$0xff]
    %v5828 = vld [vmem:[%s43 + $0x28] sm:$0xff]
    %v5829 = vld [vmem:[%s43 + $0x30] sm:$0xff]
    %v5830 = vld [vmem:[%s43 + $0x38] sm:$0xff]
    %v5831 = vld [vmem:[%s43 + $0x40] sm:$0xff]
    %v5832 = vld [vmem:[%s43 + $0x48] sm:$0xff]
    %v5833 = vld [vmem:[%s43 + $0x50] sm:$0xff]
    %v5834 = vld [vmem:[%s43 + $0x58] sm:$0xff]
    %v5835 = vld [vmem:[%s43 + $0x60] sm:$0xff]
    %v5836 = vld [vmem:[%s43 + $0x68] sm:$0xff]
    %v5837 = vld [vmem:[%s43 + $0x70] sm:$0xff]
    %v5838 = vld [vmem:[%s43 + $0x78] sm:$0xff]
    %v5839 = vld [vmem:[%s43 + $0x80] sm:$0xff]
    %v5840 = vld [vmem:[%s43 + $0x88] sm:$0xf]
    %v5841 = vld [vmem:[%s5173] sm:$0xfe]
    %v5842 = vld [vmem:[%s5173 + $0x8] sm:$0xfe]
    %v5843 = vld [vmem:[%s5173 + $0x10] sm:$0x1]
    %v5844 = vld [vmem:[%s5173 + $0x18] sm:$0x1]
    %v5845 = vld [vmem:[%s5589] sm:$0xff]
    %v5846 = vld [vmem:[%s5589 + $0x8] sm:$0xff]
    %v5847 = vld [vmem:[%s5589 + $0x10] sm:$0xff]
    %v5848 = vld [vmem:[%s5589 + $0x18] sm:$0xff]
    %v5849 = vld [vmem:[%s5589 + $0x20] sm:$0xff]
    %v5850 = vld [vmem:[%s5589 + $0x28] sm:$0xff]
    %v5851 = vld [vmem:[%s5589 + $0x30] sm:$0xff]
    %v5852 = vld [vmem:[%s5589 + $0x38] sm:$0xff]
    %v5853 = vld [vmem:[%s5589 + $0x40] sm:$0xff]
    %v5854 = vld [vmem:[%s5589 + $0x48] sm:$0xff]
    %v5855 = vld [vmem:[%s5589 + $0x50] sm:$0xff]
    %v5856 = vld [vmem:[%s5589 + $0x58] sm:$0xff]
    %v5857 = vld [vmem:[%s5589 + $0x60] sm:$0xff]
    %v5858 = vld [vmem:[%s5589 + $0x68] sm:$0xff]
    %v5859 = vld [vmem:[%s5589 + $0x70] sm:$0xff]
    %v5860 = vld [vmem:[%s5589 + $0x78] sm:$0xff]
    %v5861 = vld [vmem:[%s5589 + $0x80] sm:$0xff]
    %v5862 = vld [vmem:[%s5589 + $0x88] sm:$0xf]
    %v5867 = vrot.slane %v5841, 1
    %v5868 = vrot.slane %v5843, 1
    %v5869 = vsel %vm1408, %v5867, %v5868
    %v5870 = vrot.slane %v5842, 1
    %v5871 = vrot.slane %v5844, 1
    %v5872 = vsel %vm1408, %v5870, %v5871
    %v5874 = vsel %vm3331, %v5872, 0
    %v5877 = vsel %vm177, %v5862, 0
    %5879 = vmatpush.msra.mxu0 %v5860
    %5880 = vmatpush.msra.mxu0 %v5859
    %5881 = vmatpush.msra.mxu0 %v5858
    %5882 = vmatpush.msra.mxu0 %v5857
    %5883 = vmatpush.msra.mxu0 %v5856
    %5884 = vmatpush.msra.mxu0 %v5855
    %5885 = vmatpush.msra.mxu0 %v5854
    %5886 = vmatpush.msra.mxu0 %v5853
    %5887 = vmatpush.msra.mxu0 %v5852
    %5888 = vmatpush.msra.mxu0 %v5851
    %5889 = vmatpush.msra.mxu0 %v5850
    %5890 = vmatpush.msra.mxu0 %v5849
    %5891 = vmatpush.msra.mxu0 %v5848
    %5892 = vmatpush.msra.mxu0 %v5847
    %5893 = vmatpush.msra.mxu0 %v5846
    %5894 = vmatpush.msra.mxu0 %v5845
    %5895 = vmatmul.f32.gmra.mxu0 %v5869
    %v5896 = vpop.f32.mrf.mxu0
    %v5897 = vadd.f32 0.0, %v5896
    %5898 = vdwg.mxu0
    %5899 = vmatpush.msra.mxu0 0.0
    %5900 = vmatpush.msra.mxu0 0.0
    %5901 = vmatpush.msra.mxu0 0.0
    %5902 = vmatpush.msra.mxu0 0.0
    %5903 = vmatpush.msra.mxu0 0.0
    %5904 = vmatpush.msra.mxu0 0.0
    %5905 = vmatpush.msra.mxu0 0.0
    %5906 = vmatpush.msra.mxu0 0.0
    %5907 = vmatpush.msra.mxu0 0.0
    %5908 = vmatpush.msra.mxu0 0.0
    %5909 = vmatpush.msra.mxu0 0.0
    %5910 = vmatpush.msra.mxu0 0.0
    %5911 = vmatpush.msra.mxu0 0.0
    %5912 = vmatpush.msra.mxu0 0.0
    %5913 = vmatpush.msra.mxu0 %v5877
    %5914 = vmatpush.msra.mxu0 %v5861
    %5915 = vmatmul.f32.gmra.mxu0 %v5874
    %v5916 = vpop.f32.mrf.mxu0
    %v5917 = vadd.f32 %v5897, %v5916
    %5918 = vdwg.mxu0
    %v5920 = vsel %vm3331, %v5822, 0
    %v5923 = vsel %vm177, %v5840, 0
    %5925 = vmatpush.msra.mxu0 %v5838
    %5926 = vmatpush.msra.mxu0 %v5837
    %5927 = vmatpush.msra.mxu0 %v5836
    %5928 = vmatpush.msra.mxu0 %v5835
    %5929 = vmatpush.msra.mxu0 %v5834
    %5930 = vmatpush.msra.mxu0 %v5833
    %5931 = vmatpush.msra.mxu0 %v5832
    %5932 = vmatpush.msra.mxu0 %v5831
    %5933 = vmatpush.msra.mxu0 %v5830
    %5934 = vmatpush.msra.mxu0 %v5829
    %5935 = vmatpush.msra.mxu0 %v5828
    %5936 = vmatpush.msra.mxu0 %v5827
    %5937 = vmatpush.msra.mxu0 %v5826
    %5938 = vmatpush.msra.mxu0 %v5825
    %5939 = vmatpush.msra.mxu0 %v5824
    %5940 = vmatpush.msra.mxu0 %v5823
    %5941 = vmatmul.f32.gmra.mxu0 %v5821
    %v5942 = vpop.f32.mrf.mxu0
    %v5943 = vadd.f32 %v5917, %v5942
    %5944 = vdwg.mxu0
    %5945 = vmatpush.msra.mxu0 0.0
    %5946 = vmatpush.msra.mxu0 0.0
    %5947 = vmatpush.msra.mxu0 0.0
    %5948 = vmatpush.msra.mxu0 0.0
    %5949 = vmatpush.msra.mxu0 0.0
    %5950 = vmatpush.msra.mxu0 0.0
    %5951 = vmatpush.msra.mxu0 0.0
    %5952 = vmatpush.msra.mxu0 0.0
    %5953 = vmatpush.msra.mxu0 0.0
    %5954 = vmatpush.msra.mxu0 0.0
    %5955 = vmatpush.msra.mxu0 0.0
    %5956 = vmatpush.msra.mxu0 0.0
    %5957 = vmatpush.msra.mxu0 0.0
    %5958 = vmatpush.msra.mxu0 0.0
    %5959 = vmatpush.msra.mxu0 %v5923
    %5960 = vmatpush.msra.mxu0 %v5839
    %5961 = vmatmul.f32.gmra.mxu0 %v5920
    %v5962 = vpop.f32.mrf.mxu0
    %v5963 = vadd.f32 %v5943, %v5962
    %5964 = vdwg.mxu0
    %v5965 = vld [vmem:[%s5173] sm:$0xfc]
    %v5966 = vld [vmem:[%s5173 + $0x8] sm:$0xfc]
    %v5967 = vld [vmem:[%s5173 + $0x10] sm:$0x3]
    %v5968 = vld [vmem:[%s5173 + $0x18] sm:$0x3]
    %v5969 = vld [vmem:[%s5714] sm:$0xff]
    %v5970 = vld [vmem:[%s5714 + $0x8] sm:$0xff]
    %v5971 = vld [vmem:[%s5714 + $0x10] sm:$0xff]
    %v5972 = vld [vmem:[%s5714 + $0x18] sm:$0xff]
    %v5973 = vld [vmem:[%s5714 + $0x20] sm:$0xff]
    %v5974 = vld [vmem:[%s5714 + $0x28] sm:$0xff]
    %v5975 = vld [vmem:[%s5714 + $0x30] sm:$0xff]
    %v5976 = vld [vmem:[%s5714 + $0x38] sm:$0xff]
    %v5977 = vld [vmem:[%s5714 + $0x40] sm:$0xff]
    %v5978 = vld [vmem:[%s5714 + $0x48] sm:$0xff]
    %v5979 = vld [vmem:[%s5714 + $0x50] sm:$0xff]
    %v5980 = vld [vmem:[%s5714 + $0x58] sm:$0xff]
    %v5981 = vld [vmem:[%s5714 + $0x60] sm:$0xff]
    %v5982 = vld [vmem:[%s5714 + $0x68] sm:$0xff]
    %v5983 = vld [vmem:[%s5714 + $0x70] sm:$0xff]
    %v5984 = vld [vmem:[%s5714 + $0x78] sm:$0xff]
    %v5985 = vld [vmem:[%s5714 + $0x80] sm:$0xff]
    %v5986 = vld [vmem:[%s5714 + $0x88] sm:$0xf]
    %v5991 = vrot.slane %v5965, 2
    %v5992 = vrot.slane %v5967, 2
    %v5993 = vsel %vm1838, %v5991, %v5992
    %v5994 = vrot.slane %v5966, 2
    %v5995 = vrot.slane %v5968, 2
    %v5996 = vsel %vm1838, %v5994, %v5995
    %v5998 = vsel %vm3331, %v5996, 0
    %v6001 = vsel %vm177, %v5986, 0
    %6003 = vmatpush.msra.mxu0 %v5984
    %6004 = vmatpush.msra.mxu0 %v5983
    %6005 = vmatpush.msra.mxu0 %v5982
    %6006 = vmatpush.msra.mxu0 %v5981
    %6007 = vmatpush.msra.mxu0 %v5980
    %6008 = vmatpush.msra.mxu0 %v5979
    %6009 = vmatpush.msra.mxu0 %v5978
    %6010 = vmatpush.msra.mxu0 %v5977
    %6011 = vmatpush.msra.mxu0 %v5976
    %6012 = vmatpush.msra.mxu0 %v5975
    %6013 = vmatpush.msra.mxu0 %v5974
    %6014 = vmatpush.msra.mxu0 %v5973
    %6015 = vmatpush.msra.mxu0 %v5972
    %6016 = vmatpush.msra.mxu0 %v5971
    %6017 = vmatpush.msra.mxu0 %v5970
    %6018 = vmatpush.msra.mxu0 %v5969
    %6019 = vmatmul.f32.gmra.mxu0 %v5993
    %v6020 = vpop.f32.mrf.mxu0
    %v6021 = vadd.f32 0.0, %v6020
    %6022 = vdwg.mxu0
    %6023 = vmatpush.msra.mxu0 0.0
    %6024 = vmatpush.msra.mxu0 0.0
    %6025 = vmatpush.msra.mxu0 0.0
    %6026 = vmatpush.msra.mxu0 0.0
    %6027 = vmatpush.msra.mxu0 0.0
    %6028 = vmatpush.msra.mxu0 0.0
    %6029 = vmatpush.msra.mxu0 0.0
    %6030 = vmatpush.msra.mxu0 0.0
    %6031 = vmatpush.msra.mxu0 0.0
    %6032 = vmatpush.msra.mxu0 0.0
    %6033 = vmatpush.msra.mxu0 0.0
    %6034 = vmatpush.msra.mxu0 0.0
    %6035 = vmatpush.msra.mxu0 0.0
    %6036 = vmatpush.msra.mxu0 0.0
    %6037 = vmatpush.msra.mxu0 %v6001
    %6038 = vmatpush.msra.mxu0 %v5985
    %6039 = vmatmul.f32.gmra.mxu0 %v5998
    %v6040 = vpop.f32.mrf.mxu0
    %v6041 = vadd.f32 %v6021, %v6040
    %6042 = vdwg.mxu0
    %v6043 = vadd.f32 %v5963, %v6041
    %v6044 = vmax.f32 %v6043, 0.0
    %s6045 = scalar_lea.vmem [#allocation6], 8
    %6046 = vst [vmem:[%s6045] sm:$0xff] %v6044
    %v6047 = vrot.slane %v6044, 4
    %v6048 = vadd.f32 %v6044, %v6047
    %v6049 = vrot.slane %v6048, 2
    %v6050 = vadd.f32 %v6048, %v6049
    %v6051 = vrot.slane %v6050, 1
    %v6052 = vadd.f32 %v6050, %v6051
    %v6053 = vld [vmem:[%s45] sm:$0xff]
    %v6054 = vld [vmem:[%s45 + $0x8] sm:$0xff]
    %v6055 = vld [vmem:[%s45 + $0x10] sm:$0xff]
    %v6056 = vld [vmem:[%s45 + $0x18] sm:$0xff]
    %v6057 = vld [vmem:[%s45 + $0x20] sm:$0xff]
    %v6058 = vld [vmem:[%s45 + $0x28] sm:$0xff]
    %v6059 = vld [vmem:[%s45 + $0x30] sm:$0xff]
    %v6060 = vld [vmem:[%s45 + $0x38] sm:$0xff]
    %v6061 = vld [vmem:[%s45 + $0x40] sm:$0xff]
    %v6062 = vld [vmem:[%s45 + $0x48] sm:$0xff]
    %v6063 = vld [vmem:[%s45 + $0x50] sm:$0xff]
    %v6064 = vld [vmem:[%s45 + $0x58] sm:$0xff]
    %v6065 = vld [vmem:[%s45 + $0x60] sm:$0xff]
    %v6066 = vld [vmem:[%s45 + $0x68] sm:$0xff]
    %v6067 = vld [vmem:[%s45 + $0x70] sm:$0xff]
    %v6068 = vld [vmem:[%s45 + $0x78] sm:$0xff]
    %6069 = vmatpush.msra.mxu0 %v6068
    %6070 = vmatpush.msra.mxu0 %v6067
    %6071 = vmatpush.msra.mxu0 %v6066
    %6072 = vmatpush.msra.mxu0 %v6065
    %6073 = vmatpush.msra.mxu0 %v6064
    %6074 = vmatpush.msra.mxu0 %v6063
    %6075 = vmatpush.msra.mxu0 %v6062
    %6076 = vmatpush.msra.mxu0 %v6061
    %6077 = vmatpush.msra.mxu0 %v6060
    %6078 = vmatpush.msra.mxu0 %v6059
    %6079 = vmatpush.msra.mxu0 %v6058
    %6080 = vmatpush.msra.mxu0 %v6057
    %6081 = vmatpush.msra.mxu0 %v6056
    %6082 = vmatpush.msra.mxu0 %v6055
    %6083 = vmatpush.msra.mxu0 %v6054
    %6084 = vmatpush.msra.mxu0 %v6053
    %6085 = vmatmul.f32.gmra.mxu0 %v6052
    %v6086 = vpop.f32.mrf.mxu0
    %v6087 = vadd.f32 0.0, %v6086
    %6088 = vdwg.mxu0
    %6089 = vmatpush.msra.mxu0 %v5813
    %6090 = vmatpush.msra.mxu0 %v5812
    %6091 = vmatpush.msra.mxu0 %v5811
    %6092 = vmatpush.msra.mxu0 %v5810
    %6093 = vmatpush.msra.mxu0 %v5809
    %6094 = vmatpush.msra.mxu0 %v5808
    %6095 = vmatpush.msra.mxu0 %v5807
    %6096 = vmatpush.msra.mxu0 %v5806
    %6097 = vmatpush.msra.mxu0 %v5805
    %6098 = vmatpush.msra.mxu0 %v5804
    %6099 = vmatpush.msra.mxu0 %v5803
    %6100 = vmatpush.msra.mxu0 %v5802
    %6101 = vmatpush.msra.mxu0 %v5801
    %6102 = vmatpush.msra.mxu0 %v5800
    %6103 = vmatpush.msra.mxu0 %v5799
    %6104 = vmatpush.msra.mxu0 %v5798
    %6105 = vmatmul.f32.gmra.mxu0 %v5797
    %v6106 = vpop.f32.mrf.mxu0
    %v6107 = vadd.f32 %v6087, %v6106
    %6108 = vdwg.mxu0
    %v6109 = vmul.f32 %v6044, %v6044
    %v6110 = vrot.slane %v6109, 4
    %v6111 = vadd.f32 %v6109, %v6110
    %v6112 = vrot.slane %v6111, 2
    %v6113 = vadd.f32 %v6111, %v6112
    %v6114 = vrot.slane %v6113, 1
    %v6115 = vadd.f32 %v6113, %v6114
    %6116 = vmatpush.msra.mxu0 %v6068
    %6117 = vmatpush.msra.mxu0 %v6067
    %6118 = vmatpush.msra.mxu0 %v6066
    %6119 = vmatpush.msra.mxu0 %v6065
    %6120 = vmatpush.msra.mxu0 %v6064
    %6121 = vmatpush.msra.mxu0 %v6063
    %6122 = vmatpush.msra.mxu0 %v6062
    %6123 = vmatpush.msra.mxu0 %v6061
    %6124 = vmatpush.msra.mxu0 %v6060
    %6125 = vmatpush.msra.mxu0 %v6059
    %6126 = vmatpush.msra.mxu0 %v6058
    %6127 = vmatpush.msra.mxu0 %v6057
    %6128 = vmatpush.msra.mxu0 %v6056
    %6129 = vmatpush.msra.mxu0 %v6055
    %6130 = vmatpush.msra.mxu0 %v6054
    %6131 = vmatpush.msra.mxu0 %v6053
    %6132 = vmatmul.f32.gmra.mxu0 %v6115
    %v6133 = vpop.f32.mrf.mxu0
    %v6134 = vadd.f32 0.0, %v6133
    %6135 = vdwg.mxu0
    %6136 = vmatpush.msra.mxu0 %v5813
    %6137 = vmatpush.msra.mxu0 %v5812
    %6138 = vmatpush.msra.mxu0 %v5811
    %6139 = vmatpush.msra.mxu0 %v5810
    %6140 = vmatpush.msra.mxu0 %v5809
    %6141 = vmatpush.msra.mxu0 %v5808
    %6142 = vmatpush.msra.mxu0 %v5807
    %6143 = vmatpush.msra.mxu0 %v5806
    %6144 = vmatpush.msra.mxu0 %v5805
    %6145 = vmatpush.msra.mxu0 %v5804
    %6146 = vmatpush.msra.mxu0 %v5803
    %6147 = vmatpush.msra.mxu0 %v5802
    %6148 = vmatpush.msra.mxu0 %v5801
    %6149 = vmatpush.msra.mxu0 %v5800
    %6150 = vmatpush.msra.mxu0 %v5799
    %6151 = vmatpush.msra.mxu0 %v5798
    %6152 = vmatmul.f32.gmra.mxu0 %v5820
    %v6153 = vpop.f32.mrf.mxu0
    %v6154 = vadd.f32 %v6134, %v6153
    %6155 = vdwg.mxu0
    %v6156 = vmul.f32 %v6107, 0.0078125
    %v6157 = vmul.f32 %v6154, 0.0078125
    %v6158 = vmul.f32 %v6156, %v6156
    %v6159 = vsub.f32 %v6157, %v6158
    %v6160 = vld [vmem:[%s49] sm:$0x1]
    %v6161 = vadd.f32 %v6159, 1e-05
    %v6162 = vrsqrt.pop %v6161
    %v6163 = vmul.f32 %v6162, %v6161
    %v6164 = vmul.f32 %v6163, %v6162
    %v6165 = vmul.f32 0.5, %v6164
    %v6166 = vsub.f32 1.5, %v6165
    %v6167 = vmul.f32 %v6162, %v6166
    %vm6168 = vweird.f32 %v6161
    %vm6169 = vweird.f32 %v6162
    %vm6170 = vmor %vm6168, %vm6169
    %v6171 = vsel %vm6170, %v6162, %v6167
    %v6172 = vmul.f32 %v6160, %v6171
    %v6173 = vld [vmem:[%s51] sm:$0x1]
    %v6174 = vmul.f32 %v6156, %v6172
    %v6175 = vsub.f32 %v6173, %v6174
    %v6176 = vld [vmem:[%s47] sm:$0xff]
    %v6177 = vld [vmem:[%s47 + $0x8] sm:$0xff]
    %vm6178 = vcmask 130048
    %v6180 = vsel %vm6178, %v6172, 0
    %6182 = vmatpush.msra.mxu0 0.0
    %6183 = vmatpush.msra.mxu0 0.0
    %6184 = vmatpush.msra.mxu0 0.0
    %6185 = vmatpush.msra.mxu0 0.0
    %6186 = vmatpush.msra.mxu0 0.0
    %6187 = vmatpush.msra.mxu0 0.0
    %6188 = vmatpush.msra.mxu0 0.0
    %6189 = vmatpush.msra.mxu0 0.0
    %6190 = vmatpush.msra.mxu0 0.0
    %6191 = vmatpush.msra.mxu0 0.0
    %6192 = vmatpush.msra.mxu0 0.0
    %6193 = vmatpush.msra.mxu0 0.0
    %6194 = vmatpush.msra.mxu0 0.0
    %6195 = vmatpush.msra.mxu0 0.0
    %6196 = vmatpush.msra.mxu0 %v6177
    %6197 = vmatpush.msra.mxu0 %v6176
    %6198 = vmatmul.f32.gmra.mxu0 %v6180
    %v6199 = vpop.f32.mrf.mxu0
    %v6200 = vadd.f32 0.0, %v6199
    %6201 = vdwg.mxu0
    %v6203 = vsel %vm6178, %v6175, 0
    %6205 = vmatpush.msra.mxu0 0.0
    %6206 = vmatpush.msra.mxu0 0.0
    %6207 = vmatpush.msra.mxu0 0.0
    %6208 = vmatpush.msra.mxu0 0.0
    %6209 = vmatpush.msra.mxu0 0.0
    %6210 = vmatpush.msra.mxu0 0.0
    %6211 = vmatpush.msra.mxu0 0.0
    %6212 = vmatpush.msra.mxu0 0.0
    %6213 = vmatpush.msra.mxu0 0.0
    %6214 = vmatpush.msra.mxu0 0.0
    %6215 = vmatpush.msra.mxu0 0.0
    %6216 = vmatpush.msra.mxu0 0.0
    %6217 = vmatpush.msra.mxu0 0.0
    %6218 = vmatpush.msra.mxu0 0.0
    %6219 = vmatpush.msra.mxu0 %v6177
    %6220 = vmatpush.msra.mxu0 %v6176
    %6221 = vmatmul.f32.gmra.mxu0 %v6203
    %v6222 = vpop.f32.mrf.mxu0
    %v6223 = vadd.f32 0.0, %v6222
    %6224 = vdwg.mxu0
    %v6225 = vld [vmem:[#allocation6] sm:$0xff]
    %v6226 = vperm.slane %v6200, 0
    %v6227 = vmul.f32 %v6225, %v6226
    %v6228 = vperm.slane %v6223, 0
    %v6229 = vadd.f32 %v6227, %v6228
    %6230 = vst [vmem:[#allocation6] sm:$0xff] %v6229
    %v6231 = vld [vmem:[%s6045] sm:$0xff]
    %v6232 = vmul.f32 %v6231, %v6226
    %v6233 = vadd.f32 %v6232, %v6228
    %6234 = vst [vmem:[%s6045] sm:$0xff] %v6233
    %v6235 = vld [vmem:[#allocation6] sm:$0x3f]
    %v6236 = vld [vmem:[%s53] sm:$0xff]
    %v6237 = vld [vmem:[%s53 + $0x8] sm:$0xff]
    %v6238 = vld [vmem:[%s53 + $0x10] sm:$0xff]
    %v6239 = vld [vmem:[%s53 + $0x18] sm:$0xff]
    %v6240 = vld [vmem:[%s53 + $0x20] sm:$0xff]
    %v6241 = vld [vmem:[%s53 + $0x28] sm:$0xff]
    %v6242 = vld [vmem:[%s53 + $0x30] sm:$0xff]
    %v6243 = vld [vmem:[%s53 + $0x38] sm:$0xff]
    %v6244 = vld [vmem:[%s53 + $0x40] sm:$0xff]
    %v6245 = vld [vmem:[%s53 + $0x48] sm:$0xff]
    %v6246 = vld [vmem:[%s53 + $0x50] sm:$0xff]
    %v6247 = vld [vmem:[%s53 + $0x58] sm:$0xff]
    %v6248 = vld [vmem:[%s53 + $0x60] sm:$0xff]
    %v6249 = vld [vmem:[%s53 + $0x68] sm:$0xff]
    %v6250 = vld [vmem:[%s53 + $0x70] sm:$0xff]
    %v6251 = vld [vmem:[%s53 + $0x78] sm:$0xff]
    %v6252 = vld [vmem:[#allocation6 + $0x1] sm:$0x3f]
    %s6253 = scalar_lea.vmem %s53, 128
    %v6254 = vld [vmem:[%s6253] sm:$0xff]
    %v6255 = vld [vmem:[%s6253 + $0x8] sm:$0xff]
    %v6256 = vld [vmem:[%s6253 + $0x10] sm:$0xff]
    %v6257 = vld [vmem:[%s6253 + $0x18] sm:$0xff]
    %v6258 = vld [vmem:[%s6253 + $0x20] sm:$0xff]
    %v6259 = vld [vmem:[%s6253 + $0x28] sm:$0xff]
    %v6260 = vld [vmem:[%s6253 + $0x30] sm:$0xff]
    %v6261 = vld [vmem:[%s6253 + $0x38] sm:$0xff]
    %v6262 = vld [vmem:[%s6253 + $0x40] sm:$0xff]
    %v6263 = vld [vmem:[%s6253 + $0x48] sm:$0xff]
    %v6264 = vld [vmem:[%s6253 + $0x50] sm:$0xff]
    %v6265 = vld [vmem:[%s6253 + $0x58] sm:$0xff]
    %v6266 = vld [vmem:[%s6253 + $0x60] sm:$0xff]
    %v6267 = vld [vmem:[%s6253 + $0x68] sm:$0xff]
    %v6268 = vld [vmem:[%s6253 + $0x70] sm:$0xff]
    %v6269 = vld [vmem:[%s6253 + $0x78] sm:$0xff]
    %6270 = vmatpush.msra.mxu0 %v6269
    %6271 = vmatpush.msra.mxu0 %v6268
    %6272 = vmatpush.msra.mxu0 %v6267
    %6273 = vmatpush.msra.mxu0 %v6266
    %6274 = vmatpush.msra.mxu0 %v6265
    %6275 = vmatpush.msra.mxu0 %v6264
    %6276 = vmatpush.msra.mxu0 %v6263
    %6277 = vmatpush.msra.mxu0 %v6262
    %6278 = vmatpush.msra.mxu0 %v6261
    %6279 = vmatpush.msra.mxu0 %v6260
    %6280 = vmatpush.msra.mxu0 %v6259
    %6281 = vmatpush.msra.mxu0 %v6258
    %6282 = vmatpush.msra.mxu0 %v6257
    %6283 = vmatpush.msra.mxu0 %v6256
    %6284 = vmatpush.msra.mxu0 %v6255
    %6285 = vmatpush.msra.mxu0 %v6254
    %6286 = vmatmul.f32.gmra.mxu0 %v6252
    %v6287 = vpop.f32.mrf.mxu0
    %v6288 = vadd.f32 0.0, %v6287
    %6289 = vdwg.mxu0
    %6290 = vmatpush.msra.mxu0 %v6251
    %6291 = vmatpush.msra.mxu0 %v6250
    %6292 = vmatpush.msra.mxu0 %v6249
    %6293 = vmatpush.msra.mxu0 %v6248
    %6294 = vmatpush.msra.mxu0 %v6247
    %6295 = vmatpush.msra.mxu0 %v6246
    %6296 = vmatpush.msra.mxu0 %v6245
    %6297 = vmatpush.msra.mxu0 %v6244
    %6298 = vmatpush.msra.mxu0 %v6243
    %6299 = vmatpush.msra.mxu0 %v6242
    %6300 = vmatpush.msra.mxu0 %v6241
    %6301 = vmatpush.msra.mxu0 %v6240
    %6302 = vmatpush.msra.mxu0 %v6239
    %6303 = vmatpush.msra.mxu0 %v6238
    %6304 = vmatpush.msra.mxu0 %v6237
    %6305 = vmatpush.msra.mxu0 %v6236
    %6306 = vmatmul.f32.gmra.mxu0 %v6235
    %v6307 = vpop.f32.mrf.mxu0
    %v6308 = vadd.f32 %v6288, %v6307
    %6309 = vdwg.mxu0
    %v6310 = vld [vmem:[#allocation6 + $0x2] sm:$0x3f]
    %s6311 = scalar_lea.vmem %s53, 256
    %v6312 = vld [vmem:[%s6311] sm:$0xff]
    %v6313 = vld [vmem:[%s6311 + $0x8] sm:$0xff]
    %v6314 = vld [vmem:[%s6311 + $0x10] sm:$0xff]
    %v6315 = vld [vmem:[%s6311 + $0x18] sm:$0xff]
    %v6316 = vld [vmem:[%s6311 + $0x20] sm:$0xff]
    %v6317 = vld [vmem:[%s6311 + $0x28] sm:$0xff]
    %v6318 = vld [vmem:[%s6311 + $0x30] sm:$0xff]
    %v6319 = vld [vmem:[%s6311 + $0x38] sm:$0xff]
    %v6320 = vld [vmem:[%s6311 + $0x40] sm:$0xff]
    %v6321 = vld [vmem:[%s6311 + $0x48] sm:$0xff]
    %v6322 = vld [vmem:[%s6311 + $0x50] sm:$0xff]
    %v6323 = vld [vmem:[%s6311 + $0x58] sm:$0xff]
    %v6324 = vld [vmem:[%s6311 + $0x60] sm:$0xff]
    %v6325 = vld [vmem:[%s6311 + $0x68] sm:$0xff]
    %v6326 = vld [vmem:[%s6311 + $0x70] sm:$0xff]
    %v6327 = vld [vmem:[%s6311 + $0x78] sm:$0xff]
    %6328 = vmatpush.msra.mxu0 %v6327
    %6329 = vmatpush.msra.mxu0 %v6326
    %6330 = vmatpush.msra.mxu0 %v6325
    %6331 = vmatpush.msra.mxu0 %v6324
    %6332 = vmatpush.msra.mxu0 %v6323
    %6333 = vmatpush.msra.mxu0 %v6322
    %6334 = vmatpush.msra.mxu0 %v6321
    %6335 = vmatpush.msra.mxu0 %v6320
    %6336 = vmatpush.msra.mxu0 %v6319
    %6337 = vmatpush.msra.mxu0 %v6318
    %6338 = vmatpush.msra.mxu0 %v6317
    %6339 = vmatpush.msra.mxu0 %v6316
    %6340 = vmatpush.msra.mxu0 %v6315
    %6341 = vmatpush.msra.mxu0 %v6314
    %6342 = vmatpush.msra.mxu0 %v6313
    %6343 = vmatpush.msra.mxu0 %v6312
    %6344 = vmatmul.f32.gmra.mxu0 %v6310
    %v6345 = vpop.f32.mrf.mxu0
    %v6346 = vadd.f32 0.0, %v6345
    %6347 = vdwg.mxu0
    %v6348 = vadd.f32 %v6308, %v6346
    %v6349 = vmax.f32 %v6348, 0.0
    %vm6350 = vcmask 979968
    %6351 = vst.msk [vmem:[#allocation7] sm:$0x3f] %vm6350, %v6349
    %v6352 = vsel %vm6350, %v6349, 0.0
    %v6353 = vrot.slane %v6352, 4
    %v6354 = vadd.f32 %v6352, %v6353
    %v6355 = vrot.slane %v6354, 2
    %v6356 = vadd.f32 %v6354, %v6355
    %v6357 = vrot.slane %v6356, 1
    %v6358 = vadd.f32 %v6356, %v6357
    %v6359 = vld [vmem:[%s55] sm:$0xff]
    %v6360 = vld [vmem:[%s55 + $0x8] sm:$0xff]
    %v6361 = vld [vmem:[%s55 + $0x10] sm:$0xff]
    %v6362 = vld [vmem:[%s55 + $0x18] sm:$0xff]
    %v6363 = vld [vmem:[%s55 + $0x20] sm:$0xff]
    %v6364 = vld [vmem:[%s55 + $0x28] sm:$0xff]
    %v6365 = vld [vmem:[%s55 + $0x30] sm:$0xff]
    %v6366 = vld [vmem:[%s55 + $0x38] sm:$0xff]
    %v6367 = vld [vmem:[%s55 + $0x40] sm:$0xff]
    %v6368 = vld [vmem:[%s55 + $0x48] sm:$0xff]
    %v6369 = vld [vmem:[%s55 + $0x50] sm:$0xff]
    %v6370 = vld [vmem:[%s55 + $0x58] sm:$0xff]
    %v6371 = vld [vmem:[%s55 + $0x60] sm:$0xff]
    %v6372 = vld [vmem:[%s55 + $0x68] sm:$0xff]
    %v6373 = vld [vmem:[%s55 + $0x70] sm:$0xff]
    %v6374 = vmul.f32 %v6349, %v6349
    %v6375 = vsel %vm6350, %v6374, 0.0
    %v6376 = vrot.slane %v6375, 4
    %v6377 = vadd.f32 %v6375, %v6376
    %v6378 = vrot.slane %v6377, 2
    %v6379 = vadd.f32 %v6377, %v6378
    %v6380 = vrot.slane %v6379, 1
    %v6381 = vadd.f32 %v6379, %v6380
    %v6382 = vld [vmem:[%s6045] sm:$0x3f]
    %v6383 = vld [vmem:[%s53] sm:$0xff]
    %v6384 = vld [vmem:[%s53 + $0x8] sm:$0xff]
    %v6385 = vld [vmem:[%s53 + $0x10] sm:$0xff]
    %v6386 = vld [vmem:[%s53 + $0x18] sm:$0xff]
    %v6387 = vld [vmem:[%s53 + $0x20] sm:$0xff]
    %v6388 = vld [vmem:[%s53 + $0x28] sm:$0xff]
    %v6389 = vld [vmem:[%s53 + $0x30] sm:$0xff]
    %v6390 = vld [vmem:[%s53 + $0x38] sm:$0xff]
    %v6391 = vld [vmem:[%s53 + $0x40] sm:$0xff]
    %v6392 = vld [vmem:[%s53 + $0x48] sm:$0xff]
    %v6393 = vld [vmem:[%s53 + $0x50] sm:$0xff]
    %v6394 = vld [vmem:[%s53 + $0x58] sm:$0xff]
    %v6395 = vld [vmem:[%s53 + $0x60] sm:$0xff]
    %v6396 = vld [vmem:[%s53 + $0x68] sm:$0xff]
    %v6397 = vld [vmem:[%s53 + $0x70] sm:$0xff]
    %v6398 = vld [vmem:[%s53 + $0x78] sm:$0xff]
    %v6399 = vld [vmem:[%s6045 + $0x1] sm:$0x3f]
    %v6400 = vld [vmem:[%s6253] sm:$0xff]
    %v6401 = vld [vmem:[%s6253 + $0x8] sm:$0xff]
    %v6402 = vld [vmem:[%s6253 + $0x10] sm:$0xff]
    %v6403 = vld [vmem:[%s6253 + $0x18] sm:$0xff]
    %v6404 = vld [vmem:[%s6253 + $0x20] sm:$0xff]
    %v6405 = vld [vmem:[%s6253 + $0x28] sm:$0xff]
    %v6406 = vld [vmem:[%s6253 + $0x30] sm:$0xff]
    %v6407 = vld [vmem:[%s6253 + $0x38] sm:$0xff]
    %v6408 = vld [vmem:[%s6253 + $0x40] sm:$0xff]
    %v6409 = vld [vmem:[%s6253 + $0x48] sm:$0xff]
    %v6410 = vld [vmem:[%s6253 + $0x50] sm:$0xff]
    %v6411 = vld [vmem:[%s6253 + $0x58] sm:$0xff]
    %v6412 = vld [vmem:[%s6253 + $0x60] sm:$0xff]
    %v6413 = vld [vmem:[%s6253 + $0x68] sm:$0xff]
    %v6414 = vld [vmem:[%s6253 + $0x70] sm:$0xff]
    %v6415 = vld [vmem:[%s6253 + $0x78] sm:$0xff]
    %6416 = vmatpush.msra.mxu0 %v6415
    %6417 = vmatpush.msra.mxu0 %v6414
    %6418 = vmatpush.msra.mxu0 %v6413
    %6419 = vmatpush.msra.mxu0 %v6412
    %6420 = vmatpush.msra.mxu0 %v6411
    %6421 = vmatpush.msra.mxu0 %v6410
    %6422 = vmatpush.msra.mxu0 %v6409
    %6423 = vmatpush.msra.mxu0 %v6408
    %6424 = vmatpush.msra.mxu0 %v6407
    %6425 = vmatpush.msra.mxu0 %v6406
    %6426 = vmatpush.msra.mxu0 %v6405
    %6427 = vmatpush.msra.mxu0 %v6404
    %6428 = vmatpush.msra.mxu0 %v6403
    %6429 = vmatpush.msra.mxu0 %v6402
    %6430 = vmatpush.msra.mxu0 %v6401
    %6431 = vmatpush.msra.mxu0 %v6400
    %6432 = vmatmul.f32.gmra.mxu0 %v6399
    %v6433 = vpop.f32.mrf.mxu0
    %v6434 = vadd.f32 0.0, %v6433
    %6435 = vdwg.mxu0
    %6436 = vmatpush.msra.mxu0 %v6398
    %6437 = vmatpush.msra.mxu0 %v6397
    %6438 = vmatpush.msra.mxu0 %v6396
    %6439 = vmatpush.msra.mxu0 %v6395
    %6440 = vmatpush.msra.mxu0 %v6394
    %6441 = vmatpush.msra.mxu0 %v6393
    %6442 = vmatpush.msra.mxu0 %v6392
    %6443 = vmatpush.msra.mxu0 %v6391
    %6444 = vmatpush.msra.mxu0 %v6390
    %6445 = vmatpush.msra.mxu0 %v6389
    %6446 = vmatpush.msra.mxu0 %v6388
    %6447 = vmatpush.msra.mxu0 %v6387
    %6448 = vmatpush.msra.mxu0 %v6386
    %6449 = vmatpush.msra.mxu0 %v6385
    %6450 = vmatpush.msra.mxu0 %v6384
    %6451 = vmatpush.msra.mxu0 %v6383
    %6452 = vmatmul.f32.gmra.mxu0 %v6382
    %v6453 = vpop.f32.mrf.mxu0
    %v6454 = vadd.f32 %v6434, %v6453
    %6455 = vdwg.mxu0
    %v6456 = vld [vmem:[%s6045 + $0x2] sm:$0x3f]
    %v6457 = vld [vmem:[%s6311] sm:$0xff]
    %v6458 = vld [vmem:[%s6311 + $0x8] sm:$0xff]
    %v6459 = vld [vmem:[%s6311 + $0x10] sm:$0xff]
    %v6460 = vld [vmem:[%s6311 + $0x18] sm:$0xff]
    %v6461 = vld [vmem:[%s6311 + $0x20] sm:$0xff]
    %v6462 = vld [vmem:[%s6311 + $0x28] sm:$0xff]
    %v6463 = vld [vmem:[%s6311 + $0x30] sm:$0xff]
    %v6464 = vld [vmem:[%s6311 + $0x38] sm:$0xff]
    %v6465 = vld [vmem:[%s6311 + $0x40] sm:$0xff]
    %v6466 = vld [vmem:[%s6311 + $0x48] sm:$0xff]
    %v6467 = vld [vmem:[%s6311 + $0x50] sm:$0xff]
    %v6468 = vld [vmem:[%s6311 + $0x58] sm:$0xff]
    %v6469 = vld [vmem:[%s6311 + $0x60] sm:$0xff]
    %v6470 = vld [vmem:[%s6311 + $0x68] sm:$0xff]
    %v6471 = vld [vmem:[%s6311 + $0x70] sm:$0xff]
    %v6472 = vld [vmem:[%s6311 + $0x78] sm:$0xff]
    %6473 = vmatpush.msra.mxu0 %v6472
    %6474 = vmatpush.msra.mxu0 %v6471
    %6475 = vmatpush.msra.mxu0 %v6470
    %6476 = vmatpush.msra.mxu0 %v6469
    %6477 = vmatpush.msra.mxu0 %v6468
    %6478 = vmatpush.msra.mxu0 %v6467
    %6479 = vmatpush.msra.mxu0 %v6466
    %6480 = vmatpush.msra.mxu0 %v6465
    %6481 = vmatpush.msra.mxu0 %v6464
    %6482 = vmatpush.msra.mxu0 %v6463
    %6483 = vmatpush.msra.mxu0 %v6462
    %6484 = vmatpush.msra.mxu0 %v6461
    %6485 = vmatpush.msra.mxu0 %v6460
    %6486 = vmatpush.msra.mxu0 %v6459
    %6487 = vmatpush.msra.mxu0 %v6458
    %6488 = vmatpush.msra.mxu0 %v6457
    %6489 = vmatmul.f32.gmra.mxu0 %v6456
    %v6490 = vpop.f32.mrf.mxu0
    %v6491 = vadd.f32 0.0, %v6490
    %6492 = vdwg.mxu0
    %v6493 = vadd.f32 %v6454, %v6491
    %v6494 = vmax.f32 %v6493, 0.0
    %s6495 = scalar_lea.vmem [#allocation7], 8
    %6496 = vst.msk [vmem:[%s6495] sm:$0x3f] %vm6350, %v6494
    %v6497 = vsel %vm6350, %v6494, 0.0
    %v6498 = vrot.slane %v6497, 4
    %v6499 = vadd.f32 %v6497, %v6498
    %v6500 = vrot.slane %v6499, 2
    %v6501 = vadd.f32 %v6499, %v6500
    %v6502 = vrot.slane %v6501, 1
    %v6503 = vadd.f32 %v6501, %v6502
    %v6504 = vld [vmem:[%s55] sm:$0xff]
    %v6505 = vld [vmem:[%s55 + $0x8] sm:$0xff]
    %v6506 = vld [vmem:[%s55 + $0x10] sm:$0xff]
    %v6507 = vld [vmem:[%s55 + $0x18] sm:$0xff]
    %v6508 = vld [vmem:[%s55 + $0x20] sm:$0xff]
    %v6509 = vld [vmem:[%s55 + $0x28] sm:$0xff]
    %v6510 = vld [vmem:[%s55 + $0x30] sm:$0xff]
    %v6511 = vld [vmem:[%s55 + $0x38] sm:$0xff]
    %v6512 = vld [vmem:[%s55 + $0x40] sm:$0xff]
    %v6513 = vld [vmem:[%s55 + $0x48] sm:$0xff]
    %v6514 = vld [vmem:[%s55 + $0x50] sm:$0xff]
    %v6515 = vld [vmem:[%s55 + $0x58] sm:$0xff]
    %v6516 = vld [vmem:[%s55 + $0x60] sm:$0xff]
    %v6517 = vld [vmem:[%s55 + $0x68] sm:$0xff]
    %v6518 = vld [vmem:[%s55 + $0x70] sm:$0xff]
    %v6520 = vsel %vm4065, %v6503, 0
    %6522 = vmatpush.msra.mxu0 0.0
    %6523 = vmatpush.msra.mxu0 %v6518
    %6524 = vmatpush.msra.mxu0 %v6517
    %6525 = vmatpush.msra.mxu0 %v6516
    %6526 = vmatpush.msra.mxu0 %v6515
    %6527 = vmatpush.msra.mxu0 %v6514
    %6528 = vmatpush.msra.mxu0 %v6513
    %6529 = vmatpush.msra.mxu0 %v6512
    %6530 = vmatpush.msra.mxu0 %v6511
    %6531 = vmatpush.msra.mxu0 %v6510
    %6532 = vmatpush.msra.mxu0 %v6509
    %6533 = vmatpush.msra.mxu0 %v6508
    %6534 = vmatpush.msra.mxu0 %v6507
    %6535 = vmatpush.msra.mxu0 %v6506
    %6536 = vmatpush.msra.mxu0 %v6505
    %6537 = vmatpush.msra.mxu0 %v6504
    %6538 = vmatmul.f32.gmra.mxu0 %v6520
    %v6539 = vpop.f32.mrf.mxu0
    %v6540 = vadd.f32 0.0, %v6539
    %6541 = vdwg.mxu0
    %v6543 = vsel %vm4065, %v6358, 0
    %6545 = vmatpush.msra.mxu0 0.0
    %6546 = vmatpush.msra.mxu0 %v6373
    %6547 = vmatpush.msra.mxu0 %v6372
    %6548 = vmatpush.msra.mxu0 %v6371
    %6549 = vmatpush.msra.mxu0 %v6370
    %6550 = vmatpush.msra.mxu0 %v6369
    %6551 = vmatpush.msra.mxu0 %v6368
    %6552 = vmatpush.msra.mxu0 %v6367
    %6553 = vmatpush.msra.mxu0 %v6366
    %6554 = vmatpush.msra.mxu0 %v6365
    %6555 = vmatpush.msra.mxu0 %v6364
    %6556 = vmatpush.msra.mxu0 %v6363
    %6557 = vmatpush.msra.mxu0 %v6362
    %6558 = vmatpush.msra.mxu0 %v6361
    %6559 = vmatpush.msra.mxu0 %v6360
    %6560 = vmatpush.msra.mxu0 %v6359
    %6561 = vmatmul.f32.gmra.mxu0 %v6543
    %v6562 = vpop.f32.mrf.mxu0
    %v6563 = vadd.f32 %v6540, %v6562
    %6564 = vdwg.mxu0
    %v6565 = vmul.f32 %v6494, %v6494
    %v6566 = vsel %vm6350, %v6565, 0.0
    %v6567 = vrot.slane %v6566, 4
    %v6568 = vadd.f32 %v6566, %v6567
    %v6569 = vrot.slane %v6568, 2
    %v6570 = vadd.f32 %v6568, %v6569
    %v6571 = vrot.slane %v6570, 1
    %v6572 = vadd.f32 %v6570, %v6571
    %v6574 = vsel %vm4065, %v6572, 0
    %6576 = vmatpush.msra.mxu0 0.0
    %6577 = vmatpush.msra.mxu0 %v6518
    %6578 = vmatpush.msra.mxu0 %v6517
    %6579 = vmatpush.msra.mxu0 %v6516
    %6580 = vmatpush.msra.mxu0 %v6515
    %6581 = vmatpush.msra.mxu0 %v6514
    %6582 = vmatpush.msra.mxu0 %v6513
    %6583 = vmatpush.msra.mxu0 %v6512
    %6584 = vmatpush.msra.mxu0 %v6511
    %6585 = vmatpush.msra.mxu0 %v6510
    %6586 = vmatpush.msra.mxu0 %v6509
    %6587 = vmatpush.msra.mxu0 %v6508
    %6588 = vmatpush.msra.mxu0 %v6507
    %6589 = vmatpush.msra.mxu0 %v6506
    %6590 = vmatpush.msra.mxu0 %v6505
    %6591 = vmatpush.msra.mxu0 %v6504
    %6592 = vmatmul.f32.gmra.mxu0 %v6574
    %v6593 = vpop.f32.mrf.mxu0
    %v6594 = vadd.f32 0.0, %v6593
    %6595 = vdwg.mxu0
    %v6597 = vsel %vm4065, %v6381, 0
    %6599 = vmatpush.msra.mxu0 0.0
    %6600 = vmatpush.msra.mxu0 %v6373
    %6601 = vmatpush.msra.mxu0 %v6372
    %6602 = vmatpush.msra.mxu0 %v6371
    %6603 = vmatpush.msra.mxu0 %v6370
    %6604 = vmatpush.msra.mxu0 %v6369
    %6605 = vmatpush.msra.mxu0 %v6368
    %6606 = vmatpush.msra.mxu0 %v6367
    %6607 = vmatpush.msra.mxu0 %v6366
    %6608 = vmatpush.msra.mxu0 %v6365
    %6609 = vmatpush.msra.mxu0 %v6364
    %6610 = vmatpush.msra.mxu0 %v6363
    %6611 = vmatpush.msra.mxu0 %v6362
    %6612 = vmatpush.msra.mxu0 %v6361
    %6613 = vmatpush.msra.mxu0 %v6360
    %6614 = vmatpush.msra.mxu0 %v6359
    %6615 = vmatmul.f32.gmra.mxu0 %v6597
    %v6616 = vpop.f32.mrf.mxu0
    %v6617 = vadd.f32 %v6594, %v6616
    %6618 = vdwg.mxu0
    %v6619 = vmul.f32 %v6563, 0.013888889
    %v6620 = vmul.f32 %v6617, 0.013888889
    %v6621 = vmul.f32 %v6619, %v6619
    %v6622 = vsub.f32 %v6620, %v6621
    %v6623 = vld [vmem:[%s59] sm:$0x1]
    %v6624 = vadd.f32 %v6622, 1e-05
    %v6625 = vrsqrt.pop %v6624
    %v6626 = vmul.f32 %v6625, %v6624
    %v6627 = vmul.f32 %v6626, %v6625
    %v6628 = vmul.f32 0.5, %v6627
    %v6629 = vsub.f32 1.5, %v6628
    %v6630 = vmul.f32 %v6625, %v6629
    %vm6631 = vweird.f32 %v6624
    %vm6632 = vweird.f32 %v6625
    %vm6633 = vmor %vm6631, %vm6632
    %v6634 = vsel %vm6633, %v6625, %v6630
    %v6635 = vmul.f32 %v6623, %v6634
    %v6636 = vld [vmem:[%s61] sm:$0x1]
    %v6637 = vmul.f32 %v6619, %v6635
    %v6638 = vsub.f32 %v6636, %v6637
    %v6639 = vld [vmem:[%s57] sm:$0xff]
    %v6640 = vld [vmem:[%s57 + $0x8] sm:$0xff]
    %v6641 = vld [vmem:[%s57 + $0x10] sm:$0xf]
    %vm6642 = vcmask 162816
    %v6644 = vsel %vm6642, %v6635, 0
    %v6647 = vsel %vm177, %v6641, 0
    %6649 = vmatpush.msra.mxu0 0.0
    %6650 = vmatpush.msra.mxu0 0.0
    %6651 = vmatpush.msra.mxu0 0.0
    %6652 = vmatpush.msra.mxu0 0.0
    %6653 = vmatpush.msra.mxu0 0.0
    %6654 = vmatpush.msra.mxu0 0.0
    %6655 = vmatpush.msra.mxu0 0.0
    %6656 = vmatpush.msra.mxu0 0.0
    %6657 = vmatpush.msra.mxu0 0.0
    %6658 = vmatpush.msra.mxu0 0.0
    %6659 = vmatpush.msra.mxu0 0.0
    %6660 = vmatpush.msra.mxu0 0.0
    %6661 = vmatpush.msra.mxu0 0.0
    %6662 = vmatpush.msra.mxu0 %v6647
    %6663 = vmatpush.msra.mxu0 %v6640
    %6664 = vmatpush.msra.mxu0 %v6639
    %6665 = vmatmul.f32.gmra.mxu0 %v6644
    %v6666 = vpop.f32.mrf.mxu0
    %v6667 = vadd.f32 0.0, %v6666
    %6668 = vdwg.mxu0
    %v6670 = vsel %vm6642, %v6638, 0
    %6672 = vmatpush.msra.mxu0 0.0
    %6673 = vmatpush.msra.mxu0 0.0
    %6674 = vmatpush.msra.mxu0 0.0
    %6675 = vmatpush.msra.mxu0 0.0
    %6676 = vmatpush.msra.mxu0 0.0
    %6677 = vmatpush.msra.mxu0 0.0
    %6678 = vmatpush.msra.mxu0 0.0
    %6679 = vmatpush.msra.mxu0 0.0
    %6680 = vmatpush.msra.mxu0 0.0
    %6681 = vmatpush.msra.mxu0 0.0
    %6682 = vmatpush.msra.mxu0 0.0
    %6683 = vmatpush.msra.mxu0 0.0
    %6684 = vmatpush.msra.mxu0 0.0
    %6685 = vmatpush.msra.mxu0 %v6647
    %6686 = vmatpush.msra.mxu0 %v6640
    %6687 = vmatpush.msra.mxu0 %v6639
    %6688 = vmatmul.f32.gmra.mxu0 %v6670
    %v6689 = vpop.f32.mrf.mxu0
    %v6690 = vadd.f32 0.0, %v6689
    %6691 = vdwg.mxu0
    %v6692 = vld [vmem:[#allocation7] sm:$0x3f]
    %v6693 = vperm.slane %v6667, 0
    %v6694 = vmul.f32 %v6692, %v6693
    %v6695 = vperm.slane %v6690, 0
    %v6696 = vadd.f32 %v6694, %v6695
    %6697 = vst.msk [vmem:[#allocation7] sm:$0x3f] %vm6350, %v6696
    %v6698 = vld [vmem:[%s6495] sm:$0x3f]
    %v6699 = vmul.f32 %v6698, %v6693
    %v6700 = vadd.f32 %v6699, %v6695
    %6701 = vst.msk [vmem:[%s6495] sm:$0x3f] %vm6350, %v6700
    %v6702 = vld [vmem:[#allocation7] sm:$0x3f]
    %v6703 = vsel %vm6350, %v6702, 0.0
    %v6704 = vrot.slane %v6703, 4
    %v6705 = vadd.f32 %v6703, %v6704
    %v6706 = vrot.slane %v6705, 2
    %v6707 = vadd.f32 %v6705, %v6706
    %v6708 = vrot.slane %v6707, 1
    %v6709 = vadd.f32 %v6707, %v6708
    %v6710 = vld [vmem:[%s55] sm:$0xff]
    %v6711 = vld [vmem:[%s55 + $0x8] sm:$0xff]
    %v6712 = vld [vmem:[%s55 + $0x10] sm:$0xff]
    %v6713 = vld [vmem:[%s55 + $0x18] sm:$0xff]
    %v6714 = vld [vmem:[%s55 + $0x20] sm:$0xff]
    %v6715 = vld [vmem:[%s55 + $0x28] sm:$0xff]
    %v6716 = vld [vmem:[%s55 + $0x30] sm:$0xff]
    %v6717 = vld [vmem:[%s55 + $0x38] sm:$0xff]
    %v6718 = vld [vmem:[%s55 + $0x40] sm:$0xff]
    %v6719 = vld [vmem:[%s55 + $0x48] sm:$0xff]
    %v6720 = vld [vmem:[%s55 + $0x50] sm:$0xff]
    %v6721 = vld [vmem:[%s55 + $0x58] sm:$0xff]
    %v6722 = vld [vmem:[%s55 + $0x60] sm:$0xff]
    %v6723 = vld [vmem:[%s55 + $0x68] sm:$0xff]
    %v6724 = vld [vmem:[%s55 + $0x70] sm:$0xff]
    %v6726 = vsel %vm4065, %v6709, 0
    %6728 = vmatpush.msra.mxu0 0.0
    %6729 = vmatpush.msra.mxu0 %v6724
    %6730 = vmatpush.msra.mxu0 %v6723
    %6731 = vmatpush.msra.mxu0 %v6722
    %6732 = vmatpush.msra.mxu0 %v6721
    %6733 = vmatpush.msra.mxu0 %v6720
    %6734 = vmatpush.msra.mxu0 %v6719
    %6735 = vmatpush.msra.mxu0 %v6718
    %6736 = vmatpush.msra.mxu0 %v6717
    %6737 = vmatpush.msra.mxu0 %v6716
    %6738 = vmatpush.msra.mxu0 %v6715
    %6739 = vmatpush.msra.mxu0 %v6714
    %6740 = vmatpush.msra.mxu0 %v6713
    %6741 = vmatpush.msra.mxu0 %v6712
    %6742 = vmatpush.msra.mxu0 %v6711
    %6743 = vmatpush.msra.mxu0 %v6710
    %6744 = vmatmul.f32.gmra.mxu0 %v6726
    %v6745 = vpop.f32.mrf.mxu0
    %v6746 = vadd.f32 0.0, %v6745
    %6747 = vdwg.mxu0
    %v6748 = vmul.f32 %v6746, 0.027777778
    %v6749 = vld [vmem:[%s63] sm:$0xff]
    %v6750 = vld [vmem:[%s63 + $0x8] sm:$0xff]
    %v6751 = vld [vmem:[%s63 + $0x10] sm:$0xf]
    %v6753 = vsel %vm6642, %v6748, 0
    %v6756 = vsel %vm177, %v6751, 0
    %6758 = vmatpush.msra.mxu0 0.0
    %6759 = vmatpush.msra.mxu0 0.0
    %6760 = vmatpush.msra.mxu0 0.0
    %6761 = vmatpush.msra.mxu0 0.0
    %6762 = vmatpush.msra.mxu0 0.0
    %6763 = vmatpush.msra.mxu0 0.0
    %6764 = vmatpush.msra.mxu0 0.0
    %6765 = vmatpush.msra.mxu0 0.0
    %6766 = vmatpush.msra.mxu0 0.0
    %6767 = vmatpush.msra.mxu0 0.0
    %6768 = vmatpush.msra.mxu0 0.0
    %6769 = vmatpush.msra.mxu0 0.0
    %6770 = vmatpush.msra.mxu0 0.0
    %6771 = vmatpush.msra.mxu0 %v6756
    %6772 = vmatpush.msra.mxu0 %v6750
    %6773 = vmatpush.msra.mxu0 %v6749
    %6774 = vmatmul.f32.gmra.mxu0 %v6753
    %v6775 = vpop.f32.mrf.mxu0
    %v6776 = vadd.f32 0.0, %v6775
    %6777 = vdwg.mxu0
    %v6778 = vld [vmem:[%s65] sm:$0xff]
    %v6779 = vld [vmem:[%s65 + $0x8] sm:$0xff]
    %v6781 = vsel %vm6178, %v6776, 0
    %6783 = vmatpush.msra.mxu0 0.0
    %6784 = vmatpush.msra.mxu0 0.0
    %6785 = vmatpush.msra.mxu0 0.0
    %6786 = vmatpush.msra.mxu0 0.0
    %6787 = vmatpush.msra.mxu0 0.0
    %6788 = vmatpush.msra.mxu0 0.0
    %6789 = vmatpush.msra.mxu0 0.0
    %6790 = vmatpush.msra.mxu0 0.0
    %6791 = vmatpush.msra.mxu0 0.0
    %6792 = vmatpush.msra.mxu0 0.0
    %6793 = vmatpush.msra.mxu0 0.0
    %6794 = vmatpush.msra.mxu0 0.0
    %6795 = vmatpush.msra.mxu0 0.0
    %6796 = vmatpush.msra.mxu0 0.0
    %6797 = vmatpush.msra.mxu0 %v6779
    %6798 = vmatpush.msra.mxu0 %v6778
    %6799 = vmatmul.f32.gmra.mxu0 %v6781
    %v6800 = vpop.f32.mrf.mxu0
    %v6801 = vadd.f32 0.0, %v6800
    %6802 = vdwg.mxu0
    %vm6803 = vcmask 73728
    %v6804 = vsel %vm6803, %v6801, -inf
    %6805 = vmax.xlane.f32.xlu0 %v6804
    %v6806 = vpop.xlane.xlu0 %6805
    %v6807 = vsub.f32 %v6801, %v6806
    %v6808 = vmul.f32 %v6807, 1.442695
    %v6809 = vpow.pop %v6808
    %v6810 = vsel %vm6803, %v6809, 0.0
    %6811 = vadd.xlane.f32.xlu0 %v6810
    %v6812 = vpop.xlane.xlu0 %6811
    %v6813 = vlog2.pop %v6812
    %v6814 = vmul.f32 %v6813, 0.6931472
    %v6815 = vsub.f32 %v6807, %v6814
    %6816 = vst.msk [vmem:[#allocation8] sm:$0x1] %vm6803, %v6815
    %v6817 = vld [vmem:[%s6495] sm:$0x3f]
    %v6818 = vsel %vm6350, %v6817, 0.0
    %v6819 = vrot.slane %v6818, 4
    %v6820 = vadd.f32 %v6818, %v6819
    %v6821 = vrot.slane %v6820, 2
    %v6822 = vadd.f32 %v6820, %v6821
    %v6823 = vrot.slane %v6822, 1
    %v6824 = vadd.f32 %v6822, %v6823
    %v6825 = vld [vmem:[%s55] sm:$0xff]
    %v6826 = vld [vmem:[%s55 + $0x8] sm:$0xff]
    %v6827 = vld [vmem:[%s55 + $0x10] sm:$0xff]
    %v6828 = vld [vmem:[%s55 + $0x18] sm:$0xff]
    %v6829 = vld [vmem:[%s55 + $0x20] sm:$0xff]
    %v6830 = vld [vmem:[%s55 + $0x28] sm:$0xff]
    %v6831 = vld [vmem:[%s55 + $0x30] sm:$0xff]
    %v6832 = vld [vmem:[%s55 + $0x38] sm:$0xff]
    %v6833 = vld [vmem:[%s55 + $0x40] sm:$0xff]
    %v6834 = vld [vmem:[%s55 + $0x48] sm:$0xff]
    %v6835 = vld [vmem:[%s55 + $0x50] sm:$0xff]
    %v6836 = vld [vmem:[%s55 + $0x58] sm:$0xff]
    %v6837 = vld [vmem:[%s55 + $0x60] sm:$0xff]
    %v6838 = vld [vmem:[%s55 + $0x68] sm:$0xff]
    %v6839 = vld [vmem:[%s55 + $0x70] sm:$0xff]
    %v6841 = vsel %vm4065, %v6824, 0
    %6843 = vmatpush.msra.mxu0 0.0
    %6844 = vmatpush.msra.mxu0 %v6839
    %6845 = vmatpush.msra.mxu0 %v6838
    %6846 = vmatpush.msra.mxu0 %v6837
    %6847 = vmatpush.msra.mxu0 %v6836
    %6848 = vmatpush.msra.mxu0 %v6835
    %6849 = vmatpush.msra.mxu0 %v6834
    %6850 = vmatpush.msra.mxu0 %v6833
    %6851 = vmatpush.msra.mxu0 %v6832
    %6852 = vmatpush.msra.mxu0 %v6831
    %6853 = vmatpush.msra.mxu0 %v6830
    %6854 = vmatpush.msra.mxu0 %v6829
    %6855 = vmatpush.msra.mxu0 %v6828
    %6856 = vmatpush.msra.mxu0 %v6827
    %6857 = vmatpush.msra.mxu0 %v6826
    %6858 = vmatpush.msra.mxu0 %v6825
    %6859 = vmatmul.f32.gmra.mxu0 %v6841
    %v6860 = vpop.f32.mrf.mxu0
    %v6861 = vadd.f32 0.0, %v6860
    %6862 = vdwg.mxu0
    %v6863 = vmul.f32 %v6861, 0.027777778
    %v6864 = vld [vmem:[%s63] sm:$0xff]
    %v6865 = vld [vmem:[%s63 + $0x8] sm:$0xff]
    %v6866 = vld [vmem:[%s63 + $0x10] sm:$0xf]
    %v6868 = vsel %vm6642, %v6863, 0
    %v6871 = vsel %vm177, %v6866, 0
    %6873 = vmatpush.msra.mxu0 0.0
    %6874 = vmatpush.msra.mxu0 0.0
    %6875 = vmatpush.msra.mxu0 0.0
    %6876 = vmatpush.msra.mxu0 0.0
    %6877 = vmatpush.msra.mxu0 0.0
    %6878 = vmatpush.msra.mxu0 0.0
    %6879 = vmatpush.msra.mxu0 0.0
    %6880 = vmatpush.msra.mxu0 0.0
    %6881 = vmatpush.msra.mxu0 0.0
    %6882 = vmatpush.msra.mxu0 0.0
    %6883 = vmatpush.msra.mxu0 0.0
    %6884 = vmatpush.msra.mxu0 0.0
    %6885 = vmatpush.msra.mxu0 0.0
    %6886 = vmatpush.msra.mxu0 %v6871
    %6887 = vmatpush.msra.mxu0 %v6865
    %6888 = vmatpush.msra.mxu0 %v6864
    %6889 = vmatmul.f32.gmra.mxu0 %v6868
    %v6890 = vpop.f32.mrf.mxu0
    %v6891 = vadd.f32 0.0, %v6890
    %6892 = vdwg.mxu0
    %v6893 = vld [vmem:[%s65] sm:$0xff]
    %v6894 = vld [vmem:[%s65 + $0x8] sm:$0xff]
    %v6896 = vsel %vm6178, %v6891, 0
    %6898 = vmatpush.msra.mxu0 0.0
    %6899 = vmatpush.msra.mxu0 0.0
    %6900 = vmatpush.msra.mxu0 0.0
    %6901 = vmatpush.msra.mxu0 0.0
    %6902 = vmatpush.msra.mxu0 0.0
    %6903 = vmatpush.msra.mxu0 0.0
    %6904 = vmatpush.msra.mxu0 0.0
    %6905 = vmatpush.msra.mxu0 0.0
    %6906 = vmatpush.msra.mxu0 0.0
    %6907 = vmatpush.msra.mxu0 0.0
    %6908 = vmatpush.msra.mxu0 0.0
    %6909 = vmatpush.msra.mxu0 0.0
    %6910 = vmatpush.msra.mxu0 0.0
    %6911 = vmatpush.msra.mxu0 0.0
    %6912 = vmatpush.msra.mxu0 %v6894
    %6913 = vmatpush.msra.mxu0 %v6893
    %6914 = vmatmul.f32.gmra.mxu0 %v6896
    %v6915 = vpop.f32.mrf.mxu0
    %v6916 = vadd.f32 0.0, %v6915
    %6917 = vdwg.mxu0
    %v6918 = vsel %vm6803, %v6916, -inf
    %6919 = vmax.xlane.f32.xlu0 %v6918
    %v6920 = vpop.xlane.xlu0 %6919
    %v6921 = vsub.f32 %v6916, %v6920
    %v6922 = vmul.f32 %v6921, 1.442695
    %v6923 = vpow.pop %v6922
    %v6924 = vsel %vm6803, %v6923, 0.0
    %6925 = vadd.xlane.f32.xlu0 %v6924
    %v6926 = vpop.xlane.xlu0 %6925
    %v6927 = vlog2.pop %v6926
    %v6928 = vmul.f32 %v6927, 0.6931472
    %v6929 = vsub.f32 %v6921, %v6928
    %6930 = vst.msk [vmem:[#allocation8 + $0x1] sm:$0x1] %vm6803, %v6929
    // Predicated region
    $region134: #{model_forward.1} parent=1 // pred_check
      _
    $region135: #{model_forward.1} parent=1 // pred_check_branch
      %6932 = sbr.rel (0) target = $region137
    $region136: #{model_forward.1} parent=1 // pred_region
      %6934 = vsyncadd [#allocation9], 0
      %s6936 = sshll.u32 [#allocation8], 4
      %s6937 = int_to_ptr.vmem [resolvable:$true] %s6936
      %s6938 = sshll.u32 %s67, 4
      %s6939 = int_to_ptr.hbm [resolvable:$true] %s6938
      %6941 = dma.vmem_to_hbm [thread:$0]  %s6937, 32, %s6939, [#allocation9]
    $region137: #{model_forward.1} parent=1 // pred_fallthru
      _
    // Predicated region
    $region138: #{model_forward.1} parent=1 // pred_check
      _
    $region139: #{model_forward.1} parent=1 // pred_check_branch
      %6943 = sbr.rel (0) target = $region141
    $region140: #{model_forward.1} parent=1 // pred_region
      %6945 = dma.done [#allocation9], 32
    $region141: #{model_forward.1} parent=1 // pred_fallthru
      _
    %6946 = vsyncpa [#allocation9], 1

</llo_original>
